<compile_context>
chip_gen: v7x
topology: tpu7x:2x2x1
jax: 0.10.0
libtpu: 0.0.40
codegen_flags: <defaults>
</compile_context>

<pallas_src>
import numpy as np
import jax
import jax.numpy as jnp
from jax import lax
from jax.experimental import pallas as pl
from jax.experimental.pallas import tpu as pltpu


INPUT_CHANNELS_ENC = [1, 32, 64]
OUTPUT_CHANNELS_ENC = [32, 64, 128]
INPUT_CHANNELS_DEC = [128, 64, 32]
OUTPUT_CHANNELS_DEC = [64, 32, 1]


# --------------------- host-precomputed operator matrices --------------------


def linear_interp_matrix(l_in, l_out):
    """(l_out, l_in) matrix reproducing F.interpolate(mode='linear',
    align_corners=False) along the length axis."""
    scale = l_in / l_out
    j = np.arange(l_out)
    src = np.maximum(scale * (j + 0.5) - 0.5, 0.0)
    i0 = np.minimum(np.floor(src).astype(np.int64), l_in - 1)
    i1 = np.minimum(i0 + 1, l_in - 1)
    w1 = (src - i0).astype(np.float32)
    w0 = (1.0 - w1).astype(np.float32)
    m = np.zeros((l_out, l_in), np.float32)
    m[j, i0] += w0
    m[j, i1] += w1
    return m


def even_select_matrix(l):
    """(l, l//2) 0/1 right-multiply operator selecting the even columns."""
    p = np.zeros((l, l // 2), np.float32)
    j = np.arange(l // 2)
    p[2 * j, j] = 1.0
    return p


# ------------------------------ Pallas kernel --------------------------------


def _cae_kernel(x_ref,
                ew1_ref, eb1_ref, ew2_ref, eb2_ref, ew3_ref, eb3_ref,
                pe1_ref, pe2_ref, m2_ref, m3_ref,
                d1wa_ref, d1wb_ref, d1wc_ref, d1b_ref,
                d2wa_ref, d2wb_ref, d2wc_ref, d2b_ref,
                d3wa_ref, d3wb_ref, d3wc_ref, d3b_ref,
                o_ref):
    f32 = jnp.float32

    def dot(a, b):
        return jnp.dot(a, b, preferred_element_type=f32)

    def shift_prev(h):
        # result[:, j] = h[:, j-1], zero at j == 0  (conv tap k=0).
        col = lax.broadcasted_iota(jnp.int32, h.shape, 1)
        return jnp.where(col == 0, 0.0, pltpu.roll(h, 1, axis=1))

    def shift_next(h):
        # result[:, j] = h[:, j+1], zero at j == L-1  (conv tap k=2).
        length = h.shape[1]
        col = lax.broadcasted_iota(jnp.int32, h.shape, 1)
        return jnp.where(col == length - 1, 0.0,
                         pltpu.roll(h, length - 1, axis=1))

    def conv3(h, w_ref, bias):
        # Conv1d(k=3, stride=1, pad=1), channels-first (Cin, L) -> (Cout, L).
        # Length shifts are XLU rolls; the MXU only does channel mixes.
        acc = dot(w_ref[1], h)
        acc = acc + dot(w_ref[0], shift_prev(h))
        acc = acc + dot(w_ref[2], shift_next(h))
        return acc + bias

    def maxpool2(h, sel_ref):
        # MaxPool1d(2): pairwise max via roll, then one even-column select.
        length = h.shape[1]
        pair = jnp.maximum(h, pltpu.roll(h, length - 1, axis=1))
        return dot(pair, sel_ref[...])

    def upproj(h, m_ref, wa_ref, wb_ref, wc_ref, b_ref):
        # UpProj1d (eval-mode BN folded): interp (single matmul, shared by
        # both branches; identity stage skips it), two parallel k=3 convs with
        # interleaved per-tap accumulation, relu, conv1b, add, relu.
        hi = h if m_ref is None else dot(h, m_ref[...])
        t = shift_prev(hi)
        y1a = dot(wa_ref[0], t)
        y2 = dot(wc_ref[0], t)
        y1a = y1a + dot(wa_ref[1], hi)
        y2 = y2 + dot(wc_ref[1], hi)
        t = shift_next(hi)
        y1a = y1a + dot(wa_ref[2], t)
        y2 = y2 + dot(wc_ref[2], t)
        a = jnp.maximum(y1a + b_ref[0], 0.0)        # relu(bn1a(conv1a(x)))
        y1b = conv3(a, wb_ref, b_ref[1])            # bn1b(conv1b(.))
        return jnp.maximum(y1b + (y2 + b_ref[2]), 0.0)

    # -------------------------------- Encoder --------------------------------
    x0 = x_ref[0].astype(f32)                                    # (1, L0)
    # Cin == 1: stack the three taps on sublanes -> one K=3 matmul.
    x3 = jnp.concatenate([shift_prev(x0), x0, shift_next(x0)], axis=0)
    h = dot(ew1_ref[...], x3) + eb1_ref[...]                     # (32, L0)
    h = jnp.maximum(maxpool2(h, pe1_ref), 0.0)                   # (32, L1)
    h = conv3(h, ew2_ref, eb2_ref[...])                          # (64, L1)
    h = jnp.maximum(maxpool2(h, pe2_ref), 0.0)                   # (64, L2)
    h = jnp.maximum(conv3(h, ew3_ref, eb3_ref[...]), 0.0)        # (128, L2)

    # -------------------------- Decoder: UpProj1d x3 --------------------------
    h = upproj(h, None, d1wa_ref, d1wb_ref, d1wc_ref, d1b_ref)   # (64, L2)
    h = upproj(h, m2_ref, d2wa_ref, d2wb_ref, d2wc_ref, d2b_ref)  # (32, L1)
    h = upproj(h, m3_ref, d3wa_ref, d3wb_ref, d3wc_ref, d3b_ref)  # (1, L0)

    o_ref[0] = h.astype(o_ref.dtype)                             # lane-dense row


# ---------------------------- parameters (folded) -----------------------------


def make_encoder_params(key):
    """Conv1d(k=3, pad=1, bias=True) weights in (K=3, Cout, Cin) layout."""
    params = []
    keys = jax.random.split(key, 2 * len(OUTPUT_CHANNELS_ENC))
    for i, (cin, cout) in enumerate(zip(INPUT_CHANNELS_ENC, OUTPUT_CHANNELS_ENC)):
        w = jax.random.normal(keys[2 * i], (3, cout, cin), jnp.float32) / np.sqrt(3.0 * cin)
        b = 0.1 * jax.random.normal(keys[2 * i + 1], (cout,), jnp.float32)
        params.append((w, b))
    return params


def make_upproj_params(key, n_in, n_out):
    """Conv weights in (K=3, Cout, Cin) layout with eval-mode BatchNorm folded
    into a per-output-channel scale (into W) and an additive bias."""
    keys = jax.random.split(key, 15)

    def conv_w(k, cin, cout):
        return jax.random.normal(k, (3, cout, cin), jnp.float32) / np.sqrt(3.0 * cin)

    def bn_fold(kg, kb, km, kv, c):
        gamma = 1.0 + 0.1 * jax.random.normal(kg, (c,), jnp.float32)
        beta = 0.1 * jax.random.normal(kb, (c,), jnp.float32)
        mean = 0.1 * jax.random.normal(km, (c,), jnp.float32)
        var = 0.5 + jnp.abs(jax.random.normal(kv, (c,), jnp.float32))
        scale = gamma / jnp.sqrt(var + 1e-5)
        bias = beta - mean * scale
        return scale, bias

    w1a = conv_w(keys[0], n_in, n_out)
    s1a, b1a = bn_fold(keys[1], keys[2], keys[3], keys[4], n_out)
    w1b = conv_w(keys[5], n_out, n_out)
    s1b, b1b = bn_fold(keys[6], keys[7], keys[8], keys[9], n_out)
    w2 = conv_w(keys[10], n_in, n_out)
    s2, b2 = bn_fold(keys[11], keys[12], keys[13], keys[14], n_out)

    return (w1a * s1a[None, :, None], b1a,
            w1b * s1b[None, :, None], b1b,
            w2 * s2[None, :, None], b2)


def make_decoder_params(key):
    k3, k2, k1 = jax.random.split(key, 3)
    return [make_upproj_params(k, cin, cout)
            for k, cin, cout in zip((k3, k2, k1),
                                    INPUT_CHANNELS_DEC, OUTPUT_CHANNELS_DEC)]


# -------------------------------- CAE wrapper ---------------------------------


def build_cae_constants(l0, enc_params, dec_params):
    """All non-batch operands of the fused kernel, in kernel argument order."""
    assert l0 % 4 == 0
    l1, l2 = l0 // 2, l0 // 4

    (ew1, eb1), (ew2, eb2), (ew3, eb3) = enc_params

    def col(b):
        return jnp.asarray(b)[:, None]          # (C,) -> (C, 1) lane-broadcast bias

    ew1_cat = jnp.concatenate([ew1[0], ew1[1], ew1[2]], axis=1)   # (32, 3)

    consts = [
        ew1_cat, col(eb1),
        ew2, col(eb2),
        ew3, col(eb3),
        jnp.asarray(even_select_matrix(l0)),           # pe1: L0 -> L1
        jnp.asarray(even_select_matrix(l1)),           # pe2: L1 -> L2
        jnp.asarray(linear_interp_matrix(l2, l1).T),   # m2: L2 -> L1 (right-mult)
        jnp.asarray(linear_interp_matrix(l1, l0).T),   # m3: L1 -> L0 (right-mult)
    ]
    for (w1a, b1a, w1b, b1b, w2, b2) in dec_params:
        consts += [w1a, w1b, w2,
                   jnp.stack([col(b1a), col(b1b), col(b2)], axis=0)]  # (3, Cout, 1)
    return consts


def _estimate_flops(l0, batch):
    l1, l2 = l0 // 2, l0 // 4
    mm = lambda m, k, n: 2 * m * k * n
    fl = (mm(32, 3, l0) + mm(32, l0, l1) + 3 * mm(64, 32, l1)
          + mm(64, l1, l2) + 3 * mm(128, 64, l2))

    def up(cin, cout, lin, lout, interp):
        f = mm(cin, lin, lout) if interp else 0
        return f + 6 * mm(cout, cin, lout) + 3 * mm(cout, cout, lout)

    fl += up(128, 64, l2, l2, False) + up(64, 32, l2, l1, True) + up(32, 1, l1, l0, True)
    return batch * fl


def cae_forward(x, constants):
    """x: (B, 1, L) in PyTorch NCL layout; returns (B, 1, L) NCL."""
    batch, c_in, l0 = x.shape
    assert c_in == 1

    def const_spec(a):
        nd = a.ndim
        return pl.BlockSpec(a.shape, lambda b: (0,) * nd)

    in_specs = ([pl.BlockSpec((1, 1, l0), lambda b: (b, 0, 0))]
                + [const_spec(a) for a in constants])

    const_bytes = sum(int(np.prod(a.shape)) * a.dtype.itemsize for a in constants)
    io_bytes = 2 * batch * l0 * 4
    # Explicit scoped-VMEM limit sized from the constant set (with headroom for
    # double-buffering + intermediates), clamped to fit every chip's physical VMEM.
    vmem_limit = int(min(64 * 2**20, max(32 * 2**20, 4 * const_bytes + 8 * 2**20)))

    return pl.pallas_call(
        _cae_kernel,
        out_shape=jax.ShapeDtypeStruct((batch, 1, l0), jnp.float32),
        grid=(batch,),
        in_specs=in_specs,
        out_specs=pl.BlockSpec((1, 1, l0), lambda b: (b, 0, 0)),
        compiler_params=pltpu.CompilerParams(
            dimension_semantics=("parallel",),
            vmem_limit_bytes=vmem_limit),
        cost_estimate=pl.CostEstimate(
            flops=int(_estimate_flops(l0, batch)),
            transcendentals=0,
            bytes_accessed=int(const_bytes + io_bytes)),
    )(x.astype(jnp.float32), *constants)


# ----------------------------- pure-JAX reference -----------------------------


def _conv1d_ref(x, w, b=None):
    # x: (B, Cin, L); w: (3, Cout, Cin): Conv1d(k=3, stride=1, pad=1).
    length = x.shape[2]
    xp = jnp.pad(x, ((0, 0), (0, 0), (1, 1)))
    y = sum(jnp.einsum('oc,bcl->bol', w[k], xp[:, :, k:k + length],
                       precision=jax.lax.Precision.HIGHEST) for k in range(3))
    if b is not None:
        y = y + b[None, :, None]
    return y


def _maxpool2_ref(x):
    bsz, c, length = x.shape
    return x.reshape(bsz, c, length // 2, 2).max(axis=3)


def _interp_ref(x, l_out):
    m = jnp.asarray(linear_interp_matrix(x.shape[2], l_out))
    return jnp.einsum('ji,bci->bcj', m, x, precision=jax.lax.Precision.HIGHEST)


def _upproj_ref(x, size, w1a, b1a, w1b, b1b, w2, b2):
    xi = _interp_ref(x, size)
    br1 = jax.nn.relu(_conv1d_ref(xi, w1a, b1a))
    br1 = _conv1d_ref(br1, w1b, b1b)
    br2 = _conv1d_ref(xi, w2, b2)
    return jax.nn.relu(br1 + br2)


def cae_forward_ref(x, enc_params, dec_params):
    (w1, b1), (w2, b2), (w3, b3) = enc_params
    h1 = jax.nn.relu(_maxpool2_ref(_conv1d_ref(x, w1, b1)))
    h2 = jax.nn.relu(_maxpool2_ref(_conv1d_ref(h1, w2, b2)))
    h3 = jax.nn.relu(_conv1d_ref(h2, w3, b3))
    xs = [x, h1, h2, h3]
    sizes = [int(a.shape[2]) for a in xs]
    h = xs[3]
    for p, size in zip(dec_params, (sizes[2], sizes[1], sizes[0])):
        h = _upproj_ref(h, size, *p)
    return h


# ------------------------------------ main ------------------------------------


if __name__ == "__main__":
    key = jax.random.PRNGKey(0)
    k_enc, k_dec, k_x = jax.random.split(key, 3)

    batch, length = 2, 32
    x = jax.random.normal(k_x, (batch, 1, length), jnp.float32)  # PyTorch NCL input

    enc_params = make_encoder_params(k_enc)
    dec_params = make_decoder_params(k_dec)
    constants = build_cae_constants(length, enc_params, dec_params)

    out = jax.block_until_ready(cae_forward(x, constants))
    assert out.shape == (batch, 1, length), out.shape

    ref = cae_forward_ref(x, enc_params, dec_params)
    # All-f32 path; TPU MXU f32 matmuls are multi-pass bf16 internally, so keep
    # a moderate tolerance against the HIGHEST-precision reference.
    np.testing.assert_allclose(np.asarray(out), np.asarray(ref),
                               rtol=2e-2, atol=2e-2)
    print("KERNEL_OK")
</pallas_src>

<mosaic_0001>
module attributes {stable_mosaic.version = 11 : i64} {
  func.func @_cae_kernel(%arg0: i32, %arg1: memref<1x1x32xf32, #tpu.memory_space<vmem>>, %arg2: memref<32x3xf32, #tpu.memory_space<vmem>>, %arg3: memref<32x1xf32, #tpu.memory_space<vmem>>, %arg4: memref<3x64x32xf32, #tpu.memory_space<vmem>>, %arg5: memref<64x1xf32, #tpu.memory_space<vmem>>, %arg6: memref<3x128x64xf32, #tpu.memory_space<vmem>>, %arg7: memref<128x1xf32, #tpu.memory_space<vmem>>, %arg8: memref<32x16xf32, #tpu.memory_space<vmem>>, %arg9: memref<16x8xf32, #tpu.memory_space<vmem>>, %arg10: memref<8x16xf32, #tpu.memory_space<vmem>>, %arg11: memref<16x32xf32, #tpu.memory_space<vmem>>, %arg12: memref<3x64x128xf32, #tpu.memory_space<vmem>>, %arg13: memref<3x64x64xf32, #tpu.memory_space<vmem>>, %arg14: memref<3x64x128xf32, #tpu.memory_space<vmem>>, %arg15: memref<3x64x1xf32, #tpu.memory_space<vmem>>, %arg16: memref<3x32x64xf32, #tpu.memory_space<vmem>>, %arg17: memref<3x32x32xf32, #tpu.memory_space<vmem>>, %arg18: memref<3x32x64xf32, #tpu.memory_space<vmem>>, %arg19: memref<3x32x1xf32, #tpu.memory_space<vmem>>, %arg20: memref<3x1x32xf32, #tpu.memory_space<vmem>>, %arg21: memref<3x1x1xf32, #tpu.memory_space<vmem>>, %arg22: memref<3x1x32xf32, #tpu.memory_space<vmem>>, %arg23: memref<3x1x1xf32, #tpu.memory_space<vmem>>, %arg24: memref<1x1x32xf32, #tpu.memory_space<vmem>>) attributes {dimension_semantics = [#tpu.dimension_semantics<parallel>], iteration_bounds = array<i64: 2>, scalar_prefetch = 0 : i64, scratch_operands = 0 : i64, tpu.core_type = #tpu.core_type<tc>, window_params = [{transform_indices = @transform_0, window_bounds = array<i64: 1, 1, 32>}, {pipeline_mode = #tpu.pipeline_mode<synchronous>, transform_indices = @transform_1, window_bounds = array<i64: 32, 3>}, {pipeline_mode = #tpu.pipeline_mode<synchronous>, transform_indices = @transform_2, window_bounds = array<i64: 32, 1>}, {pipeline_mode = #tpu.pipeline_mode<synchronous>, transform_indices = @transform_3, window_bounds = array<i64: 3, 64, 32>}, {pipeline_mode = #tpu.pipeline_mode<synchronous>, transform_indices = @transform_4, window_bounds = array<i64: 64, 1>}, {pipeline_mode = #tpu.pipeline_mode<synchronous>, transform_indices = @transform_5, window_bounds = array<i64: 3, 128, 64>}, {pipeline_mode = #tpu.pipeline_mode<synchronous>, transform_indices = @transform_6, window_bounds = array<i64: 128, 1>}, {pipeline_mode = #tpu.pipeline_mode<synchronous>, transform_indices = @transform_7, window_bounds = array<i64: 32, 16>}, {pipeline_mode = #tpu.pipeline_mode<synchronous>, transform_indices = @transform_8, window_bounds = array<i64: 16, 8>}, {pipeline_mode = #tpu.pipeline_mode<synchronous>, transform_indices = @transform_9, window_bounds = array<i64: 8, 16>}, {pipeline_mode = #tpu.pipeline_mode<synchronous>, transform_indices = @transform_10, window_bounds = array<i64: 16, 32>}, {pipeline_mode = #tpu.pipeline_mode<synchronous>, transform_indices = @transform_11, window_bounds = array<i64: 3, 64, 128>}, {pipeline_mode = #tpu.pipeline_mode<synchronous>, transform_indices = @transform_12, window_bounds = array<i64: 3, 64, 64>}, {pipeline_mode = #tpu.pipeline_mode<synchronous>, transform_indices = @transform_13, window_bounds = array<i64: 3, 64, 128>}, {pipeline_mode = #tpu.pipeline_mode<synchronous>, transform_indices = @transform_14, window_bounds = array<i64: 3, 64, 1>}, {pipeline_mode = #tpu.pipeline_mode<synchronous>, transform_indices = @transform_15, window_bounds = array<i64: 3, 32, 64>}, {pipeline_mode = #tpu.pipeline_mode<synchronous>, transform_indices = @transform_16, window_bounds = array<i64: 3, 32, 32>}, {pipeline_mode = #tpu.pipeline_mode<synchronous>, transform_indices = @transform_17, window_bounds = array<i64: 3, 32, 64>}, {pipeline_mode = #tpu.pipeline_mode<synchronous>, transform_indices = @transform_18, window_bounds = array<i64: 3, 32, 1>}, {pipeline_mode = #tpu.pipeline_mode<synchronous>, transform_indices = @transform_19, window_bounds = array<i64: 3, 1, 32>}, {pipeline_mode = #tpu.pipeline_mode<synchronous>, transform_indices = @transform_20, window_bounds = array<i64: 3, 1, 1>}, {pipeline_mode = #tpu.pipeline_mode<synchronous>, transform_indices = @transform_21, window_bounds = array<i64: 3, 1, 32>}, {pipeline_mode = #tpu.pipeline_mode<synchronous>, transform_indices = @transform_22, window_bounds = array<i64: 3, 1, 1>}, {transform_indices = @transform_23, window_bounds = array<i64: 1, 1, 32>}]} {
    %c0 = arith.constant 0 : index
    %c0_0 = arith.constant 0 : index
    %c0_1 = arith.constant 0 : index
    %0 = vector.load %arg1[%c0, %c0_0, %c0_1] : memref<1x1x32xf32, #tpu.memory_space<vmem>>, vector<1x1x32xf32>
    %1 = vector.shape_cast %0 : vector<1x1x32xf32> to vector<1x32xf32>
    %2 = tpu.iota {dimensions = array<i32: 1>} : vector<1x32xi32>
    %c0_i32 = arith.constant 0 : i32
    %3 = vector.broadcast %c0_i32 : i32 to vector<1x32xi32>
    %4 = arith.cmpi eq, %2, %3 : vector<1x32xi32>
    %c1_i32 = arith.constant 1 : i32
    %5 = tpu.dynamic_rotate %1 by %c1_i32 dim 1 : vector<1x32xf32>, i32 -> vector<1x32xf32>
    %cst = arith.constant 0.000000e+00 : f32
    %6 = vector.broadcast %cst : f32 to vector<1x32xf32>
    %7 = arith.select %4, %6, %5 : vector<1x32xi1>, vector<1x32xf32>
    %8 = tpu.iota {dimensions = array<i32: 1>} : vector<1x32xi32>
    %c31_i32 = arith.constant 31 : i32
    %9 = vector.broadcast %c31_i32 : i32 to vector<1x32xi32>
    %10 = arith.cmpi eq, %8, %9 : vector<1x32xi32>
    %c31_i32_2 = arith.constant 31 : i32
    %11 = tpu.dynamic_rotate %1 by %c31_i32_2 dim 1 : vector<1x32xf32>, i32 -> vector<1x32xf32>
    %cst_3 = arith.constant 0.000000e+00 : f32
    %12 = vector.broadcast %cst_3 : f32 to vector<1x32xf32>
    %13 = arith.select %10, %12, %11 : vector<1x32xi1>, vector<1x32xf32>
    %14 = tpu.concatenate %7, %1, %13 in 0 : vector<1x32xf32>, vector<1x32xf32>, vector<1x32xf32> -> vector<3x32xf32>
    %c0_4 = arith.constant 0 : index
    %c0_5 = arith.constant 0 : index
    %15 = vector.load %arg2[%c0_4, %c0_5] : memref<32x3xf32, #tpu.memory_space<vmem>>, vector<32x3xf32>
    %cst_6 = arith.constant dense<0.000000e+00> : vector<32x32xf32>
    %16 = tpu.matmul %15, %14, %cst_6 {dimension_numbers = #tpu.dot_dimension_numbers<[1], [0], [0], [1], [0, 0, 1, 1], [], []>} : vector<32x3xf32>, vector<3x32xf32>, vector<32x32xf32> -> vector<32x32xf32>
    %c0_7 = arith.constant 0 : index
    %c0_8 = arith.constant 0 : index
    %17 = vector.load %arg3[%c0_7, %c0_8] : memref<32x1xf32, #tpu.memory_space<vmem>>, vector<32x1xf32>
    %18 = vector.broadcast %17 : vector<32x1xf32> to vector<32x32xf32>
    %19 = arith.addf %16, %18 : vector<32x32xf32>
    %c31_i32_9 = arith.constant 31 : i32
    %20 = tpu.dynamic_rotate %19 by %c31_i32_9 dim 1 : vector<32x32xf32>, i32 -> vector<32x32xf32>
    %21 = arith.maximumf %19, %20 : vector<32x32xf32>
    %c0_10 = arith.constant 0 : index
    %c0_11 = arith.constant 0 : index
    %22 = vector.load %arg8[%c0_10, %c0_11] : memref<32x16xf32, #tpu.memory_space<vmem>>, vector<32x16xf32>
    %cst_12 = arith.constant dense<0.000000e+00> : vector<32x16xf32>
    %23 = tpu.matmul %21, %22, %cst_12 {dimension_numbers = #tpu.dot_dimension_numbers<[1], [0], [0], [1], [0, 0, 1, 1], [], []>} : vector<32x32xf32>, vector<32x16xf32>, vector<32x16xf32> -> vector<32x16xf32>
    %cst_13 = arith.constant 0.000000e+00 : f32
    %24 = vector.broadcast %cst_13 : f32 to vector<32x16xf32>
    %25 = arith.maximumf %23, %24 : vector<32x16xf32>
    %c0_14 = arith.constant 0 : index
    %c0_15 = arith.constant 0 : index
    %26 = vector.load %arg5[%c0_14, %c0_15] : memref<64x1xf32, #tpu.memory_space<vmem>>, vector<64x1xf32>
    %c1 = arith.constant 1 : index
    %c0_16 = arith.constant 0 : index
    %c0_17 = arith.constant 0 : index
    %27 = vector.load %arg4[%c1, %c0_16, %c0_17] : memref<3x64x32xf32, #tpu.memory_space<vmem>>, vector<1x64x32xf32>
    %28 = vector.shape_cast %27 : vector<1x64x32xf32> to vector<64x32xf32>
    %cst_18 = arith.constant dense<0.000000e+00> : vector<64x16xf32>
    %29 = tpu.matmul %28, %25, %cst_18 {dimension_numbers = #tpu.dot_dimension_numbers<[1], [0], [0], [1], [0, 0, 1, 1], [], []>} : vector<64x32xf32>, vector<32x16xf32>, vector<64x16xf32> -> vector<64x16xf32>
    %c0_19 = arith.constant 0 : index
    %c0_20 = arith.constant 0 : index
    %c0_21 = arith.constant 0 : index
    %30 = vector.load %arg4[%c0_19, %c0_20, %c0_21] : memref<3x64x32xf32, #tpu.memory_space<vmem>>, vector<1x64x32xf32>
    %31 = vector.shape_cast %30 : vector<1x64x32xf32> to vector<64x32xf32>
    %32 = tpu.iota {dimensions = array<i32: 1>} : vector<32x16xi32>
    %c0_i32_22 = arith.constant 0 : i32
    %33 = vector.broadcast %c0_i32_22 : i32 to vector<32x16xi32>
    %34 = arith.cmpi eq, %32, %33 : vector<32x16xi32>
    %c1_i32_23 = arith.constant 1 : i32
    %35 = tpu.dynamic_rotate %25 by %c1_i32_23 dim 1 : vector<32x16xf32>, i32 -> vector<32x16xf32>
    %cst_24 = arith.constant 0.000000e+00 : f32
    %36 = vector.broadcast %cst_24 : f32 to vector<32x16xf32>
    %37 = arith.select %34, %36, %35 : vector<32x16xi1>, vector<32x16xf32>
    %cst_25 = arith.constant dense<0.000000e+00> : vector<64x16xf32>
    %38 = tpu.matmul %31, %37, %cst_25 {dimension_numbers = #tpu.dot_dimension_numbers<[1], [0], [0], [1], [0, 0, 1, 1], [], []>} : vector<64x32xf32>, vector<32x16xf32>, vector<64x16xf32> -> vector<64x16xf32>
    %39 = arith.addf %29, %38 : vector<64x16xf32>
    %c2 = arith.constant 2 : index
    %c0_26 = arith.constant 0 : index
    %c0_27 = arith.constant 0 : index
    %40 = vector.load %arg4[%c2, %c0_26, %c0_27] : memref<3x64x32xf32, #tpu.memory_space<vmem>>, vector<1x64x32xf32>
    %41 = vector.shape_cast %40 : vector<1x64x32xf32> to vector<64x32xf32>
    %42 = tpu.iota {dimensions = array<i32: 1>} : vector<32x16xi32>
    %c15_i32 = arith.constant 15 : i32
    %43 = vector.broadcast %c15_i32 : i32 to vector<32x16xi32>
    %44 = arith.cmpi eq, %42, %43 : vector<32x16xi32>
    %c15_i32_28 = arith.constant 15 : i32
    %45 = tpu.dynamic_rotate %25 by %c15_i32_28 dim 1 : vector<32x16xf32>, i32 -> vector<32x16xf32>
    %cst_29 = arith.constant 0.000000e+00 : f32
    %46 = vector.broadcast %cst_29 : f32 to vector<32x16xf32>
    %47 = arith.select %44, %46, %45 : vector<32x16xi1>, vector<32x16xf32>
    %cst_30 = arith.constant dense<0.000000e+00> : vector<64x16xf32>
    %48 = tpu.matmul %41, %47, %cst_30 {dimension_numbers = #tpu.dot_dimension_numbers<[1], [0], [0], [1], [0, 0, 1, 1], [], []>} : vector<64x32xf32>, vector<32x16xf32>, vector<64x16xf32> -> vector<64x16xf32>
    %49 = arith.addf %39, %48 : vector<64x16xf32>
    %50 = vector.broadcast %26 : vector<64x1xf32> to vector<64x16xf32>
    %51 = arith.addf %49, %50 : vector<64x16xf32>
    %c15_i32_31 = arith.constant 15 : i32
    %52 = tpu.dynamic_rotate %51 by %c15_i32_31 dim 1 : vector<64x16xf32>, i32 -> vector<64x16xf32>
    %53 = arith.maximumf %51, %52 : vector<64x16xf32>
    %c0_32 = arith.constant 0 : index
    %c0_33 = arith.constant 0 : index
    %54 = vector.load %arg9[%c0_32, %c0_33] : memref<16x8xf32, #tpu.memory_space<vmem>>, vector<16x8xf32>
    %cst_34 = arith.constant dense<0.000000e+00> : vector<64x8xf32>
    %55 = tpu.matmul %53, %54, %cst_34 {dimension_numbers = #tpu.dot_dimension_numbers<[1], [0], [0], [1], [0, 0, 1, 1], [], []>} : vector<64x16xf32>, vector<16x8xf32>, vector<64x8xf32> -> vector<64x8xf32>
    %cst_35 = arith.constant 0.000000e+00 : f32
    %56 = vector.broadcast %cst_35 : f32 to vector<64x8xf32>
    %57 = arith.maximumf %55, %56 : vector<64x8xf32>
    %c0_36 = arith.constant 0 : index
    %c0_37 = arith.constant 0 : index
    %58 = vector.load %arg7[%c0_36, %c0_37] : memref<128x1xf32, #tpu.memory_space<vmem>>, vector<128x1xf32>
    %c1_38 = arith.constant 1 : index
    %c0_39 = arith.constant 0 : index
    %c0_40 = arith.constant 0 : index
    %59 = vector.load %arg6[%c1_38, %c0_39, %c0_40] : memref<3x128x64xf32, #tpu.memory_space<vmem>>, vector<1x128x64xf32>
    %60 = vector.shape_cast %59 : vector<1x128x64xf32> to vector<128x64xf32>
    %cst_41 = arith.constant dense<0.000000e+00> : vector<128x8xf32>
    %61 = tpu.matmul %60, %57, %cst_41 {dimension_numbers = #tpu.dot_dimension_numbers<[1], [0], [0], [1], [0, 0, 1, 1], [], []>} : vector<128x64xf32>, vector<64x8xf32>, vector<128x8xf32> -> vector<128x8xf32>
    %c0_42 = arith.constant 0 : index
    %c0_43 = arith.constant 0 : index
    %c0_44 = arith.constant 0 : index
    %62 = vector.load %arg6[%c0_42, %c0_43, %c0_44] : memref<3x128x64xf32, #tpu.memory_space<vmem>>, vector<1x128x64xf32>
    %63 = vector.shape_cast %62 : vector<1x128x64xf32> to vector<128x64xf32>
    %64 = tpu.iota {dimensions = array<i32: 1>} : vector<64x8xi32>
    %c0_i32_45 = arith.constant 0 : i32
    %65 = vector.broadcast %c0_i32_45 : i32 to vector<64x8xi32>
    %66 = arith.cmpi eq, %64, %65 : vector<64x8xi32>
    %c1_i32_46 = arith.constant 1 : i32
    %67 = tpu.dynamic_rotate %57 by %c1_i32_46 dim 1 : vector<64x8xf32>, i32 -> vector<64x8xf32>
    %cst_47 = arith.constant 0.000000e+00 : f32
    %68 = vector.broadcast %cst_47 : f32 to vector<64x8xf32>
    %69 = arith.select %66, %68, %67 : vector<64x8xi1>, vector<64x8xf32>
    %cst_48 = arith.constant dense<0.000000e+00> : vector<128x8xf32>
    %70 = tpu.matmul %63, %69, %cst_48 {dimension_numbers = #tpu.dot_dimension_numbers<[1], [0], [0], [1], [0, 0, 1, 1], [], []>} : vector<128x64xf32>, vector<64x8xf32>, vector<128x8xf32> -> vector<128x8xf32>
    %71 = arith.addf %61, %70 : vector<128x8xf32>
    %c2_49 = arith.constant 2 : index
    %c0_50 = arith.constant 0 : index
    %c0_51 = arith.constant 0 : index
    %72 = vector.load %arg6[%c2_49, %c0_50, %c0_51] : memref<3x128x64xf32, #tpu.memory_space<vmem>>, vector<1x128x64xf32>
    %73 = vector.shape_cast %72 : vector<1x128x64xf32> to vector<128x64xf32>
    %74 = tpu.iota {dimensions = array<i32: 1>} : vector<64x8xi32>
    %c7_i32 = arith.constant 7 : i32
    %75 = vector.broadcast %c7_i32 : i32 to vector<64x8xi32>
    %76 = arith.cmpi eq, %74, %75 : vector<64x8xi32>
    %c7_i32_52 = arith.constant 7 : i32
    %77 = tpu.dynamic_rotate %57 by %c7_i32_52 dim 1 : vector<64x8xf32>, i32 -> vector<64x8xf32>
    %cst_53 = arith.constant 0.000000e+00 : f32
    %78 = vector.broadcast %cst_53 : f32 to vector<64x8xf32>
    %79 = arith.select %76, %78, %77 : vector<64x8xi1>, vector<64x8xf32>
    %cst_54 = arith.constant dense<0.000000e+00> : vector<128x8xf32>
    %80 = tpu.matmul %73, %79, %cst_54 {dimension_numbers = #tpu.dot_dimension_numbers<[1], [0], [0], [1], [0, 0, 1, 1], [], []>} : vector<128x64xf32>, vector<64x8xf32>, vector<128x8xf32> -> vector<128x8xf32>
    %81 = arith.addf %71, %80 : vector<128x8xf32>
    %82 = vector.broadcast %58 : vector<128x1xf32> to vector<128x8xf32>
    %83 = arith.addf %81, %82 : vector<128x8xf32>
    %cst_55 = arith.constant 0.000000e+00 : f32
    %84 = vector.broadcast %cst_55 : f32 to vector<128x8xf32>
    %85 = arith.maximumf %83, %84 : vector<128x8xf32>
    %86 = tpu.iota {dimensions = array<i32: 1>} : vector<128x8xi32>
    %c0_i32_56 = arith.constant 0 : i32
    %87 = vector.broadcast %c0_i32_56 : i32 to vector<128x8xi32>
    %88 = arith.cmpi eq, %86, %87 : vector<128x8xi32>
    %c1_i32_57 = arith.constant 1 : i32
    %89 = tpu.dynamic_rotate %85 by %c1_i32_57 dim 1 : vector<128x8xf32>, i32 -> vector<128x8xf32>
    %cst_58 = arith.constant 0.000000e+00 : f32
    %90 = vector.broadcast %cst_58 : f32 to vector<128x8xf32>
    %91 = arith.select %88, %90, %89 : vector<128x8xi1>, vector<128x8xf32>
    %c0_59 = arith.constant 0 : index
    %c0_60 = arith.constant 0 : index
    %c0_61 = arith.constant 0 : index
    %92 = vector.load %arg12[%c0_59, %c0_60, %c0_61] : memref<3x64x128xf32, #tpu.memory_space<vmem>>, vector<1x64x128xf32>
    %93 = vector.shape_cast %92 : vector<1x64x128xf32> to vector<64x128xf32>
    %cst_62 = arith.constant dense<0.000000e+00> : vector<64x8xf32>
    %94 = tpu.matmul %93, %91, %cst_62 {dimension_numbers = #tpu.dot_dimension_numbers<[1], [0], [0], [1], [0, 0, 1, 1], [], []>} : vector<64x128xf32>, vector<128x8xf32>, vector<64x8xf32> -> vector<64x8xf32>
    %c0_63 = arith.constant 0 : index
    %c0_64 = arith.constant 0 : index
    %c0_65 = arith.constant 0 : index
    %95 = vector.load %arg14[%c0_63, %c0_64, %c0_65] : memref<3x64x128xf32, #tpu.memory_space<vmem>>, vector<1x64x128xf32>
    %96 = vector.shape_cast %95 : vector<1x64x128xf32> to vector<64x128xf32>
    %cst_66 = arith.constant dense<0.000000e+00> : vector<64x8xf32>
    %97 = tpu.matmul %96, %91, %cst_66 {dimension_numbers = #tpu.dot_dimension_numbers<[1], [0], [0], [1], [0, 0, 1, 1], [], []>} : vector<64x128xf32>, vector<128x8xf32>, vector<64x8xf32> -> vector<64x8xf32>
    %c1_67 = arith.constant 1 : index
    %c0_68 = arith.constant 0 : index
    %c0_69 = arith.constant 0 : index
    %98 = vector.load %arg12[%c1_67, %c0_68, %c0_69] : memref<3x64x128xf32, #tpu.memory_space<vmem>>, vector<1x64x128xf32>
    %99 = vector.shape_cast %98 : vector<1x64x128xf32> to vector<64x128xf32>
    %cst_70 = arith.constant dense<0.000000e+00> : vector<64x8xf32>
    %100 = tpu.matmul %99, %85, %cst_70 {dimension_numbers = #tpu.dot_dimension_numbers<[1], [0], [0], [1], [0, 0, 1, 1], [], []>} : vector<64x128xf32>, vector<128x8xf32>, vector<64x8xf32> -> vector<64x8xf32>
    %101 = arith.addf %94, %100 : vector<64x8xf32>
    %c1_71 = arith.constant 1 : index
    %c0_72 = arith.constant 0 : index
    %c0_73 = arith.constant 0 : index
    %102 = vector.load %arg14[%c1_71, %c0_72, %c0_73] : memref<3x64x128xf32, #tpu.memory_space<vmem>>, vector<1x64x128xf32>
    %103 = vector.shape_cast %102 : vector<1x64x128xf32> to vector<64x128xf32>
    %cst_74 = arith.constant dense<0.000000e+00> : vector<64x8xf32>
    %104 = tpu.matmul %103, %85, %cst_74 {dimension_numbers = #tpu.dot_dimension_numbers<[1], [0], [0], [1], [0, 0, 1, 1], [], []>} : vector<64x128xf32>, vector<128x8xf32>, vector<64x8xf32> -> vector<64x8xf32>
    %105 = arith.addf %97, %104 : vector<64x8xf32>
    %106 = tpu.iota {dimensions = array<i32: 1>} : vector<128x8xi32>
    %c7_i32_75 = arith.constant 7 : i32
    %107 = vector.broadcast %c7_i32_75 : i32 to vector<128x8xi32>
    %108 = arith.cmpi eq, %106, %107 : vector<128x8xi32>
    %c7_i32_76 = arith.constant 7 : i32
    %109 = tpu.dynamic_rotate %85 by %c7_i32_76 dim 1 : vector<128x8xf32>, i32 -> vector<128x8xf32>
    %cst_77 = arith.constant 0.000000e+00 : f32
    %110 = vector.broadcast %cst_77 : f32 to vector<128x8xf32>
    %111 = arith.select %108, %110, %109 : vector<128x8xi1>, vector<128x8xf32>
    %c2_78 = arith.constant 2 : index
    %c0_79 = arith.constant 0 : index
    %c0_80 = arith.constant 0 : index
    %112 = vector.load %arg12[%c2_78, %c0_79, %c0_80] : memref<3x64x128xf32, #tpu.memory_space<vmem>>, vector<1x64x128xf32>
    %113 = vector.shape_cast %112 : vector<1x64x128xf32> to vector<64x128xf32>
    %cst_81 = arith.constant dense<0.000000e+00> : vector<64x8xf32>
    %114 = tpu.matmul %113, %111, %cst_81 {dimension_numbers = #tpu.dot_dimension_numbers<[1], [0], [0], [1], [0, 0, 1, 1], [], []>} : vector<64x128xf32>, vector<128x8xf32>, vector<64x8xf32> -> vector<64x8xf32>
    %115 = arith.addf %101, %114 : vector<64x8xf32>
    %c2_82 = arith.constant 2 : index
    %c0_83 = arith.constant 0 : index
    %c0_84 = arith.constant 0 : index
    %116 = vector.load %arg14[%c2_82, %c0_83, %c0_84] : memref<3x64x128xf32, #tpu.memory_space<vmem>>, vector<1x64x128xf32>
    %117 = vector.shape_cast %116 : vector<1x64x128xf32> to vector<64x128xf32>
    %cst_85 = arith.constant dense<0.000000e+00> : vector<64x8xf32>
    %118 = tpu.matmul %117, %111, %cst_85 {dimension_numbers = #tpu.dot_dimension_numbers<[1], [0], [0], [1], [0, 0, 1, 1], [], []>} : vector<64x128xf32>, vector<128x8xf32>, vector<64x8xf32> -> vector<64x8xf32>
    %119 = arith.addf %105, %118 : vector<64x8xf32>
    %c0_86 = arith.constant 0 : index
    %c0_87 = arith.constant 0 : index
    %c0_88 = arith.constant 0 : index
    %120 = vector.load %arg15[%c0_86, %c0_87, %c0_88] : memref<3x64x1xf32, #tpu.memory_space<vmem>>, vector<1x64x1xf32>
    %121 = vector.shape_cast %120 : vector<1x64x1xf32> to vector<64x1xf32>
    %122 = vector.broadcast %121 : vector<64x1xf32> to vector<64x8xf32>
    %123 = arith.addf %115, %122 : vector<64x8xf32>
    %cst_89 = arith.constant 0.000000e+00 : f32
    %124 = vector.broadcast %cst_89 : f32 to vector<64x8xf32>
    %125 = arith.maximumf %123, %124 : vector<64x8xf32>
    %c1_90 = arith.constant 1 : index
    %c0_91 = arith.constant 0 : index
    %c0_92 = arith.constant 0 : index
    %126 = vector.load %arg15[%c1_90, %c0_91, %c0_92] : memref<3x64x1xf32, #tpu.memory_space<vmem>>, vector<1x64x1xf32>
    %127 = vector.shape_cast %126 : vector<1x64x1xf32> to vector<64x1xf32>
    %c1_93 = arith.constant 1 : index
    %c0_94 = arith.constant 0 : index
    %c0_95 = arith.constant 0 : index
    %128 = vector.load %arg13[%c1_93, %c0_94, %c0_95] : memref<3x64x64xf32, #tpu.memory_space<vmem>>, vector<1x64x64xf32>
    %129 = vector.shape_cast %128 : vector<1x64x64xf32> to vector<64x64xf32>
    %cst_96 = arith.constant dense<0.000000e+00> : vector<64x8xf32>
    %130 = tpu.matmul %129, %125, %cst_96 {dimension_numbers = #tpu.dot_dimension_numbers<[1], [0], [0], [1], [0, 0, 1, 1], [], []>} : vector<64x64xf32>, vector<64x8xf32>, vector<64x8xf32> -> vector<64x8xf32>
    %c0_97 = arith.constant 0 : index
    %c0_98 = arith.constant 0 : index
    %c0_99 = arith.constant 0 : index
    %131 = vector.load %arg13[%c0_97, %c0_98, %c0_99] : memref<3x64x64xf32, #tpu.memory_space<vmem>>, vector<1x64x64xf32>
    %132 = vector.shape_cast %131 : vector<1x64x64xf32> to vector<64x64xf32>
    %133 = tpu.iota {dimensions = array<i32: 1>} : vector<64x8xi32>
    %c0_i32_100 = arith.constant 0 : i32
    %134 = vector.broadcast %c0_i32_100 : i32 to vector<64x8xi32>
    %135 = arith.cmpi eq, %133, %134 : vector<64x8xi32>
    %c1_i32_101 = arith.constant 1 : i32
    %136 = tpu.dynamic_rotate %125 by %c1_i32_101 dim 1 : vector<64x8xf32>, i32 -> vector<64x8xf32>
    %cst_102 = arith.constant 0.000000e+00 : f32
    %137 = vector.broadcast %cst_102 : f32 to vector<64x8xf32>
    %138 = arith.select %135, %137, %136 : vector<64x8xi1>, vector<64x8xf32>
    %cst_103 = arith.constant dense<0.000000e+00> : vector<64x8xf32>
    %139 = tpu.matmul %132, %138, %cst_103 {dimension_numbers = #tpu.dot_dimension_numbers<[1], [0], [0], [1], [0, 0, 1, 1], [], []>} : vector<64x64xf32>, vector<64x8xf32>, vector<64x8xf32> -> vector<64x8xf32>
    %140 = arith.addf %130, %139 : vector<64x8xf32>
    %c2_104 = arith.constant 2 : index
    %c0_105 = arith.constant 0 : index
    %c0_106 = arith.constant 0 : index
    %141 = vector.load %arg13[%c2_104, %c0_105, %c0_106] : memref<3x64x64xf32, #tpu.memory_space<vmem>>, vector<1x64x64xf32>
    %142 = vector.shape_cast %141 : vector<1x64x64xf32> to vector<64x64xf32>
    %143 = tpu.iota {dimensions = array<i32: 1>} : vector<64x8xi32>
    %c7_i32_107 = arith.constant 7 : i32
    %144 = vector.broadcast %c7_i32_107 : i32 to vector<64x8xi32>
    %145 = arith.cmpi eq, %143, %144 : vector<64x8xi32>
    %c7_i32_108 = arith.constant 7 : i32
    %146 = tpu.dynamic_rotate %125 by %c7_i32_108 dim 1 : vector<64x8xf32>, i32 -> vector<64x8xf32>
    %cst_109 = arith.constant 0.000000e+00 : f32
    %147 = vector.broadcast %cst_109 : f32 to vector<64x8xf32>
    %148 = arith.select %145, %147, %146 : vector<64x8xi1>, vector<64x8xf32>
    %cst_110 = arith.constant dense<0.000000e+00> : vector<64x8xf32>
    %149 = tpu.matmul %142, %148, %cst_110 {dimension_numbers = #tpu.dot_dimension_numbers<[1], [0], [0], [1], [0, 0, 1, 1], [], []>} : vector<64x64xf32>, vector<64x8xf32>, vector<64x8xf32> -> vector<64x8xf32>
    %150 = arith.addf %140, %149 : vector<64x8xf32>
    %151 = vector.broadcast %127 : vector<64x1xf32> to vector<64x8xf32>
    %152 = arith.addf %150, %151 : vector<64x8xf32>
    %c2_111 = arith.constant 2 : index
    %c0_112 = arith.constant 0 : index
    %c0_113 = arith.constant 0 : index
    %153 = vector.load %arg15[%c2_111, %c0_112, %c0_113] : memref<3x64x1xf32, #tpu.memory_space<vmem>>, vector<1x64x1xf32>
    %154 = vector.shape_cast %153 : vector<1x64x1xf32> to vector<64x1xf32>
    %155 = vector.broadcast %154 : vector<64x1xf32> to vector<64x8xf32>
    %156 = arith.addf %119, %155 : vector<64x8xf32>
    %157 = arith.addf %152, %156 : vector<64x8xf32>
    %cst_114 = arith.constant 0.000000e+00 : f32
    %158 = vector.broadcast %cst_114 : f32 to vector<64x8xf32>
    %159 = arith.maximumf %157, %158 : vector<64x8xf32>
    %c0_115 = arith.constant 0 : index
    %c0_116 = arith.constant 0 : index
    %160 = vector.load %arg10[%c0_115, %c0_116] : memref<8x16xf32, #tpu.memory_space<vmem>>, vector<8x16xf32>
    %cst_117 = arith.constant dense<0.000000e+00> : vector<64x16xf32>
    %161 = tpu.matmul %159, %160, %cst_117 {dimension_numbers = #tpu.dot_dimension_numbers<[1], [0], [0], [1], [0, 0, 1, 1], [], []>} : vector<64x8xf32>, vector<8x16xf32>, vector<64x16xf32> -> vector<64x16xf32>
    %162 = tpu.iota {dimensions = array<i32: 1>} : vector<64x16xi32>
    %c0_i32_118 = arith.constant 0 : i32
    %163 = vector.broadcast %c0_i32_118 : i32 to vector<64x16xi32>
    %164 = arith.cmpi eq, %162, %163 : vector<64x16xi32>
    %c1_i32_119 = arith.constant 1 : i32
    %165 = tpu.dynamic_rotate %161 by %c1_i32_119 dim 1 : vector<64x16xf32>, i32 -> vector<64x16xf32>
    %cst_120 = arith.constant 0.000000e+00 : f32
    %166 = vector.broadcast %cst_120 : f32 to vector<64x16xf32>
    %167 = arith.select %164, %166, %165 : vector<64x16xi1>, vector<64x16xf32>
    %c0_121 = arith.constant 0 : index
    %c0_122 = arith.constant 0 : index
    %c0_123 = arith.constant 0 : index
    %168 = vector.load %arg16[%c0_121, %c0_122, %c0_123] : memref<3x32x64xf32, #tpu.memory_space<vmem>>, vector<1x32x64xf32>
    %169 = vector.shape_cast %168 : vector<1x32x64xf32> to vector<32x64xf32>
    %cst_124 = arith.constant dense<0.000000e+00> : vector<32x16xf32>
    %170 = tpu.matmul %169, %167, %cst_124 {dimension_numbers = #tpu.dot_dimension_numbers<[1], [0], [0], [1], [0, 0, 1, 1], [], []>} : vector<32x64xf32>, vector<64x16xf32>, vector<32x16xf32> -> vector<32x16xf32>
    %c0_125 = arith.constant 0 : index
    %c0_126 = arith.constant 0 : index
    %c0_127 = arith.constant 0 : index
    %171 = vector.load %arg18[%c0_125, %c0_126, %c0_127] : memref<3x32x64xf32, #tpu.memory_space<vmem>>, vector<1x32x64xf32>
    %172 = vector.shape_cast %171 : vector<1x32x64xf32> to vector<32x64xf32>
    %cst_128 = arith.constant dense<0.000000e+00> : vector<32x16xf32>
    %173 = tpu.matmul %172, %167, %cst_128 {dimension_numbers = #tpu.dot_dimension_numbers<[1], [0], [0], [1], [0, 0, 1, 1], [], []>} : vector<32x64xf32>, vector<64x16xf32>, vector<32x16xf32> -> vector<32x16xf32>
    %c1_129 = arith.constant 1 : index
    %c0_130 = arith.constant 0 : index
    %c0_131 = arith.constant 0 : index
    %174 = vector.load %arg16[%c1_129, %c0_130, %c0_131] : memref<3x32x64xf32, #tpu.memory_space<vmem>>, vector<1x32x64xf32>
    %175 = vector.shape_cast %174 : vector<1x32x64xf32> to vector<32x64xf32>
    %cst_132 = arith.constant dense<0.000000e+00> : vector<32x16xf32>
    %176 = tpu.matmul %175, %161, %cst_132 {dimension_numbers = #tpu.dot_dimension_numbers<[1], [0], [0], [1], [0, 0, 1, 1], [], []>} : vector<32x64xf32>, vector<64x16xf32>, vector<32x16xf32> -> vector<32x16xf32>
    %177 = arith.addf %170, %176 : vector<32x16xf32>
    %c1_133 = arith.constant 1 : index
    %c0_134 = arith.constant 0 : index
    %c0_135 = arith.constant 0 : index
    %178 = vector.load %arg18[%c1_133, %c0_134, %c0_135] : memref<3x32x64xf32, #tpu.memory_space<vmem>>, vector<1x32x64xf32>
    %179 = vector.shape_cast %178 : vector<1x32x64xf32> to vector<32x64xf32>
    %cst_136 = arith.constant dense<0.000000e+00> : vector<32x16xf32>
    %180 = tpu.matmul %179, %161, %cst_136 {dimension_numbers = #tpu.dot_dimension_numbers<[1], [0], [0], [1], [0, 0, 1, 1], [], []>} : vector<32x64xf32>, vector<64x16xf32>, vector<32x16xf32> -> vector<32x16xf32>
    %181 = arith.addf %173, %180 : vector<32x16xf32>
    %182 = tpu.iota {dimensions = array<i32: 1>} : vector<64x16xi32>
    %c15_i32_137 = arith.constant 15 : i32
    %183 = vector.broadcast %c15_i32_137 : i32 to vector<64x16xi32>
    %184 = arith.cmpi eq, %182, %183 : vector<64x16xi32>
    %c15_i32_138 = arith.constant 15 : i32
    %185 = tpu.dynamic_rotate %161 by %c15_i32_138 dim 1 : vector<64x16xf32>, i32 -> vector<64x16xf32>
    %cst_139 = arith.constant 0.000000e+00 : f32
    %186 = vector.broadcast %cst_139 : f32 to vector<64x16xf32>
    %187 = arith.select %184, %186, %185 : vector<64x16xi1>, vector<64x16xf32>
    %c2_140 = arith.constant 2 : index
    %c0_141 = arith.constant 0 : index
    %c0_142 = arith.constant 0 : index
    %188 = vector.load %arg16[%c2_140, %c0_141, %c0_142] : memref<3x32x64xf32, #tpu.memory_space<vmem>>, vector<1x32x64xf32>
    %189 = vector.shape_cast %188 : vector<1x32x64xf32> to vector<32x64xf32>
    %cst_143 = arith.constant dense<0.000000e+00> : vector<32x16xf32>
    %190 = tpu.matmul %189, %187, %cst_143 {dimension_numbers = #tpu.dot_dimension_numbers<[1], [0], [0], [1], [0, 0, 1, 1], [], []>} : vector<32x64xf32>, vector<64x16xf32>, vector<32x16xf32> -> vector<32x16xf32>
    %191 = arith.addf %177, %190 : vector<32x16xf32>
    %c2_144 = arith.constant 2 : index
    %c0_145 = arith.constant 0 : index
    %c0_146 = arith.constant 0 : index
    %192 = vector.load %arg18[%c2_144, %c0_145, %c0_146] : memref<3x32x64xf32, #tpu.memory_space<vmem>>, vector<1x32x64xf32>
    %193 = vector.shape_cast %192 : vector<1x32x64xf32> to vector<32x64xf32>
    %cst_147 = arith.constant dense<0.000000e+00> : vector<32x16xf32>
    %194 = tpu.matmul %193, %187, %cst_147 {dimension_numbers = #tpu.dot_dimension_numbers<[1], [0], [0], [1], [0, 0, 1, 1], [], []>} : vector<32x64xf32>, vector<64x16xf32>, vector<32x16xf32> -> vector<32x16xf32>
    %195 = arith.addf %181, %194 : vector<32x16xf32>
    %c0_148 = arith.constant 0 : index
    %c0_149 = arith.constant 0 : index
    %c0_150 = arith.constant 0 : index
    %196 = vector.load %arg19[%c0_148, %c0_149, %c0_150] : memref<3x32x1xf32, #tpu.memory_space<vmem>>, vector<1x32x1xf32>
    %197 = vector.shape_cast %196 : vector<1x32x1xf32> to vector<32x1xf32>
    %198 = vector.broadcast %197 : vector<32x1xf32> to vector<32x16xf32>
    %199 = arith.addf %191, %198 : vector<32x16xf32>
    %cst_151 = arith.constant 0.000000e+00 : f32
    %200 = vector.broadcast %cst_151 : f32 to vector<32x16xf32>
    %201 = arith.maximumf %199, %200 : vector<32x16xf32>
    %c1_152 = arith.constant 1 : index
    %c0_153 = arith.constant 0 : index
    %c0_154 = arith.constant 0 : index
    %202 = vector.load %arg19[%c1_152, %c0_153, %c0_154] : memref<3x32x1xf32, #tpu.memory_space<vmem>>, vector<1x32x1xf32>
    %203 = vector.shape_cast %202 : vector<1x32x1xf32> to vector<32x1xf32>
    %c1_155 = arith.constant 1 : index
    %c0_156 = arith.constant 0 : index
    %c0_157 = arith.constant 0 : index
    %204 = vector.load %arg17[%c1_155, %c0_156, %c0_157] : memref<3x32x32xf32, #tpu.memory_space<vmem>>, vector<1x32x32xf32>
    %205 = vector.shape_cast %204 : vector<1x32x32xf32> to vector<32x32xf32>
    %cst_158 = arith.constant dense<0.000000e+00> : vector<32x16xf32>
    %206 = tpu.matmul %205, %201, %cst_158 {dimension_numbers = #tpu.dot_dimension_numbers<[1], [0], [0], [1], [0, 0, 1, 1], [], []>} : vector<32x32xf32>, vector<32x16xf32>, vector<32x16xf32> -> vector<32x16xf32>
    %c0_159 = arith.constant 0 : index
    %c0_160 = arith.constant 0 : index
    %c0_161 = arith.constant 0 : index
    %207 = vector.load %arg17[%c0_159, %c0_160, %c0_161] : memref<3x32x32xf32, #tpu.memory_space<vmem>>, vector<1x32x32xf32>
    %208 = vector.shape_cast %207 : vector<1x32x32xf32> to vector<32x32xf32>
    %209 = tpu.iota {dimensions = array<i32: 1>} : vector<32x16xi32>
    %c0_i32_162 = arith.constant 0 : i32
    %210 = vector.broadcast %c0_i32_162 : i32 to vector<32x16xi32>
    %211 = arith.cmpi eq, %209, %210 : vector<32x16xi32>
    %c1_i32_163 = arith.constant 1 : i32
    %212 = tpu.dynamic_rotate %201 by %c1_i32_163 dim 1 : vector<32x16xf32>, i32 -> vector<32x16xf32>
    %cst_164 = arith.constant 0.000000e+00 : f32
    %213 = vector.broadcast %cst_164 : f32 to vector<32x16xf32>
    %214 = arith.select %211, %213, %212 : vector<32x16xi1>, vector<32x16xf32>
    %cst_165 = arith.constant dense<0.000000e+00> : vector<32x16xf32>
    %215 = tpu.matmul %208, %214, %cst_165 {dimension_numbers = #tpu.dot_dimension_numbers<[1], [0], [0], [1], [0, 0, 1, 1], [], []>} : vector<32x32xf32>, vector<32x16xf32>, vector<32x16xf32> -> vector<32x16xf32>
    %216 = arith.addf %206, %215 : vector<32x16xf32>
    %c2_166 = arith.constant 2 : index
    %c0_167 = arith.constant 0 : index
    %c0_168 = arith.constant 0 : index
    %217 = vector.load %arg17[%c2_166, %c0_167, %c0_168] : memref<3x32x32xf32, #tpu.memory_space<vmem>>, vector<1x32x32xf32>
    %218 = vector.shape_cast %217 : vector<1x32x32xf32> to vector<32x32xf32>
    %219 = tpu.iota {dimensions = array<i32: 1>} : vector<32x16xi32>
    %c15_i32_169 = arith.constant 15 : i32
    %220 = vector.broadcast %c15_i32_169 : i32 to vector<32x16xi32>
    %221 = arith.cmpi eq, %219, %220 : vector<32x16xi32>
    %c15_i32_170 = arith.constant 15 : i32
    %222 = tpu.dynamic_rotate %201 by %c15_i32_170 dim 1 : vector<32x16xf32>, i32 -> vector<32x16xf32>
    %cst_171 = arith.constant 0.000000e+00 : f32
    %223 = vector.broadcast %cst_171 : f32 to vector<32x16xf32>
    %224 = arith.select %221, %223, %222 : vector<32x16xi1>, vector<32x16xf32>
    %cst_172 = arith.constant dense<0.000000e+00> : vector<32x16xf32>
    %225 = tpu.matmul %218, %224, %cst_172 {dimension_numbers = #tpu.dot_dimension_numbers<[1], [0], [0], [1], [0, 0, 1, 1], [], []>} : vector<32x32xf32>, vector<32x16xf32>, vector<32x16xf32> -> vector<32x16xf32>
    %226 = arith.addf %216, %225 : vector<32x16xf32>
    %227 = vector.broadcast %203 : vector<32x1xf32> to vector<32x16xf32>
    %228 = arith.addf %226, %227 : vector<32x16xf32>
    %c2_173 = arith.constant 2 : index
    %c0_174 = arith.constant 0 : index
    %c0_175 = arith.constant 0 : index
    %229 = vector.load %arg19[%c2_173, %c0_174, %c0_175] : memref<3x32x1xf32, #tpu.memory_space<vmem>>, vector<1x32x1xf32>
    %230 = vector.shape_cast %229 : vector<1x32x1xf32> to vector<32x1xf32>
    %231 = vector.broadcast %230 : vector<32x1xf32> to vector<32x16xf32>
    %232 = arith.addf %195, %231 : vector<32x16xf32>
    %233 = arith.addf %228, %232 : vector<32x16xf32>
    %cst_176 = arith.constant 0.000000e+00 : f32
    %234 = vector.broadcast %cst_176 : f32 to vector<32x16xf32>
    %235 = arith.maximumf %233, %234 : vector<32x16xf32>
    %c0_177 = arith.constant 0 : index
    %c0_178 = arith.constant 0 : index
    %236 = vector.load %arg11[%c0_177, %c0_178] : memref<16x32xf32, #tpu.memory_space<vmem>>, vector<16x32xf32>
    %cst_179 = arith.constant dense<0.000000e+00> : vector<32x32xf32>
    %237 = tpu.matmul %235, %236, %cst_179 {dimension_numbers = #tpu.dot_dimension_numbers<[1], [0], [0], [1], [0, 0, 1, 1], [], []>} : vector<32x16xf32>, vector<16x32xf32>, vector<32x32xf32> -> vector<32x32xf32>
    %238 = tpu.iota {dimensions = array<i32: 1>} : vector<32x32xi32>
    %c0_i32_180 = arith.constant 0 : i32
    %239 = vector.broadcast %c0_i32_180 : i32 to vector<32x32xi32>
    %240 = arith.cmpi eq, %238, %239 : vector<32x32xi32>
    %c1_i32_181 = arith.constant 1 : i32
    %241 = tpu.dynamic_rotate %237 by %c1_i32_181 dim 1 : vector<32x32xf32>, i32 -> vector<32x32xf32>
    %cst_182 = arith.constant 0.000000e+00 : f32
    %242 = vector.broadcast %cst_182 : f32 to vector<32x32xf32>
    %243 = arith.select %240, %242, %241 : vector<32x32xi1>, vector<32x32xf32>
    %c0_183 = arith.constant 0 : index
    %c0_184 = arith.constant 0 : index
    %c0_185 = arith.constant 0 : index
    %244 = vector.load %arg20[%c0_183, %c0_184, %c0_185] : memref<3x1x32xf32, #tpu.memory_space<vmem>>, vector<1x1x32xf32>
    %245 = vector.shape_cast %244 : vector<1x1x32xf32> to vector<1x32xf32>
    %cst_186 = arith.constant dense<0.000000e+00> : vector<1x32xf32>
    %246 = tpu.matmul %245, %243, %cst_186 {dimension_numbers = #tpu.dot_dimension_numbers<[1], [0], [0], [1], [0, 0, 1, 1], [], []>} : vector<1x32xf32>, vector<32x32xf32>, vector<1x32xf32> -> vector<1x32xf32>
    %c0_187 = arith.constant 0 : index
    %c0_188 = arith.constant 0 : index
    %c0_189 = arith.constant 0 : index
    %247 = vector.load %arg22[%c0_187, %c0_188, %c0_189] : memref<3x1x32xf32, #tpu.memory_space<vmem>>, vector<1x1x32xf32>
    %248 = vector.shape_cast %247 : vector<1x1x32xf32> to vector<1x32xf32>
    %cst_190 = arith.constant dense<0.000000e+00> : vector<1x32xf32>
    %249 = tpu.matmul %248, %243, %cst_190 {dimension_numbers = #tpu.dot_dimension_numbers<[1], [0], [0], [1], [0, 0, 1, 1], [], []>} : vector<1x32xf32>, vector<32x32xf32>, vector<1x32xf32> -> vector<1x32xf32>
    %c1_191 = arith.constant 1 : index
    %c0_192 = arith.constant 0 : index
    %c0_193 = arith.constant 0 : index
    %250 = vector.load %arg20[%c1_191, %c0_192, %c0_193] : memref<3x1x32xf32, #tpu.memory_space<vmem>>, vector<1x1x32xf32>
    %251 = vector.shape_cast %250 : vector<1x1x32xf32> to vector<1x32xf32>
    %cst_194 = arith.constant dense<0.000000e+00> : vector<1x32xf32>
    %252 = tpu.matmul %251, %237, %cst_194 {dimension_numbers = #tpu.dot_dimension_numbers<[1], [0], [0], [1], [0, 0, 1, 1], [], []>} : vector<1x32xf32>, vector<32x32xf32>, vector<1x32xf32> -> vector<1x32xf32>
    %253 = arith.addf %246, %252 : vector<1x32xf32>
    %c1_195 = arith.constant 1 : index
    %c0_196 = arith.constant 0 : index
    %c0_197 = arith.constant 0 : index
    %254 = vector.load %arg22[%c1_195, %c0_196, %c0_197] : memref<3x1x32xf32, #tpu.memory_space<vmem>>, vector<1x1x32xf32>
    %255 = vector.shape_cast %254 : vector<1x1x32xf32> to vector<1x32xf32>
    %cst_198 = arith.constant dense<0.000000e+00> : vector<1x32xf32>
    %256 = tpu.matmul %255, %237, %cst_198 {dimension_numbers = #tpu.dot_dimension_numbers<[1], [0], [0], [1], [0, 0, 1, 1], [], []>} : vector<1x32xf32>, vector<32x32xf32>, vector<1x32xf32> -> vector<1x32xf32>
    %257 = arith.addf %249, %256 : vector<1x32xf32>
    %258 = tpu.iota {dimensions = array<i32: 1>} : vector<32x32xi32>
    %c31_i32_199 = arith.constant 31 : i32
    %259 = vector.broadcast %c31_i32_199 : i32 to vector<32x32xi32>
    %260 = arith.cmpi eq, %258, %259 : vector<32x32xi32>
    %c31_i32_200 = arith.constant 31 : i32
    %261 = tpu.dynamic_rotate %237 by %c31_i32_200 dim 1 : vector<32x32xf32>, i32 -> vector<32x32xf32>
    %cst_201 = arith.constant 0.000000e+00 : f32
    %262 = vector.broadcast %cst_201 : f32 to vector<32x32xf32>
    %263 = arith.select %260, %262, %261 : vector<32x32xi1>, vector<32x32xf32>
    %c2_202 = arith.constant 2 : index
    %c0_203 = arith.constant 0 : index
    %c0_204 = arith.constant 0 : index
    %264 = vector.load %arg20[%c2_202, %c0_203, %c0_204] : memref<3x1x32xf32, #tpu.memory_space<vmem>>, vector<1x1x32xf32>
    %265 = vector.shape_cast %264 : vector<1x1x32xf32> to vector<1x32xf32>
    %cst_205 = arith.constant dense<0.000000e+00> : vector<1x32xf32>
    %266 = tpu.matmul %265, %263, %cst_205 {dimension_numbers = #tpu.dot_dimension_numbers<[1], [0], [0], [1], [0, 0, 1, 1], [], []>} : vector<1x32xf32>, vector<32x32xf32>, vector<1x32xf32> -> vector<1x32xf32>
    %267 = arith.addf %253, %266 : vector<1x32xf32>
    %c2_206 = arith.constant 2 : index
    %c0_207 = arith.constant 0 : index
    %c0_208 = arith.constant 0 : index
    %268 = vector.load %arg22[%c2_206, %c0_207, %c0_208] : memref<3x1x32xf32, #tpu.memory_space<vmem>>, vector<1x1x32xf32>
    %269 = vector.shape_cast %268 : vector<1x1x32xf32> to vector<1x32xf32>
    %cst_209 = arith.constant dense<0.000000e+00> : vector<1x32xf32>
    %270 = tpu.matmul %269, %263, %cst_209 {dimension_numbers = #tpu.dot_dimension_numbers<[1], [0], [0], [1], [0, 0, 1, 1], [], []>} : vector<1x32xf32>, vector<32x32xf32>, vector<1x32xf32> -> vector<1x32xf32>
    %271 = arith.addf %257, %270 : vector<1x32xf32>
    %c0_210 = arith.constant 0 : index
    %c0_211 = arith.constant 0 : index
    %c0_212 = arith.constant 0 : index
    %272 = vector.load %arg23[%c0_210, %c0_211, %c0_212] : memref<3x1x1xf32, #tpu.memory_space<vmem>>, vector<1x1x1xf32>
    %273 = vector.shape_cast %272 : vector<1x1x1xf32> to vector<1x1xf32>
    %274 = vector.broadcast %273 : vector<1x1xf32> to vector<1x32xf32>
    %275 = arith.addf %267, %274 : vector<1x32xf32>
    %cst_213 = arith.constant 0.000000e+00 : f32
    %276 = vector.broadcast %cst_213 : f32 to vector<1x32xf32>
    %277 = arith.maximumf %275, %276 : vector<1x32xf32>
    %c1_214 = arith.constant 1 : index
    %c0_215 = arith.constant 0 : index
    %c0_216 = arith.constant 0 : index
    %278 = vector.load %arg23[%c1_214, %c0_215, %c0_216] : memref<3x1x1xf32, #tpu.memory_space<vmem>>, vector<1x1x1xf32>
    %279 = vector.shape_cast %278 : vector<1x1x1xf32> to vector<1x1xf32>
    %c1_217 = arith.constant 1 : index
    %c0_218 = arith.constant 0 : index
    %c0_219 = arith.constant 0 : index
    %280 = vector.load %arg21[%c1_217, %c0_218, %c0_219] : memref<3x1x1xf32, #tpu.memory_space<vmem>>, vector<1x1x1xf32>
    %281 = vector.shape_cast %280 : vector<1x1x1xf32> to vector<1x1xf32>
    %cst_220 = arith.constant dense<0.000000e+00> : vector<1x32xf32>
    %282 = tpu.matmul %281, %277, %cst_220 {dimension_numbers = #tpu.dot_dimension_numbers<[1], [0], [0], [1], [0, 0, 1, 1], [], []>} : vector<1x1xf32>, vector<1x32xf32>, vector<1x32xf32> -> vector<1x32xf32>
    %c0_221 = arith.constant 0 : index
    %c0_222 = arith.constant 0 : index
    %c0_223 = arith.constant 0 : index
    %283 = vector.load %arg21[%c0_221, %c0_222, %c0_223] : memref<3x1x1xf32, #tpu.memory_space<vmem>>, vector<1x1x1xf32>
    %284 = vector.shape_cast %283 : vector<1x1x1xf32> to vector<1x1xf32>
    %285 = tpu.iota {dimensions = array<i32: 1>} : vector<1x32xi32>
    %c0_i32_224 = arith.constant 0 : i32
    %286 = vector.broadcast %c0_i32_224 : i32 to vector<1x32xi32>
    %287 = arith.cmpi eq, %285, %286 : vector<1x32xi32>
    %c1_i32_225 = arith.constant 1 : i32
    %288 = tpu.dynamic_rotate %277 by %c1_i32_225 dim 1 : vector<1x32xf32>, i32 -> vector<1x32xf32>
    %cst_226 = arith.constant 0.000000e+00 : f32
    %289 = vector.broadcast %cst_226 : f32 to vector<1x32xf32>
    %290 = arith.select %287, %289, %288 : vector<1x32xi1>, vector<1x32xf32>
    %cst_227 = arith.constant dense<0.000000e+00> : vector<1x32xf32>
    %291 = tpu.matmul %284, %290, %cst_227 {dimension_numbers = #tpu.dot_dimension_numbers<[1], [0], [0], [1], [0, 0, 1, 1], [], []>} : vector<1x1xf32>, vector<1x32xf32>, vector<1x32xf32> -> vector<1x32xf32>
    %292 = arith.addf %282, %291 : vector<1x32xf32>
    %c2_228 = arith.constant 2 : index
    %c0_229 = arith.constant 0 : index
    %c0_230 = arith.constant 0 : index
    %293 = vector.load %arg21[%c2_228, %c0_229, %c0_230] : memref<3x1x1xf32, #tpu.memory_space<vmem>>, vector<1x1x1xf32>
    %294 = vector.shape_cast %293 : vector<1x1x1xf32> to vector<1x1xf32>
    %295 = tpu.iota {dimensions = array<i32: 1>} : vector<1x32xi32>
    %c31_i32_231 = arith.constant 31 : i32
    %296 = vector.broadcast %c31_i32_231 : i32 to vector<1x32xi32>
    %297 = arith.cmpi eq, %295, %296 : vector<1x32xi32>
    %c31_i32_232 = arith.constant 31 : i32
    %298 = tpu.dynamic_rotate %277 by %c31_i32_232 dim 1 : vector<1x32xf32>, i32 -> vector<1x32xf32>
    %cst_233 = arith.constant 0.000000e+00 : f32
    %299 = vector.broadcast %cst_233 : f32 to vector<1x32xf32>
    %300 = arith.select %297, %299, %298 : vector<1x32xi1>, vector<1x32xf32>
    %cst_234 = arith.constant dense<0.000000e+00> : vector<1x32xf32>
    %301 = tpu.matmul %294, %300, %cst_234 {dimension_numbers = #tpu.dot_dimension_numbers<[1], [0], [0], [1], [0, 0, 1, 1], [], []>} : vector<1x1xf32>, vector<1x32xf32>, vector<1x32xf32> -> vector<1x32xf32>
    %302 = arith.addf %292, %301 : vector<1x32xf32>
    %303 = vector.broadcast %279 : vector<1x1xf32> to vector<1x32xf32>
    %304 = arith.addf %302, %303 : vector<1x32xf32>
    %c2_235 = arith.constant 2 : index
    %c0_236 = arith.constant 0 : index
    %c0_237 = arith.constant 0 : index
    %305 = vector.load %arg23[%c2_235, %c0_236, %c0_237] : memref<3x1x1xf32, #tpu.memory_space<vmem>>, vector<1x1x1xf32>
    %306 = vector.shape_cast %305 : vector<1x1x1xf32> to vector<1x1xf32>
    %307 = vector.broadcast %306 : vector<1x1xf32> to vector<1x32xf32>
    %308 = arith.addf %271, %307 : vector<1x32xf32>
    %309 = arith.addf %304, %308 : vector<1x32xf32>
    %cst_238 = arith.constant 0.000000e+00 : f32
    %310 = vector.broadcast %cst_238 : f32 to vector<1x32xf32>
    %311 = arith.maximumf %309, %310 : vector<1x32xf32>
    %c0_239 = arith.constant 0 : index
    %c0_240 = arith.constant 0 : index
    %c0_241 = arith.constant 0 : index
    %312 = vector.load %arg24[%c0_239, %c0_240, %c0_241] : memref<1x1x32xf32, #tpu.memory_space<vmem>>, vector<1x1x32xf32>
    %313 = vector.shape_cast %312 : vector<1x1x32xf32> to vector<1x32xf32>
    %314 = vector.shape_cast %311 : vector<1x32xf32> to vector<1x1x32xf32>
    tpu.vector_store %arg24[%c0_239, %c0_240, %c0_241], %314 {strides = array<i32>} : memref<1x1x32xf32, #tpu.memory_space<vmem>>, vector<1x1x32xf32>,
    return
  }
  func.func @transform_0(%arg0: i32) -> (i32, i32, i32) {
    %c0_i32 = arith.constant 0 : i32
    %c0_i32_0 = arith.constant 0 : i32
    %c0_i32_1 = arith.constant 0 : i32
    return %arg0, %c0_i32, %c0_i32_0 : i32, i32, i32
  }
  func.func @transform_1(%arg0: i32) -> (i32, i32) {
    %c0_i32 = arith.constant 0 : i32
    %c0_i32_0 = arith.constant 0 : i32
    %c0_i32_1 = arith.constant 0 : i32
    return %c0_i32, %c0_i32_0 : i32, i32
  }
  func.func @transform_2(%arg0: i32) -> (i32, i32) {
    %c0_i32 = arith.constant 0 : i32
    %c0_i32_0 = arith.constant 0 : i32
    %c0_i32_1 = arith.constant 0 : i32
    return %c0_i32, %c0_i32_0 : i32, i32
  }
  func.func @transform_3(%arg0: i32) -> (i32, i32, i32) {
    %c0_i32 = arith.constant 0 : i32
    %c0_i32_0 = arith.constant 0 : i32
    %c0_i32_1 = arith.constant 0 : i32
    %c0_i32_2 = arith.constant 0 : i32
    return %c0_i32, %c0_i32_0, %c0_i32_1 : i32, i32, i32
  }
  func.func @transform_4(%arg0: i32) -> (i32, i32) {
    %c0_i32 = arith.constant 0 : i32
    %c0_i32_0 = arith.constant 0 : i32
    %c0_i32_1 = arith.constant 0 : i32
    return %c0_i32, %c0_i32_0 : i32, i32
  }
  func.func @transform_5(%arg0: i32) -> (i32, i32, i32) {
    %c0_i32 = arith.constant 0 : i32
    %c0_i32_0 = arith.constant 0 : i32
    %c0_i32_1 = arith.constant 0 : i32
    %c0_i32_2 = arith.constant 0 : i32
    return %c0_i32, %c0_i32_0, %c0_i32_1 : i32, i32, i32
  }
  func.func @transform_6(%arg0: i32) -> (i32, i32) {
    %c0_i32 = arith.constant 0 : i32
    %c0_i32_0 = arith.constant 0 : i32
    %c0_i32_1 = arith.constant 0 : i32
    return %c0_i32, %c0_i32_0 : i32, i32
  }
  func.func @transform_7(%arg0: i32) -> (i32, i32) {
    %c0_i32 = arith.constant 0 : i32
    %c0_i32_0 = arith.constant 0 : i32
    %c0_i32_1 = arith.constant 0 : i32
    return %c0_i32, %c0_i32_0 : i32, i32
  }
  func.func @transform_8(%arg0: i32) -> (i32, i32) {
    %c0_i32 = arith.constant 0 : i32
    %c0_i32_0 = arith.constant 0 : i32
    %c0_i32_1 = arith.constant 0 : i32
    return %c0_i32, %c0_i32_0 : i32, i32
  }
  func.func @transform_9(%arg0: i32) -> (i32, i32) {
    %c0_i32 = arith.constant 0 : i32
    %c0_i32_0 = arith.constant 0 : i32
    %c0_i32_1 = arith.constant 0 : i32
    return %c0_i32, %c0_i32_0 : i32, i32
  }
  func.func @transform_10(%arg0: i32) -> (i32, i32) {
    %c0_i32 = arith.constant 0 : i32
    %c0_i32_0 = arith.constant 0 : i32
    %c0_i32_1 = arith.constant 0 : i32
    return %c0_i32, %c0_i32_0 : i32, i32
  }
  func.func @transform_11(%arg0: i32) -> (i32, i32, i32) {
    %c0_i32 = arith.constant 0 : i32
    %c0_i32_0 = arith.constant 0 : i32
    %c0_i32_1 = arith.constant 0 : i32
    %c0_i32_2 = arith.constant 0 : i32
    return %c0_i32, %c0_i32_0, %c0_i32_1 : i32, i32, i32
  }
  func.func @transform_12(%arg0: i32) -> (i32, i32, i32) {
    %c0_i32 = arith.constant 0 : i32
    %c0_i32_0 = arith.constant 0 : i32
    %c0_i32_1 = arith.constant 0 : i32
    %c0_i32_2 = arith.constant 0 : i32
    return %c0_i32, %c0_i32_0, %c0_i32_1 : i32, i32, i32
  }
  func.func @transform_13(%arg0: i32) -> (i32, i32, i32) {
    %c0_i32 = arith.constant 0 : i32
    %c0_i32_0 = arith.constant 0 : i32
    %c0_i32_1 = arith.constant 0 : i32
    %c0_i32_2 = arith.constant 0 : i32
    return %c0_i32, %c0_i32_0, %c0_i32_1 : i32, i32, i32
  }
  func.func @transform_14(%arg0: i32) -> (i32, i32, i32) {
    %c0_i32 = arith.constant 0 : i32
    %c0_i32_0 = arith.constant 0 : i32
    %c0_i32_1 = arith.constant 0 : i32
    %c0_i32_2 = arith.constant 0 : i32
    return %c0_i32, %c0_i32_0, %c0_i32_1 : i32, i32, i32
  }
  func.func @transform_15(%arg0: i32) -> (i32, i32, i32) {
    %c0_i32 = arith.constant 0 : i32
    %c0_i32_0 = arith.constant 0 : i32
    %c0_i32_1 = arith.constant 0 : i32
    %c0_i32_2 = arith.constant 0 : i32
    return %c0_i32, %c0_i32_0, %c0_i32_1 : i32, i32, i32
  }
  func.func @transform_16(%arg0: i32) -> (i32, i32, i32) {
    %c0_i32 = arith.constant 0 : i32
    %c0_i32_0 = arith.constant 0 : i32
    %c0_i32_1 = arith.constant 0 : i32
    %c0_i32_2 = arith.constant 0 : i32
    return %c0_i32, %c0_i32_0, %c0_i32_1 : i32, i32, i32
  }
  func.func @transform_17(%arg0: i32) -> (i32, i32, i32) {
    %c0_i32 = arith.constant 0 : i32
    %c0_i32_0 = arith.constant 0 : i32
    %c0_i32_1 = arith.constant 0 : i32
    %c0_i32_2 = arith.constant 0 : i32
    return %c0_i32, %c0_i32_0, %c0_i32_1 : i32, i32, i32
  }
  func.func @transform_18(%arg0: i32) -> (i32, i32, i32) {
    %c0_i32 = arith.constant 0 : i32
    %c0_i32_0 = arith.constant 0 : i32
    %c0_i32_1 = arith.constant 0 : i32
    %c0_i32_2 = arith.constant 0 : i32
    return %c0_i32, %c0_i32_0, %c0_i32_1 : i32, i32, i32
  }
  func.func @transform_19(%arg0: i32) -> (i32, i32, i32) {
    %c0_i32 = arith.constant 0 : i32
    %c0_i32_0 = arith.constant 0 : i32
    %c0_i32_1 = arith.constant 0 : i32
    %c0_i32_2 = arith.constant 0 : i32
    return %c0_i32, %c0_i32_0, %c0_i32_1 : i32, i32, i32
  }
  func.func @transform_20(%arg0: i32) -> (i32, i32, i32) {
    %c0_i32 = arith.constant 0 : i32
    %c0_i32_0 = arith.constant 0 : i32
    %c0_i32_1 = arith.constant 0 : i32
    %c0_i32_2 = arith.constant 0 : i32
    return %c0_i32, %c0_i32_0, %c0_i32_1 : i32, i32, i32
  }
  func.func @transform_21(%arg0: i32) -> (i32, i32, i32) {
    %c0_i32 = arith.constant 0 : i32
    %c0_i32_0 = arith.constant 0 : i32
    %c0_i32_1 = arith.constant 0 : i32
    %c0_i32_2 = arith.constant 0 : i32
    return %c0_i32, %c0_i32_0, %c0_i32_1 : i32, i32, i32
  }
  func.func @transform_22(%arg0: i32) -> (i32, i32, i32) {
    %c0_i32 = arith.constant 0 : i32
    %c0_i32_0 = arith.constant 0 : i32
    %c0_i32_1 = arith.constant 0 : i32
    %c0_i32_2 = arith.constant 0 : i32
    return %c0_i32, %c0_i32_0, %c0_i32_1 : i32, i32, i32
  }
  func.func @transform_23(%arg0: i32) -> (i32, i32, i32) {
    %c0_i32 = arith.constant 0 : i32
    %c0_i32_0 = arith.constant 0 : i32
    %c0_i32_1 = arith.constant 0 : i32
    return %arg0, %c0_i32, %c0_i32_0 : i32, i32, i32
  }
}

</mosaic_0001>

<llo_original>
// kernel: tpu_custom_call.1
$region0: #{tpu_custom_call.1}
  #allocation0 [shape = 'u32[]', space=smem, size = 0x4, offset = 0x4, fixed_abs, tag = 'smem constant byte address 0x4 - core index']
  #allocation1 [shape = 'u32[144,128]{1,0:T(1,128)}', space=vmem, size = 0x12000, scoped, tag = 'internal scratch']
  %s0 = inlined_call_operand.vmem [shape: f32[2,1,32], index: 0, kind: input, shape index: {}]
  %s1 = inlined_call_operand.vmem [shape: f32[32,3], index: 1, kind: input, shape index: {}]
  %s2 = inlined_call_operand.vmem [shape: f32[32,1], index: 2, kind: input, shape index: {}]
  %s3 = inlined_call_operand.vmem [shape: f32[3,64,32], index: 3, kind: input, shape index: {}]
  %s4 = inlined_call_operand.vmem [shape: f32[64,1], index: 4, kind: input, shape index: {}]
  %s5 = inlined_call_operand.vmem [shape: f32[3,128,64], index: 5, kind: input, shape index: {}]
  %s6 = inlined_call_operand.vmem [shape: f32[128,1], index: 6, kind: input, shape index: {}]
  %s7 = inlined_call_operand.vmem [shape: f32[32,16], index: 7, kind: input, shape index: {}]
  %s8 = inlined_call_operand.vmem [shape: f32[16,8], index: 8, kind: input, shape index: {}]
  %s9 = inlined_call_operand.vmem [shape: f32[8,16], index: 9, kind: input, shape index: {}]
  %s10 = inlined_call_operand.vmem [shape: f32[16,32], index: 10, kind: input, shape index: {}]
  %s11 = inlined_call_operand.vmem [shape: f32[3,64,128], index: 11, kind: input, shape index: {}]
  %s12 = inlined_call_operand.vmem [shape: f32[3,64,64], index: 12, kind: input, shape index: {}]
  %s13 = inlined_call_operand.vmem [shape: f32[3,64,128], index: 13, kind: input, shape index: {}]
  %s14 = inlined_call_operand.vmem [shape: f32[3,64,1], index: 14, kind: input, shape index: {}]
  %s15 = inlined_call_operand.vmem [shape: f32[3,32,64], index: 15, kind: input, shape index: {}]
  %s16 = inlined_call_operand.vmem [shape: f32[3,32,32], index: 16, kind: input, shape index: {}]
  %s17 = inlined_call_operand.vmem [shape: f32[3,32,64], index: 17, kind: input, shape index: {}]
  %s18 = inlined_call_operand.vmem [shape: f32[3,32,1], index: 18, kind: input, shape index: {}]
  %s19 = inlined_call_operand.vmem [shape: f32[3,1,32], index: 19, kind: input, shape index: {}]
  %s20 = inlined_call_operand.vmem [shape: f32[3,1,1], index: 20, kind: input, shape index: {}]
  %s21 = inlined_call_operand.vmem [shape: f32[3,1,32], index: 21, kind: input, shape index: {}]
  %s22 = inlined_call_operand.vmem [shape: f32[3,1,1], index: 22, kind: input, shape index: {}]
  %s23 = inlined_call_operand.hbm [shape: f32[2,1,32], index: 23, kind: output, shape index: {}]
  %s24 = sld [smem:[#allocation0]]
  $region125: #{tpu_custom_call.1} parent=0
    _
  %s26 = ssub.s32 1, %s24
  %s27 = scalar_select 0, %s26, %s24
  $region1: #{tpu_custom_call.1} parent=0
    #allocation2 [shape = 'u8[1024]{0}', space=vmem, size = 0x400, scoped, tag = 'output window, operand 0']
    #allocation3 [shape = 's32[2]{0}', space=sflag, size = 0x8, scoped, tag = 'scoped memory for tpu_custom_call.1']
    %28 = vsyncpa [#allocation3], 0
    %s29 = scalar_lea.sflag [#allocation3], 1
    %30 = vsyncpa %s29, 0
    loop: start=0, step=1, limit=4
    $region2: #{tpu_custom_call.1} parent=1 // loop_pre_header
      _
    $region3: #{tpu_custom_call.1} parent=1 // loop_header
      %s32 = sphi 0, %s36
      %p33 = scmp.ge.s32.totalorder %s32, 4
      %s42 = sphi 0, %s44
      %s45 = sphi 0, %s42
      %s46 = sphi 0, %s45
      %s62 = sphi 0, %s46
      %s66 = sphi 0, %s66
      %s68 = sphi 0, %s66
      %s69 = sphi 0, %s68
      %s83 = sphi 0, %s69
      %s87 = sphi 0, %s87
      %s89 = sphi 0, %s87
      %s90 = sphi 0, %s89
      %s104 = sphi 0, %s90
      %s108 = sphi 0, %s108
      %s110 = sphi 0, %s108
      %s111 = sphi 0, %s110
      %s125 = sphi 0, %s111
      %s129 = sphi 0, %s129
      %s131 = sphi 0, %s129
      %s132 = sphi 0, %s131
      %s146 = sphi 0, %s132
      %s150 = sphi 0, %s150
      %s152 = sphi 0, %s150
      %s153 = sphi 0, %s152
      %s167 = sphi 0, %s153
      %s171 = sphi 0, %s171
      %s173 = sphi 0, %s171
      %s174 = sphi 0, %s173
      %s188 = sphi 0, %s174
      %s192 = sphi 0, %s192
      %s194 = sphi 0, %s192
      %s195 = sphi 0, %s194
      %s209 = sphi 0, %s195
      %s213 = sphi 0, %s213
      %s215 = sphi 0, %s213
      %s216 = sphi 0, %s215
      %s230 = sphi 0, %s216
      %s234 = sphi 0, %s234
      %s236 = sphi 0, %s234
      %s237 = sphi 0, %s236
      %s251 = sphi 0, %s237
      %s255 = sphi 0, %s255
      %s257 = sphi 0, %s255
      %s258 = sphi 0, %s257
      %s272 = sphi 0, %s258
      %s276 = sphi 0, %s276
      %s278 = sphi 0, %s276
      %s279 = sphi 0, %s278
      %s293 = sphi 0, %s279
      %s297 = sphi 0, %s297
      %s299 = sphi 0, %s297
      %s300 = sphi 0, %s299
      %s314 = sphi 0, %s300
      %s318 = sphi 0, %s318
      %s320 = sphi 0, %s318
      %s321 = sphi 0, %s320
      %s335 = sphi 0, %s321
      %s339 = sphi 0, %s339
      %s341 = sphi 0, %s339
      %s342 = sphi 0, %s341
      %s356 = sphi 0, %s342
      %s360 = sphi 0, %s360
      %s362 = sphi 0, %s360
      %s363 = sphi 0, %s362
      %s377 = sphi 0, %s363
      %s381 = sphi 0, %s381
      %s383 = sphi 0, %s381
      %s384 = sphi 0, %s383
      %s398 = sphi 0, %s384
      %s402 = sphi 0, %s402
      %s404 = sphi 0, %s402
      %s405 = sphi 0, %s404
      %s419 = sphi 0, %s405
      %s423 = sphi 0, %s423
      %s425 = sphi 0, %s423
      %s426 = sphi 0, %s425
      %s440 = sphi 0, %s426
      %s444 = sphi 0, %s444
      %s446 = sphi 0, %s444
      %s447 = sphi 0, %s446
      %s461 = sphi 0, %s447
      %s465 = sphi 0, %s465
      %s467 = sphi 0, %s465
      %s468 = sphi 0, %s467
      %s482 = sphi 0, %s468
      %s486 = sphi 0, %s486
      %s488 = sphi 0, %s486
      %s489 = sphi 0, %s488
      %s503 = sphi 0, %s489
      %s507 = sphi 0, %s507
      %s509 = sphi 0, %s507
      %s510 = sphi 0, %s509
      %s524 = sphi 0, %s510
      %s530 = sphi 0, %s532
      %s533 = sphi 0, %s530
      %s534 = sphi 0, %s533
      %s550 = sphi 0, %s534
    $region4: #{tpu_custom_call.1} parent=1 // loop_header_branch
      %35 = sbr.rel (%p33) target = $region8
    $region5: #{tpu_custom_call.1} parent=1 // loop_body
      %s37 = ssub.s32 %s32, 1
      %s38 = ssub.s32 %s32, 2
      %s39 = sadd.s32 %s32, 1
      %s40 = ssub.s32 %s32, %s39
      %p41 = scmp.eq.s32.totalorder %s40, 0
      %s43 = sadd.s32 %s42, 1
      %s44 = scalar_select %p41, %s42, %s43
      %p47 = pneg %p41
      %p48 = scmp.eq.s32.totalorder %s32, 1
      %p49 = por %p47, %p48
      %p50 = scmp.ne.s32.totalorder %s42, %s45
      %p51 = scmp.eq.s32.totalorder %s32, 0
      %p52 = por %p50, %p51
      %p53 = scmp.ne.s32.totalorder %s42, %s45
      %p54 = scmp.eq.s32.totalorder %s37, 1
      %p55 = por %p53, %p54
      %p56 = scmp.ne.s32.totalorder %s45, %s46
      %p57 = scmp.eq.s32.totalorder %s37, 0
      %p58 = por %p56, %p57
      %p59 = scmp.ne.s32.totalorder %s45, %s46
      %p60 = scmp.eq.s32.totalorder %s38, 1
      %p61 = por %p59, %p60
      %p63 = scmp.ne.s32.totalorder %s46, %s62
      %p64 = scmp.eq.s32.totalorder %s38, 0
      %p65 = por %p63, %p64
      %s67 = sadd.s32 %s66, 1
      %p70 = scmp.eq.s32.totalorder %s32, 1
      %p71 = scmp.ne.s32.totalorder %s66, %s68
      %p72 = scmp.eq.s32.totalorder %s32, 0
      %p73 = por %p71, %p72
      %p74 = scmp.ne.s32.totalorder %s66, %s68
      %p75 = scmp.eq.s32.totalorder %s37, 1
      %p76 = por %p74, %p75
      %p77 = scmp.ne.s32.totalorder %s68, %s69
      %p78 = scmp.eq.s32.totalorder %s37, 0
      %p79 = por %p77, %p78
      %p80 = scmp.ne.s32.totalorder %s68, %s69
      %p81 = scmp.eq.s32.totalorder %s38, 1
      %p82 = por %p80, %p81
      %p84 = scmp.ne.s32.totalorder %s69, %s83
      %p85 = scmp.eq.s32.totalorder %s38, 0
      %p86 = por %p84, %p85
      %s88 = sadd.s32 %s87, 1
      %p91 = scmp.eq.s32.totalorder %s32, 1
      %p92 = scmp.ne.s32.totalorder %s87, %s89
      %p93 = scmp.eq.s32.totalorder %s32, 0
      %p94 = por %p92, %p93
      %p95 = scmp.ne.s32.totalorder %s87, %s89
      %p96 = scmp.eq.s32.totalorder %s37, 1
      %p97 = por %p95, %p96
      %p98 = scmp.ne.s32.totalorder %s89, %s90
      %p99 = scmp.eq.s32.totalorder %s37, 0
      %p100 = por %p98, %p99
      %p101 = scmp.ne.s32.totalorder %s89, %s90
      %p102 = scmp.eq.s32.totalorder %s38, 1
      %p103 = por %p101, %p102
      %p105 = scmp.ne.s32.totalorder %s90, %s104
      %p106 = scmp.eq.s32.totalorder %s38, 0
      %p107 = por %p105, %p106
      %s109 = sadd.s32 %s108, 1
      %p112 = scmp.eq.s32.totalorder %s32, 1
      %p113 = scmp.ne.s32.totalorder %s108, %s110
      %p114 = scmp.eq.s32.totalorder %s32, 0
      %p115 = por %p113, %p114
      %p116 = scmp.ne.s32.totalorder %s108, %s110
      %p117 = scmp.eq.s32.totalorder %s37, 1
      %p118 = por %p116, %p117
      %p119 = scmp.ne.s32.totalorder %s110, %s111
      %p120 = scmp.eq.s32.totalorder %s37, 0
      %p121 = por %p119, %p120
      %p122 = scmp.ne.s32.totalorder %s110, %s111
      %p123 = scmp.eq.s32.totalorder %s38, 1
      %p124 = por %p122, %p123
      %p126 = scmp.ne.s32.totalorder %s111, %s125
      %p127 = scmp.eq.s32.totalorder %s38, 0
      %p128 = por %p126, %p127
      %s130 = sadd.s32 %s129, 1
      %p133 = scmp.eq.s32.totalorder %s32, 1
      %p134 = scmp.ne.s32.totalorder %s129, %s131
      %p135 = scmp.eq.s32.totalorder %s32, 0
      %p136 = por %p134, %p135
      %p137 = scmp.ne.s32.totalorder %s129, %s131
      %p138 = scmp.eq.s32.totalorder %s37, 1
      %p139 = por %p137, %p138
      %p140 = scmp.ne.s32.totalorder %s131, %s132
      %p141 = scmp.eq.s32.totalorder %s37, 0
      %p142 = por %p140, %p141
      %p143 = scmp.ne.s32.totalorder %s131, %s132
      %p144 = scmp.eq.s32.totalorder %s38, 1
      %p145 = por %p143, %p144
      %p147 = scmp.ne.s32.totalorder %s132, %s146
      %p148 = scmp.eq.s32.totalorder %s38, 0
      %p149 = por %p147, %p148
      %s151 = sadd.s32 %s150, 1
      %p154 = scmp.eq.s32.totalorder %s32, 1
      %p155 = scmp.ne.s32.totalorder %s150, %s152
      %p156 = scmp.eq.s32.totalorder %s32, 0
      %p157 = por %p155, %p156
      %p158 = scmp.ne.s32.totalorder %s150, %s152
      %p159 = scmp.eq.s32.totalorder %s37, 1
      %p160 = por %p158, %p159
      %p161 = scmp.ne.s32.totalorder %s152, %s153
      %p162 = scmp.eq.s32.totalorder %s37, 0
      %p163 = por %p161, %p162
      %p164 = scmp.ne.s32.totalorder %s152, %s153
      %p165 = scmp.eq.s32.totalorder %s38, 1
      %p166 = por %p164, %p165
      %p168 = scmp.ne.s32.totalorder %s153, %s167
      %p169 = scmp.eq.s32.totalorder %s38, 0
      %p170 = por %p168, %p169
      %s172 = sadd.s32 %s171, 1
      %p175 = scmp.eq.s32.totalorder %s32, 1
      %p176 = scmp.ne.s32.totalorder %s171, %s173
      %p177 = scmp.eq.s32.totalorder %s32, 0
      %p178 = por %p176, %p177
      %p179 = scmp.ne.s32.totalorder %s171, %s173
      %p180 = scmp.eq.s32.totalorder %s37, 1
      %p181 = por %p179, %p180
      %p182 = scmp.ne.s32.totalorder %s173, %s174
      %p183 = scmp.eq.s32.totalorder %s37, 0
      %p184 = por %p182, %p183
      %p185 = scmp.ne.s32.totalorder %s173, %s174
      %p186 = scmp.eq.s32.totalorder %s38, 1
      %p187 = por %p185, %p186
      %p189 = scmp.ne.s32.totalorder %s174, %s188
      %p190 = scmp.eq.s32.totalorder %s38, 0
      %p191 = por %p189, %p190
      %s193 = sadd.s32 %s192, 1
      %p196 = scmp.eq.s32.totalorder %s32, 1
      %p197 = scmp.ne.s32.totalorder %s192, %s194
      %p198 = scmp.eq.s32.totalorder %s32, 0
      %p199 = por %p197, %p198
      %p200 = scmp.ne.s32.totalorder %s192, %s194
      %p201 = scmp.eq.s32.totalorder %s37, 1
      %p202 = por %p200, %p201
      %p203 = scmp.ne.s32.totalorder %s194, %s195
      %p204 = scmp.eq.s32.totalorder %s37, 0
      %p205 = por %p203, %p204
      %p206 = scmp.ne.s32.totalorder %s194, %s195
      %p207 = scmp.eq.s32.totalorder %s38, 1
      %p208 = por %p206, %p207
      %p210 = scmp.ne.s32.totalorder %s195, %s209
      %p211 = scmp.eq.s32.totalorder %s38, 0
      %p212 = por %p210, %p211
      %s214 = sadd.s32 %s213, 1
      %p217 = scmp.eq.s32.totalorder %s32, 1
      %p218 = scmp.ne.s32.totalorder %s213, %s215
      %p219 = scmp.eq.s32.totalorder %s32, 0
      %p220 = por %p218, %p219
      %p221 = scmp.ne.s32.totalorder %s213, %s215
      %p222 = scmp.eq.s32.totalorder %s37, 1
      %p223 = por %p221, %p222
      %p224 = scmp.ne.s32.totalorder %s215, %s216
      %p225 = scmp.eq.s32.totalorder %s37, 0
      %p226 = por %p224, %p225
      %p227 = scmp.ne.s32.totalorder %s215, %s216
      %p228 = scmp.eq.s32.totalorder %s38, 1
      %p229 = por %p227, %p228
      %p231 = scmp.ne.s32.totalorder %s216, %s230
      %p232 = scmp.eq.s32.totalorder %s38, 0
      %p233 = por %p231, %p232
      %s235 = sadd.s32 %s234, 1
      %p238 = scmp.eq.s32.totalorder %s32, 1
      %p239 = scmp.ne.s32.totalorder %s234, %s236
      %p240 = scmp.eq.s32.totalorder %s32, 0
      %p241 = por %p239, %p240
      %p242 = scmp.ne.s32.totalorder %s234, %s236
      %p243 = scmp.eq.s32.totalorder %s37, 1
      %p244 = por %p242, %p243
      %p245 = scmp.ne.s32.totalorder %s236, %s237
      %p246 = scmp.eq.s32.totalorder %s37, 0
      %p247 = por %p245, %p246
      %p248 = scmp.ne.s32.totalorder %s236, %s237
      %p249 = scmp.eq.s32.totalorder %s38, 1
      %p250 = por %p248, %p249
      %p252 = scmp.ne.s32.totalorder %s237, %s251
      %p253 = scmp.eq.s32.totalorder %s38, 0
      %p254 = por %p252, %p253
      %s256 = sadd.s32 %s255, 1
      %p259 = scmp.eq.s32.totalorder %s32, 1
      %p260 = scmp.ne.s32.totalorder %s255, %s257
      %p261 = scmp.eq.s32.totalorder %s32, 0
      %p262 = por %p260, %p261
      %p263 = scmp.ne.s32.totalorder %s255, %s257
      %p264 = scmp.eq.s32.totalorder %s37, 1
      %p265 = por %p263, %p264
      %p266 = scmp.ne.s32.totalorder %s257, %s258
      %p267 = scmp.eq.s32.totalorder %s37, 0
      %p268 = por %p266, %p267
      %p269 = scmp.ne.s32.totalorder %s257, %s258
      %p270 = scmp.eq.s32.totalorder %s38, 1
      %p271 = por %p269, %p270
      %p273 = scmp.ne.s32.totalorder %s258, %s272
      %p274 = scmp.eq.s32.totalorder %s38, 0
      %p275 = por %p273, %p274
      %s277 = sadd.s32 %s276, 1
      %p280 = scmp.eq.s32.totalorder %s32, 1
      %p281 = scmp.ne.s32.totalorder %s276, %s278
      %p282 = scmp.eq.s32.totalorder %s32, 0
      %p283 = por %p281, %p282
      %p284 = scmp.ne.s32.totalorder %s276, %s278
      %p285 = scmp.eq.s32.totalorder %s37, 1
      %p286 = por %p284, %p285
      %p287 = scmp.ne.s32.totalorder %s278, %s279
      %p288 = scmp.eq.s32.totalorder %s37, 0
      %p289 = por %p287, %p288
      %p290 = scmp.ne.s32.totalorder %s278, %s279
      %p291 = scmp.eq.s32.totalorder %s38, 1
      %p292 = por %p290, %p291
      %p294 = scmp.ne.s32.totalorder %s279, %s293
      %p295 = scmp.eq.s32.totalorder %s38, 0
      %p296 = por %p294, %p295
      %s298 = sadd.s32 %s297, 1
      %p301 = scmp.eq.s32.totalorder %s32, 1
      %p302 = scmp.ne.s32.totalorder %s297, %s299
      %p303 = scmp.eq.s32.totalorder %s32, 0
      %p304 = por %p302, %p303
      %p305 = scmp.ne.s32.totalorder %s297, %s299
      %p306 = scmp.eq.s32.totalorder %s37, 1
      %p307 = por %p305, %p306
      %p308 = scmp.ne.s32.totalorder %s299, %s300
      %p309 = scmp.eq.s32.totalorder %s37, 0
      %p310 = por %p308, %p309
      %p311 = scmp.ne.s32.totalorder %s299, %s300
      %p312 = scmp.eq.s32.totalorder %s38, 1
      %p313 = por %p311, %p312
      %p315 = scmp.ne.s32.totalorder %s300, %s314
      %p316 = scmp.eq.s32.totalorder %s38, 0
      %p317 = por %p315, %p316
      %s319 = sadd.s32 %s318, 1
      %p322 = scmp.eq.s32.totalorder %s32, 1
      %p323 = scmp.ne.s32.totalorder %s318, %s320
      %p324 = scmp.eq.s32.totalorder %s32, 0
      %p325 = por %p323, %p324
      %p326 = scmp.ne.s32.totalorder %s318, %s320
      %p327 = scmp.eq.s32.totalorder %s37, 1
      %p328 = por %p326, %p327
      %p329 = scmp.ne.s32.totalorder %s320, %s321
      %p330 = scmp.eq.s32.totalorder %s37, 0
      %p331 = por %p329, %p330
      %p332 = scmp.ne.s32.totalorder %s320, %s321
      %p333 = scmp.eq.s32.totalorder %s38, 1
      %p334 = por %p332, %p333
      %p336 = scmp.ne.s32.totalorder %s321, %s335
      %p337 = scmp.eq.s32.totalorder %s38, 0
      %p338 = por %p336, %p337
      %s340 = sadd.s32 %s339, 1
      %p343 = scmp.eq.s32.totalorder %s32, 1
      %p344 = scmp.ne.s32.totalorder %s339, %s341
      %p345 = scmp.eq.s32.totalorder %s32, 0
      %p346 = por %p344, %p345
      %p347 = scmp.ne.s32.totalorder %s339, %s341
      %p348 = scmp.eq.s32.totalorder %s37, 1
      %p349 = por %p347, %p348
      %p350 = scmp.ne.s32.totalorder %s341, %s342
      %p351 = scmp.eq.s32.totalorder %s37, 0
      %p352 = por %p350, %p351
      %p353 = scmp.ne.s32.totalorder %s341, %s342
      %p354 = scmp.eq.s32.totalorder %s38, 1
      %p355 = por %p353, %p354
      %p357 = scmp.ne.s32.totalorder %s342, %s356
      %p358 = scmp.eq.s32.totalorder %s38, 0
      %p359 = por %p357, %p358
      %s361 = sadd.s32 %s360, 1
      %p364 = scmp.eq.s32.totalorder %s32, 1
      %p365 = scmp.ne.s32.totalorder %s360, %s362
      %p366 = scmp.eq.s32.totalorder %s32, 0
      %p367 = por %p365, %p366
      %p368 = scmp.ne.s32.totalorder %s360, %s362
      %p369 = scmp.eq.s32.totalorder %s37, 1
      %p370 = por %p368, %p369
      %p371 = scmp.ne.s32.totalorder %s362, %s363
      %p372 = scmp.eq.s32.totalorder %s37, 0
      %p373 = por %p371, %p372
      %p374 = scmp.ne.s32.totalorder %s362, %s363
      %p375 = scmp.eq.s32.totalorder %s38, 1
      %p376 = por %p374, %p375
      %p378 = scmp.ne.s32.totalorder %s363, %s377
      %p379 = scmp.eq.s32.totalorder %s38, 0
      %p380 = por %p378, %p379
      %s382 = sadd.s32 %s381, 1
      %p385 = scmp.eq.s32.totalorder %s32, 1
      %p386 = scmp.ne.s32.totalorder %s381, %s383
      %p387 = scmp.eq.s32.totalorder %s32, 0
      %p388 = por %p386, %p387
      %p389 = scmp.ne.s32.totalorder %s381, %s383
      %p390 = scmp.eq.s32.totalorder %s37, 1
      %p391 = por %p389, %p390
      %p392 = scmp.ne.s32.totalorder %s383, %s384
      %p393 = scmp.eq.s32.totalorder %s37, 0
      %p394 = por %p392, %p393
      %p395 = scmp.ne.s32.totalorder %s383, %s384
      %p396 = scmp.eq.s32.totalorder %s38, 1
      %p397 = por %p395, %p396
      %p399 = scmp.ne.s32.totalorder %s384, %s398
      %p400 = scmp.eq.s32.totalorder %s38, 0
      %p401 = por %p399, %p400
      %s403 = sadd.s32 %s402, 1
      %p406 = scmp.eq.s32.totalorder %s32, 1
      %p407 = scmp.ne.s32.totalorder %s402, %s404
      %p408 = scmp.eq.s32.totalorder %s32, 0
      %p409 = por %p407, %p408
      %p410 = scmp.ne.s32.totalorder %s402, %s404
      %p411 = scmp.eq.s32.totalorder %s37, 1
      %p412 = por %p410, %p411
      %p413 = scmp.ne.s32.totalorder %s404, %s405
      %p414 = scmp.eq.s32.totalorder %s37, 0
      %p415 = por %p413, %p414
      %p416 = scmp.ne.s32.totalorder %s404, %s405
      %p417 = scmp.eq.s32.totalorder %s38, 1
      %p418 = por %p416, %p417
      %p420 = scmp.ne.s32.totalorder %s405, %s419
      %p421 = scmp.eq.s32.totalorder %s38, 0
      %p422 = por %p420, %p421
      %s424 = sadd.s32 %s423, 1
      %p427 = scmp.eq.s32.totalorder %s32, 1
      %p428 = scmp.ne.s32.totalorder %s423, %s425
      %p429 = scmp.eq.s32.totalorder %s32, 0
      %p430 = por %p428, %p429
      %p431 = scmp.ne.s32.totalorder %s423, %s425
      %p432 = scmp.eq.s32.totalorder %s37, 1
      %p433 = por %p431, %p432
      %p434 = scmp.ne.s32.totalorder %s425, %s426
      %p435 = scmp.eq.s32.totalorder %s37, 0
      %p436 = por %p434, %p435
      %p437 = scmp.ne.s32.totalorder %s425, %s426
      %p438 = scmp.eq.s32.totalorder %s38, 1
      %p439 = por %p437, %p438
      %p441 = scmp.ne.s32.totalorder %s426, %s440
      %p442 = scmp.eq.s32.totalorder %s38, 0
      %p443 = por %p441, %p442
      %s445 = sadd.s32 %s444, 1
      %p448 = scmp.eq.s32.totalorder %s32, 1
      %p449 = scmp.ne.s32.totalorder %s444, %s446
      %p450 = scmp.eq.s32.totalorder %s32, 0
      %p451 = por %p449, %p450
      %p452 = scmp.ne.s32.totalorder %s444, %s446
      %p453 = scmp.eq.s32.totalorder %s37, 1
      %p454 = por %p452, %p453
      %p455 = scmp.ne.s32.totalorder %s446, %s447
      %p456 = scmp.eq.s32.totalorder %s37, 0
      %p457 = por %p455, %p456
      %p458 = scmp.ne.s32.totalorder %s446, %s447
      %p459 = scmp.eq.s32.totalorder %s38, 1
      %p460 = por %p458, %p459
      %p462 = scmp.ne.s32.totalorder %s447, %s461
      %p463 = scmp.eq.s32.totalorder %s38, 0
      %p464 = por %p462, %p463
      %s466 = sadd.s32 %s465, 1
      %p469 = scmp.eq.s32.totalorder %s32, 1
      %p470 = scmp.ne.s32.totalorder %s465, %s467
      %p471 = scmp.eq.s32.totalorder %s32, 0
      %p472 = por %p470, %p471
      %p473 = scmp.ne.s32.totalorder %s465, %s467
      %p474 = scmp.eq.s32.totalorder %s37, 1
      %p475 = por %p473, %p474
      %p476 = scmp.ne.s32.totalorder %s467, %s468
      %p477 = scmp.eq.s32.totalorder %s37, 0
      %p478 = por %p476, %p477
      %p479 = scmp.ne.s32.totalorder %s467, %s468
      %p480 = scmp.eq.s32.totalorder %s38, 1
      %p481 = por %p479, %p480
      %p483 = scmp.ne.s32.totalorder %s468, %s482
      %p484 = scmp.eq.s32.totalorder %s38, 0
      %p485 = por %p483, %p484
      %s487 = sadd.s32 %s486, 1
      %p490 = scmp.eq.s32.totalorder %s32, 1
      %p491 = scmp.ne.s32.totalorder %s486, %s488
      %p492 = scmp.eq.s32.totalorder %s32, 0
      %p493 = por %p491, %p492
      %p494 = scmp.ne.s32.totalorder %s486, %s488
      %p495 = scmp.eq.s32.totalorder %s37, 1
      %p496 = por %p494, %p495
      %p497 = scmp.ne.s32.totalorder %s488, %s489
      %p498 = scmp.eq.s32.totalorder %s37, 0
      %p499 = por %p497, %p498
      %p500 = scmp.ne.s32.totalorder %s488, %s489
      %p501 = scmp.eq.s32.totalorder %s38, 1
      %p502 = por %p500, %p501
      %p504 = scmp.ne.s32.totalorder %s489, %s503
      %p505 = scmp.eq.s32.totalorder %s38, 0
      %p506 = por %p504, %p505
      %s508 = sadd.s32 %s507, 1
      %p511 = scmp.eq.s32.totalorder %s32, 1
      %p512 = scmp.ne.s32.totalorder %s507, %s509
      %p513 = scmp.eq.s32.totalorder %s32, 0
      %p514 = por %p512, %p513
      %p515 = scmp.ne.s32.totalorder %s507, %s509
      %p516 = scmp.eq.s32.totalorder %s37, 1
      %p517 = por %p515, %p516
      %p518 = scmp.ne.s32.totalorder %s509, %s510
      %p519 = scmp.eq.s32.totalorder %s37, 0
      %p520 = por %p518, %p519
      %p521 = scmp.ne.s32.totalorder %s509, %s510
      %p522 = scmp.eq.s32.totalorder %s38, 1
      %p523 = por %p521, %p522
      %p525 = scmp.ne.s32.totalorder %s510, %s524
      %p526 = scmp.eq.s32.totalorder %s38, 0
      %p527 = por %p525, %p526
      %s528 = ssub.s32 %s32, %s39
      %p529 = scmp.eq.s32.totalorder %s528, 0
      %s531 = sadd.s32 %s530, 1
      %s532 = scalar_select %p529, %s530, %s531
      %p535 = pneg %p529
      %p536 = scmp.eq.s32.totalorder %s32, 1
      %p537 = por %p535, %p536
      %p538 = scmp.ne.s32.totalorder %s530, %s533
      %p539 = scmp.eq.s32.totalorder %s32, 0
      %p540 = por %p538, %p539
      %p541 = scmp.ne.s32.totalorder %s530, %s533
      %p542 = scmp.eq.s32.totalorder %s37, 1
      %p543 = por %p541, %p542
      %p544 = scmp.ne.s32.totalorder %s533, %s534
      %p545 = scmp.eq.s32.totalorder %s37, 0
      %p546 = por %p544, %p545
      %p547 = scmp.ne.s32.totalorder %s533, %s534
      %p548 = scmp.eq.s32.totalorder %s38, 1
      %p549 = por %p547, %p548
      %p551 = scmp.ne.s32.totalorder %s534, %s550
      %p552 = scmp.eq.s32.totalorder %s38, 0
      %p553 = por %p551, %p552
      %p554 = scmp.le.s32.totalorder 1, %s32
      %p555 = scmp.lt.s32.totalorder %s32, 3
      %p556 = pnand %p554, %p555
      %p557 = pneg %p556
      // Predicated region
      $region9: #{tpu_custom_call.1} parent=5 // pred_check
        _
      $region10: #{tpu_custom_call.1} parent=5 // pred_check_branch
        %559 = sbr.rel (%p556) target = $region12
      $region11: #{tpu_custom_call.1} parent=5 // pred_region
        %s560 = ssub.s32 %s32, 1
        // Predicated region
        $region13: #{tpu_custom_call.1} parent=11 // pred_check
          %p561 = pneg %p79
        $region14: #{tpu_custom_call.1} parent=11 // pred_check_branch
          %563 = sbr.rel (%p561) target = $region16
        $region15: #{tpu_custom_call.1} parent=11 // pred_region
          _
        $region16: #{tpu_custom_call.1} parent=11 // pred_fallthru
          _
        // Predicated region
        $region17: #{tpu_custom_call.1} parent=11 // pred_check
          %p564 = pneg %p100
        $region18: #{tpu_custom_call.1} parent=11 // pred_check_branch
          %566 = sbr.rel (%p564) target = $region20
        $region19: #{tpu_custom_call.1} parent=11 // pred_region
          _
        $region20: #{tpu_custom_call.1} parent=11 // pred_fallthru
          _
        // Predicated region
        $region21: #{tpu_custom_call.1} parent=11 // pred_check
          %p567 = pneg %p121
        $region22: #{tpu_custom_call.1} parent=11 // pred_check_branch
          %569 = sbr.rel (%p567) target = $region24
        $region23: #{tpu_custom_call.1} parent=11 // pred_region
          _
        $region24: #{tpu_custom_call.1} parent=11 // pred_fallthru
          _
        // Predicated region
        $region25: #{tpu_custom_call.1} parent=11 // pred_check
          %p570 = pneg %p142
        $region26: #{tpu_custom_call.1} parent=11 // pred_check_branch
          %572 = sbr.rel (%p570) target = $region28
        $region27: #{tpu_custom_call.1} parent=11 // pred_region
          _
        $region28: #{tpu_custom_call.1} parent=11 // pred_fallthru
          _
        // Predicated region
        $region29: #{tpu_custom_call.1} parent=11 // pred_check
          %p573 = pneg %p163
        $region30: #{tpu_custom_call.1} parent=11 // pred_check_branch
          %575 = sbr.rel (%p573) target = $region32
        $region31: #{tpu_custom_call.1} parent=11 // pred_region
          _
        $region32: #{tpu_custom_call.1} parent=11 // pred_fallthru
          _
        // Predicated region
        $region33: #{tpu_custom_call.1} parent=11 // pred_check
          %p576 = pneg %p184
        $region34: #{tpu_custom_call.1} parent=11 // pred_check_branch
          %578 = sbr.rel (%p576) target = $region36
        $region35: #{tpu_custom_call.1} parent=11 // pred_region
          _
        $region36: #{tpu_custom_call.1} parent=11 // pred_fallthru
          _
        // Predicated region
        $region37: #{tpu_custom_call.1} parent=11 // pred_check
          %p579 = pneg %p205
        $region38: #{tpu_custom_call.1} parent=11 // pred_check_branch
          %581 = sbr.rel (%p579) target = $region40
        $region39: #{tpu_custom_call.1} parent=11 // pred_region
          _
        $region40: #{tpu_custom_call.1} parent=11 // pred_fallthru
          _
        // Predicated region
        $region41: #{tpu_custom_call.1} parent=11 // pred_check
          %p582 = pneg %p226
        $region42: #{tpu_custom_call.1} parent=11 // pred_check_branch
          %584 = sbr.rel (%p582) target = $region44
        $region43: #{tpu_custom_call.1} parent=11 // pred_region
          _
        $region44: #{tpu_custom_call.1} parent=11 // pred_fallthru
          _
        // Predicated region
        $region45: #{tpu_custom_call.1} parent=11 // pred_check
          %p585 = pneg %p247
        $region46: #{tpu_custom_call.1} parent=11 // pred_check_branch
          %587 = sbr.rel (%p585) target = $region48
        $region47: #{tpu_custom_call.1} parent=11 // pred_region
          _
        $region48: #{tpu_custom_call.1} parent=11 // pred_fallthru
          _
        // Predicated region
        $region49: #{tpu_custom_call.1} parent=11 // pred_check
          %p588 = pneg %p268
        $region50: #{tpu_custom_call.1} parent=11 // pred_check_branch
          %590 = sbr.rel (%p588) target = $region52
        $region51: #{tpu_custom_call.1} parent=11 // pred_region
          _
        $region52: #{tpu_custom_call.1} parent=11 // pred_fallthru
          _
        // Predicated region
        $region53: #{tpu_custom_call.1} parent=11 // pred_check
          %p591 = pneg %p289
        $region54: #{tpu_custom_call.1} parent=11 // pred_check_branch
          %593 = sbr.rel (%p591) target = $region56
        $region55: #{tpu_custom_call.1} parent=11 // pred_region
          _
        $region56: #{tpu_custom_call.1} parent=11 // pred_fallthru
          _
        // Predicated region
        $region57: #{tpu_custom_call.1} parent=11 // pred_check
          %p594 = pneg %p310
        $region58: #{tpu_custom_call.1} parent=11 // pred_check_branch
          %596 = sbr.rel (%p594) target = $region60
        $region59: #{tpu_custom_call.1} parent=11 // pred_region
          _
        $region60: #{tpu_custom_call.1} parent=11 // pred_fallthru
          _
        // Predicated region
        $region61: #{tpu_custom_call.1} parent=11 // pred_check
          %p597 = pneg %p331
        $region62: #{tpu_custom_call.1} parent=11 // pred_check_branch
          %599 = sbr.rel (%p597) target = $region64
        $region63: #{tpu_custom_call.1} parent=11 // pred_region
          _
        $region64: #{tpu_custom_call.1} parent=11 // pred_fallthru
          _
        // Predicated region
        $region65: #{tpu_custom_call.1} parent=11 // pred_check
          %p600 = pneg %p352
        $region66: #{tpu_custom_call.1} parent=11 // pred_check_branch
          %602 = sbr.rel (%p600) target = $region68
        $region67: #{tpu_custom_call.1} parent=11 // pred_region
          _
        $region68: #{tpu_custom_call.1} parent=11 // pred_fallthru
          _
        // Predicated region
        $region69: #{tpu_custom_call.1} parent=11 // pred_check
          %p603 = pneg %p373
        $region70: #{tpu_custom_call.1} parent=11 // pred_check_branch
          %605 = sbr.rel (%p603) target = $region72
        $region71: #{tpu_custom_call.1} parent=11 // pred_region
          _
        $region72: #{tpu_custom_call.1} parent=11 // pred_fallthru
          _
        // Predicated region
        $region73: #{tpu_custom_call.1} parent=11 // pred_check
          %p606 = pneg %p394
        $region74: #{tpu_custom_call.1} parent=11 // pred_check_branch
          %608 = sbr.rel (%p606) target = $region76
        $region75: #{tpu_custom_call.1} parent=11 // pred_region
          _
        $region76: #{tpu_custom_call.1} parent=11 // pred_fallthru
          _
        // Predicated region
        $region77: #{tpu_custom_call.1} parent=11 // pred_check
          %p609 = pneg %p415
        $region78: #{tpu_custom_call.1} parent=11 // pred_check_branch
          %611 = sbr.rel (%p609) target = $region80
        $region79: #{tpu_custom_call.1} parent=11 // pred_region
          _
        $region80: #{tpu_custom_call.1} parent=11 // pred_fallthru
          _
        // Predicated region
        $region81: #{tpu_custom_call.1} parent=11 // pred_check
          %p612 = pneg %p436
        $region82: #{tpu_custom_call.1} parent=11 // pred_check_branch
          %614 = sbr.rel (%p612) target = $region84
        $region83: #{tpu_custom_call.1} parent=11 // pred_region
          _
        $region84: #{tpu_custom_call.1} parent=11 // pred_fallthru
          _
        // Predicated region
        $region85: #{tpu_custom_call.1} parent=11 // pred_check
          %p615 = pneg %p457
        $region86: #{tpu_custom_call.1} parent=11 // pred_check_branch
          %617 = sbr.rel (%p615) target = $region88
        $region87: #{tpu_custom_call.1} parent=11 // pred_region
          _
        $region88: #{tpu_custom_call.1} parent=11 // pred_fallthru
          _
        // Predicated region
        $region89: #{tpu_custom_call.1} parent=11 // pred_check
          %p618 = pneg %p478
        $region90: #{tpu_custom_call.1} parent=11 // pred_check_branch
          %620 = sbr.rel (%p618) target = $region92
        $region91: #{tpu_custom_call.1} parent=11 // pred_region
          _
        $region92: #{tpu_custom_call.1} parent=11 // pred_fallthru
          _
        // Predicated region
        $region93: #{tpu_custom_call.1} parent=11 // pred_check
          %p621 = pneg %p499
        $region94: #{tpu_custom_call.1} parent=11 // pred_check_branch
          %623 = sbr.rel (%p621) target = $region96
        $region95: #{tpu_custom_call.1} parent=11 // pred_region
          _
        $region96: #{tpu_custom_call.1} parent=11 // pred_fallthru
          _
        // Predicated region
        $region97: #{tpu_custom_call.1} parent=11 // pred_check
          %p624 = pneg %p520
        $region98: #{tpu_custom_call.1} parent=11 // pred_check_branch
          %626 = sbr.rel (%p624) target = $region100
        $region99: #{tpu_custom_call.1} parent=11 // pred_region
          _
        $region100: #{tpu_custom_call.1} parent=11 // pred_fallthru
          _
      $region12: #{tpu_custom_call.1} parent=5 // pred_fallthru
        _
      %p627 = scmp.lt.s32.totalorder %s32, 2
      // Predicated region
      $region101: #{tpu_custom_call.1} parent=5 // pred_check
        %p628 = pneg %p627
      $region102: #{tpu_custom_call.1} parent=5 // pred_check_branch
        %630 = sbr.rel (%p628) target = $region104
      $region103: #{tpu_custom_call.1} parent=5 // pred_region
        // Predicated region
        $region105: #{tpu_custom_call.1} parent=103 // pred_check
          %p631 = pneg %p52
        $region106: #{tpu_custom_call.1} parent=103 // pred_check_branch
          %633 = sbr.rel (%p631) target = $region108
        $region107: #{tpu_custom_call.1} parent=103 // pred_region
          %p634 = scmp.lt.s32.totalorder %s32, 1
          %s635 = scalar_select %p634, %s32, 1
          %s636 = scalar_lea.vmem %s0, %s635
        $region108: #{tpu_custom_call.1} parent=103 // pred_fallthru
          _
      $region104: #{tpu_custom_call.1} parent=5 // pred_fallthru
        _
      %p637 = scmp.le.s32.totalorder 1, %s32
      %p638 = scmp.lt.s32.totalorder %s32, 3
      %p639 = pnand %p637, %p638
      %p640 = pneg %p639
      // Predicated region
      $region109: #{tpu_custom_call.1} parent=5 // pred_check
        _
      $region110: #{tpu_custom_call.1} parent=5 // pred_check_branch
        %642 = sbr.rel (%p639) target = $region112
      $region111: #{tpu_custom_call.1} parent=5 // pred_region
        %s643 = ssub.s32 %s32, 1
        %p644 = scmp.lt.s32.totalorder %s37, 1
        %s645 = scalar_select %p644, %s37, 1
        %s646 = scalar_lea.vmem %s0, %s645
        %p647 = pneg %p58
        %p648 = pneg %p55
        %p649 = pneg %p79
        %p650 = pneg %p76
        %p651 = pneg %p100
        %p652 = pneg %p97
        %p653 = pneg %p121
        %p654 = pneg %p118
        %p655 = pneg %p142
        %p656 = pneg %p139
        %p657 = pneg %p163
        %p658 = pneg %p160
        %p659 = pneg %p184
        %p660 = pneg %p181
        %p661 = pneg %p205
        %p662 = pneg %p202
        %p663 = pneg %p226
        %p664 = pneg %p223
        %p665 = pneg %p247
        %p666 = pneg %p244
        %p667 = pneg %p268
        %p668 = pneg %p265
        %p669 = pneg %p289
        %p670 = pneg %p286
        %p671 = pneg %p310
        %p672 = pneg %p307
        %p673 = pneg %p331
        %p674 = pneg %p328
        %p675 = pneg %p352
        %p676 = pneg %p349
        %p677 = pneg %p373
        %p678 = pneg %p370
        %p679 = pneg %p394
        %p680 = pneg %p391
        %p681 = pneg %p415
        %p682 = pneg %p412
        %p683 = pneg %p436
        %p684 = pneg %p433
        %p685 = pneg %p457
        %p686 = pneg %p454
        %p687 = pneg %p478
        %p688 = pneg %p475
        %p689 = pneg %p499
        %p690 = pneg %p496
        %p691 = pneg %p520
        %p692 = pneg %p517
        %p693 = pneg %p546
        %p694 = pneg %p543
        %s695 = sand.u32 %s533, 1
        %s696 = scalar_lea.sflag [#allocation3], %s695
        %s697 = sand.u32 %s533, 1
        %s698 = scalar_lea.vmem [#allocation2], %s697
        %p699 = scmp.lt.s32.totalorder %s37, 1
        %s700 = scalar_select %p699, %s37, 1
        %s701 = scalar_lea.vmem %s0, %s700
        %v702 = vld [vmem:[%s701] sm:$0x1]
        %v703 = vlaneseq
        %v704 = vand.u32 %v703, 127
        %vm705 = vcmp.eq.s32.totalorder %v704, 0
        %vm706 = vcmask 1047808
        %707 = vrot.lane.b32.xlu0 %v702, 32
        %v708 = vpop.permute.xlu0 %707
        %v709 = vsel %vm706, %v708, %v702
        %710 = vrot.lane.b32.xlu0 %v709, 32
        %v711 = vpop.permute.xlu0 %710
        %v712 = vsel %vm706, %v711, %v702
        %714 = vrot.lane.b32.xlu0 %v712, 97
        %v715 = vpop.permute.xlu0 %714
        %v717 = vsel %vm705, 0.0, %v715
        %vm718 = vcmp.eq.s32.totalorder %v704, 31
        %719 = vrot.lane.b32.xlu0 %v712, 127
        %v720 = vpop.permute.xlu0 %719
        %v722 = vsel %vm718, 0.0, %v720
        %v724 = vlaneseq
        %v725 = vshrl.u32 %v724, 7
        %v726 = vsub.s32 0, %v725
        %v727 = vrot.slane %v702, %v726
        %v730 = vrot.slane %v722, 6
        %vm732 = vcmask 1040384
        %v733 = vsel %vm732, %v717, %v727
        %vm734 = vcmask 1041408
        %v735 = vsel %vm734, %v733, %v730
        %v736 = vld [vmem:[%s1] sm:$0xff]
        %v737 = vld [vmem:[%s1 + $0x8] sm:$0xff]
        %v738 = vld [vmem:[%s1 + $0x10] sm:$0xff]
        %v739 = vld [vmem:[%s1 + $0x18] sm:$0xff]
        %v740 = vld [vmem:[%s2] sm:$0xff]
        %v741 = vld [vmem:[%s2 + $0x8] sm:$0xff]
        %v742 = vld [vmem:[%s2 + $0x10] sm:$0xff]
        %v743 = vld [vmem:[%s2 + $0x18] sm:$0xff]
        %745 = vset.pattern.permute.xlu0 0
        %746 = vperm.xlu0 %745, %v740
        %v747 = vpop.permute.xlu0 %746
        %750 = vset.pattern.permute.xlu0 0
        %751 = vperm.xlu0 %750, %v741
        %v752 = vpop.permute.xlu0 %751
        %755 = vset.pattern.permute.xlu0 0
        %756 = vperm.xlu0 %755, %v742
        %v757 = vpop.permute.xlu0 %756
        %760 = vset.pattern.permute.xlu0 0
        %761 = vperm.xlu0 %760, %v743
        %v762 = vpop.permute.xlu0 %761
        %vm764 = vcmask 23552
        %v766 = vsel %vm764, %v736, 0
        %v769 = vsel %vm764, %v737, 0
        %v772 = vsel %vm764, %v738, 0
        %v775 = vsel %vm764, %v739, 0
        %vm777 = vcmask 1042432
        %v779 = vsel %vm777, %v735, 0
        %781 = vmatprep.subr.mxu0 0.0
        %782 = vmatpush1.msra.mxu0 %v779
        %783 = vmatprep.subr.mxu0 0.0
        %784 = vmatpush1.msra.mxu0 0.0
        %785 = vmatprep.subr.mxu0 0.0
        %786 = vmatpush1.msra.mxu0 0.0
        %787 = vmatprep.subr.mxu0 0.0
        %788 = vmatpush1.msra.mxu0 0.0
        %789 = vmatprep.subr.mxu0 0.0
        %790 = vmatpush1.msra.mxu0 0.0
        %791 = vmatprep.subr.mxu0 0.0
        %792 = vmatpush1.msra.mxu0 0.0
        %793 = vmatprep.subr.mxu0 0.0
        %794 = vmatpush1.msra.mxu0 0.0
        %795 = vmatprep.subr.mxu0 0.0
        %796 = vmatpush1.msra.mxu0 0.0
        %797 = vmatprep.subr.mxu0 0.0
        %798 = vmatpush1.msra.mxu0 0.0
        %799 = vmatprep.subr.mxu0 0.0
        %800 = vmatpush1.msra.mxu0 0.0
        %801 = vmatprep.subr.mxu0 0.0
        %802 = vmatpush1.msra.mxu0 0.0
        %803 = vmatprep.subr.mxu0 0.0
        %804 = vmatpush1.msra.mxu0 0.0
        %805 = vmatprep.subr.mxu0 0.0
        %806 = vmatpush1.msra.mxu0 0.0
        %807 = vmatprep.subr.mxu0 0.0
        %808 = vmatpush1.msra.mxu0 0.0
        %809 = vmatprep.subr.mxu0 0.0
        %810 = vmatpush1.msra.mxu0 0.0
        %811 = vmatprep.subr.mxu0 0.0
        %812 = vmatpush1.msra.mxu0 0.0
        %813 = vmatprep.subr.mxu0 0.0
        %814 = vmatpush1.msra.mxu0 0.0
        %815 = vmatprep.subr.mxu0 0.0
        %816 = vmatpush1.msra.mxu0 0.0
        %817 = vmatprep.subr.mxu0 0.0
        %818 = vmatpush1.msra.mxu0 0.0
        %819 = vmatprep.subr.mxu0 0.0
        %820 = vmatpush1.msra.mxu0 0.0
        %821 = vmatprep.subr.mxu0 0.0
        %822 = vmatpush1.msra.mxu0 0.0
        %823 = vmatprep.subr.mxu0 0.0
        %824 = vmatpush1.msra.mxu0 0.0
        %825 = vmatprep.subr.mxu0 0.0
        %826 = vmatpush1.msra.mxu0 0.0
        %827 = vmatprep.subr.mxu0 0.0
        %828 = vmatpush1.msra.mxu0 0.0
        %829 = vmatprep.subr.mxu0 0.0
        %830 = vmatpush1.msra.mxu0 0.0
        %831 = vmatprep.subr.mxu0 0.0
        %832 = vmatpush1.msra.mxu0 0.0
        %833 = vmatprep.subr.mxu0 0.0
        %834 = vmatpush1.msra.mxu0 0.0
        %835 = vmatprep.subr.mxu0 0.0
        %836 = vmatpush1.msra.mxu0 0.0
        %837 = vmatprep.subr.mxu0 0.0
        %838 = vmatpush1.msra.mxu0 0.0
        %839 = vmatprep.subr.mxu0 0.0
        %840 = vmatpush1.msra.mxu0 0.0
        %841 = vmatprep.subr.mxu0 0.0
        %842 = vmatpush1.msra.mxu0 0.0
        %843 = vmatprep.subr.mxu0 0.0
        %844 = vmatpush1.msra.mxu0 0.0
        %845 = vmatprep.mubr.f32.mxu0 0.0
        %846 = vmatmul.mubr.f32.gmra.mrb[0].mxu0 %v766
        %v847 = vpop.f32.mrb[0].mxu0
        %v848 = vadd.f32 %v747, %v847
        %v849 = vpop.f32.mrb[0].mxu0
        %850 = vmatprep.mubr.f32.mxu0 0.0
        %851 = vmatmul.mubr.f32.gmra.mrb[0].mxu0 %v769
        %v852 = vpop.f32.mrb[0].mxu0
        %v853 = vadd.f32 %v752, %v852
        %v854 = vpop.f32.mrb[0].mxu0
        %855 = vmatprep.mubr.f32.mxu0 0.0
        %856 = vmatmul.mubr.f32.gmra.mrb[0].mxu0 %v772
        %v857 = vpop.f32.mrb[0].mxu0
        %v858 = vadd.f32 %v757, %v857
        %v859 = vpop.f32.mrb[0].mxu0
        %860 = vmatprep.mubr.f32.mxu0 0.0
        %861 = vmatmul.mubr.f32.gmra.mrb[0].mxu0 %v775
        %v862 = vpop.f32.mrb[0].mxu0
        %v863 = vadd.f32 %v762, %v862
        %v864 = vpop.f32.mrb[0].mxu0
        %865 = vdwg.mxu0
        %866 = vrot.lane.b32.xlu0 %v848, 32
        %v867 = vpop.permute.xlu0 %866
        %v868 = vsel %vm706, %v867, %v848
        %869 = vrot.lane.b32.xlu0 %v853, 32
        %v870 = vpop.permute.xlu0 %869
        %v871 = vsel %vm706, %v870, %v853
        %872 = vrot.lane.b32.xlu0 %v858, 32
        %v873 = vpop.permute.xlu0 %872
        %v874 = vsel %vm706, %v873, %v858
        %875 = vrot.lane.b32.xlu0 %v863, 32
        %v876 = vpop.permute.xlu0 %875
        %v877 = vsel %vm706, %v876, %v863
        %878 = vrot.lane.b32.xlu0 %v868, 32
        %v879 = vpop.permute.xlu0 %878
        %880 = vrot.lane.b32.xlu0 %v871, 32
        %v881 = vpop.permute.xlu0 %880
        %882 = vrot.lane.b32.xlu0 %v874, 32
        %v883 = vpop.permute.xlu0 %882
        %884 = vrot.lane.b32.xlu0 %v877, 32
        %v885 = vpop.permute.xlu0 %884
        %v886 = vsel %vm706, %v879, %v848
        %v887 = vsel %vm706, %v881, %v853
        %v888 = vsel %vm706, %v883, %v858
        %v889 = vsel %vm706, %v885, %v863
        %894 = vrot.lane.b32.xlu0 %v886, 127
        %v895 = vpop.permute.xlu0 %894
        %896 = vrot.lane.b32.xlu0 %v887, 127
        %v897 = vpop.permute.xlu0 %896
        %898 = vrot.lane.b32.xlu0 %v888, 127
        %v899 = vpop.permute.xlu0 %898
        %900 = vrot.lane.b32.xlu0 %v889, 127
        %v901 = vpop.permute.xlu0 %900
        %v906 = vmax.f32 %v848, %v895
        %v907 = vmax.f32 %v853, %v897
        %v908 = vmax.f32 %v858, %v899
        %v909 = vmax.f32 %v863, %v901
        %v910 = vld [vmem:[%s7] sm:$0xff]
        %v911 = vld [vmem:[%s7 + $0x8] sm:$0xff]
        %v912 = vld [vmem:[%s7 + $0x10] sm:$0xff]
        %v913 = vld [vmem:[%s7 + $0x18] sm:$0xff]
        %vm914 = vcmask 261120
        %v916 = vsel %vm914, %v906, 0
        %v919 = vsel %vm914, %v907, 0
        %v922 = vsel %vm914, %v908, 0
        %v925 = vsel %vm914, %v909, 0
        %927 = vmatprep.subr.mxu0 0.0
        %928 = vmatpush1.msra.mxu0 %v910
        %929 = vmatprep.subr.mxu0 0.0
        %930 = vmatpush1.msra.mxu0 %v911
        %931 = vmatprep.subr.mxu0 0.0
        %932 = vmatpush1.msra.mxu0 %v912
        %933 = vmatprep.subr.mxu0 0.0
        %934 = vmatpush1.msra.mxu0 %v913
        %935 = vmatprep.subr.mxu0 0.0
        %936 = vmatpush1.msra.mxu0 0.0
        %937 = vmatprep.subr.mxu0 0.0
        %938 = vmatpush1.msra.mxu0 0.0
        %939 = vmatprep.subr.mxu0 0.0
        %940 = vmatpush1.msra.mxu0 0.0
        %941 = vmatprep.subr.mxu0 0.0
        %942 = vmatpush1.msra.mxu0 0.0
        %943 = vmatprep.subr.mxu0 0.0
        %944 = vmatpush1.msra.mxu0 0.0
        %945 = vmatprep.subr.mxu0 0.0
        %946 = vmatpush1.msra.mxu0 0.0
        %947 = vmatprep.subr.mxu0 0.0
        %948 = vmatpush1.msra.mxu0 0.0
        %949 = vmatprep.subr.mxu0 0.0
        %950 = vmatpush1.msra.mxu0 0.0
        %951 = vmatprep.subr.mxu0 0.0
        %952 = vmatpush1.msra.mxu0 0.0
        %953 = vmatprep.subr.mxu0 0.0
        %954 = vmatpush1.msra.mxu0 0.0
        %955 = vmatprep.subr.mxu0 0.0
        %956 = vmatpush1.msra.mxu0 0.0
        %957 = vmatprep.subr.mxu0 0.0
        %958 = vmatpush1.msra.mxu0 0.0
        %959 = vmatprep.subr.mxu0 0.0
        %960 = vmatpush1.msra.mxu0 0.0
        %961 = vmatprep.subr.mxu0 0.0
        %962 = vmatpush1.msra.mxu0 0.0
        %963 = vmatprep.subr.mxu0 0.0
        %964 = vmatpush1.msra.mxu0 0.0
        %965 = vmatprep.subr.mxu0 0.0
        %966 = vmatpush1.msra.mxu0 0.0
        %967 = vmatprep.subr.mxu0 0.0
        %968 = vmatpush1.msra.mxu0 0.0
        %969 = vmatprep.subr.mxu0 0.0
        %970 = vmatpush1.msra.mxu0 0.0
        %971 = vmatprep.subr.mxu0 0.0
        %972 = vmatpush1.msra.mxu0 0.0
        %973 = vmatprep.subr.mxu0 0.0
        %974 = vmatpush1.msra.mxu0 0.0
        %975 = vmatprep.subr.mxu0 0.0
        %976 = vmatpush1.msra.mxu0 0.0
        %977 = vmatprep.subr.mxu0 0.0
        %978 = vmatpush1.msra.mxu0 0.0
        %979 = vmatprep.subr.mxu0 0.0
        %980 = vmatpush1.msra.mxu0 0.0
        %981 = vmatprep.subr.mxu0 0.0
        %982 = vmatpush1.msra.mxu0 0.0
        %983 = vmatprep.subr.mxu0 0.0
        %984 = vmatpush1.msra.mxu0 0.0
        %985 = vmatprep.subr.mxu0 0.0
        %986 = vmatpush1.msra.mxu0 0.0
        %987 = vmatprep.subr.mxu0 0.0
        %988 = vmatpush1.msra.mxu0 0.0
        %989 = vmatprep.subr.mxu0 0.0
        %990 = vmatpush1.msra.mxu0 0.0
        %991 = vmatprep.mubr.f32.mxu0 0.0
        %992 = vmatmul.mubr.f32.gmra.mrb[0].mxu0 %v916
        %v993 = vpop.f32.mrb[0].mxu0
        %v994 = vadd.f32 0.0, %v993
        %v995 = vpop.f32.mrb[0].mxu0
        %996 = vmatprep.mubr.f32.mxu0 0.0
        %997 = vmatmul.mubr.f32.gmra.mrb[0].mxu0 %v919
        %v998 = vpop.f32.mrb[0].mxu0
        %v999 = vadd.f32 0.0, %v998
        %v1000 = vpop.f32.mrb[0].mxu0
        %1001 = vmatprep.mubr.f32.mxu0 0.0
        %1002 = vmatmul.mubr.f32.gmra.mrb[0].mxu0 %v922
        %v1003 = vpop.f32.mrb[0].mxu0
        %v1004 = vadd.f32 0.0, %v1003
        %v1005 = vpop.f32.mrb[0].mxu0
        %1006 = vmatprep.mubr.f32.mxu0 0.0
        %1007 = vmatmul.mubr.f32.gmra.mrb[0].mxu0 %v925
        %v1008 = vpop.f32.mrb[0].mxu0
        %v1009 = vadd.f32 0.0, %v1008
        %v1010 = vpop.f32.mrb[0].mxu0
        %1011 = vdwg.mxu0
        %v1012 = vmax.f32 %v994, 0.0
        %v1013 = vmax.f32 %v999, 0.0
        %v1014 = vmax.f32 %v1004, 0.0
        %v1015 = vmax.f32 %v1009, 0.0
        %v1016 = vld [vmem:[%s4] sm:$0xff]
        %v1017 = vld [vmem:[%s4 + $0x8] sm:$0xff]
        %v1018 = vld [vmem:[%s4 + $0x10] sm:$0xff]
        %v1019 = vld [vmem:[%s4 + $0x18] sm:$0xff]
        %v1020 = vld [vmem:[%s4 + $0x20] sm:$0xff]
        %v1021 = vld [vmem:[%s4 + $0x28] sm:$0xff]
        %v1022 = vld [vmem:[%s4 + $0x30] sm:$0xff]
        %v1023 = vld [vmem:[%s4 + $0x38] sm:$0xff]
        %s1024 = scalar_lea.vmem %s3, 64
        %v1025 = vld [vmem:[%s1024] sm:$0xff]
        %v1026 = vld [vmem:[%s1024 + $0x8] sm:$0xff]
        %v1027 = vld [vmem:[%s1024 + $0x10] sm:$0xff]
        %v1028 = vld [vmem:[%s1024 + $0x18] sm:$0xff]
        %v1029 = vld [vmem:[%s1024 + $0x20] sm:$0xff]
        %v1030 = vld [vmem:[%s1024 + $0x28] sm:$0xff]
        %v1031 = vld [vmem:[%s1024 + $0x30] sm:$0xff]
        %v1032 = vld [vmem:[%s1024 + $0x38] sm:$0xff]
        %v1033 = vld [vmem:[%s3] sm:$0xff]
        %v1034 = vld [vmem:[%s3 + $0x8] sm:$0xff]
        %v1035 = vld [vmem:[%s3 + $0x10] sm:$0xff]
        %v1036 = vld [vmem:[%s3 + $0x18] sm:$0xff]
        %v1037 = vld [vmem:[%s3 + $0x20] sm:$0xff]
        %v1038 = vld [vmem:[%s3 + $0x28] sm:$0xff]
        %v1039 = vld [vmem:[%s3 + $0x30] sm:$0xff]
        %v1040 = vld [vmem:[%s3 + $0x38] sm:$0xff]
        %vm1041 = vcmask 1047680
        %1042 = vrot.lane.b32.xlu0 %v1012, 16
        %v1043 = vpop.permute.xlu0 %1042
        %v1044 = vsel %vm1041, %v1043, %v1012
        %1045 = vrot.lane.b32.xlu0 %v1013, 16
        %v1046 = vpop.permute.xlu0 %1045
        %v1047 = vsel %vm1041, %v1046, %v1013
        %1048 = vrot.lane.b32.xlu0 %v1014, 16
        %v1049 = vpop.permute.xlu0 %1048
        %v1050 = vsel %vm1041, %v1049, %v1014
        %1051 = vrot.lane.b32.xlu0 %v1015, 16
        %v1052 = vpop.permute.xlu0 %1051
        %v1053 = vsel %vm1041, %v1052, %v1015
        %1054 = vrot.lane.b32.xlu0 %v1044, 16
        %v1055 = vpop.permute.xlu0 %1054
        %1056 = vrot.lane.b32.xlu0 %v1047, 16
        %v1057 = vpop.permute.xlu0 %1056
        %1058 = vrot.lane.b32.xlu0 %v1050, 16
        %v1059 = vpop.permute.xlu0 %1058
        %1060 = vrot.lane.b32.xlu0 %v1053, 16
        %v1061 = vpop.permute.xlu0 %1060
        %v1062 = vsel %vm1041, %v1055, %v1012
        %v1063 = vsel %vm1041, %v1057, %v1013
        %v1064 = vsel %vm1041, %v1059, %v1014
        %v1065 = vsel %vm1041, %v1061, %v1015
        %1070 = vrot.lane.b32.xlu0 %v1062, 113
        %v1071 = vpop.permute.xlu0 %1070
        %1072 = vrot.lane.b32.xlu0 %v1063, 113
        %v1073 = vpop.permute.xlu0 %1072
        %1074 = vrot.lane.b32.xlu0 %v1064, 113
        %v1075 = vpop.permute.xlu0 %1074
        %1076 = vrot.lane.b32.xlu0 %v1065, 113
        %v1077 = vpop.permute.xlu0 %1076
        %v1082 = vsel %vm705, 0.0, %v1071
        %v1083 = vsel %vm705, 0.0, %v1073
        %v1084 = vsel %vm705, 0.0, %v1075
        %v1085 = vsel %vm705, 0.0, %v1077
        %v1087 = vsel %vm914, %v1033, 0
        %v1090 = vsel %vm914, %v1034, 0
        %v1093 = vsel %vm914, %v1035, 0
        %v1096 = vsel %vm914, %v1036, 0
        %v1099 = vsel %vm914, %v1037, 0
        %v1102 = vsel %vm914, %v1038, 0
        %v1105 = vsel %vm914, %v1039, 0
        %v1108 = vsel %vm914, %v1040, 0
        %1110 = vmatprep.subr.mxu0 0.0
        %1111 = vmatpush1.msra.mxu0 %v1082
        %1112 = vmatprep.subr.mxu0 0.0
        %1113 = vmatpush1.msra.mxu0 %v1083
        %1114 = vmatprep.subr.mxu0 0.0
        %1115 = vmatpush1.msra.mxu0 %v1084
        %1116 = vmatprep.subr.mxu0 0.0
        %1117 = vmatpush1.msra.mxu0 %v1085
        %1118 = vmatprep.subr.mxu0 0.0
        %1119 = vmatpush1.msra.mxu0 0.0
        %1120 = vmatprep.subr.mxu0 0.0
        %1121 = vmatpush1.msra.mxu0 0.0
        %1122 = vmatprep.subr.mxu0 0.0
        %1123 = vmatpush1.msra.mxu0 0.0
        %1124 = vmatprep.subr.mxu0 0.0
        %1125 = vmatpush1.msra.mxu0 0.0
        %1126 = vmatprep.subr.mxu0 0.0
        %1127 = vmatpush1.msra.mxu0 0.0
        %1128 = vmatprep.subr.mxu0 0.0
        %1129 = vmatpush1.msra.mxu0 0.0
        %1130 = vmatprep.subr.mxu0 0.0
        %1131 = vmatpush1.msra.mxu0 0.0
        %1132 = vmatprep.subr.mxu0 0.0
        %1133 = vmatpush1.msra.mxu0 0.0
        %1134 = vmatprep.subr.mxu0 0.0
        %1135 = vmatpush1.msra.mxu0 0.0
        %1136 = vmatprep.subr.mxu0 0.0
        %1137 = vmatpush1.msra.mxu0 0.0
        %1138 = vmatprep.subr.mxu0 0.0
        %1139 = vmatpush1.msra.mxu0 0.0
        %1140 = vmatprep.subr.mxu0 0.0
        %1141 = vmatpush1.msra.mxu0 0.0
        %1142 = vmatprep.subr.mxu0 0.0
        %1143 = vmatpush1.msra.mxu0 0.0
        %1144 = vmatprep.subr.mxu0 0.0
        %1145 = vmatpush1.msra.mxu0 0.0
        %1146 = vmatprep.subr.mxu0 0.0
        %1147 = vmatpush1.msra.mxu0 0.0
        %1148 = vmatprep.subr.mxu0 0.0
        %1149 = vmatpush1.msra.mxu0 0.0
        %1150 = vmatprep.subr.mxu0 0.0
        %1151 = vmatpush1.msra.mxu0 0.0
        %1152 = vmatprep.subr.mxu0 0.0
        %1153 = vmatpush1.msra.mxu0 0.0
        %1154 = vmatprep.subr.mxu0 0.0
        %1155 = vmatpush1.msra.mxu0 0.0
        %1156 = vmatprep.subr.mxu0 0.0
        %1157 = vmatpush1.msra.mxu0 0.0
        %1158 = vmatprep.subr.mxu0 0.0
        %1159 = vmatpush1.msra.mxu0 0.0
        %1160 = vmatprep.subr.mxu0 0.0
        %1161 = vmatpush1.msra.mxu0 0.0
        %1162 = vmatprep.subr.mxu0 0.0
        %1163 = vmatpush1.msra.mxu0 0.0
        %1164 = vmatprep.subr.mxu0 0.0
        %1165 = vmatpush1.msra.mxu0 0.0
        %1166 = vmatprep.subr.mxu0 0.0
        %1167 = vmatpush1.msra.mxu0 0.0
        %1168 = vmatprep.subr.mxu0 0.0
        %1169 = vmatpush1.msra.mxu0 0.0
        %1170 = vmatprep.subr.mxu0 0.0
        %1171 = vmatpush1.msra.mxu0 0.0
        %1172 = vmatprep.subr.mxu0 0.0
        %1173 = vmatpush1.msra.mxu0 0.0
        %1174 = vmatprep.mubr.f32.mxu0 0.0
        %1175 = vmatmul.mubr.f32.gmra.mrb[0].mxu0 %v1087
        %v1176 = vpop.f32.mrb[0].mxu0
        %v1177 = vadd.f32 0.0, %v1176
        %v1178 = vpop.f32.mrb[0].mxu0
        %1179 = vmatprep.mubr.f32.mxu0 0.0
        %1180 = vmatmul.mubr.f32.gmra.mrb[0].mxu0 %v1090
        %v1181 = vpop.f32.mrb[0].mxu0
        %v1182 = vadd.f32 0.0, %v1181
        %v1183 = vpop.f32.mrb[0].mxu0
        %1184 = vmatprep.mubr.f32.mxu0 0.0
        %1185 = vmatmul.mubr.f32.gmra.mrb[0].mxu0 %v1093
        %v1186 = vpop.f32.mrb[0].mxu0
        %v1187 = vadd.f32 0.0, %v1186
        %v1188 = vpop.f32.mrb[0].mxu0
        %1189 = vmatprep.mubr.f32.mxu0 0.0
        %1190 = vmatmul.mubr.f32.gmra.mrb[0].mxu0 %v1096
        %v1191 = vpop.f32.mrb[0].mxu0
        %v1192 = vadd.f32 0.0, %v1191
        %v1193 = vpop.f32.mrb[0].mxu0
        %1194 = vmatprep.mubr.f32.mxu0 0.0
        %1195 = vmatmul.mubr.f32.gmra.mrb[0].mxu0 %v1099
        %v1196 = vpop.f32.mrb[0].mxu0
        %v1197 = vadd.f32 0.0, %v1196
        %v1198 = vpop.f32.mrb[0].mxu0
        %1199 = vmatprep.mubr.f32.mxu0 0.0
        %1200 = vmatmul.mubr.f32.gmra.mrb[0].mxu0 %v1102
        %v1201 = vpop.f32.mrb[0].mxu0
        %v1202 = vadd.f32 0.0, %v1201
        %v1203 = vpop.f32.mrb[0].mxu0
        %1204 = vmatprep.mubr.f32.mxu0 0.0
        %1205 = vmatmul.mubr.f32.gmra.mrb[0].mxu0 %v1105
        %v1206 = vpop.f32.mrb[0].mxu0
        %v1207 = vadd.f32 0.0, %v1206
        %v1208 = vpop.f32.mrb[0].mxu0
        %1209 = vmatprep.mubr.f32.mxu0 0.0
        %1210 = vmatmul.mubr.f32.gmra.mrb[0].mxu0 %v1108
        %v1211 = vpop.f32.mrb[0].mxu0
        %v1212 = vadd.f32 0.0, %v1211
        %v1213 = vpop.f32.mrb[0].mxu0
        %1214 = vdwg.mxu0
        %v1216 = vsel %vm914, %v1025, 0
        %v1219 = vsel %vm914, %v1026, 0
        %v1222 = vsel %vm914, %v1027, 0
        %v1225 = vsel %vm914, %v1028, 0
        %v1228 = vsel %vm914, %v1029, 0
        %v1231 = vsel %vm914, %v1030, 0
        %v1234 = vsel %vm914, %v1031, 0
        %v1237 = vsel %vm914, %v1032, 0
        %1239 = vmatprep.subr.mxu0 0.0
        %1240 = vmatpush1.msra.mxu0 %v1012
        %1241 = vmatprep.subr.mxu0 0.0
        %1242 = vmatpush1.msra.mxu0 %v1013
        %1243 = vmatprep.subr.mxu0 0.0
        %1244 = vmatpush1.msra.mxu0 %v1014
        %1245 = vmatprep.subr.mxu0 0.0
        %1246 = vmatpush1.msra.mxu0 %v1015
        %1247 = vmatprep.subr.mxu0 0.0
        %1248 = vmatpush1.msra.mxu0 0.0
        %1249 = vmatprep.subr.mxu0 0.0
        %1250 = vmatpush1.msra.mxu0 0.0
        %1251 = vmatprep.subr.mxu0 0.0
        %1252 = vmatpush1.msra.mxu0 0.0
        %1253 = vmatprep.subr.mxu0 0.0
        %1254 = vmatpush1.msra.mxu0 0.0
        %1255 = vmatprep.subr.mxu0 0.0
        %1256 = vmatpush1.msra.mxu0 0.0
        %1257 = vmatprep.subr.mxu0 0.0
        %1258 = vmatpush1.msra.mxu0 0.0
        %1259 = vmatprep.subr.mxu0 0.0
        %1260 = vmatpush1.msra.mxu0 0.0
        %1261 = vmatprep.subr.mxu0 0.0
        %1262 = vmatpush1.msra.mxu0 0.0
        %1263 = vmatprep.subr.mxu0 0.0
        %1264 = vmatpush1.msra.mxu0 0.0
        %1265 = vmatprep.subr.mxu0 0.0
        %1266 = vmatpush1.msra.mxu0 0.0
        %1267 = vmatprep.subr.mxu0 0.0
        %1268 = vmatpush1.msra.mxu0 0.0
        %1269 = vmatprep.subr.mxu0 0.0
        %1270 = vmatpush1.msra.mxu0 0.0
        %1271 = vmatprep.subr.mxu0 0.0
        %1272 = vmatpush1.msra.mxu0 0.0
        %1273 = vmatprep.subr.mxu0 0.0
        %1274 = vmatpush1.msra.mxu0 0.0
        %1275 = vmatprep.subr.mxu0 0.0
        %1276 = vmatpush1.msra.mxu0 0.0
        %1277 = vmatprep.subr.mxu0 0.0
        %1278 = vmatpush1.msra.mxu0 0.0
        %1279 = vmatprep.subr.mxu0 0.0
        %1280 = vmatpush1.msra.mxu0 0.0
        %1281 = vmatprep.subr.mxu0 0.0
        %1282 = vmatpush1.msra.mxu0 0.0
        %1283 = vmatprep.subr.mxu0 0.0
        %1284 = vmatpush1.msra.mxu0 0.0
        %1285 = vmatprep.subr.mxu0 0.0
        %1286 = vmatpush1.msra.mxu0 0.0
        %1287 = vmatprep.subr.mxu0 0.0
        %1288 = vmatpush1.msra.mxu0 0.0
        %1289 = vmatprep.subr.mxu0 0.0
        %1290 = vmatpush1.msra.mxu0 0.0
        %1291 = vmatprep.subr.mxu0 0.0
        %1292 = vmatpush1.msra.mxu0 0.0
        %1293 = vmatprep.subr.mxu0 0.0
        %1294 = vmatpush1.msra.mxu0 0.0
        %1295 = vmatprep.subr.mxu0 0.0
        %1296 = vmatpush1.msra.mxu0 0.0
        %1297 = vmatprep.subr.mxu0 0.0
        %1298 = vmatpush1.msra.mxu0 0.0
        %1299 = vmatprep.subr.mxu0 0.0
        %1300 = vmatpush1.msra.mxu0 0.0
        %1301 = vmatprep.subr.mxu0 0.0
        %1302 = vmatpush1.msra.mxu0 0.0
        %1303 = vmatprep.mubr.f32.mxu0 0.0
        %1304 = vmatmul.mubr.f32.gmra.mrb[0].mxu0 %v1216
        %v1305 = vpop.f32.mrb[0].mxu0
        %v1306 = vadd.f32 %v1177, %v1305
        %v1307 = vpop.f32.mrb[0].mxu0
        %1308 = vmatprep.mubr.f32.mxu0 0.0
        %1309 = vmatmul.mubr.f32.gmra.mrb[0].mxu0 %v1219
        %v1310 = vpop.f32.mrb[0].mxu0
        %v1311 = vadd.f32 %v1182, %v1310
        %v1312 = vpop.f32.mrb[0].mxu0
        %1313 = vmatprep.mubr.f32.mxu0 0.0
        %1314 = vmatmul.mubr.f32.gmra.mrb[0].mxu0 %v1222
        %v1315 = vpop.f32.mrb[0].mxu0
        %v1316 = vadd.f32 %v1187, %v1315
        %v1317 = vpop.f32.mrb[0].mxu0
        %1318 = vmatprep.mubr.f32.mxu0 0.0
        %1319 = vmatmul.mubr.f32.gmra.mrb[0].mxu0 %v1225
        %v1320 = vpop.f32.mrb[0].mxu0
        %v1321 = vadd.f32 %v1192, %v1320
        %v1322 = vpop.f32.mrb[0].mxu0
        %1323 = vmatprep.mubr.f32.mxu0 0.0
        %1324 = vmatmul.mubr.f32.gmra.mrb[0].mxu0 %v1228
        %v1325 = vpop.f32.mrb[0].mxu0
        %v1326 = vadd.f32 %v1197, %v1325
        %v1327 = vpop.f32.mrb[0].mxu0
        %1328 = vmatprep.mubr.f32.mxu0 0.0
        %1329 = vmatmul.mubr.f32.gmra.mrb[0].mxu0 %v1231
        %v1330 = vpop.f32.mrb[0].mxu0
        %v1331 = vadd.f32 %v1202, %v1330
        %v1332 = vpop.f32.mrb[0].mxu0
        %1333 = vmatprep.mubr.f32.mxu0 0.0
        %1334 = vmatmul.mubr.f32.gmra.mrb[0].mxu0 %v1234
        %v1335 = vpop.f32.mrb[0].mxu0
        %v1336 = vadd.f32 %v1207, %v1335
        %v1337 = vpop.f32.mrb[0].mxu0
        %1338 = vmatprep.mubr.f32.mxu0 0.0
        %1339 = vmatmul.mubr.f32.gmra.mrb[0].mxu0 %v1237
        %v1340 = vpop.f32.mrb[0].mxu0
        %v1341 = vadd.f32 %v1212, %v1340
        %v1342 = vpop.f32.mrb[0].mxu0
        %1343 = vdwg.mxu0
        %s1344 = scalar_lea.vmem %s3, 128
        %v1345 = vld [vmem:[%s1344] sm:$0xff]
        %v1346 = vld [vmem:[%s1344 + $0x8] sm:$0xff]
        %v1347 = vld [vmem:[%s1344 + $0x10] sm:$0xff]
        %v1348 = vld [vmem:[%s1344 + $0x18] sm:$0xff]
        %v1349 = vld [vmem:[%s1344 + $0x20] sm:$0xff]
        %v1350 = vld [vmem:[%s1344 + $0x28] sm:$0xff]
        %v1351 = vld [vmem:[%s1344 + $0x30] sm:$0xff]
        %v1352 = vld [vmem:[%s1344 + $0x38] sm:$0xff]
        %vm1353 = vcmp.eq.s32.totalorder %v704, 15
        %1354 = vrot.lane.b32.xlu0 %v1062, 127
        %v1355 = vpop.permute.xlu0 %1354
        %1356 = vrot.lane.b32.xlu0 %v1063, 127
        %v1357 = vpop.permute.xlu0 %1356
        %1358 = vrot.lane.b32.xlu0 %v1064, 127
        %v1359 = vpop.permute.xlu0 %1358
        %1360 = vrot.lane.b32.xlu0 %v1065, 127
        %v1361 = vpop.permute.xlu0 %1360
        %v1366 = vsel %vm1353, 0.0, %v1355
        %v1367 = vsel %vm1353, 0.0, %v1357
        %v1368 = vsel %vm1353, 0.0, %v1359
        %v1369 = vsel %vm1353, 0.0, %v1361
        %v1371 = vsel %vm914, %v1345, 0
        %v1374 = vsel %vm914, %v1346, 0
        %v1377 = vsel %vm914, %v1347, 0
        %v1380 = vsel %vm914, %v1348, 0
        %v1383 = vsel %vm914, %v1349, 0
        %v1386 = vsel %vm914, %v1350, 0
        %v1389 = vsel %vm914, %v1351, 0
        %v1392 = vsel %vm914, %v1352, 0
        %1394 = vmatprep.subr.mxu0 0.0
        %1395 = vmatpush1.msra.mxu0 %v1366
        %1396 = vmatprep.subr.mxu0 0.0
        %1397 = vmatpush1.msra.mxu0 %v1367
        %1398 = vmatprep.subr.mxu0 0.0
        %1399 = vmatpush1.msra.mxu0 %v1368
        %1400 = vmatprep.subr.mxu0 0.0
        %1401 = vmatpush1.msra.mxu0 %v1369
        %1402 = vmatprep.subr.mxu0 0.0
        %1403 = vmatpush1.msra.mxu0 0.0
        %1404 = vmatprep.subr.mxu0 0.0
        %1405 = vmatpush1.msra.mxu0 0.0
        %1406 = vmatprep.subr.mxu0 0.0
        %1407 = vmatpush1.msra.mxu0 0.0
        %1408 = vmatprep.subr.mxu0 0.0
        %1409 = vmatpush1.msra.mxu0 0.0
        %1410 = vmatprep.subr.mxu0 0.0
        %1411 = vmatpush1.msra.mxu0 0.0
        %1412 = vmatprep.subr.mxu0 0.0
        %1413 = vmatpush1.msra.mxu0 0.0
        %1414 = vmatprep.subr.mxu0 0.0
        %1415 = vmatpush1.msra.mxu0 0.0
        %1416 = vmatprep.subr.mxu0 0.0
        %1417 = vmatpush1.msra.mxu0 0.0
        %1418 = vmatprep.subr.mxu0 0.0
        %1419 = vmatpush1.msra.mxu0 0.0
        %1420 = vmatprep.subr.mxu0 0.0
        %1421 = vmatpush1.msra.mxu0 0.0
        %1422 = vmatprep.subr.mxu0 0.0
        %1423 = vmatpush1.msra.mxu0 0.0
        %1424 = vmatprep.subr.mxu0 0.0
        %1425 = vmatpush1.msra.mxu0 0.0
        %1426 = vmatprep.subr.mxu0 0.0
        %1427 = vmatpush1.msra.mxu0 0.0
        %1428 = vmatprep.subr.mxu0 0.0
        %1429 = vmatpush1.msra.mxu0 0.0
        %1430 = vmatprep.subr.mxu0 0.0
        %1431 = vmatpush1.msra.mxu0 0.0
        %1432 = vmatprep.subr.mxu0 0.0
        %1433 = vmatpush1.msra.mxu0 0.0
        %1434 = vmatprep.subr.mxu0 0.0
        %1435 = vmatpush1.msra.mxu0 0.0
        %1436 = vmatprep.subr.mxu0 0.0
        %1437 = vmatpush1.msra.mxu0 0.0
        %1438 = vmatprep.subr.mxu0 0.0
        %1439 = vmatpush1.msra.mxu0 0.0
        %1440 = vmatprep.subr.mxu0 0.0
        %1441 = vmatpush1.msra.mxu0 0.0
        %1442 = vmatprep.subr.mxu0 0.0
        %1443 = vmatpush1.msra.mxu0 0.0
        %1444 = vmatprep.subr.mxu0 0.0
        %1445 = vmatpush1.msra.mxu0 0.0
        %1446 = vmatprep.subr.mxu0 0.0
        %1447 = vmatpush1.msra.mxu0 0.0
        %1448 = vmatprep.subr.mxu0 0.0
        %1449 = vmatpush1.msra.mxu0 0.0
        %1450 = vmatprep.subr.mxu0 0.0
        %1451 = vmatpush1.msra.mxu0 0.0
        %1452 = vmatprep.subr.mxu0 0.0
        %1453 = vmatpush1.msra.mxu0 0.0
        %1454 = vmatprep.subr.mxu0 0.0
        %1455 = vmatpush1.msra.mxu0 0.0
        %1456 = vmatprep.subr.mxu0 0.0
        %1457 = vmatpush1.msra.mxu0 0.0
        %1458 = vmatprep.mubr.f32.mxu0 0.0
        %1459 = vmatmul.mubr.f32.gmra.mrb[0].mxu0 %v1371
        %v1460 = vpop.f32.mrb[0].mxu0
        %v1461 = vadd.f32 0.0, %v1460
        %v1462 = vpop.f32.mrb[0].mxu0
        %1463 = vmatprep.mubr.f32.mxu0 0.0
        %1464 = vmatmul.mubr.f32.gmra.mrb[0].mxu0 %v1374
        %v1465 = vpop.f32.mrb[0].mxu0
        %v1466 = vadd.f32 0.0, %v1465
        %v1467 = vpop.f32.mrb[0].mxu0
        %1468 = vmatprep.mubr.f32.mxu0 0.0
        %1469 = vmatmul.mubr.f32.gmra.mrb[0].mxu0 %v1377
        %v1470 = vpop.f32.mrb[0].mxu0
        %v1471 = vadd.f32 0.0, %v1470
        %v1472 = vpop.f32.mrb[0].mxu0
        %1473 = vmatprep.mubr.f32.mxu0 0.0
        %1474 = vmatmul.mubr.f32.gmra.mrb[0].mxu0 %v1380
        %v1475 = vpop.f32.mrb[0].mxu0
        %v1476 = vadd.f32 0.0, %v1475
        %v1477 = vpop.f32.mrb[0].mxu0
        %1478 = vmatprep.mubr.f32.mxu0 0.0
        %1479 = vmatmul.mubr.f32.gmra.mrb[0].mxu0 %v1383
        %v1480 = vpop.f32.mrb[0].mxu0
        %v1481 = vadd.f32 0.0, %v1480
        %v1482 = vpop.f32.mrb[0].mxu0
        %1483 = vmatprep.mubr.f32.mxu0 0.0
        %1484 = vmatmul.mubr.f32.gmra.mrb[0].mxu0 %v1386
        %v1485 = vpop.f32.mrb[0].mxu0
        %v1486 = vadd.f32 0.0, %v1485
        %v1487 = vpop.f32.mrb[0].mxu0
        %1488 = vmatprep.mubr.f32.mxu0 0.0
        %1489 = vmatmul.mubr.f32.gmra.mrb[0].mxu0 %v1389
        %v1490 = vpop.f32.mrb[0].mxu0
        %v1491 = vadd.f32 0.0, %v1490
        %v1492 = vpop.f32.mrb[0].mxu0
        %1493 = vmatprep.mubr.f32.mxu0 0.0
        %1494 = vmatmul.mubr.f32.gmra.mrb[0].mxu0 %v1392
        %v1495 = vpop.f32.mrb[0].mxu0
        %v1496 = vadd.f32 0.0, %v1495
        %v1497 = vpop.f32.mrb[0].mxu0
        %1498 = vdwg.mxu0
        %v1499 = vadd.f32 %v1306, %v1461
        %v1500 = vadd.f32 %v1311, %v1466
        %v1501 = vadd.f32 %v1316, %v1471
        %v1502 = vadd.f32 %v1321, %v1476
        %v1503 = vadd.f32 %v1326, %v1481
        %v1504 = vadd.f32 %v1331, %v1486
        %v1505 = vadd.f32 %v1336, %v1491
        %v1506 = vadd.f32 %v1341, %v1496
        %1508 = vset.pattern.permute.xlu0 0
        %1509 = vperm.xlu0 %1508, %v1016
        %v1510 = vpop.permute.xlu0 %1509
        %1513 = vset.pattern.permute.xlu0 0
        %1514 = vperm.xlu0 %1513, %v1017
        %v1515 = vpop.permute.xlu0 %1514
        %1518 = vset.pattern.permute.xlu0 0
        %1519 = vperm.xlu0 %1518, %v1018
        %v1520 = vpop.permute.xlu0 %1519
        %1523 = vset.pattern.permute.xlu0 0
        %1524 = vperm.xlu0 %1523, %v1019
        %v1525 = vpop.permute.xlu0 %1524
        %1528 = vset.pattern.permute.xlu0 0
        %1529 = vperm.xlu0 %1528, %v1020
        %v1530 = vpop.permute.xlu0 %1529
        %1533 = vset.pattern.permute.xlu0 0
        %1534 = vperm.xlu0 %1533, %v1021
        %v1535 = vpop.permute.xlu0 %1534
        %1538 = vset.pattern.permute.xlu0 0
        %1539 = vperm.xlu0 %1538, %v1022
        %v1540 = vpop.permute.xlu0 %1539
        %1543 = vset.pattern.permute.xlu0 0
        %1544 = vperm.xlu0 %1543, %v1023
        %v1545 = vpop.permute.xlu0 %1544
        %v1547 = vadd.f32 %v1499, %v1510
        %v1548 = vadd.f32 %v1500, %v1515
        %v1549 = vadd.f32 %v1501, %v1520
        %v1550 = vadd.f32 %v1502, %v1525
        %v1551 = vadd.f32 %v1503, %v1530
        %v1552 = vadd.f32 %v1504, %v1535
        %v1553 = vadd.f32 %v1505, %v1540
        %v1554 = vadd.f32 %v1506, %v1545
        %1555 = vrot.lane.b32.xlu0 %v1547, 16
        %v1556 = vpop.permute.xlu0 %1555
        %v1557 = vsel %vm1041, %v1556, %v1547
        %1558 = vrot.lane.b32.xlu0 %v1548, 16
        %v1559 = vpop.permute.xlu0 %1558
        %v1560 = vsel %vm1041, %v1559, %v1548
        %1561 = vrot.lane.b32.xlu0 %v1549, 16
        %v1562 = vpop.permute.xlu0 %1561
        %v1563 = vsel %vm1041, %v1562, %v1549
        %1564 = vrot.lane.b32.xlu0 %v1550, 16
        %v1565 = vpop.permute.xlu0 %1564
        %v1566 = vsel %vm1041, %v1565, %v1550
        %1567 = vrot.lane.b32.xlu0 %v1551, 16
        %v1568 = vpop.permute.xlu0 %1567
        %v1569 = vsel %vm1041, %v1568, %v1551
        %1570 = vrot.lane.b32.xlu0 %v1552, 16
        %v1571 = vpop.permute.xlu0 %1570
        %v1572 = vsel %vm1041, %v1571, %v1552
        %1573 = vrot.lane.b32.xlu0 %v1553, 16
        %v1574 = vpop.permute.xlu0 %1573
        %v1575 = vsel %vm1041, %v1574, %v1553
        %1576 = vrot.lane.b32.xlu0 %v1554, 16
        %v1577 = vpop.permute.xlu0 %1576
        %v1578 = vsel %vm1041, %v1577, %v1554
        %1579 = vrot.lane.b32.xlu0 %v1557, 16
        %v1580 = vpop.permute.xlu0 %1579
        %1581 = vrot.lane.b32.xlu0 %v1560, 16
        %v1582 = vpop.permute.xlu0 %1581
        %1583 = vrot.lane.b32.xlu0 %v1563, 16
        %v1584 = vpop.permute.xlu0 %1583
        %1585 = vrot.lane.b32.xlu0 %v1566, 16
        %v1586 = vpop.permute.xlu0 %1585
        %1587 = vrot.lane.b32.xlu0 %v1569, 16
        %v1588 = vpop.permute.xlu0 %1587
        %1589 = vrot.lane.b32.xlu0 %v1572, 16
        %v1590 = vpop.permute.xlu0 %1589
        %1591 = vrot.lane.b32.xlu0 %v1575, 16
        %v1592 = vpop.permute.xlu0 %1591
        %1593 = vrot.lane.b32.xlu0 %v1578, 16
        %v1594 = vpop.permute.xlu0 %1593
        %v1595 = vsel %vm1041, %v1580, %v1547
        %v1596 = vsel %vm1041, %v1582, %v1548
        %v1597 = vsel %vm1041, %v1584, %v1549
        %v1598 = vsel %vm1041, %v1586, %v1550
        %v1599 = vsel %vm1041, %v1588, %v1551
        %v1600 = vsel %vm1041, %v1590, %v1552
        %v1601 = vsel %vm1041, %v1592, %v1553
        %v1602 = vsel %vm1041, %v1594, %v1554
        %1611 = vrot.lane.b32.xlu0 %v1595, 127
        %v1612 = vpop.permute.xlu0 %1611
        %1613 = vrot.lane.b32.xlu0 %v1596, 127
        %v1614 = vpop.permute.xlu0 %1613
        %1615 = vrot.lane.b32.xlu0 %v1597, 127
        %v1616 = vpop.permute.xlu0 %1615
        %1617 = vrot.lane.b32.xlu0 %v1598, 127
        %v1618 = vpop.permute.xlu0 %1617
        %1619 = vrot.lane.b32.xlu0 %v1599, 127
        %v1620 = vpop.permute.xlu0 %1619
        %1621 = vrot.lane.b32.xlu0 %v1600, 127
        %v1622 = vpop.permute.xlu0 %1621
        %1623 = vrot.lane.b32.xlu0 %v1601, 127
        %v1624 = vpop.permute.xlu0 %1623
        %1625 = vrot.lane.b32.xlu0 %v1602, 127
        %v1626 = vpop.permute.xlu0 %1625
        %v1635 = vmax.f32 %v1547, %v1612
        %v1636 = vmax.f32 %v1548, %v1614
        %v1637 = vmax.f32 %v1549, %v1616
        %v1638 = vmax.f32 %v1550, %v1618
        %v1639 = vmax.f32 %v1551, %v1620
        %v1640 = vmax.f32 %v1552, %v1622
        %v1641 = vmax.f32 %v1553, %v1624
        %v1642 = vmax.f32 %v1554, %v1626
        %v1643 = vld [vmem:[%s8] sm:$0xff]
        %v1644 = vld [vmem:[%s8 + $0x8] sm:$0xff]
        %vm1645 = vcmask 130048
        %v1647 = vsel %vm1645, %v1635, 0
        %v1650 = vsel %vm1645, %v1636, 0
        %v1653 = vsel %vm1645, %v1637, 0
        %v1656 = vsel %vm1645, %v1638, 0
        %v1659 = vsel %vm1645, %v1639, 0
        %v1662 = vsel %vm1645, %v1640, 0
        %v1665 = vsel %vm1645, %v1641, 0
        %v1668 = vsel %vm1645, %v1642, 0
        %1670 = vmatprep.subr.mxu0 0.0
        %1671 = vmatpush1.msra.mxu0 %v1643
        %1672 = vmatprep.subr.mxu0 0.0
        %1673 = vmatpush1.msra.mxu0 %v1644
        %1674 = vmatprep.subr.mxu0 0.0
        %1675 = vmatpush1.msra.mxu0 0.0
        %1676 = vmatprep.subr.mxu0 0.0
        %1677 = vmatpush1.msra.mxu0 0.0
        %1678 = vmatprep.subr.mxu0 0.0
        %1679 = vmatpush1.msra.mxu0 0.0
        %1680 = vmatprep.subr.mxu0 0.0
        %1681 = vmatpush1.msra.mxu0 0.0
        %1682 = vmatprep.subr.mxu0 0.0
        %1683 = vmatpush1.msra.mxu0 0.0
        %1684 = vmatprep.subr.mxu0 0.0
        %1685 = vmatpush1.msra.mxu0 0.0
        %1686 = vmatprep.subr.mxu0 0.0
        %1687 = vmatpush1.msra.mxu0 0.0
        %1688 = vmatprep.subr.mxu0 0.0
        %1689 = vmatpush1.msra.mxu0 0.0
        %1690 = vmatprep.subr.mxu0 0.0
        %1691 = vmatpush1.msra.mxu0 0.0
        %1692 = vmatprep.subr.mxu0 0.0
        %1693 = vmatpush1.msra.mxu0 0.0
        %1694 = vmatprep.subr.mxu0 0.0
        %1695 = vmatpush1.msra.mxu0 0.0
        %1696 = vmatprep.subr.mxu0 0.0
        %1697 = vmatpush1.msra.mxu0 0.0
        %1698 = vmatprep.subr.mxu0 0.0
        %1699 = vmatpush1.msra.mxu0 0.0
        %1700 = vmatprep.subr.mxu0 0.0
        %1701 = vmatpush1.msra.mxu0 0.0
        %1702 = vmatprep.subr.mxu0 0.0
        %1703 = vmatpush1.msra.mxu0 0.0
        %1704 = vmatprep.subr.mxu0 0.0
        %1705 = vmatpush1.msra.mxu0 0.0
        %1706 = vmatprep.subr.mxu0 0.0
        %1707 = vmatpush1.msra.mxu0 0.0
        %1708 = vmatprep.subr.mxu0 0.0
        %1709 = vmatpush1.msra.mxu0 0.0
        %1710 = vmatprep.subr.mxu0 0.0
        %1711 = vmatpush1.msra.mxu0 0.0
        %1712 = vmatprep.subr.mxu0 0.0
        %1713 = vmatpush1.msra.mxu0 0.0
        %1714 = vmatprep.subr.mxu0 0.0
        %1715 = vmatpush1.msra.mxu0 0.0
        %1716 = vmatprep.subr.mxu0 0.0
        %1717 = vmatpush1.msra.mxu0 0.0
        %1718 = vmatprep.subr.mxu0 0.0
        %1719 = vmatpush1.msra.mxu0 0.0
        %1720 = vmatprep.subr.mxu0 0.0
        %1721 = vmatpush1.msra.mxu0 0.0
        %1722 = vmatprep.subr.mxu0 0.0
        %1723 = vmatpush1.msra.mxu0 0.0
        %1724 = vmatprep.subr.mxu0 0.0
        %1725 = vmatpush1.msra.mxu0 0.0
        %1726 = vmatprep.subr.mxu0 0.0
        %1727 = vmatpush1.msra.mxu0 0.0
        %1728 = vmatprep.subr.mxu0 0.0
        %1729 = vmatpush1.msra.mxu0 0.0
        %1730 = vmatprep.subr.mxu0 0.0
        %1731 = vmatpush1.msra.mxu0 0.0
        %1732 = vmatprep.subr.mxu0 0.0
        %1733 = vmatpush1.msra.mxu0 0.0
        %1734 = vmatprep.mubr.f32.mxu0 0.0
        %1735 = vmatmul.mubr.f32.gmra.mrb[0].mxu0 %v1647
        %v1736 = vpop.f32.mrb[0].mxu0
        %v1737 = vadd.f32 0.0, %v1736
        %v1738 = vpop.f32.mrb[0].mxu0
        %1739 = vmatprep.mubr.f32.mxu0 0.0
        %1740 = vmatmul.mubr.f32.gmra.mrb[0].mxu0 %v1650
        %v1741 = vpop.f32.mrb[0].mxu0
        %v1742 = vadd.f32 0.0, %v1741
        %v1743 = vpop.f32.mrb[0].mxu0
        %1744 = vmatprep.mubr.f32.mxu0 0.0
        %1745 = vmatmul.mubr.f32.gmra.mrb[0].mxu0 %v1653
        %v1746 = vpop.f32.mrb[0].mxu0
        %v1747 = vadd.f32 0.0, %v1746
        %v1748 = vpop.f32.mrb[0].mxu0
        %1749 = vmatprep.mubr.f32.mxu0 0.0
        %1750 = vmatmul.mubr.f32.gmra.mrb[0].mxu0 %v1656
        %v1751 = vpop.f32.mrb[0].mxu0
        %v1752 = vadd.f32 0.0, %v1751
        %v1753 = vpop.f32.mrb[0].mxu0
        %1754 = vmatprep.mubr.f32.mxu0 0.0
        %1755 = vmatmul.mubr.f32.gmra.mrb[0].mxu0 %v1659
        %v1756 = vpop.f32.mrb[0].mxu0
        %v1757 = vadd.f32 0.0, %v1756
        %v1758 = vpop.f32.mrb[0].mxu0
        %1759 = vmatprep.mubr.f32.mxu0 0.0
        %1760 = vmatmul.mubr.f32.gmra.mrb[0].mxu0 %v1662
        %v1761 = vpop.f32.mrb[0].mxu0
        %v1762 = vadd.f32 0.0, %v1761
        %v1763 = vpop.f32.mrb[0].mxu0
        %1764 = vmatprep.mubr.f32.mxu0 0.0
        %1765 = vmatmul.mubr.f32.gmra.mrb[0].mxu0 %v1665
        %v1766 = vpop.f32.mrb[0].mxu0
        %v1767 = vadd.f32 0.0, %v1766
        %v1768 = vpop.f32.mrb[0].mxu0
        %1769 = vmatprep.mubr.f32.mxu0 0.0
        %1770 = vmatmul.mubr.f32.gmra.mrb[0].mxu0 %v1668
        %v1771 = vpop.f32.mrb[0].mxu0
        %v1772 = vadd.f32 0.0, %v1771
        %v1773 = vpop.f32.mrb[0].mxu0
        %1774 = vdwg.mxu0
        %v1775 = vmax.f32 %v1737, 0.0
        %v1776 = vmax.f32 %v1742, 0.0
        %v1777 = vmax.f32 %v1747, 0.0
        %v1778 = vmax.f32 %v1752, 0.0
        %v1779 = vmax.f32 %v1757, 0.0
        %v1780 = vmax.f32 %v1762, 0.0
        %v1781 = vmax.f32 %v1767, 0.0
        %v1782 = vmax.f32 %v1772, 0.0
        %v1783 = vld [vmem:[%s6] sm:$0xff]
        %v1784 = vld [vmem:[%s6 + $0x8] sm:$0xff]
        %v1785 = vld [vmem:[%s6 + $0x10] sm:$0xff]
        %v1786 = vld [vmem:[%s6 + $0x18] sm:$0xff]
        %v1787 = vld [vmem:[%s6 + $0x20] sm:$0xff]
        %v1788 = vld [vmem:[%s6 + $0x28] sm:$0xff]
        %v1789 = vld [vmem:[%s6 + $0x30] sm:$0xff]
        %v1790 = vld [vmem:[%s6 + $0x38] sm:$0xff]
        %v1791 = vld [vmem:[%s6 + $0x40] sm:$0xff]
        %v1792 = vld [vmem:[%s6 + $0x48] sm:$0xff]
        %v1793 = vld [vmem:[%s6 + $0x50] sm:$0xff]
        %v1794 = vld [vmem:[%s6 + $0x58] sm:$0xff]
        %v1795 = vld [vmem:[%s6 + $0x60] sm:$0xff]
        %v1796 = vld [vmem:[%s6 + $0x68] sm:$0xff]
        %v1797 = vld [vmem:[%s6 + $0x70] sm:$0xff]
        %v1798 = vld [vmem:[%s6 + $0x78] sm:$0xff]
        %s1799 = scalar_lea.vmem %s5, 128
        %v1800 = vld [vmem:[%s1799] sm:$0xff]
        %v1801 = vld [vmem:[%s1799 + $0x8] sm:$0xff]
        %v1802 = vld [vmem:[%s1799 + $0x10] sm:$0xff]
        %v1803 = vld [vmem:[%s1799 + $0x18] sm:$0xff]
        %v1804 = vld [vmem:[%s1799 + $0x20] sm:$0xff]
        %v1805 = vld [vmem:[%s1799 + $0x28] sm:$0xff]
        %v1806 = vld [vmem:[%s1799 + $0x30] sm:$0xff]
        %v1807 = vld [vmem:[%s1799 + $0x38] sm:$0xff]
        %v1808 = vld [vmem:[%s1799 + $0x40] sm:$0xff]
        %v1809 = vld [vmem:[%s1799 + $0x48] sm:$0xff]
        %v1810 = vld [vmem:[%s1799 + $0x50] sm:$0xff]
        %v1811 = vld [vmem:[%s1799 + $0x58] sm:$0xff]
        %v1812 = vld [vmem:[%s1799 + $0x60] sm:$0xff]
        %v1813 = vld [vmem:[%s1799 + $0x68] sm:$0xff]
        %v1814 = vld [vmem:[%s1799 + $0x70] sm:$0xff]
        %v1815 = vld [vmem:[%s1799 + $0x78] sm:$0xff]
        %v1816 = vld [vmem:[%s5] sm:$0xff]
        %v1817 = vld [vmem:[%s5 + $0x8] sm:$0xff]
        %v1818 = vld [vmem:[%s5 + $0x10] sm:$0xff]
        %v1819 = vld [vmem:[%s5 + $0x18] sm:$0xff]
        %v1820 = vld [vmem:[%s5 + $0x20] sm:$0xff]
        %v1821 = vld [vmem:[%s5 + $0x28] sm:$0xff]
        %v1822 = vld [vmem:[%s5 + $0x30] sm:$0xff]
        %v1823 = vld [vmem:[%s5 + $0x38] sm:$0xff]
        %v1824 = vld [vmem:[%s5 + $0x40] sm:$0xff]
        %v1825 = vld [vmem:[%s5 + $0x48] sm:$0xff]
        %v1826 = vld [vmem:[%s5 + $0x50] sm:$0xff]
        %v1827 = vld [vmem:[%s5 + $0x58] sm:$0xff]
        %v1828 = vld [vmem:[%s5 + $0x60] sm:$0xff]
        %v1829 = vld [vmem:[%s5 + $0x68] sm:$0xff]
        %v1830 = vld [vmem:[%s5 + $0x70] sm:$0xff]
        %v1831 = vld [vmem:[%s5 + $0x78] sm:$0xff]
        %vm1832 = vcmask 1047616
        %1833 = vrot.lane.b32.xlu0 %v1775, 8
        %v1834 = vpop.permute.xlu0 %1833
        %v1835 = vsel %vm1832, %v1834, %v1775
        %1836 = vrot.lane.b32.xlu0 %v1776, 8
        %v1837 = vpop.permute.xlu0 %1836
        %v1838 = vsel %vm1832, %v1837, %v1776
        %1839 = vrot.lane.b32.xlu0 %v1777, 8
        %v1840 = vpop.permute.xlu0 %1839
        %v1841 = vsel %vm1832, %v1840, %v1777
        %1842 = vrot.lane.b32.xlu0 %v1778, 8
        %v1843 = vpop.permute.xlu0 %1842
        %v1844 = vsel %vm1832, %v1843, %v1778
        %1845 = vrot.lane.b32.xlu0 %v1779, 8
        %v1846 = vpop.permute.xlu0 %1845
        %v1847 = vsel %vm1832, %v1846, %v1779
        %1848 = vrot.lane.b32.xlu0 %v1780, 8
        %v1849 = vpop.permute.xlu0 %1848
        %v1850 = vsel %vm1832, %v1849, %v1780
        %1851 = vrot.lane.b32.xlu0 %v1781, 8
        %v1852 = vpop.permute.xlu0 %1851
        %v1853 = vsel %vm1832, %v1852, %v1781
        %1854 = vrot.lane.b32.xlu0 %v1782, 8
        %v1855 = vpop.permute.xlu0 %1854
        %v1856 = vsel %vm1832, %v1855, %v1782
        %1857 = vrot.lane.b32.xlu0 %v1835, 8
        %v1858 = vpop.permute.xlu0 %1857
        %1859 = vrot.lane.b32.xlu0 %v1838, 8
        %v1860 = vpop.permute.xlu0 %1859
        %1861 = vrot.lane.b32.xlu0 %v1841, 8
        %v1862 = vpop.permute.xlu0 %1861
        %1863 = vrot.lane.b32.xlu0 %v1844, 8
        %v1864 = vpop.permute.xlu0 %1863
        %1865 = vrot.lane.b32.xlu0 %v1847, 8
        %v1866 = vpop.permute.xlu0 %1865
        %1867 = vrot.lane.b32.xlu0 %v1850, 8
        %v1868 = vpop.permute.xlu0 %1867
        %1869 = vrot.lane.b32.xlu0 %v1853, 8
        %v1870 = vpop.permute.xlu0 %1869
        %1871 = vrot.lane.b32.xlu0 %v1856, 8
        %v1872 = vpop.permute.xlu0 %1871
        %v1873 = vsel %vm1832, %v1858, %v1775
        %v1874 = vsel %vm1832, %v1860, %v1776
        %v1875 = vsel %vm1832, %v1862, %v1777
        %v1876 = vsel %vm1832, %v1864, %v1778
        %v1877 = vsel %vm1832, %v1866, %v1779
        %v1878 = vsel %vm1832, %v1868, %v1780
        %v1879 = vsel %vm1832, %v1870, %v1781
        %v1880 = vsel %vm1832, %v1872, %v1782
        %1889 = vrot.lane.b32.xlu0 %v1873, 121
        %v1890 = vpop.permute.xlu0 %1889
        %1891 = vrot.lane.b32.xlu0 %v1874, 121
        %v1892 = vpop.permute.xlu0 %1891
        %1893 = vrot.lane.b32.xlu0 %v1875, 121
        %v1894 = vpop.permute.xlu0 %1893
        %1895 = vrot.lane.b32.xlu0 %v1876, 121
        %v1896 = vpop.permute.xlu0 %1895
        %1897 = vrot.lane.b32.xlu0 %v1877, 121
        %v1898 = vpop.permute.xlu0 %1897
        %1899 = vrot.lane.b32.xlu0 %v1878, 121
        %v1900 = vpop.permute.xlu0 %1899
        %1901 = vrot.lane.b32.xlu0 %v1879, 121
        %v1902 = vpop.permute.xlu0 %1901
        %1903 = vrot.lane.b32.xlu0 %v1880, 121
        %v1904 = vpop.permute.xlu0 %1903
        %v1913 = vsel %vm705, 0.0, %v1890
        %v1914 = vsel %vm705, 0.0, %v1892
        %v1915 = vsel %vm705, 0.0, %v1894
        %v1916 = vsel %vm705, 0.0, %v1896
        %v1917 = vsel %vm705, 0.0, %v1898
        %v1918 = vsel %vm705, 0.0, %v1900
        %v1919 = vsel %vm705, 0.0, %v1902
        %v1920 = vsel %vm705, 0.0, %v1904
        %vm1921 = vcmask 523264
        %v1923 = vsel %vm1921, %v1816, 0
        %v1926 = vsel %vm1921, %v1817, 0
        %v1929 = vsel %vm1921, %v1818, 0
        %v1932 = vsel %vm1921, %v1819, 0
        %v1935 = vsel %vm1921, %v1820, 0
        %v1938 = vsel %vm1921, %v1821, 0
        %v1941 = vsel %vm1921, %v1822, 0
        %v1944 = vsel %vm1921, %v1823, 0
        %v1947 = vsel %vm1921, %v1824, 0
        %v1950 = vsel %vm1921, %v1825, 0
        %v1953 = vsel %vm1921, %v1826, 0
        %v1956 = vsel %vm1921, %v1827, 0
        %v1959 = vsel %vm1921, %v1828, 0
        %v1962 = vsel %vm1921, %v1829, 0
        %v1965 = vsel %vm1921, %v1830, 0
        %v1968 = vsel %vm1921, %v1831, 0
        %1970 = vmatprep.subr.mxu0 0.0
        %1971 = vmatpush1.msra.mxu0 %v1913
        %1972 = vmatprep.subr.mxu0 0.0
        %1973 = vmatpush1.msra.mxu0 %v1914
        %1974 = vmatprep.subr.mxu0 0.0
        %1975 = vmatpush1.msra.mxu0 %v1915
        %1976 = vmatprep.subr.mxu0 0.0
        %1977 = vmatpush1.msra.mxu0 %v1916
        %1978 = vmatprep.subr.mxu0 0.0
        %1979 = vmatpush1.msra.mxu0 %v1917
        %1980 = vmatprep.subr.mxu0 0.0
        %1981 = vmatpush1.msra.mxu0 %v1918
        %1982 = vmatprep.subr.mxu0 0.0
        %1983 = vmatpush1.msra.mxu0 %v1919
        %1984 = vmatprep.subr.mxu0 0.0
        %1985 = vmatpush1.msra.mxu0 %v1920
        %1986 = vmatprep.subr.mxu0 0.0
        %1987 = vmatpush1.msra.mxu0 0.0
        %1988 = vmatprep.subr.mxu0 0.0
        %1989 = vmatpush1.msra.mxu0 0.0
        %1990 = vmatprep.subr.mxu0 0.0
        %1991 = vmatpush1.msra.mxu0 0.0
        %1992 = vmatprep.subr.mxu0 0.0
        %1993 = vmatpush1.msra.mxu0 0.0
        %1994 = vmatprep.subr.mxu0 0.0
        %1995 = vmatpush1.msra.mxu0 0.0
        %1996 = vmatprep.subr.mxu0 0.0
        %1997 = vmatpush1.msra.mxu0 0.0
        %1998 = vmatprep.subr.mxu0 0.0
        %1999 = vmatpush1.msra.mxu0 0.0
        %2000 = vmatprep.subr.mxu0 0.0
        %2001 = vmatpush1.msra.mxu0 0.0
        %2002 = vmatprep.subr.mxu0 0.0
        %2003 = vmatpush1.msra.mxu0 0.0
        %2004 = vmatprep.subr.mxu0 0.0
        %2005 = vmatpush1.msra.mxu0 0.0
        %2006 = vmatprep.subr.mxu0 0.0
        %2007 = vmatpush1.msra.mxu0 0.0
        %2008 = vmatprep.subr.mxu0 0.0
        %2009 = vmatpush1.msra.mxu0 0.0
        %2010 = vmatprep.subr.mxu0 0.0
        %2011 = vmatpush1.msra.mxu0 0.0
        %2012 = vmatprep.subr.mxu0 0.0
        %2013 = vmatpush1.msra.mxu0 0.0
        %2014 = vmatprep.subr.mxu0 0.0
        %2015 = vmatpush1.msra.mxu0 0.0
        %2016 = vmatprep.subr.mxu0 0.0
        %2017 = vmatpush1.msra.mxu0 0.0
        %2018 = vmatprep.subr.mxu0 0.0
        %2019 = vmatpush1.msra.mxu0 0.0
        %2020 = vmatprep.subr.mxu0 0.0
        %2021 = vmatpush1.msra.mxu0 0.0
        %2022 = vmatprep.subr.mxu0 0.0
        %2023 = vmatpush1.msra.mxu0 0.0
        %2024 = vmatprep.subr.mxu0 0.0
        %2025 = vmatpush1.msra.mxu0 0.0
        %2026 = vmatprep.subr.mxu0 0.0
        %2027 = vmatpush1.msra.mxu0 0.0
        %2028 = vmatprep.subr.mxu0 0.0
        %2029 = vmatpush1.msra.mxu0 0.0
        %2030 = vmatprep.subr.mxu0 0.0
        %2031 = vmatpush1.msra.mxu0 0.0
        %2032 = vmatprep.subr.mxu0 0.0
        %2033 = vmatpush1.msra.mxu0 0.0
        %2034 = vmatprep.mubr.f32.mxu0 0.0
        %2035 = vmatmul.mubr.f32.gmra.mrb[0].mxu0 %v1923
        %v2036 = vpop.f32.mrb[0].mxu0
        %v2037 = vadd.f32 0.0, %v2036
        %v2038 = vpop.f32.mrb[0].mxu0
        %2039 = vmatprep.mubr.f32.mxu0 0.0
        %2040 = vmatmul.mubr.f32.gmra.mrb[0].mxu0 %v1926
        %v2041 = vpop.f32.mrb[0].mxu0
        %v2042 = vadd.f32 0.0, %v2041
        %v2043 = vpop.f32.mrb[0].mxu0
        %2044 = vmatprep.mubr.f32.mxu0 0.0
        %2045 = vmatmul.mubr.f32.gmra.mrb[0].mxu0 %v1929
        %v2046 = vpop.f32.mrb[0].mxu0
        %v2047 = vadd.f32 0.0, %v2046
        %v2048 = vpop.f32.mrb[0].mxu0
        %2049 = vmatprep.mubr.f32.mxu0 0.0
        %2050 = vmatmul.mubr.f32.gmra.mrb[0].mxu0 %v1932
        %v2051 = vpop.f32.mrb[0].mxu0
        %v2052 = vadd.f32 0.0, %v2051
        %v2053 = vpop.f32.mrb[0].mxu0
        %2054 = vmatprep.mubr.f32.mxu0 0.0
        %2055 = vmatmul.mubr.f32.gmra.mrb[0].mxu0 %v1935
        %v2056 = vpop.f32.mrb[0].mxu0
        %v2057 = vadd.f32 0.0, %v2056
        %v2058 = vpop.f32.mrb[0].mxu0
        %2059 = vmatprep.mubr.f32.mxu0 0.0
        %2060 = vmatmul.mubr.f32.gmra.mrb[0].mxu0 %v1938
        %v2061 = vpop.f32.mrb[0].mxu0
        %v2062 = vadd.f32 0.0, %v2061
        %v2063 = vpop.f32.mrb[0].mxu0
        %2064 = vmatprep.mubr.f32.mxu0 0.0
        %2065 = vmatmul.mubr.f32.gmra.mrb[0].mxu0 %v1941
        %v2066 = vpop.f32.mrb[0].mxu0
        %v2067 = vadd.f32 0.0, %v2066
        %v2068 = vpop.f32.mrb[0].mxu0
        %2069 = vmatprep.mubr.f32.mxu0 0.0
        %2070 = vmatmul.mubr.f32.gmra.mrb[0].mxu0 %v1944
        %v2071 = vpop.f32.mrb[0].mxu0
        %v2072 = vadd.f32 0.0, %v2071
        %v2073 = vpop.f32.mrb[0].mxu0
        %2074 = vmatprep.mubr.f32.mxu0 0.0
        %2075 = vmatmul.mubr.f32.gmra.mrb[0].mxu0 %v1947
        %v2076 = vpop.f32.mrb[0].mxu0
        %v2077 = vadd.f32 0.0, %v2076
        %v2078 = vpop.f32.mrb[0].mxu0
        %2079 = vmatprep.mubr.f32.mxu0 0.0
        %2080 = vmatmul.mubr.f32.gmra.mrb[0].mxu0 %v1950
        %v2081 = vpop.f32.mrb[0].mxu0
        %v2082 = vadd.f32 0.0, %v2081
        %v2083 = vpop.f32.mrb[0].mxu0
        %2084 = vmatprep.mubr.f32.mxu0 0.0
        %2085 = vmatmul.mubr.f32.gmra.mrb[0].mxu0 %v1953
        %v2086 = vpop.f32.mrb[0].mxu0
        %v2087 = vadd.f32 0.0, %v2086
        %v2088 = vpop.f32.mrb[0].mxu0
        %2089 = vmatprep.mubr.f32.mxu0 0.0
        %2090 = vmatmul.mubr.f32.gmra.mrb[0].mxu0 %v1956
        %v2091 = vpop.f32.mrb[0].mxu0
        %v2092 = vadd.f32 0.0, %v2091
        %v2093 = vpop.f32.mrb[0].mxu0
        %2094 = vmatprep.mubr.f32.mxu0 0.0
        %2095 = vmatmul.mubr.f32.gmra.mrb[0].mxu0 %v1959
        %v2096 = vpop.f32.mrb[0].mxu0
        %v2097 = vadd.f32 0.0, %v2096
        %v2098 = vpop.f32.mrb[0].mxu0
        %2099 = vmatprep.mubr.f32.mxu0 0.0
        %2100 = vmatmul.mubr.f32.gmra.mrb[0].mxu0 %v1962
        %v2101 = vpop.f32.mrb[0].mxu0
        %v2102 = vadd.f32 0.0, %v2101
        %v2103 = vpop.f32.mrb[0].mxu0
        %2104 = vmatprep.mubr.f32.mxu0 0.0
        %2105 = vmatmul.mubr.f32.gmra.mrb[0].mxu0 %v1965
        %v2106 = vpop.f32.mrb[0].mxu0
        %v2107 = vadd.f32 0.0, %v2106
        %v2108 = vpop.f32.mrb[0].mxu0
        %2109 = vmatprep.mubr.f32.mxu0 0.0
        %2110 = vmatmul.mubr.f32.gmra.mrb[0].mxu0 %v1968
        %v2111 = vpop.f32.mrb[0].mxu0
        %v2112 = vadd.f32 0.0, %v2111
        %v2113 = vpop.f32.mrb[0].mxu0
        %2114 = vdwg.mxu0
        %v2116 = vsel %vm1921, %v1800, 0
        %v2119 = vsel %vm1921, %v1801, 0
        %v2122 = vsel %vm1921, %v1802, 0
        %v2125 = vsel %vm1921, %v1803, 0
        %v2128 = vsel %vm1921, %v1804, 0
        %v2131 = vsel %vm1921, %v1805, 0
        %v2134 = vsel %vm1921, %v1806, 0
        %v2137 = vsel %vm1921, %v1807, 0
        %v2140 = vsel %vm1921, %v1808, 0
        %v2143 = vsel %vm1921, %v1809, 0
        %v2146 = vsel %vm1921, %v1810, 0
        %v2149 = vsel %vm1921, %v1811, 0
        %v2152 = vsel %vm1921, %v1812, 0
        %v2155 = vsel %vm1921, %v1813, 0
        %v2158 = vsel %vm1921, %v1814, 0
        %v2161 = vsel %vm1921, %v1815, 0
        %2163 = vmatprep.subr.mxu0 0.0
        %2164 = vmatpush1.msra.mxu0 %v1775
        %2165 = vmatprep.subr.mxu0 0.0
        %2166 = vmatpush1.msra.mxu0 %v1776
        %2167 = vmatprep.subr.mxu0 0.0
        %2168 = vmatpush1.msra.mxu0 %v1777
        %2169 = vmatprep.subr.mxu0 0.0
        %2170 = vmatpush1.msra.mxu0 %v1778
        %2171 = vmatprep.subr.mxu0 0.0
        %2172 = vmatpush1.msra.mxu0 %v1779
        %2173 = vmatprep.subr.mxu0 0.0
        %2174 = vmatpush1.msra.mxu0 %v1780
        %2175 = vmatprep.subr.mxu0 0.0
        %2176 = vmatpush1.msra.mxu0 %v1781
        %2177 = vmatprep.subr.mxu0 0.0
        %2178 = vmatpush1.msra.mxu0 %v1782
        %2179 = vmatprep.subr.mxu0 0.0
        %2180 = vmatpush1.msra.mxu0 0.0
        %2181 = vmatprep.subr.mxu0 0.0
        %2182 = vmatpush1.msra.mxu0 0.0
        %2183 = vmatprep.subr.mxu0 0.0
        %2184 = vmatpush1.msra.mxu0 0.0
        %2185 = vmatprep.subr.mxu0 0.0
        %2186 = vmatpush1.msra.mxu0 0.0
        %2187 = vmatprep.subr.mxu0 0.0
        %2188 = vmatpush1.msra.mxu0 0.0
        %2189 = vmatprep.subr.mxu0 0.0
        %2190 = vmatpush1.msra.mxu0 0.0
        %2191 = vmatprep.subr.mxu0 0.0
        %2192 = vmatpush1.msra.mxu0 0.0
        %2193 = vmatprep.subr.mxu0 0.0
        %2194 = vmatpush1.msra.mxu0 0.0
        %2195 = vmatprep.subr.mxu0 0.0
        %2196 = vmatpush1.msra.mxu0 0.0
        %2197 = vmatprep.subr.mxu0 0.0
        %2198 = vmatpush1.msra.mxu0 0.0
        %2199 = vmatprep.subr.mxu0 0.0
        %2200 = vmatpush1.msra.mxu0 0.0
        %2201 = vmatprep.subr.mxu0 0.0
        %2202 = vmatpush1.msra.mxu0 0.0
        %2203 = vmatprep.subr.mxu0 0.0
        %2204 = vmatpush1.msra.mxu0 0.0
        %2205 = vmatprep.subr.mxu0 0.0
        %2206 = vmatpush1.msra.mxu0 0.0
        %2207 = vmatprep.subr.mxu0 0.0
        %2208 = vmatpush1.msra.mxu0 0.0
        %2209 = vmatprep.subr.mxu0 0.0
        %2210 = vmatpush1.msra.mxu0 0.0
        %2211 = vmatprep.subr.mxu0 0.0
        %2212 = vmatpush1.msra.mxu0 0.0
        %2213 = vmatprep.subr.mxu0 0.0
        %2214 = vmatpush1.msra.mxu0 0.0
        %2215 = vmatprep.subr.mxu0 0.0
        %2216 = vmatpush1.msra.mxu0 0.0
        %2217 = vmatprep.subr.mxu0 0.0
        %2218 = vmatpush1.msra.mxu0 0.0
        %2219 = vmatprep.subr.mxu0 0.0
        %2220 = vmatpush1.msra.mxu0 0.0
        %2221 = vmatprep.subr.mxu0 0.0
        %2222 = vmatpush1.msra.mxu0 0.0
        %2223 = vmatprep.subr.mxu0 0.0
        %2224 = vmatpush1.msra.mxu0 0.0
        %2225 = vmatprep.subr.mxu0 0.0
        %2226 = vmatpush1.msra.mxu0 0.0
        %2227 = vmatprep.mubr.f32.mxu0 0.0
        %2228 = vmatmul.mubr.f32.gmra.mrb[0].mxu0 %v2116
        %v2229 = vpop.f32.mrb[0].mxu0
        %v2230 = vadd.f32 %v2037, %v2229
        %v2231 = vpop.f32.mrb[0].mxu0
        %2232 = vmatprep.mubr.f32.mxu0 0.0
        %2233 = vmatmul.mubr.f32.gmra.mrb[0].mxu0 %v2119
        %v2234 = vpop.f32.mrb[0].mxu0
        %v2235 = vadd.f32 %v2042, %v2234
        %v2236 = vpop.f32.mrb[0].mxu0
        %2237 = vmatprep.mubr.f32.mxu0 0.0
        %2238 = vmatmul.mubr.f32.gmra.mrb[0].mxu0 %v2122
        %v2239 = vpop.f32.mrb[0].mxu0
        %v2240 = vadd.f32 %v2047, %v2239
        %v2241 = vpop.f32.mrb[0].mxu0
        %2242 = vmatprep.mubr.f32.mxu0 0.0
        %2243 = vmatmul.mubr.f32.gmra.mrb[0].mxu0 %v2125
        %v2244 = vpop.f32.mrb[0].mxu0
        %v2245 = vadd.f32 %v2052, %v2244
        %v2246 = vpop.f32.mrb[0].mxu0
        %2247 = vmatprep.mubr.f32.mxu0 0.0
        %2248 = vmatmul.mubr.f32.gmra.mrb[0].mxu0 %v2128
        %v2249 = vpop.f32.mrb[0].mxu0
        %v2250 = vadd.f32 %v2057, %v2249
        %v2251 = vpop.f32.mrb[0].mxu0
        %2252 = vmatprep.mubr.f32.mxu0 0.0
        %2253 = vmatmul.mubr.f32.gmra.mrb[0].mxu0 %v2131
        %v2254 = vpop.f32.mrb[0].mxu0
        %v2255 = vadd.f32 %v2062, %v2254
        %v2256 = vpop.f32.mrb[0].mxu0
        %2257 = vmatprep.mubr.f32.mxu0 0.0
        %2258 = vmatmul.mubr.f32.gmra.mrb[0].mxu0 %v2134
        %v2259 = vpop.f32.mrb[0].mxu0
        %v2260 = vadd.f32 %v2067, %v2259
        %v2261 = vpop.f32.mrb[0].mxu0
        %2262 = vmatprep.mubr.f32.mxu0 0.0
        %2263 = vmatmul.mubr.f32.gmra.mrb[0].mxu0 %v2137
        %v2264 = vpop.f32.mrb[0].mxu0
        %v2265 = vadd.f32 %v2072, %v2264
        %v2266 = vpop.f32.mrb[0].mxu0
        %2267 = vmatprep.mubr.f32.mxu0 0.0
        %2268 = vmatmul.mubr.f32.gmra.mrb[0].mxu0 %v2140
        %v2269 = vpop.f32.mrb[0].mxu0
        %v2270 = vadd.f32 %v2077, %v2269
        %v2271 = vpop.f32.mrb[0].mxu0
        %2272 = vmatprep.mubr.f32.mxu0 0.0
        %2273 = vmatmul.mubr.f32.gmra.mrb[0].mxu0 %v2143
        %v2274 = vpop.f32.mrb[0].mxu0
        %v2275 = vadd.f32 %v2082, %v2274
        %v2276 = vpop.f32.mrb[0].mxu0
        %2277 = vmatprep.mubr.f32.mxu0 0.0
        %2278 = vmatmul.mubr.f32.gmra.mrb[0].mxu0 %v2146
        %v2279 = vpop.f32.mrb[0].mxu0
        %v2280 = vadd.f32 %v2087, %v2279
        %v2281 = vpop.f32.mrb[0].mxu0
        %2282 = vmatprep.mubr.f32.mxu0 0.0
        %2283 = vmatmul.mubr.f32.gmra.mrb[0].mxu0 %v2149
        %v2284 = vpop.f32.mrb[0].mxu0
        %v2285 = vadd.f32 %v2092, %v2284
        %v2286 = vpop.f32.mrb[0].mxu0
        %2287 = vmatprep.mubr.f32.mxu0 0.0
        %2288 = vmatmul.mubr.f32.gmra.mrb[0].mxu0 %v2152
        %v2289 = vpop.f32.mrb[0].mxu0
        %v2290 = vadd.f32 %v2097, %v2289
        %v2291 = vpop.f32.mrb[0].mxu0
        %2292 = vmatprep.mubr.f32.mxu0 0.0
        %2293 = vmatmul.mubr.f32.gmra.mrb[0].mxu0 %v2155
        %v2294 = vpop.f32.mrb[0].mxu0
        %v2295 = vadd.f32 %v2102, %v2294
        %v2296 = vpop.f32.mrb[0].mxu0
        %2297 = vmatprep.mubr.f32.mxu0 0.0
        %2298 = vmatmul.mubr.f32.gmra.mrb[0].mxu0 %v2158
        %v2299 = vpop.f32.mrb[0].mxu0
        %v2300 = vadd.f32 %v2107, %v2299
        %v2301 = vpop.f32.mrb[0].mxu0
        %2302 = vmatprep.mubr.f32.mxu0 0.0
        %2303 = vmatmul.mubr.f32.gmra.mrb[0].mxu0 %v2161
        %v2304 = vpop.f32.mrb[0].mxu0
        %v2305 = vadd.f32 %v2112, %v2304
        %v2306 = vpop.f32.mrb[0].mxu0
        %2307 = vdwg.mxu0
        %s2308 = scalar_lea.vmem %s5, 256
        %v2309 = vld [vmem:[%s2308] sm:$0xff]
        %v2310 = vld [vmem:[%s2308 + $0x8] sm:$0xff]
        %v2311 = vld [vmem:[%s2308 + $0x10] sm:$0xff]
        %v2312 = vld [vmem:[%s2308 + $0x18] sm:$0xff]
        %v2313 = vld [vmem:[%s2308 + $0x20] sm:$0xff]
        %v2314 = vld [vmem:[%s2308 + $0x28] sm:$0xff]
        %v2315 = vld [vmem:[%s2308 + $0x30] sm:$0xff]
        %v2316 = vld [vmem:[%s2308 + $0x38] sm:$0xff]
        %v2317 = vld [vmem:[%s2308 + $0x40] sm:$0xff]
        %v2318 = vld [vmem:[%s2308 + $0x48] sm:$0xff]
        %v2319 = vld [vmem:[%s2308 + $0x50] sm:$0xff]
        %v2320 = vld [vmem:[%s2308 + $0x58] sm:$0xff]
        %v2321 = vld [vmem:[%s2308 + $0x60] sm:$0xff]
        %v2322 = vld [vmem:[%s2308 + $0x68] sm:$0xff]
        %v2323 = vld [vmem:[%s2308 + $0x70] sm:$0xff]
        %v2324 = vld [vmem:[%s2308 + $0x78] sm:$0xff]
        %vm2325 = vcmp.eq.s32.totalorder %v704, 7
        %2326 = vrot.lane.b32.xlu0 %v1873, 127
        %v2327 = vpop.permute.xlu0 %2326
        %2328 = vrot.lane.b32.xlu0 %v1874, 127
        %v2329 = vpop.permute.xlu0 %2328
        %2330 = vrot.lane.b32.xlu0 %v1875, 127
        %v2331 = vpop.permute.xlu0 %2330
        %2332 = vrot.lane.b32.xlu0 %v1876, 127
        %v2333 = vpop.permute.xlu0 %2332
        %2334 = vrot.lane.b32.xlu0 %v1877, 127
        %v2335 = vpop.permute.xlu0 %2334
        %2336 = vrot.lane.b32.xlu0 %v1878, 127
        %v2337 = vpop.permute.xlu0 %2336
        %2338 = vrot.lane.b32.xlu0 %v1879, 127
        %v2339 = vpop.permute.xlu0 %2338
        %2340 = vrot.lane.b32.xlu0 %v1880, 127
        %v2341 = vpop.permute.xlu0 %2340
        %v2350 = vsel %vm2325, 0.0, %v2327
        %v2351 = vsel %vm2325, 0.0, %v2329
        %v2352 = vsel %vm2325, 0.0, %v2331
        %v2353 = vsel %vm2325, 0.0, %v2333
        %v2354 = vsel %vm2325, 0.0, %v2335
        %v2355 = vsel %vm2325, 0.0, %v2337
        %v2356 = vsel %vm2325, 0.0, %v2339
        %v2357 = vsel %vm2325, 0.0, %v2341
        %v2359 = vsel %vm1921, %v2309, 0
        %v2362 = vsel %vm1921, %v2310, 0
        %v2365 = vsel %vm1921, %v2311, 0
        %v2368 = vsel %vm1921, %v2312, 0
        %v2371 = vsel %vm1921, %v2313, 0
        %v2374 = vsel %vm1921, %v2314, 0
        %v2377 = vsel %vm1921, %v2315, 0
        %v2380 = vsel %vm1921, %v2316, 0
        %v2383 = vsel %vm1921, %v2317, 0
        %v2386 = vsel %vm1921, %v2318, 0
        %v2389 = vsel %vm1921, %v2319, 0
        %v2392 = vsel %vm1921, %v2320, 0
        %v2395 = vsel %vm1921, %v2321, 0
        %v2398 = vsel %vm1921, %v2322, 0
        %v2401 = vsel %vm1921, %v2323, 0
        %v2404 = vsel %vm1921, %v2324, 0
        %2406 = vmatprep.subr.mxu0 0.0
        %2407 = vmatpush1.msra.mxu0 %v2350
        %2408 = vmatprep.subr.mxu0 0.0
        %2409 = vmatpush1.msra.mxu0 %v2351
        %2410 = vmatprep.subr.mxu0 0.0
        %2411 = vmatpush1.msra.mxu0 %v2352
        %2412 = vmatprep.subr.mxu0 0.0
        %2413 = vmatpush1.msra.mxu0 %v2353
        %2414 = vmatprep.subr.mxu0 0.0
        %2415 = vmatpush1.msra.mxu0 %v2354
        %2416 = vmatprep.subr.mxu0 0.0
        %2417 = vmatpush1.msra.mxu0 %v2355
        %2418 = vmatprep.subr.mxu0 0.0
        %2419 = vmatpush1.msra.mxu0 %v2356
        %2420 = vmatprep.subr.mxu0 0.0
        %2421 = vmatpush1.msra.mxu0 %v2357
        %2422 = vmatprep.subr.mxu0 0.0
        %2423 = vmatpush1.msra.mxu0 0.0
        %2424 = vmatprep.subr.mxu0 0.0
        %2425 = vmatpush1.msra.mxu0 0.0
        %2426 = vmatprep.subr.mxu0 0.0
        %2427 = vmatpush1.msra.mxu0 0.0
        %2428 = vmatprep.subr.mxu0 0.0
        %2429 = vmatpush1.msra.mxu0 0.0
        %2430 = vmatprep.subr.mxu0 0.0
        %2431 = vmatpush1.msra.mxu0 0.0
        %2432 = vmatprep.subr.mxu0 0.0
        %2433 = vmatpush1.msra.mxu0 0.0
        %2434 = vmatprep.subr.mxu0 0.0
        %2435 = vmatpush1.msra.mxu0 0.0
        %2436 = vmatprep.subr.mxu0 0.0
        %2437 = vmatpush1.msra.mxu0 0.0
        %2438 = vmatprep.subr.mxu0 0.0
        %2439 = vmatpush1.msra.mxu0 0.0
        %2440 = vmatprep.subr.mxu0 0.0
        %2441 = vmatpush1.msra.mxu0 0.0
        %2442 = vmatprep.subr.mxu0 0.0
        %2443 = vmatpush1.msra.mxu0 0.0
        %2444 = vmatprep.subr.mxu0 0.0
        %2445 = vmatpush1.msra.mxu0 0.0
        %2446 = vmatprep.subr.mxu0 0.0
        %2447 = vmatpush1.msra.mxu0 0.0
        %2448 = vmatprep.subr.mxu0 0.0
        %2449 = vmatpush1.msra.mxu0 0.0
        %2450 = vmatprep.subr.mxu0 0.0
        %2451 = vmatpush1.msra.mxu0 0.0
        %2452 = vmatprep.subr.mxu0 0.0
        %2453 = vmatpush1.msra.mxu0 0.0
        %2454 = vmatprep.subr.mxu0 0.0
        %2455 = vmatpush1.msra.mxu0 0.0
        %2456 = vmatprep.subr.mxu0 0.0
        %2457 = vmatpush1.msra.mxu0 0.0
        %2458 = vmatprep.subr.mxu0 0.0
        %2459 = vmatpush1.msra.mxu0 0.0
        %2460 = vmatprep.subr.mxu0 0.0
        %2461 = vmatpush1.msra.mxu0 0.0
        %2462 = vmatprep.subr.mxu0 0.0
        %2463 = vmatpush1.msra.mxu0 0.0
        %2464 = vmatprep.subr.mxu0 0.0
        %2465 = vmatpush1.msra.mxu0 0.0
        %2466 = vmatprep.subr.mxu0 0.0
        %2467 = vmatpush1.msra.mxu0 0.0
        %2468 = vmatprep.subr.mxu0 0.0
        %2469 = vmatpush1.msra.mxu0 0.0
        %2470 = vmatprep.mubr.f32.mxu0 0.0
        %2471 = vmatmul.mubr.f32.gmra.mrb[0].mxu0 %v2359
        %v2472 = vpop.f32.mrb[0].mxu0
        %v2473 = vadd.f32 0.0, %v2472
        %v2474 = vpop.f32.mrb[0].mxu0
        %2475 = vmatprep.mubr.f32.mxu0 0.0
        %2476 = vmatmul.mubr.f32.gmra.mrb[0].mxu0 %v2362
        %v2477 = vpop.f32.mrb[0].mxu0
        %v2478 = vadd.f32 0.0, %v2477
        %v2479 = vpop.f32.mrb[0].mxu0
        %2480 = vmatprep.mubr.f32.mxu0 0.0
        %2481 = vmatmul.mubr.f32.gmra.mrb[0].mxu0 %v2365
        %v2482 = vpop.f32.mrb[0].mxu0
        %v2483 = vadd.f32 0.0, %v2482
        %v2484 = vpop.f32.mrb[0].mxu0
        %2485 = vmatprep.mubr.f32.mxu0 0.0
        %2486 = vmatmul.mubr.f32.gmra.mrb[0].mxu0 %v2368
        %v2487 = vpop.f32.mrb[0].mxu0
        %v2488 = vadd.f32 0.0, %v2487
        %v2489 = vpop.f32.mrb[0].mxu0
        %2490 = vmatprep.mubr.f32.mxu0 0.0
        %2491 = vmatmul.mubr.f32.gmra.mrb[0].mxu0 %v2371
        %v2492 = vpop.f32.mrb[0].mxu0
        %v2493 = vadd.f32 0.0, %v2492
        %v2494 = vpop.f32.mrb[0].mxu0
        %2495 = vmatprep.mubr.f32.mxu0 0.0
        %2496 = vmatmul.mubr.f32.gmra.mrb[0].mxu0 %v2374
        %v2497 = vpop.f32.mrb[0].mxu0
        %v2498 = vadd.f32 0.0, %v2497
        %v2499 = vpop.f32.mrb[0].mxu0
        %2500 = vmatprep.mubr.f32.mxu0 0.0
        %2501 = vmatmul.mubr.f32.gmra.mrb[0].mxu0 %v2377
        %v2502 = vpop.f32.mrb[0].mxu0
        %v2503 = vadd.f32 0.0, %v2502
        %v2504 = vpop.f32.mrb[0].mxu0
        %2505 = vmatprep.mubr.f32.mxu0 0.0
        %2506 = vmatmul.mubr.f32.gmra.mrb[0].mxu0 %v2380
        %v2507 = vpop.f32.mrb[0].mxu0
        %v2508 = vadd.f32 0.0, %v2507
        %v2509 = vpop.f32.mrb[0].mxu0
        %2510 = vmatprep.mubr.f32.mxu0 0.0
        %2511 = vmatmul.mubr.f32.gmra.mrb[0].mxu0 %v2383
        %v2512 = vpop.f32.mrb[0].mxu0
        %v2513 = vadd.f32 0.0, %v2512
        %v2514 = vpop.f32.mrb[0].mxu0
        %2515 = vmatprep.mubr.f32.mxu0 0.0
        %2516 = vmatmul.mubr.f32.gmra.mrb[0].mxu0 %v2386
        %v2517 = vpop.f32.mrb[0].mxu0
        %v2518 = vadd.f32 0.0, %v2517
        %v2519 = vpop.f32.mrb[0].mxu0
        %2520 = vmatprep.mubr.f32.mxu0 0.0
        %2521 = vmatmul.mubr.f32.gmra.mrb[0].mxu0 %v2389
        %v2522 = vpop.f32.mrb[0].mxu0
        %v2523 = vadd.f32 0.0, %v2522
        %v2524 = vpop.f32.mrb[0].mxu0
        %2525 = vmatprep.mubr.f32.mxu0 0.0
        %2526 = vmatmul.mubr.f32.gmra.mrb[0].mxu0 %v2392
        %v2527 = vpop.f32.mrb[0].mxu0
        %v2528 = vadd.f32 0.0, %v2527
        %v2529 = vpop.f32.mrb[0].mxu0
        %2530 = vmatprep.mubr.f32.mxu0 0.0
        %2531 = vmatmul.mubr.f32.gmra.mrb[0].mxu0 %v2395
        %v2532 = vpop.f32.mrb[0].mxu0
        %v2533 = vadd.f32 0.0, %v2532
        %v2534 = vpop.f32.mrb[0].mxu0
        %2535 = vmatprep.mubr.f32.mxu0 0.0
        %2536 = vmatmul.mubr.f32.gmra.mrb[0].mxu0 %v2398
        %v2537 = vpop.f32.mrb[0].mxu0
        %v2538 = vadd.f32 0.0, %v2537
        %v2539 = vpop.f32.mrb[0].mxu0
        %2540 = vmatprep.mubr.f32.mxu0 0.0
        %2541 = vmatmul.mubr.f32.gmra.mrb[0].mxu0 %v2401
        %v2542 = vpop.f32.mrb[0].mxu0
        %v2543 = vadd.f32 0.0, %v2542
        %v2544 = vpop.f32.mrb[0].mxu0
        %2545 = vmatprep.mubr.f32.mxu0 0.0
        %2546 = vmatmul.mubr.f32.gmra.mrb[0].mxu0 %v2404
        %v2547 = vpop.f32.mrb[0].mxu0
        %v2548 = vadd.f32 0.0, %v2547
        %v2549 = vpop.f32.mrb[0].mxu0
        %2550 = vdwg.mxu0
        %v2551 = vadd.f32 %v2230, %v2473
        %v2552 = vadd.f32 %v2235, %v2478
        %v2553 = vadd.f32 %v2240, %v2483
        %v2554 = vadd.f32 %v2245, %v2488
        %v2555 = vadd.f32 %v2250, %v2493
        %v2556 = vadd.f32 %v2255, %v2498
        %v2557 = vadd.f32 %v2260, %v2503
        %v2558 = vadd.f32 %v2265, %v2508
        %v2559 = vadd.f32 %v2270, %v2513
        %v2560 = vadd.f32 %v2275, %v2518
        %v2561 = vadd.f32 %v2280, %v2523
        %v2562 = vadd.f32 %v2285, %v2528
        %v2563 = vadd.f32 %v2290, %v2533
        %v2564 = vadd.f32 %v2295, %v2538
        %v2565 = vadd.f32 %v2300, %v2543
        %v2566 = vadd.f32 %v2305, %v2548
        %2568 = vset.pattern.permute.xlu0 0
        %2569 = vperm.xlu0 %2568, %v1783
        %v2570 = vpop.permute.xlu0 %2569
        %2573 = vset.pattern.permute.xlu0 0
        %2574 = vperm.xlu0 %2573, %v1784
        %v2575 = vpop.permute.xlu0 %2574
        %2578 = vset.pattern.permute.xlu0 0
        %2579 = vperm.xlu0 %2578, %v1785
        %v2580 = vpop.permute.xlu0 %2579
        %2583 = vset.pattern.permute.xlu0 0
        %2584 = vperm.xlu0 %2583, %v1786
        %v2585 = vpop.permute.xlu0 %2584
        %2588 = vset.pattern.permute.xlu0 0
        %2589 = vperm.xlu0 %2588, %v1787
        %v2590 = vpop.permute.xlu0 %2589
        %2593 = vset.pattern.permute.xlu0 0
        %2594 = vperm.xlu0 %2593, %v1788
        %v2595 = vpop.permute.xlu0 %2594
        %2598 = vset.pattern.permute.xlu0 0
        %2599 = vperm.xlu0 %2598, %v1789
        %v2600 = vpop.permute.xlu0 %2599
        %2603 = vset.pattern.permute.xlu0 0
        %2604 = vperm.xlu0 %2603, %v1790
        %v2605 = vpop.permute.xlu0 %2604
        %2608 = vset.pattern.permute.xlu0 0
        %2609 = vperm.xlu0 %2608, %v1791
        %v2610 = vpop.permute.xlu0 %2609
        %2613 = vset.pattern.permute.xlu0 0
        %2614 = vperm.xlu0 %2613, %v1792
        %v2615 = vpop.permute.xlu0 %2614
        %2618 = vset.pattern.permute.xlu0 0
        %2619 = vperm.xlu0 %2618, %v1793
        %v2620 = vpop.permute.xlu0 %2619
        %2623 = vset.pattern.permute.xlu0 0
        %2624 = vperm.xlu0 %2623, %v1794
        %v2625 = vpop.permute.xlu0 %2624
        %2628 = vset.pattern.permute.xlu0 0
        %2629 = vperm.xlu0 %2628, %v1795
        %v2630 = vpop.permute.xlu0 %2629
        %2633 = vset.pattern.permute.xlu0 0
        %2634 = vperm.xlu0 %2633, %v1796
        %v2635 = vpop.permute.xlu0 %2634
        %2638 = vset.pattern.permute.xlu0 0
        %2639 = vperm.xlu0 %2638, %v1797
        %v2640 = vpop.permute.xlu0 %2639
        %2643 = vset.pattern.permute.xlu0 0
        %2644 = vperm.xlu0 %2643, %v1798
        %v2645 = vpop.permute.xlu0 %2644
        %v2647 = vadd.f32 %v2551, %v2570
        %v2648 = vadd.f32 %v2552, %v2575
        %v2649 = vadd.f32 %v2553, %v2580
        %v2650 = vadd.f32 %v2554, %v2585
        %v2651 = vadd.f32 %v2555, %v2590
        %v2652 = vadd.f32 %v2556, %v2595
        %v2653 = vadd.f32 %v2557, %v2600
        %v2654 = vadd.f32 %v2558, %v2605
        %v2655 = vadd.f32 %v2559, %v2610
        %v2656 = vadd.f32 %v2560, %v2615
        %v2657 = vadd.f32 %v2561, %v2620
        %v2658 = vadd.f32 %v2562, %v2625
        %v2659 = vadd.f32 %v2563, %v2630
        %v2660 = vadd.f32 %v2564, %v2635
        %v2661 = vadd.f32 %v2565, %v2640
        %v2662 = vadd.f32 %v2566, %v2645
        %v2663 = vmax.f32 %v2647, 0.0
        %v2664 = vmax.f32 %v2648, 0.0
        %v2665 = vmax.f32 %v2649, 0.0
        %v2666 = vmax.f32 %v2650, 0.0
        %v2667 = vmax.f32 %v2651, 0.0
        %v2668 = vmax.f32 %v2652, 0.0
        %v2669 = vmax.f32 %v2653, 0.0
        %v2670 = vmax.f32 %v2654, 0.0
        %v2671 = vmax.f32 %v2655, 0.0
        %v2672 = vmax.f32 %v2656, 0.0
        %v2673 = vmax.f32 %v2657, 0.0
        %v2674 = vmax.f32 %v2658, 0.0
        %v2675 = vmax.f32 %v2659, 0.0
        %v2676 = vmax.f32 %v2660, 0.0
        %v2677 = vmax.f32 %v2661, 0.0
        %v2678 = vmax.f32 %v2662, 0.0
        %2679 = vrot.lane.b32.xlu0 %v2663, 8
        %v2680 = vpop.permute.xlu0 %2679
        %v2681 = vsel %vm1832, %v2680, %v2663
        %2682 = vrot.lane.b32.xlu0 %v2664, 8
        %v2683 = vpop.permute.xlu0 %2682
        %v2684 = vsel %vm1832, %v2683, %v2664
        %2685 = vrot.lane.b32.xlu0 %v2665, 8
        %v2686 = vpop.permute.xlu0 %2685
        %v2687 = vsel %vm1832, %v2686, %v2665
        %2688 = vrot.lane.b32.xlu0 %v2666, 8
        %v2689 = vpop.permute.xlu0 %2688
        %v2690 = vsel %vm1832, %v2689, %v2666
        %2691 = vrot.lane.b32.xlu0 %v2667, 8
        %v2692 = vpop.permute.xlu0 %2691
        %v2693 = vsel %vm1832, %v2692, %v2667
        %2694 = vrot.lane.b32.xlu0 %v2668, 8
        %v2695 = vpop.permute.xlu0 %2694
        %v2696 = vsel %vm1832, %v2695, %v2668
        %2697 = vrot.lane.b32.xlu0 %v2669, 8
        %v2698 = vpop.permute.xlu0 %2697
        %v2699 = vsel %vm1832, %v2698, %v2669
        %2700 = vrot.lane.b32.xlu0 %v2670, 8
        %v2701 = vpop.permute.xlu0 %2700
        %v2702 = vsel %vm1832, %v2701, %v2670
        %2703 = vrot.lane.b32.xlu0 %v2671, 8
        %v2704 = vpop.permute.xlu0 %2703
        %v2705 = vsel %vm1832, %v2704, %v2671
        %2706 = vrot.lane.b32.xlu0 %v2672, 8
        %v2707 = vpop.permute.xlu0 %2706
        %v2708 = vsel %vm1832, %v2707, %v2672
        %2709 = vrot.lane.b32.xlu0 %v2673, 8
        %v2710 = vpop.permute.xlu0 %2709
        %v2711 = vsel %vm1832, %v2710, %v2673
        %2712 = vrot.lane.b32.xlu0 %v2674, 8
        %v2713 = vpop.permute.xlu0 %2712
        %v2714 = vsel %vm1832, %v2713, %v2674
        %2715 = vrot.lane.b32.xlu0 %v2675, 8
        %v2716 = vpop.permute.xlu0 %2715
        %v2717 = vsel %vm1832, %v2716, %v2675
        %2718 = vrot.lane.b32.xlu0 %v2676, 8
        %v2719 = vpop.permute.xlu0 %2718
        %v2720 = vsel %vm1832, %v2719, %v2676
        %2721 = vrot.lane.b32.xlu0 %v2677, 8
        %v2722 = vpop.permute.xlu0 %2721
        %v2723 = vsel %vm1832, %v2722, %v2677
        %2724 = vrot.lane.b32.xlu0 %v2678, 8
        %v2725 = vpop.permute.xlu0 %2724
        %v2726 = vsel %vm1832, %v2725, %v2678
        %2727 = vrot.lane.b32.xlu0 %v2681, 8
        %v2728 = vpop.permute.xlu0 %2727
        %2729 = vrot.lane.b32.xlu0 %v2684, 8
        %v2730 = vpop.permute.xlu0 %2729
        %2731 = vrot.lane.b32.xlu0 %v2687, 8
        %v2732 = vpop.permute.xlu0 %2731
        %2733 = vrot.lane.b32.xlu0 %v2690, 8
        %v2734 = vpop.permute.xlu0 %2733
        %2735 = vrot.lane.b32.xlu0 %v2693, 8
        %v2736 = vpop.permute.xlu0 %2735
        %2737 = vrot.lane.b32.xlu0 %v2696, 8
        %v2738 = vpop.permute.xlu0 %2737
        %2739 = vrot.lane.b32.xlu0 %v2699, 8
        %v2740 = vpop.permute.xlu0 %2739
        %2741 = vrot.lane.b32.xlu0 %v2702, 8
        %v2742 = vpop.permute.xlu0 %2741
        %2743 = vrot.lane.b32.xlu0 %v2705, 8
        %v2744 = vpop.permute.xlu0 %2743
        %2745 = vrot.lane.b32.xlu0 %v2708, 8
        %v2746 = vpop.permute.xlu0 %2745
        %2747 = vrot.lane.b32.xlu0 %v2711, 8
        %v2748 = vpop.permute.xlu0 %2747
        %2749 = vrot.lane.b32.xlu0 %v2714, 8
        %v2750 = vpop.permute.xlu0 %2749
        %2751 = vrot.lane.b32.xlu0 %v2717, 8
        %v2752 = vpop.permute.xlu0 %2751
        %2753 = vrot.lane.b32.xlu0 %v2720, 8
        %v2754 = vpop.permute.xlu0 %2753
        %2755 = vrot.lane.b32.xlu0 %v2723, 8
        %v2756 = vpop.permute.xlu0 %2755
        %2757 = vrot.lane.b32.xlu0 %v2726, 8
        %v2758 = vpop.permute.xlu0 %2757
        %v2759 = vsel %vm1832, %v2728, %v2663
        %v2760 = vsel %vm1832, %v2730, %v2664
        %v2761 = vsel %vm1832, %v2732, %v2665
        %v2762 = vsel %vm1832, %v2734, %v2666
        %v2763 = vsel %vm1832, %v2736, %v2667
        %v2764 = vsel %vm1832, %v2738, %v2668
        %v2765 = vsel %vm1832, %v2740, %v2669
        %v2766 = vsel %vm1832, %v2742, %v2670
        %v2767 = vsel %vm1832, %v2744, %v2671
        %v2768 = vsel %vm1832, %v2746, %v2672
        %v2769 = vsel %vm1832, %v2748, %v2673
        %v2770 = vsel %vm1832, %v2750, %v2674
        %v2771 = vsel %vm1832, %v2752, %v2675
        %v2772 = vsel %vm1832, %v2754, %v2676
        %v2773 = vsel %vm1832, %v2756, %v2677
        %v2774 = vsel %vm1832, %v2758, %v2678
        %2791 = vrot.lane.b32.xlu0 %v2759, 121
        %v2792 = vpop.permute.xlu0 %2791
        %2793 = vrot.lane.b32.xlu0 %v2760, 121
        %v2794 = vpop.permute.xlu0 %2793
        %2795 = vrot.lane.b32.xlu0 %v2761, 121
        %v2796 = vpop.permute.xlu0 %2795
        %2797 = vrot.lane.b32.xlu0 %v2762, 121
        %v2798 = vpop.permute.xlu0 %2797
        %2799 = vrot.lane.b32.xlu0 %v2763, 121
        %v2800 = vpop.permute.xlu0 %2799
        %2801 = vrot.lane.b32.xlu0 %v2764, 121
        %v2802 = vpop.permute.xlu0 %2801
        %2803 = vrot.lane.b32.xlu0 %v2765, 121
        %v2804 = vpop.permute.xlu0 %2803
        %2805 = vrot.lane.b32.xlu0 %v2766, 121
        %v2806 = vpop.permute.xlu0 %2805
        %2807 = vrot.lane.b32.xlu0 %v2767, 121
        %v2808 = vpop.permute.xlu0 %2807
        %2809 = vrot.lane.b32.xlu0 %v2768, 121
        %v2810 = vpop.permute.xlu0 %2809
        %2811 = vrot.lane.b32.xlu0 %v2769, 121
        %v2812 = vpop.permute.xlu0 %2811
        %2813 = vrot.lane.b32.xlu0 %v2770, 121
        %v2814 = vpop.permute.xlu0 %2813
        %2815 = vrot.lane.b32.xlu0 %v2771, 121
        %v2816 = vpop.permute.xlu0 %2815
        %2817 = vrot.lane.b32.xlu0 %v2772, 121
        %v2818 = vpop.permute.xlu0 %2817
        %2819 = vrot.lane.b32.xlu0 %v2773, 121
        %v2820 = vpop.permute.xlu0 %2819
        %2821 = vrot.lane.b32.xlu0 %v2774, 121
        %v2822 = vpop.permute.xlu0 %2821
        %v2839 = vsel %vm705, 0.0, %v2792
        %v2840 = vsel %vm705, 0.0, %v2794
        %v2841 = vsel %vm705, 0.0, %v2796
        %v2842 = vsel %vm705, 0.0, %v2798
        %v2843 = vsel %vm705, 0.0, %v2800
        %v2844 = vsel %vm705, 0.0, %v2802
        %v2845 = vsel %vm705, 0.0, %v2804
        %v2846 = vsel %vm705, 0.0, %v2806
        %v2847 = vsel %vm705, 0.0, %v2808
        %v2848 = vsel %vm705, 0.0, %v2810
        %v2849 = vsel %vm705, 0.0, %v2812
        %v2850 = vsel %vm705, 0.0, %v2814
        %v2851 = vsel %vm705, 0.0, %v2816
        %v2852 = vsel %vm705, 0.0, %v2818
        %v2853 = vsel %vm705, 0.0, %v2820
        %v2854 = vsel %vm705, 0.0, %v2822
        %v2855 = vld [vmem:[%s11] sm:$0xff]
        %v2856 = vld [vmem:[%s11 + $0x8] sm:$0xff]
        %v2857 = vld [vmem:[%s11 + $0x10] sm:$0xff]
        %v2858 = vld [vmem:[%s11 + $0x18] sm:$0xff]
        %v2859 = vld [vmem:[%s11 + $0x20] sm:$0xff]
        %v2860 = vld [vmem:[%s11 + $0x28] sm:$0xff]
        %v2861 = vld [vmem:[%s11 + $0x30] sm:$0xff]
        %v2862 = vld [vmem:[%s11 + $0x38] sm:$0xff]
        %v2863 = vld [vmem:[%s13] sm:$0xff]
        %v2864 = vld [vmem:[%s13 + $0x8] sm:$0xff]
        %v2865 = vld [vmem:[%s13 + $0x10] sm:$0xff]
        %v2866 = vld [vmem:[%s13 + $0x18] sm:$0xff]
        %v2867 = vld [vmem:[%s13 + $0x20] sm:$0xff]
        %v2868 = vld [vmem:[%s13 + $0x28] sm:$0xff]
        %v2869 = vld [vmem:[%s13 + $0x30] sm:$0xff]
        %v2870 = vld [vmem:[%s13 + $0x38] sm:$0xff]
        %s2871 = scalar_lea.vmem %s11, 64
        %v2872 = vld [vmem:[%s2871] sm:$0xff]
        %v2873 = vld [vmem:[%s2871 + $0x8] sm:$0xff]
        %v2874 = vld [vmem:[%s2871 + $0x10] sm:$0xff]
        %v2875 = vld [vmem:[%s2871 + $0x18] sm:$0xff]
        %v2876 = vld [vmem:[%s2871 + $0x20] sm:$0xff]
        %v2877 = vld [vmem:[%s2871 + $0x28] sm:$0xff]
        %v2878 = vld [vmem:[%s2871 + $0x30] sm:$0xff]
        %v2879 = vld [vmem:[%s2871 + $0x38] sm:$0xff]
        %2880 = vmatprep.subr.mxu0 0.0
        %2881 = vmatpush1.msra.mxu0 %v2663
        %2882 = vmatprep.subr.mxu0 0.0
        %2883 = vmatpush1.msra.mxu0 %v2664
        %2884 = vmatprep.subr.mxu0 0.0
        %2885 = vmatpush1.msra.mxu0 %v2665
        %2886 = vmatprep.subr.mxu0 0.0
        %2887 = vmatpush1.msra.mxu0 %v2666
        %2888 = vmatprep.subr.mxu0 0.0
        %2889 = vmatpush1.msra.mxu0 %v2667
        %2890 = vmatprep.subr.mxu0 0.0
        %2891 = vmatpush1.msra.mxu0 %v2668
        %2892 = vmatprep.subr.mxu0 0.0
        %2893 = vmatpush1.msra.mxu0 %v2669
        %2894 = vmatprep.subr.mxu0 0.0
        %2895 = vmatpush1.msra.mxu0 %v2670
        %2896 = vmatprep.subr.mxu0 0.0
        %2897 = vmatpush1.msra.mxu0 %v2671
        %2898 = vmatprep.subr.mxu0 0.0
        %2899 = vmatpush1.msra.mxu0 %v2672
        %2900 = vmatprep.subr.mxu0 0.0
        %2901 = vmatpush1.msra.mxu0 %v2673
        %2902 = vmatprep.subr.mxu0 0.0
        %2903 = vmatpush1.msra.mxu0 %v2674
        %2904 = vmatprep.subr.mxu0 0.0
        %2905 = vmatpush1.msra.mxu0 %v2675
        %2906 = vmatprep.subr.mxu0 0.0
        %2907 = vmatpush1.msra.mxu0 %v2676
        %2908 = vmatprep.subr.mxu0 0.0
        %2909 = vmatpush1.msra.mxu0 %v2677
        %2910 = vmatprep.subr.mxu0 0.0
        %2911 = vmatpush1.msra.mxu0 %v2678
        %2912 = vmatprep.subr.mxu0 0.0
        %2913 = vmatpush1.msra.mxu0 0.0
        %2914 = vmatprep.subr.mxu0 0.0
        %2915 = vmatpush1.msra.mxu0 0.0
        %2916 = vmatprep.subr.mxu0 0.0
        %2917 = vmatpush1.msra.mxu0 0.0
        %2918 = vmatprep.subr.mxu0 0.0
        %2919 = vmatpush1.msra.mxu0 0.0
        %2920 = vmatprep.subr.mxu0 0.0
        %2921 = vmatpush1.msra.mxu0 0.0
        %2922 = vmatprep.subr.mxu0 0.0
        %2923 = vmatpush1.msra.mxu0 0.0
        %2924 = vmatprep.subr.mxu0 0.0
        %2925 = vmatpush1.msra.mxu0 0.0
        %2926 = vmatprep.subr.mxu0 0.0
        %2927 = vmatpush1.msra.mxu0 0.0
        %2928 = vmatprep.subr.mxu0 0.0
        %2929 = vmatpush1.msra.mxu0 0.0
        %2930 = vmatprep.subr.mxu0 0.0
        %2931 = vmatpush1.msra.mxu0 0.0
        %2932 = vmatprep.subr.mxu0 0.0
        %2933 = vmatpush1.msra.mxu0 0.0
        %2934 = vmatprep.subr.mxu0 0.0
        %2935 = vmatpush1.msra.mxu0 0.0
        %2936 = vmatprep.subr.mxu0 0.0
        %2937 = vmatpush1.msra.mxu0 0.0
        %2938 = vmatprep.subr.mxu0 0.0
        %2939 = vmatpush1.msra.mxu0 0.0
        %2940 = vmatprep.subr.mxu0 0.0
        %2941 = vmatpush1.msra.mxu0 0.0
        %2942 = vmatprep.subr.mxu0 0.0
        %2943 = vmatpush1.msra.mxu0 0.0
        %2944 = vmatprep.mubr.f32.mxu0 0.0
        %2945 = vmatmul.mubr.f32.gmra.mrb[0].mxu0 %v2872
        %v2946 = vpop.f32.mrb[0].mxu0
        %v2947 = vadd.f32 0.0, %v2946
        %v2948 = vpop.f32.mrb[0].mxu0
        %2949 = vmatprep.mubr.f32.mxu0 0.0
        %2950 = vmatmul.mubr.f32.gmra.mrb[0].mxu0 %v2873
        %v2951 = vpop.f32.mrb[0].mxu0
        %v2952 = vadd.f32 0.0, %v2951
        %v2953 = vpop.f32.mrb[0].mxu0
        %2954 = vmatprep.mubr.f32.mxu0 0.0
        %2955 = vmatmul.mubr.f32.gmra.mrb[0].mxu0 %v2874
        %v2956 = vpop.f32.mrb[0].mxu0
        %v2957 = vadd.f32 0.0, %v2956
        %v2958 = vpop.f32.mrb[0].mxu0
        %2959 = vmatprep.mubr.f32.mxu0 0.0
        %2960 = vmatmul.mubr.f32.gmra.mrb[0].mxu0 %v2875
        %v2961 = vpop.f32.mrb[0].mxu0
        %v2962 = vadd.f32 0.0, %v2961
        %v2963 = vpop.f32.mrb[0].mxu0
        %2964 = vmatprep.mubr.f32.mxu0 0.0
        %2965 = vmatmul.mubr.f32.gmra.mrb[0].mxu0 %v2876
        %v2966 = vpop.f32.mrb[0].mxu0
        %v2967 = vadd.f32 0.0, %v2966
        %v2968 = vpop.f32.mrb[0].mxu0
        %2969 = vmatprep.mubr.f32.mxu0 0.0
        %2970 = vmatmul.mubr.f32.gmra.mrb[0].mxu0 %v2877
        %v2971 = vpop.f32.mrb[0].mxu0
        %v2972 = vadd.f32 0.0, %v2971
        %v2973 = vpop.f32.mrb[0].mxu0
        %2974 = vmatprep.mubr.f32.mxu0 0.0
        %2975 = vmatmul.mubr.f32.gmra.mrb[0].mxu0 %v2878
        %v2976 = vpop.f32.mrb[0].mxu0
        %v2977 = vadd.f32 0.0, %v2976
        %v2978 = vpop.f32.mrb[0].mxu0
        %2979 = vmatprep.mubr.f32.mxu0 0.0
        %2980 = vmatmul.mubr.f32.gmra.mrb[0].mxu0 %v2879
        %v2981 = vpop.f32.mrb[0].mxu0
        %v2982 = vadd.f32 0.0, %v2981
        %v2983 = vpop.f32.mrb[0].mxu0
        %2984 = vdwg.mxu0
        %2985 = vmatprep.subr.mxu0 0.0
        %2986 = vmatpush1.msra.mxu0 %v2839
        %2987 = vmatprep.subr.mxu0 0.0
        %2988 = vmatpush1.msra.mxu0 %v2840
        %2989 = vmatprep.subr.mxu0 0.0
        %2990 = vmatpush1.msra.mxu0 %v2841
        %2991 = vmatprep.subr.mxu0 0.0
        %2992 = vmatpush1.msra.mxu0 %v2842
        %2993 = vmatprep.subr.mxu0 0.0
        %2994 = vmatpush1.msra.mxu0 %v2843
        %2995 = vmatprep.subr.mxu0 0.0
        %2996 = vmatpush1.msra.mxu0 %v2844
        %2997 = vmatprep.subr.mxu0 0.0
        %2998 = vmatpush1.msra.mxu0 %v2845
        %2999 = vmatprep.subr.mxu0 0.0
        %3000 = vmatpush1.msra.mxu0 %v2846
        %3001 = vmatprep.subr.mxu0 0.0
        %3002 = vmatpush1.msra.mxu0 %v2847
        %3003 = vmatprep.subr.mxu0 0.0
        %3004 = vmatpush1.msra.mxu0 %v2848
        %3005 = vmatprep.subr.mxu0 0.0
        %3006 = vmatpush1.msra.mxu0 %v2849
        %3007 = vmatprep.subr.mxu0 0.0
        %3008 = vmatpush1.msra.mxu0 %v2850
        %3009 = vmatprep.subr.mxu0 0.0
        %3010 = vmatpush1.msra.mxu0 %v2851
        %3011 = vmatprep.subr.mxu0 0.0
        %3012 = vmatpush1.msra.mxu0 %v2852
        %3013 = vmatprep.subr.mxu0 0.0
        %3014 = vmatpush1.msra.mxu0 %v2853
        %3015 = vmatprep.subr.mxu0 0.0
        %3016 = vmatpush1.msra.mxu0 %v2854
        %3017 = vmatprep.subr.mxu0 0.0
        %3018 = vmatpush1.msra.mxu0 0.0
        %3019 = vmatprep.subr.mxu0 0.0
        %3020 = vmatpush1.msra.mxu0 0.0
        %3021 = vmatprep.subr.mxu0 0.0
        %3022 = vmatpush1.msra.mxu0 0.0
        %3023 = vmatprep.subr.mxu0 0.0
        %3024 = vmatpush1.msra.mxu0 0.0
        %3025 = vmatprep.subr.mxu0 0.0
        %3026 = vmatpush1.msra.mxu0 0.0
        %3027 = vmatprep.subr.mxu0 0.0
        %3028 = vmatpush1.msra.mxu0 0.0
        %3029 = vmatprep.subr.mxu0 0.0
        %3030 = vmatpush1.msra.mxu0 0.0
        %3031 = vmatprep.subr.mxu0 0.0
        %3032 = vmatpush1.msra.mxu0 0.0
        %3033 = vmatprep.subr.mxu0 0.0
        %3034 = vmatpush1.msra.mxu0 0.0
        %3035 = vmatprep.subr.mxu0 0.0
        %3036 = vmatpush1.msra.mxu0 0.0
        %3037 = vmatprep.subr.mxu0 0.0
        %3038 = vmatpush1.msra.mxu0 0.0
        %3039 = vmatprep.subr.mxu0 0.0
        %3040 = vmatpush1.msra.mxu0 0.0
        %3041 = vmatprep.subr.mxu0 0.0
        %3042 = vmatpush1.msra.mxu0 0.0
        %3043 = vmatprep.subr.mxu0 0.0
        %3044 = vmatpush1.msra.mxu0 0.0
        %3045 = vmatprep.subr.mxu0 0.0
        %3046 = vmatpush1.msra.mxu0 0.0
        %3047 = vmatprep.subr.mxu0 0.0
        %3048 = vmatpush1.msra.mxu0 0.0
        %3049 = vmatprep.mubr.f32.mxu0 0.0
        %3050 = vmatmul.mubr.f32.gmra.mrb[0].mxu0 %v2855
        %v3051 = vpop.f32.mrb[0].mxu0
        %v3052 = vadd.f32 %v2947, %v3051
        %v3053 = vpop.f32.mrb[0].mxu0
        %3054 = vmatprep.mubr.f32.mxu0 0.0
        %3055 = vmatmul.mubr.f32.gmra.mrb[0].mxu0 %v2856
        %v3056 = vpop.f32.mrb[0].mxu0
        %v3057 = vadd.f32 %v2952, %v3056
        %v3058 = vpop.f32.mrb[0].mxu0
        %3059 = vmatprep.mubr.f32.mxu0 0.0
        %3060 = vmatmul.mubr.f32.gmra.mrb[0].mxu0 %v2857
        %v3061 = vpop.f32.mrb[0].mxu0
        %v3062 = vadd.f32 %v2957, %v3061
        %v3063 = vpop.f32.mrb[0].mxu0
        %3064 = vmatprep.mubr.f32.mxu0 0.0
        %3065 = vmatmul.mubr.f32.gmra.mrb[0].mxu0 %v2858
        %v3066 = vpop.f32.mrb[0].mxu0
        %v3067 = vadd.f32 %v2962, %v3066
        %v3068 = vpop.f32.mrb[0].mxu0
        %3069 = vmatprep.mubr.f32.mxu0 0.0
        %3070 = vmatmul.mubr.f32.gmra.mrb[0].mxu0 %v2859
        %v3071 = vpop.f32.mrb[0].mxu0
        %v3072 = vadd.f32 %v2967, %v3071
        %v3073 = vpop.f32.mrb[0].mxu0
        %3074 = vmatprep.mubr.f32.mxu0 0.0
        %3075 = vmatmul.mubr.f32.gmra.mrb[0].mxu0 %v2860
        %v3076 = vpop.f32.mrb[0].mxu0
        %v3077 = vadd.f32 %v2972, %v3076
        %v3078 = vpop.f32.mrb[0].mxu0
        %3079 = vmatprep.mubr.f32.mxu0 0.0
        %3080 = vmatmul.mubr.f32.gmra.mrb[0].mxu0 %v2861
        %v3081 = vpop.f32.mrb[0].mxu0
        %v3082 = vadd.f32 %v2977, %v3081
        %v3083 = vpop.f32.mrb[0].mxu0
        %3084 = vmatprep.mubr.f32.mxu0 0.0
        %3085 = vmatmul.mubr.f32.gmra.mrb[0].mxu0 %v2862
        %v3086 = vpop.f32.mrb[0].mxu0
        %v3087 = vadd.f32 %v2982, %v3086
        %v3088 = vpop.f32.mrb[0].mxu0
        %3089 = vdwg.mxu0
        %s3090 = scalar_lea.vmem %s13, 64
        %v3091 = vld [vmem:[%s3090] sm:$0xff]
        %v3092 = vld [vmem:[%s3090 + $0x8] sm:$0xff]
        %v3093 = vld [vmem:[%s3090 + $0x10] sm:$0xff]
        %v3094 = vld [vmem:[%s3090 + $0x18] sm:$0xff]
        %v3095 = vld [vmem:[%s3090 + $0x20] sm:$0xff]
        %v3096 = vld [vmem:[%s3090 + $0x28] sm:$0xff]
        %v3097 = vld [vmem:[%s3090 + $0x30] sm:$0xff]
        %v3098 = vld [vmem:[%s3090 + $0x38] sm:$0xff]
        %3099 = vmatprep.subr.mxu0 0.0
        %3100 = vmatpush1.msra.mxu0 %v2663
        %3101 = vmatprep.subr.mxu0 0.0
        %3102 = vmatpush1.msra.mxu0 %v2664
        %3103 = vmatprep.subr.mxu0 0.0
        %3104 = vmatpush1.msra.mxu0 %v2665
        %3105 = vmatprep.subr.mxu0 0.0
        %3106 = vmatpush1.msra.mxu0 %v2666
        %3107 = vmatprep.subr.mxu0 0.0
        %3108 = vmatpush1.msra.mxu0 %v2667
        %3109 = vmatprep.subr.mxu0 0.0
        %3110 = vmatpush1.msra.mxu0 %v2668
        %3111 = vmatprep.subr.mxu0 0.0
        %3112 = vmatpush1.msra.mxu0 %v2669
        %3113 = vmatprep.subr.mxu0 0.0
        %3114 = vmatpush1.msra.mxu0 %v2670
        %3115 = vmatprep.subr.mxu0 0.0
        %3116 = vmatpush1.msra.mxu0 %v2671
        %3117 = vmatprep.subr.mxu0 0.0
        %3118 = vmatpush1.msra.mxu0 %v2672
        %3119 = vmatprep.subr.mxu0 0.0
        %3120 = vmatpush1.msra.mxu0 %v2673
        %3121 = vmatprep.subr.mxu0 0.0
        %3122 = vmatpush1.msra.mxu0 %v2674
        %3123 = vmatprep.subr.mxu0 0.0
        %3124 = vmatpush1.msra.mxu0 %v2675
        %3125 = vmatprep.subr.mxu0 0.0
        %3126 = vmatpush1.msra.mxu0 %v2676
        %3127 = vmatprep.subr.mxu0 0.0
        %3128 = vmatpush1.msra.mxu0 %v2677
        %3129 = vmatprep.subr.mxu0 0.0
        %3130 = vmatpush1.msra.mxu0 %v2678
        %3131 = vmatprep.subr.mxu0 0.0
        %3132 = vmatpush1.msra.mxu0 0.0
        %3133 = vmatprep.subr.mxu0 0.0
        %3134 = vmatpush1.msra.mxu0 0.0
        %3135 = vmatprep.subr.mxu0 0.0
        %3136 = vmatpush1.msra.mxu0 0.0
        %3137 = vmatprep.subr.mxu0 0.0
        %3138 = vmatpush1.msra.mxu0 0.0
        %3139 = vmatprep.subr.mxu0 0.0
        %3140 = vmatpush1.msra.mxu0 0.0
        %3141 = vmatprep.subr.mxu0 0.0
        %3142 = vmatpush1.msra.mxu0 0.0
        %3143 = vmatprep.subr.mxu0 0.0
        %3144 = vmatpush1.msra.mxu0 0.0
        %3145 = vmatprep.subr.mxu0 0.0
        %3146 = vmatpush1.msra.mxu0 0.0
        %3147 = vmatprep.subr.mxu0 0.0
        %3148 = vmatpush1.msra.mxu0 0.0
        %3149 = vmatprep.subr.mxu0 0.0
        %3150 = vmatpush1.msra.mxu0 0.0
        %3151 = vmatprep.subr.mxu0 0.0
        %3152 = vmatpush1.msra.mxu0 0.0
        %3153 = vmatprep.subr.mxu0 0.0
        %3154 = vmatpush1.msra.mxu0 0.0
        %3155 = vmatprep.subr.mxu0 0.0
        %3156 = vmatpush1.msra.mxu0 0.0
        %3157 = vmatprep.subr.mxu0 0.0
        %3158 = vmatpush1.msra.mxu0 0.0
        %3159 = vmatprep.subr.mxu0 0.0
        %3160 = vmatpush1.msra.mxu0 0.0
        %3161 = vmatprep.subr.mxu0 0.0
        %3162 = vmatpush1.msra.mxu0 0.0
        %3163 = vmatprep.mubr.f32.mxu0 0.0
        %3164 = vmatmul.mubr.f32.gmra.mrb[0].mxu0 %v3091
        %v3165 = vpop.f32.mrb[0].mxu0
        %v3166 = vadd.f32 0.0, %v3165
        %v3167 = vpop.f32.mrb[0].mxu0
        %3168 = vmatprep.mubr.f32.mxu0 0.0
        %3169 = vmatmul.mubr.f32.gmra.mrb[0].mxu0 %v3092
        %v3170 = vpop.f32.mrb[0].mxu0
        %v3171 = vadd.f32 0.0, %v3170
        %v3172 = vpop.f32.mrb[0].mxu0
        %3173 = vmatprep.mubr.f32.mxu0 0.0
        %3174 = vmatmul.mubr.f32.gmra.mrb[0].mxu0 %v3093
        %v3175 = vpop.f32.mrb[0].mxu0
        %v3176 = vadd.f32 0.0, %v3175
        %v3177 = vpop.f32.mrb[0].mxu0
        %3178 = vmatprep.mubr.f32.mxu0 0.0
        %3179 = vmatmul.mubr.f32.gmra.mrb[0].mxu0 %v3094
        %v3180 = vpop.f32.mrb[0].mxu0
        %v3181 = vadd.f32 0.0, %v3180
        %v3182 = vpop.f32.mrb[0].mxu0
        %3183 = vmatprep.mubr.f32.mxu0 0.0
        %3184 = vmatmul.mubr.f32.gmra.mrb[0].mxu0 %v3095
        %v3185 = vpop.f32.mrb[0].mxu0
        %v3186 = vadd.f32 0.0, %v3185
        %v3187 = vpop.f32.mrb[0].mxu0
        %3188 = vmatprep.mubr.f32.mxu0 0.0
        %3189 = vmatmul.mubr.f32.gmra.mrb[0].mxu0 %v3096
        %v3190 = vpop.f32.mrb[0].mxu0
        %v3191 = vadd.f32 0.0, %v3190
        %v3192 = vpop.f32.mrb[0].mxu0
        %3193 = vmatprep.mubr.f32.mxu0 0.0
        %3194 = vmatmul.mubr.f32.gmra.mrb[0].mxu0 %v3097
        %v3195 = vpop.f32.mrb[0].mxu0
        %v3196 = vadd.f32 0.0, %v3195
        %v3197 = vpop.f32.mrb[0].mxu0
        %3198 = vmatprep.mubr.f32.mxu0 0.0
        %3199 = vmatmul.mubr.f32.gmra.mrb[0].mxu0 %v3098
        %v3200 = vpop.f32.mrb[0].mxu0
        %v3201 = vadd.f32 0.0, %v3200
        %v3202 = vpop.f32.mrb[0].mxu0
        %3203 = vdwg.mxu0
        %3204 = vmatprep.subr.mxu0 0.0
        %3205 = vmatpush1.msra.mxu0 %v2839
        %3206 = vmatprep.subr.mxu0 0.0
        %3207 = vmatpush1.msra.mxu0 %v2840
        %3208 = vmatprep.subr.mxu0 0.0
        %3209 = vmatpush1.msra.mxu0 %v2841
        %3210 = vmatprep.subr.mxu0 0.0
        %3211 = vmatpush1.msra.mxu0 %v2842
        %3212 = vmatprep.subr.mxu0 0.0
        %3213 = vmatpush1.msra.mxu0 %v2843
        %3214 = vmatprep.subr.mxu0 0.0
        %3215 = vmatpush1.msra.mxu0 %v2844
        %3216 = vmatprep.subr.mxu0 0.0
        %3217 = vmatpush1.msra.mxu0 %v2845
        %3218 = vmatprep.subr.mxu0 0.0
        %3219 = vmatpush1.msra.mxu0 %v2846
        %3220 = vmatprep.subr.mxu0 0.0
        %3221 = vmatpush1.msra.mxu0 %v2847
        %3222 = vmatprep.subr.mxu0 0.0
        %3223 = vmatpush1.msra.mxu0 %v2848
        %3224 = vmatprep.subr.mxu0 0.0
        %3225 = vmatpush1.msra.mxu0 %v2849
        %3226 = vmatprep.subr.mxu0 0.0
        %3227 = vmatpush1.msra.mxu0 %v2850
        %3228 = vmatprep.subr.mxu0 0.0
        %3229 = vmatpush1.msra.mxu0 %v2851
        %3230 = vmatprep.subr.mxu0 0.0
        %3231 = vmatpush1.msra.mxu0 %v2852
        %3232 = vmatprep.subr.mxu0 0.0
        %3233 = vmatpush1.msra.mxu0 %v2853
        %3234 = vmatprep.subr.mxu0 0.0
        %3235 = vmatpush1.msra.mxu0 %v2854
        %3236 = vmatprep.subr.mxu0 0.0
        %3237 = vmatpush1.msra.mxu0 0.0
        %3238 = vmatprep.subr.mxu0 0.0
        %3239 = vmatpush1.msra.mxu0 0.0
        %3240 = vmatprep.subr.mxu0 0.0
        %3241 = vmatpush1.msra.mxu0 0.0
        %3242 = vmatprep.subr.mxu0 0.0
        %3243 = vmatpush1.msra.mxu0 0.0
        %3244 = vmatprep.subr.mxu0 0.0
        %3245 = vmatpush1.msra.mxu0 0.0
        %3246 = vmatprep.subr.mxu0 0.0
        %3247 = vmatpush1.msra.mxu0 0.0
        %3248 = vmatprep.subr.mxu0 0.0
        %3249 = vmatpush1.msra.mxu0 0.0
        %3250 = vmatprep.subr.mxu0 0.0
        %3251 = vmatpush1.msra.mxu0 0.0
        %3252 = vmatprep.subr.mxu0 0.0
        %3253 = vmatpush1.msra.mxu0 0.0
        %3254 = vmatprep.subr.mxu0 0.0
        %3255 = vmatpush1.msra.mxu0 0.0
        %3256 = vmatprep.subr.mxu0 0.0
        %3257 = vmatpush1.msra.mxu0 0.0
        %3258 = vmatprep.subr.mxu0 0.0
        %3259 = vmatpush1.msra.mxu0 0.0
        %3260 = vmatprep.subr.mxu0 0.0
        %3261 = vmatpush1.msra.mxu0 0.0
        %3262 = vmatprep.subr.mxu0 0.0
        %3263 = vmatpush1.msra.mxu0 0.0
        %3264 = vmatprep.subr.mxu0 0.0
        %3265 = vmatpush1.msra.mxu0 0.0
        %3266 = vmatprep.subr.mxu0 0.0
        %3267 = vmatpush1.msra.mxu0 0.0
        %3268 = vmatprep.mubr.f32.mxu0 0.0
        %3269 = vmatmul.mubr.f32.gmra.mrb[0].mxu0 %v2863
        %v3270 = vpop.f32.mrb[0].mxu0
        %v3271 = vadd.f32 %v3166, %v3270
        %v3272 = vpop.f32.mrb[0].mxu0
        %3273 = vmatprep.mubr.f32.mxu0 0.0
        %3274 = vmatmul.mubr.f32.gmra.mrb[0].mxu0 %v2864
        %v3275 = vpop.f32.mrb[0].mxu0
        %v3276 = vadd.f32 %v3171, %v3275
        %v3277 = vpop.f32.mrb[0].mxu0
        %3278 = vmatprep.mubr.f32.mxu0 0.0
        %3279 = vmatmul.mubr.f32.gmra.mrb[0].mxu0 %v2865
        %v3280 = vpop.f32.mrb[0].mxu0
        %v3281 = vadd.f32 %v3176, %v3280
        %v3282 = vpop.f32.mrb[0].mxu0
        %3283 = vmatprep.mubr.f32.mxu0 0.0
        %3284 = vmatmul.mubr.f32.gmra.mrb[0].mxu0 %v2866
        %v3285 = vpop.f32.mrb[0].mxu0
        %v3286 = vadd.f32 %v3181, %v3285
        %v3287 = vpop.f32.mrb[0].mxu0
        %3288 = vmatprep.mubr.f32.mxu0 0.0
        %3289 = vmatmul.mubr.f32.gmra.mrb[0].mxu0 %v2867
        %v3290 = vpop.f32.mrb[0].mxu0
        %v3291 = vadd.f32 %v3186, %v3290
        %v3292 = vpop.f32.mrb[0].mxu0
        %3293 = vmatprep.mubr.f32.mxu0 0.0
        %3294 = vmatmul.mubr.f32.gmra.mrb[0].mxu0 %v2868
        %v3295 = vpop.f32.mrb[0].mxu0
        %v3296 = vadd.f32 %v3191, %v3295
        %v3297 = vpop.f32.mrb[0].mxu0
        %3298 = vmatprep.mubr.f32.mxu0 0.0
        %3299 = vmatmul.mubr.f32.gmra.mrb[0].mxu0 %v2869
        %v3300 = vpop.f32.mrb[0].mxu0
        %v3301 = vadd.f32 %v3196, %v3300
        %v3302 = vpop.f32.mrb[0].mxu0
        %3303 = vmatprep.mubr.f32.mxu0 0.0
        %3304 = vmatmul.mubr.f32.gmra.mrb[0].mxu0 %v2870
        %v3305 = vpop.f32.mrb[0].mxu0
        %v3306 = vadd.f32 %v3201, %v3305
        %v3307 = vpop.f32.mrb[0].mxu0
        %3308 = vdwg.mxu0
        %3309 = vrot.lane.b32.xlu0 %v2759, 127
        %v3310 = vpop.permute.xlu0 %3309
        %3311 = vrot.lane.b32.xlu0 %v2760, 127
        %v3312 = vpop.permute.xlu0 %3311
        %3313 = vrot.lane.b32.xlu0 %v2761, 127
        %v3314 = vpop.permute.xlu0 %3313
        %3315 = vrot.lane.b32.xlu0 %v2762, 127
        %v3316 = vpop.permute.xlu0 %3315
        %3317 = vrot.lane.b32.xlu0 %v2763, 127
        %v3318 = vpop.permute.xlu0 %3317
        %3319 = vrot.lane.b32.xlu0 %v2764, 127
        %v3320 = vpop.permute.xlu0 %3319
        %3321 = vrot.lane.b32.xlu0 %v2765, 127
        %v3322 = vpop.permute.xlu0 %3321
        %3323 = vrot.lane.b32.xlu0 %v2766, 127
        %v3324 = vpop.permute.xlu0 %3323
        %3325 = vrot.lane.b32.xlu0 %v2767, 127
        %v3326 = vpop.permute.xlu0 %3325
        %3327 = vrot.lane.b32.xlu0 %v2768, 127
        %v3328 = vpop.permute.xlu0 %3327
        %3329 = vrot.lane.b32.xlu0 %v2769, 127
        %v3330 = vpop.permute.xlu0 %3329
        %3331 = vrot.lane.b32.xlu0 %v2770, 127
        %v3332 = vpop.permute.xlu0 %3331
        %3333 = vrot.lane.b32.xlu0 %v2771, 127
        %v3334 = vpop.permute.xlu0 %3333
        %3335 = vrot.lane.b32.xlu0 %v2772, 127
        %v3336 = vpop.permute.xlu0 %3335
        %3337 = vrot.lane.b32.xlu0 %v2773, 127
        %v3338 = vpop.permute.xlu0 %3337
        %3339 = vrot.lane.b32.xlu0 %v2774, 127
        %v3340 = vpop.permute.xlu0 %3339
        %v3357 = vsel %vm2325, 0.0, %v3310
        %v3358 = vsel %vm2325, 0.0, %v3312
        %v3359 = vsel %vm2325, 0.0, %v3314
        %v3360 = vsel %vm2325, 0.0, %v3316
        %v3361 = vsel %vm2325, 0.0, %v3318
        %v3362 = vsel %vm2325, 0.0, %v3320
        %v3363 = vsel %vm2325, 0.0, %v3322
        %v3364 = vsel %vm2325, 0.0, %v3324
        %v3365 = vsel %vm2325, 0.0, %v3326
        %v3366 = vsel %vm2325, 0.0, %v3328
        %v3367 = vsel %vm2325, 0.0, %v3330
        %v3368 = vsel %vm2325, 0.0, %v3332
        %v3369 = vsel %vm2325, 0.0, %v3334
        %v3370 = vsel %vm2325, 0.0, %v3336
        %v3371 = vsel %vm2325, 0.0, %v3338
        %v3372 = vsel %vm2325, 0.0, %v3340
        %s3373 = scalar_lea.vmem %s11, 128
        %v3374 = vld [vmem:[%s3373] sm:$0xff]
        %v3375 = vld [vmem:[%s3373 + $0x8] sm:$0xff]
        %v3376 = vld [vmem:[%s3373 + $0x10] sm:$0xff]
        %v3377 = vld [vmem:[%s3373 + $0x18] sm:$0xff]
        %v3378 = vld [vmem:[%s3373 + $0x20] sm:$0xff]
        %v3379 = vld [vmem:[%s3373 + $0x28] sm:$0xff]
        %v3380 = vld [vmem:[%s3373 + $0x30] sm:$0xff]
        %v3381 = vld [vmem:[%s3373 + $0x38] sm:$0xff]
        %3382 = vmatprep.subr.mxu0 0.0
        %3383 = vmatpush1.msra.mxu0 %v3357
        %3384 = vmatprep.subr.mxu0 0.0
        %3385 = vmatpush1.msra.mxu0 %v3358
        %3386 = vmatprep.subr.mxu0 0.0
        %3387 = vmatpush1.msra.mxu0 %v3359
        %3388 = vmatprep.subr.mxu0 0.0
        %3389 = vmatpush1.msra.mxu0 %v3360
        %3390 = vmatprep.subr.mxu0 0.0
        %3391 = vmatpush1.msra.mxu0 %v3361
        %3392 = vmatprep.subr.mxu0 0.0
        %3393 = vmatpush1.msra.mxu0 %v3362
        %3394 = vmatprep.subr.mxu0 0.0
        %3395 = vmatpush1.msra.mxu0 %v3363
        %3396 = vmatprep.subr.mxu0 0.0
        %3397 = vmatpush1.msra.mxu0 %v3364
        %3398 = vmatprep.subr.mxu0 0.0
        %3399 = vmatpush1.msra.mxu0 %v3365
        %3400 = vmatprep.subr.mxu0 0.0
        %3401 = vmatpush1.msra.mxu0 %v3366
        %3402 = vmatprep.subr.mxu0 0.0
        %3403 = vmatpush1.msra.mxu0 %v3367
        %3404 = vmatprep.subr.mxu0 0.0
        %3405 = vmatpush1.msra.mxu0 %v3368
        %3406 = vmatprep.subr.mxu0 0.0
        %3407 = vmatpush1.msra.mxu0 %v3369
        %3408 = vmatprep.subr.mxu0 0.0
        %3409 = vmatpush1.msra.mxu0 %v3370
        %3410 = vmatprep.subr.mxu0 0.0
        %3411 = vmatpush1.msra.mxu0 %v3371
        %3412 = vmatprep.subr.mxu0 0.0
        %3413 = vmatpush1.msra.mxu0 %v3372
        %3414 = vmatprep.subr.mxu0 0.0
        %3415 = vmatpush1.msra.mxu0 0.0
        %3416 = vmatprep.subr.mxu0 0.0
        %3417 = vmatpush1.msra.mxu0 0.0
        %3418 = vmatprep.subr.mxu0 0.0
        %3419 = vmatpush1.msra.mxu0 0.0
        %3420 = vmatprep.subr.mxu0 0.0
        %3421 = vmatpush1.msra.mxu0 0.0
        %3422 = vmatprep.subr.mxu0 0.0
        %3423 = vmatpush1.msra.mxu0 0.0
        %3424 = vmatprep.subr.mxu0 0.0
        %3425 = vmatpush1.msra.mxu0 0.0
        %3426 = vmatprep.subr.mxu0 0.0
        %3427 = vmatpush1.msra.mxu0 0.0
        %3428 = vmatprep.subr.mxu0 0.0
        %3429 = vmatpush1.msra.mxu0 0.0
        %3430 = vmatprep.subr.mxu0 0.0
        %3431 = vmatpush1.msra.mxu0 0.0
        %3432 = vmatprep.subr.mxu0 0.0
        %3433 = vmatpush1.msra.mxu0 0.0
        %3434 = vmatprep.subr.mxu0 0.0
        %3435 = vmatpush1.msra.mxu0 0.0
        %3436 = vmatprep.subr.mxu0 0.0
        %3437 = vmatpush1.msra.mxu0 0.0
        %3438 = vmatprep.subr.mxu0 0.0
        %3439 = vmatpush1.msra.mxu0 0.0
        %3440 = vmatprep.subr.mxu0 0.0
        %3441 = vmatpush1.msra.mxu0 0.0
        %3442 = vmatprep.subr.mxu0 0.0
        %3443 = vmatpush1.msra.mxu0 0.0
        %3444 = vmatprep.subr.mxu0 0.0
        %3445 = vmatpush1.msra.mxu0 0.0
        %3446 = vmatprep.mubr.f32.mxu0 0.0
        %3447 = vmatmul.mubr.f32.gmra.mrb[0].mxu0 %v3374
        %v3448 = vpop.f32.mrb[0].mxu0
        %v3449 = vadd.f32 0.0, %v3448
        %v3450 = vpop.f32.mrb[0].mxu0
        %3451 = vmatprep.mubr.f32.mxu0 0.0
        %3452 = vmatmul.mubr.f32.gmra.mrb[0].mxu0 %v3375
        %v3453 = vpop.f32.mrb[0].mxu0
        %v3454 = vadd.f32 0.0, %v3453
        %v3455 = vpop.f32.mrb[0].mxu0
        %3456 = vmatprep.mubr.f32.mxu0 0.0
        %3457 = vmatmul.mubr.f32.gmra.mrb[0].mxu0 %v3376
        %v3458 = vpop.f32.mrb[0].mxu0
        %v3459 = vadd.f32 0.0, %v3458
        %v3460 = vpop.f32.mrb[0].mxu0
        %3461 = vmatprep.mubr.f32.mxu0 0.0
        %3462 = vmatmul.mubr.f32.gmra.mrb[0].mxu0 %v3377
        %v3463 = vpop.f32.mrb[0].mxu0
        %v3464 = vadd.f32 0.0, %v3463
        %v3465 = vpop.f32.mrb[0].mxu0
        %3466 = vmatprep.mubr.f32.mxu0 0.0
        %3467 = vmatmul.mubr.f32.gmra.mrb[0].mxu0 %v3378
        %v3468 = vpop.f32.mrb[0].mxu0
        %v3469 = vadd.f32 0.0, %v3468
        %v3470 = vpop.f32.mrb[0].mxu0
        %3471 = vmatprep.mubr.f32.mxu0 0.0
        %3472 = vmatmul.mubr.f32.gmra.mrb[0].mxu0 %v3379
        %v3473 = vpop.f32.mrb[0].mxu0
        %v3474 = vadd.f32 0.0, %v3473
        %v3475 = vpop.f32.mrb[0].mxu0
        %3476 = vmatprep.mubr.f32.mxu0 0.0
        %3477 = vmatmul.mubr.f32.gmra.mrb[0].mxu0 %v3380
        %v3478 = vpop.f32.mrb[0].mxu0
        %v3479 = vadd.f32 0.0, %v3478
        %v3480 = vpop.f32.mrb[0].mxu0
        %3481 = vmatprep.mubr.f32.mxu0 0.0
        %3482 = vmatmul.mubr.f32.gmra.mrb[0].mxu0 %v3381
        %v3483 = vpop.f32.mrb[0].mxu0
        %v3484 = vadd.f32 0.0, %v3483
        %v3485 = vpop.f32.mrb[0].mxu0
        %3486 = vdwg.mxu0
        %v3487 = vadd.f32 %v3052, %v3449
        %v3488 = vadd.f32 %v3057, %v3454
        %v3489 = vadd.f32 %v3062, %v3459
        %v3490 = vadd.f32 %v3067, %v3464
        %v3491 = vadd.f32 %v3072, %v3469
        %v3492 = vadd.f32 %v3077, %v3474
        %v3493 = vadd.f32 %v3082, %v3479
        %v3494 = vadd.f32 %v3087, %v3484
        %s3495 = scalar_lea.vmem %s13, 128
        %v3496 = vld [vmem:[%s3495] sm:$0xff]
        %v3497 = vld [vmem:[%s3495 + $0x8] sm:$0xff]
        %v3498 = vld [vmem:[%s3495 + $0x10] sm:$0xff]
        %v3499 = vld [vmem:[%s3495 + $0x18] sm:$0xff]
        %v3500 = vld [vmem:[%s3495 + $0x20] sm:$0xff]
        %v3501 = vld [vmem:[%s3495 + $0x28] sm:$0xff]
        %v3502 = vld [vmem:[%s3495 + $0x30] sm:$0xff]
        %v3503 = vld [vmem:[%s3495 + $0x38] sm:$0xff]
        %3504 = vmatprep.subr.mxu0 0.0
        %3505 = vmatpush1.msra.mxu0 %v3357
        %3506 = vmatprep.subr.mxu0 0.0
        %3507 = vmatpush1.msra.mxu0 %v3358
        %3508 = vmatprep.subr.mxu0 0.0
        %3509 = vmatpush1.msra.mxu0 %v3359
        %3510 = vmatprep.subr.mxu0 0.0
        %3511 = vmatpush1.msra.mxu0 %v3360
        %3512 = vmatprep.subr.mxu0 0.0
        %3513 = vmatpush1.msra.mxu0 %v3361
        %3514 = vmatprep.subr.mxu0 0.0
        %3515 = vmatpush1.msra.mxu0 %v3362
        %3516 = vmatprep.subr.mxu0 0.0
        %3517 = vmatpush1.msra.mxu0 %v3363
        %3518 = vmatprep.subr.mxu0 0.0
        %3519 = vmatpush1.msra.mxu0 %v3364
        %3520 = vmatprep.subr.mxu0 0.0
        %3521 = vmatpush1.msra.mxu0 %v3365
        %3522 = vmatprep.subr.mxu0 0.0
        %3523 = vmatpush1.msra.mxu0 %v3366
        %3524 = vmatprep.subr.mxu0 0.0
        %3525 = vmatpush1.msra.mxu0 %v3367
        %3526 = vmatprep.subr.mxu0 0.0
        %3527 = vmatpush1.msra.mxu0 %v3368
        %3528 = vmatprep.subr.mxu0 0.0
        %3529 = vmatpush1.msra.mxu0 %v3369
        %3530 = vmatprep.subr.mxu0 0.0
        %3531 = vmatpush1.msra.mxu0 %v3370
        %3532 = vmatprep.subr.mxu0 0.0
        %3533 = vmatpush1.msra.mxu0 %v3371
        %3534 = vmatprep.subr.mxu0 0.0
        %3535 = vmatpush1.msra.mxu0 %v3372
        %3536 = vmatprep.subr.mxu0 0.0
        %3537 = vmatpush1.msra.mxu0 0.0
        %3538 = vmatprep.subr.mxu0 0.0
        %3539 = vmatpush1.msra.mxu0 0.0
        %3540 = vmatprep.subr.mxu0 0.0
        %3541 = vmatpush1.msra.mxu0 0.0
        %3542 = vmatprep.subr.mxu0 0.0
        %3543 = vmatpush1.msra.mxu0 0.0
        %3544 = vmatprep.subr.mxu0 0.0
        %3545 = vmatpush1.msra.mxu0 0.0
        %3546 = vmatprep.subr.mxu0 0.0
        %3547 = vmatpush1.msra.mxu0 0.0
        %3548 = vmatprep.subr.mxu0 0.0
        %3549 = vmatpush1.msra.mxu0 0.0
        %3550 = vmatprep.subr.mxu0 0.0
        %3551 = vmatpush1.msra.mxu0 0.0
        %3552 = vmatprep.subr.mxu0 0.0
        %3553 = vmatpush1.msra.mxu0 0.0
        %3554 = vmatprep.subr.mxu0 0.0
        %3555 = vmatpush1.msra.mxu0 0.0
        %3556 = vmatprep.subr.mxu0 0.0
        %3557 = vmatpush1.msra.mxu0 0.0
        %3558 = vmatprep.subr.mxu0 0.0
        %3559 = vmatpush1.msra.mxu0 0.0
        %3560 = vmatprep.subr.mxu0 0.0
        %3561 = vmatpush1.msra.mxu0 0.0
        %3562 = vmatprep.subr.mxu0 0.0
        %3563 = vmatpush1.msra.mxu0 0.0
        %3564 = vmatprep.subr.mxu0 0.0
        %3565 = vmatpush1.msra.mxu0 0.0
        %3566 = vmatprep.subr.mxu0 0.0
        %3567 = vmatpush1.msra.mxu0 0.0
        %3568 = vmatprep.mubr.f32.mxu0 0.0
        %3569 = vmatmul.mubr.f32.gmra.mrb[0].mxu0 %v3496
        %v3570 = vpop.f32.mrb[0].mxu0
        %v3571 = vadd.f32 0.0, %v3570
        %v3572 = vpop.f32.mrb[0].mxu0
        %3573 = vmatprep.mubr.f32.mxu0 0.0
        %3574 = vmatmul.mubr.f32.gmra.mrb[0].mxu0 %v3497
        %v3575 = vpop.f32.mrb[0].mxu0
        %v3576 = vadd.f32 0.0, %v3575
        %v3577 = vpop.f32.mrb[0].mxu0
        %3578 = vmatprep.mubr.f32.mxu0 0.0
        %3579 = vmatmul.mubr.f32.gmra.mrb[0].mxu0 %v3498
        %v3580 = vpop.f32.mrb[0].mxu0
        %v3581 = vadd.f32 0.0, %v3580
        %v3582 = vpop.f32.mrb[0].mxu0
        %3583 = vmatprep.mubr.f32.mxu0 0.0
        %3584 = vmatmul.mubr.f32.gmra.mrb[0].mxu0 %v3499
        %v3585 = vpop.f32.mrb[0].mxu0
        %v3586 = vadd.f32 0.0, %v3585
        %v3587 = vpop.f32.mrb[0].mxu0
        %3588 = vmatprep.mubr.f32.mxu0 0.0
        %3589 = vmatmul.mubr.f32.gmra.mrb[0].mxu0 %v3500
        %v3590 = vpop.f32.mrb[0].mxu0
        %v3591 = vadd.f32 0.0, %v3590
        %v3592 = vpop.f32.mrb[0].mxu0
        %3593 = vmatprep.mubr.f32.mxu0 0.0
        %3594 = vmatmul.mubr.f32.gmra.mrb[0].mxu0 %v3501
        %v3595 = vpop.f32.mrb[0].mxu0
        %v3596 = vadd.f32 0.0, %v3595
        %v3597 = vpop.f32.mrb[0].mxu0
        %3598 = vmatprep.mubr.f32.mxu0 0.0
        %3599 = vmatmul.mubr.f32.gmra.mrb[0].mxu0 %v3502
        %v3600 = vpop.f32.mrb[0].mxu0
        %v3601 = vadd.f32 0.0, %v3600
        %v3602 = vpop.f32.mrb[0].mxu0
        %3603 = vmatprep.mubr.f32.mxu0 0.0
        %3604 = vmatmul.mubr.f32.gmra.mrb[0].mxu0 %v3503
        %v3605 = vpop.f32.mrb[0].mxu0
        %v3606 = vadd.f32 0.0, %v3605
        %v3607 = vpop.f32.mrb[0].mxu0
        %3608 = vdwg.mxu0
        %v3609 = vadd.f32 %v3271, %v3571
        %v3610 = vadd.f32 %v3276, %v3576
        %v3611 = vadd.f32 %v3281, %v3581
        %v3612 = vadd.f32 %v3286, %v3586
        %v3613 = vadd.f32 %v3291, %v3591
        %v3614 = vadd.f32 %v3296, %v3596
        %v3615 = vadd.f32 %v3301, %v3601
        %v3616 = vadd.f32 %v3306, %v3606
        %v3617 = vld [vmem:[%s14] sm:$0xff]
        %v3618 = vld [vmem:[%s14 + $0x8] sm:$0xff]
        %v3619 = vld [vmem:[%s14 + $0x10] sm:$0xff]
        %v3620 = vld [vmem:[%s14 + $0x18] sm:$0xff]
        %v3621 = vld [vmem:[%s14 + $0x20] sm:$0xff]
        %v3622 = vld [vmem:[%s14 + $0x28] sm:$0xff]
        %v3623 = vld [vmem:[%s14 + $0x30] sm:$0xff]
        %v3624 = vld [vmem:[%s14 + $0x38] sm:$0xff]
        %3626 = vset.pattern.permute.xlu0 0
        %3627 = vperm.xlu0 %3626, %v3617
        %v3628 = vpop.permute.xlu0 %3627
        %3631 = vset.pattern.permute.xlu0 0
        %3632 = vperm.xlu0 %3631, %v3618
        %v3633 = vpop.permute.xlu0 %3632
        %3636 = vset.pattern.permute.xlu0 0
        %3637 = vperm.xlu0 %3636, %v3619
        %v3638 = vpop.permute.xlu0 %3637
        %3641 = vset.pattern.permute.xlu0 0
        %3642 = vperm.xlu0 %3641, %v3620
        %v3643 = vpop.permute.xlu0 %3642
        %3646 = vset.pattern.permute.xlu0 0
        %3647 = vperm.xlu0 %3646, %v3621
        %v3648 = vpop.permute.xlu0 %3647
        %3651 = vset.pattern.permute.xlu0 0
        %3652 = vperm.xlu0 %3651, %v3622
        %v3653 = vpop.permute.xlu0 %3652
        %3656 = vset.pattern.permute.xlu0 0
        %3657 = vperm.xlu0 %3656, %v3623
        %v3658 = vpop.permute.xlu0 %3657
        %3661 = vset.pattern.permute.xlu0 0
        %3662 = vperm.xlu0 %3661, %v3624
        %v3663 = vpop.permute.xlu0 %3662
        %v3665 = vadd.f32 %v3487, %v3628
        %v3666 = vadd.f32 %v3488, %v3633
        %v3667 = vadd.f32 %v3489, %v3638
        %v3668 = vadd.f32 %v3490, %v3643
        %v3669 = vadd.f32 %v3491, %v3648
        %v3670 = vadd.f32 %v3492, %v3653
        %v3671 = vadd.f32 %v3493, %v3658
        %v3672 = vadd.f32 %v3494, %v3663
        %v3673 = vmax.f32 %v3665, 0.0
        %v3674 = vmax.f32 %v3666, 0.0
        %v3675 = vmax.f32 %v3667, 0.0
        %v3676 = vmax.f32 %v3668, 0.0
        %v3677 = vmax.f32 %v3669, 0.0
        %v3678 = vmax.f32 %v3670, 0.0
        %v3679 = vmax.f32 %v3671, 0.0
        %v3680 = vmax.f32 %v3672, 0.0
        %s3681 = scalar_lea.vmem %s14, 64
        %v3682 = vld [vmem:[%s3681] sm:$0xff]
        %v3683 = vld [vmem:[%s3681 + $0x8] sm:$0xff]
        %v3684 = vld [vmem:[%s3681 + $0x10] sm:$0xff]
        %v3685 = vld [vmem:[%s3681 + $0x18] sm:$0xff]
        %v3686 = vld [vmem:[%s3681 + $0x20] sm:$0xff]
        %v3687 = vld [vmem:[%s3681 + $0x28] sm:$0xff]
        %v3688 = vld [vmem:[%s3681 + $0x30] sm:$0xff]
        %v3689 = vld [vmem:[%s3681 + $0x38] sm:$0xff]
        %s3690 = scalar_lea.vmem %s12, 64
        %v3691 = vld [vmem:[%s3690] sm:$0xff]
        %v3692 = vld [vmem:[%s3690 + $0x8] sm:$0xff]
        %v3693 = vld [vmem:[%s3690 + $0x10] sm:$0xff]
        %v3694 = vld [vmem:[%s3690 + $0x18] sm:$0xff]
        %v3695 = vld [vmem:[%s3690 + $0x20] sm:$0xff]
        %v3696 = vld [vmem:[%s3690 + $0x28] sm:$0xff]
        %v3697 = vld [vmem:[%s3690 + $0x30] sm:$0xff]
        %v3698 = vld [vmem:[%s3690 + $0x38] sm:$0xff]
        %v3699 = vld [vmem:[%s12] sm:$0xff]
        %v3700 = vld [vmem:[%s12 + $0x8] sm:$0xff]
        %v3701 = vld [vmem:[%s12 + $0x10] sm:$0xff]
        %v3702 = vld [vmem:[%s12 + $0x18] sm:$0xff]
        %v3703 = vld [vmem:[%s12 + $0x20] sm:$0xff]
        %v3704 = vld [vmem:[%s12 + $0x28] sm:$0xff]
        %v3705 = vld [vmem:[%s12 + $0x30] sm:$0xff]
        %v3706 = vld [vmem:[%s12 + $0x38] sm:$0xff]
        %3707 = vrot.lane.b32.xlu0 %v3673, 8
        %v3708 = vpop.permute.xlu0 %3707
        %v3709 = vsel %vm1832, %v3708, %v3673
        %3710 = vrot.lane.b32.xlu0 %v3674, 8
        %v3711 = vpop.permute.xlu0 %3710
        %v3712 = vsel %vm1832, %v3711, %v3674
        %3713 = vrot.lane.b32.xlu0 %v3675, 8
        %v3714 = vpop.permute.xlu0 %3713
        %v3715 = vsel %vm1832, %v3714, %v3675
        %3716 = vrot.lane.b32.xlu0 %v3676, 8
        %v3717 = vpop.permute.xlu0 %3716
        %v3718 = vsel %vm1832, %v3717, %v3676
        %3719 = vrot.lane.b32.xlu0 %v3677, 8
        %v3720 = vpop.permute.xlu0 %3719
        %v3721 = vsel %vm1832, %v3720, %v3677
        %3722 = vrot.lane.b32.xlu0 %v3678, 8
        %v3723 = vpop.permute.xlu0 %3722
        %v3724 = vsel %vm1832, %v3723, %v3678
        %3725 = vrot.lane.b32.xlu0 %v3679, 8
        %v3726 = vpop.permute.xlu0 %3725
        %v3727 = vsel %vm1832, %v3726, %v3679
        %3728 = vrot.lane.b32.xlu0 %v3680, 8
        %v3729 = vpop.permute.xlu0 %3728
        %v3730 = vsel %vm1832, %v3729, %v3680
        %3731 = vrot.lane.b32.xlu0 %v3709, 8
        %v3732 = vpop.permute.xlu0 %3731
        %3733 = vrot.lane.b32.xlu0 %v3712, 8
        %v3734 = vpop.permute.xlu0 %3733
        %3735 = vrot.lane.b32.xlu0 %v3715, 8
        %v3736 = vpop.permute.xlu0 %3735
        %3737 = vrot.lane.b32.xlu0 %v3718, 8
        %v3738 = vpop.permute.xlu0 %3737
        %3739 = vrot.lane.b32.xlu0 %v3721, 8
        %v3740 = vpop.permute.xlu0 %3739
        %3741 = vrot.lane.b32.xlu0 %v3724, 8
        %v3742 = vpop.permute.xlu0 %3741
        %3743 = vrot.lane.b32.xlu0 %v3727, 8
        %v3744 = vpop.permute.xlu0 %3743
        %3745 = vrot.lane.b32.xlu0 %v3730, 8
        %v3746 = vpop.permute.xlu0 %3745
        %v3747 = vsel %vm1832, %v3732, %v3673
        %v3748 = vsel %vm1832, %v3734, %v3674
        %v3749 = vsel %vm1832, %v3736, %v3675
        %v3750 = vsel %vm1832, %v3738, %v3676
        %v3751 = vsel %vm1832, %v3740, %v3677
        %v3752 = vsel %vm1832, %v3742, %v3678
        %v3753 = vsel %vm1832, %v3744, %v3679
        %v3754 = vsel %vm1832, %v3746, %v3680
        %3763 = vrot.lane.b32.xlu0 %v3747, 121
        %v3764 = vpop.permute.xlu0 %3763
        %3765 = vrot.lane.b32.xlu0 %v3748, 121
        %v3766 = vpop.permute.xlu0 %3765
        %3767 = vrot.lane.b32.xlu0 %v3749, 121
        %v3768 = vpop.permute.xlu0 %3767
        %3769 = vrot.lane.b32.xlu0 %v3750, 121
        %v3770 = vpop.permute.xlu0 %3769
        %3771 = vrot.lane.b32.xlu0 %v3751, 121
        %v3772 = vpop.permute.xlu0 %3771
        %3773 = vrot.lane.b32.xlu0 %v3752, 121
        %v3774 = vpop.permute.xlu0 %3773
        %3775 = vrot.lane.b32.xlu0 %v3753, 121
        %v3776 = vpop.permute.xlu0 %3775
        %3777 = vrot.lane.b32.xlu0 %v3754, 121
        %v3778 = vpop.permute.xlu0 %3777
        %v3787 = vsel %vm705, 0.0, %v3764
        %v3788 = vsel %vm705, 0.0, %v3766
        %v3789 = vsel %vm705, 0.0, %v3768
        %v3790 = vsel %vm705, 0.0, %v3770
        %v3791 = vsel %vm705, 0.0, %v3772
        %v3792 = vsel %vm705, 0.0, %v3774
        %v3793 = vsel %vm705, 0.0, %v3776
        %v3794 = vsel %vm705, 0.0, %v3778
        %v3796 = vsel %vm1921, %v3699, 0
        %v3799 = vsel %vm1921, %v3700, 0
        %v3802 = vsel %vm1921, %v3701, 0
        %v3805 = vsel %vm1921, %v3702, 0
        %v3808 = vsel %vm1921, %v3703, 0
        %v3811 = vsel %vm1921, %v3704, 0
        %v3814 = vsel %vm1921, %v3705, 0
        %v3817 = vsel %vm1921, %v3706, 0
        %3819 = vmatprep.subr.mxu0 0.0
        %3820 = vmatpush1.msra.mxu0 %v3787
        %3821 = vmatprep.subr.mxu0 0.0
        %3822 = vmatpush1.msra.mxu0 %v3788
        %3823 = vmatprep.subr.mxu0 0.0
        %3824 = vmatpush1.msra.mxu0 %v3789
        %3825 = vmatprep.subr.mxu0 0.0
        %3826 = vmatpush1.msra.mxu0 %v3790
        %3827 = vmatprep.subr.mxu0 0.0
        %3828 = vmatpush1.msra.mxu0 %v3791
        %3829 = vmatprep.subr.mxu0 0.0
        %3830 = vmatpush1.msra.mxu0 %v3792
        %3831 = vmatprep.subr.mxu0 0.0
        %3832 = vmatpush1.msra.mxu0 %v3793
        %3833 = vmatprep.subr.mxu0 0.0
        %3834 = vmatpush1.msra.mxu0 %v3794
        %3835 = vmatprep.subr.mxu0 0.0
        %3836 = vmatpush1.msra.mxu0 0.0
        %3837 = vmatprep.subr.mxu0 0.0
        %3838 = vmatpush1.msra.mxu0 0.0
        %3839 = vmatprep.subr.mxu0 0.0
        %3840 = vmatpush1.msra.mxu0 0.0
        %3841 = vmatprep.subr.mxu0 0.0
        %3842 = vmatpush1.msra.mxu0 0.0
        %3843 = vmatprep.subr.mxu0 0.0
        %3844 = vmatpush1.msra.mxu0 0.0
        %3845 = vmatprep.subr.mxu0 0.0
        %3846 = vmatpush1.msra.mxu0 0.0
        %3847 = vmatprep.subr.mxu0 0.0
        %3848 = vmatpush1.msra.mxu0 0.0
        %3849 = vmatprep.subr.mxu0 0.0
        %3850 = vmatpush1.msra.mxu0 0.0
        %3851 = vmatprep.subr.mxu0 0.0
        %3852 = vmatpush1.msra.mxu0 0.0
        %3853 = vmatprep.subr.mxu0 0.0
        %3854 = vmatpush1.msra.mxu0 0.0
        %3855 = vmatprep.subr.mxu0 0.0
        %3856 = vmatpush1.msra.mxu0 0.0
        %3857 = vmatprep.subr.mxu0 0.0
        %3858 = vmatpush1.msra.mxu0 0.0
        %3859 = vmatprep.subr.mxu0 0.0
        %3860 = vmatpush1.msra.mxu0 0.0
        %3861 = vmatprep.subr.mxu0 0.0
        %3862 = vmatpush1.msra.mxu0 0.0
        %3863 = vmatprep.subr.mxu0 0.0
        %3864 = vmatpush1.msra.mxu0 0.0
        %3865 = vmatprep.subr.mxu0 0.0
        %3866 = vmatpush1.msra.mxu0 0.0
        %3867 = vmatprep.subr.mxu0 0.0
        %3868 = vmatpush1.msra.mxu0 0.0
        %3869 = vmatprep.subr.mxu0 0.0
        %3870 = vmatpush1.msra.mxu0 0.0
        %3871 = vmatprep.subr.mxu0 0.0
        %3872 = vmatpush1.msra.mxu0 0.0
        %3873 = vmatprep.subr.mxu0 0.0
        %3874 = vmatpush1.msra.mxu0 0.0
        %3875 = vmatprep.subr.mxu0 0.0
        %3876 = vmatpush1.msra.mxu0 0.0
        %3877 = vmatprep.subr.mxu0 0.0
        %3878 = vmatpush1.msra.mxu0 0.0
        %3879 = vmatprep.subr.mxu0 0.0
        %3880 = vmatpush1.msra.mxu0 0.0
        %3881 = vmatprep.subr.mxu0 0.0
        %3882 = vmatpush1.msra.mxu0 0.0
        %3883 = vmatprep.mubr.f32.mxu0 0.0
        %3884 = vmatmul.mubr.f32.gmra.mrb[0].mxu0 %v3796
        %v3885 = vpop.f32.mrb[0].mxu0
        %v3886 = vadd.f32 0.0, %v3885
        %v3887 = vpop.f32.mrb[0].mxu0
        %3888 = vmatprep.mubr.f32.mxu0 0.0
        %3889 = vmatmul.mubr.f32.gmra.mrb[0].mxu0 %v3799
        %v3890 = vpop.f32.mrb[0].mxu0
        %v3891 = vadd.f32 0.0, %v3890
        %v3892 = vpop.f32.mrb[0].mxu0
        %3893 = vmatprep.mubr.f32.mxu0 0.0
        %3894 = vmatmul.mubr.f32.gmra.mrb[0].mxu0 %v3802
        %v3895 = vpop.f32.mrb[0].mxu0
        %v3896 = vadd.f32 0.0, %v3895
        %v3897 = vpop.f32.mrb[0].mxu0
        %3898 = vmatprep.mubr.f32.mxu0 0.0
        %3899 = vmatmul.mubr.f32.gmra.mrb[0].mxu0 %v3805
        %v3900 = vpop.f32.mrb[0].mxu0
        %v3901 = vadd.f32 0.0, %v3900
        %v3902 = vpop.f32.mrb[0].mxu0
        %3903 = vmatprep.mubr.f32.mxu0 0.0
        %3904 = vmatmul.mubr.f32.gmra.mrb[0].mxu0 %v3808
        %v3905 = vpop.f32.mrb[0].mxu0
        %v3906 = vadd.f32 0.0, %v3905
        %v3907 = vpop.f32.mrb[0].mxu0
        %3908 = vmatprep.mubr.f32.mxu0 0.0
        %3909 = vmatmul.mubr.f32.gmra.mrb[0].mxu0 %v3811
        %v3910 = vpop.f32.mrb[0].mxu0
        %v3911 = vadd.f32 0.0, %v3910
        %v3912 = vpop.f32.mrb[0].mxu0
        %3913 = vmatprep.mubr.f32.mxu0 0.0
        %3914 = vmatmul.mubr.f32.gmra.mrb[0].mxu0 %v3814
        %v3915 = vpop.f32.mrb[0].mxu0
        %v3916 = vadd.f32 0.0, %v3915
        %v3917 = vpop.f32.mrb[0].mxu0
        %3918 = vmatprep.mubr.f32.mxu0 0.0
        %3919 = vmatmul.mubr.f32.gmra.mrb[0].mxu0 %v3817
        %v3920 = vpop.f32.mrb[0].mxu0
        %v3921 = vadd.f32 0.0, %v3920
        %v3922 = vpop.f32.mrb[0].mxu0
        %3923 = vdwg.mxu0
        %v3925 = vsel %vm1921, %v3691, 0
        %v3928 = vsel %vm1921, %v3692, 0
        %v3931 = vsel %vm1921, %v3693, 0
        %v3934 = vsel %vm1921, %v3694, 0
        %v3937 = vsel %vm1921, %v3695, 0
        %v3940 = vsel %vm1921, %v3696, 0
        %v3943 = vsel %vm1921, %v3697, 0
        %v3946 = vsel %vm1921, %v3698, 0
        %3948 = vmatprep.subr.mxu0 0.0
        %3949 = vmatpush1.msra.mxu0 %v3673
        %3950 = vmatprep.subr.mxu0 0.0
        %3951 = vmatpush1.msra.mxu0 %v3674
        %3952 = vmatprep.subr.mxu0 0.0
        %3953 = vmatpush1.msra.mxu0 %v3675
        %3954 = vmatprep.subr.mxu0 0.0
        %3955 = vmatpush1.msra.mxu0 %v3676
        %3956 = vmatprep.subr.mxu0 0.0
        %3957 = vmatpush1.msra.mxu0 %v3677
        %3958 = vmatprep.subr.mxu0 0.0
        %3959 = vmatpush1.msra.mxu0 %v3678
        %3960 = vmatprep.subr.mxu0 0.0
        %3961 = vmatpush1.msra.mxu0 %v3679
        %3962 = vmatprep.subr.mxu0 0.0
        %3963 = vmatpush1.msra.mxu0 %v3680
        %3964 = vmatprep.subr.mxu0 0.0
        %3965 = vmatpush1.msra.mxu0 0.0
        %3966 = vmatprep.subr.mxu0 0.0
        %3967 = vmatpush1.msra.mxu0 0.0
        %3968 = vmatprep.subr.mxu0 0.0
        %3969 = vmatpush1.msra.mxu0 0.0
        %3970 = vmatprep.subr.mxu0 0.0
        %3971 = vmatpush1.msra.mxu0 0.0
        %3972 = vmatprep.subr.mxu0 0.0
        %3973 = vmatpush1.msra.mxu0 0.0
        %3974 = vmatprep.subr.mxu0 0.0
        %3975 = vmatpush1.msra.mxu0 0.0
        %3976 = vmatprep.subr.mxu0 0.0
        %3977 = vmatpush1.msra.mxu0 0.0
        %3978 = vmatprep.subr.mxu0 0.0
        %3979 = vmatpush1.msra.mxu0 0.0
        %3980 = vmatprep.subr.mxu0 0.0
        %3981 = vmatpush1.msra.mxu0 0.0
        %3982 = vmatprep.subr.mxu0 0.0
        %3983 = vmatpush1.msra.mxu0 0.0
        %3984 = vmatprep.subr.mxu0 0.0
        %3985 = vmatpush1.msra.mxu0 0.0
        %3986 = vmatprep.subr.mxu0 0.0
        %3987 = vmatpush1.msra.mxu0 0.0
        %3988 = vmatprep.subr.mxu0 0.0
        %3989 = vmatpush1.msra.mxu0 0.0
        %3990 = vmatprep.subr.mxu0 0.0
        %3991 = vmatpush1.msra.mxu0 0.0
        %3992 = vmatprep.subr.mxu0 0.0
        %3993 = vmatpush1.msra.mxu0 0.0
        %3994 = vmatprep.subr.mxu0 0.0
        %3995 = vmatpush1.msra.mxu0 0.0
        %3996 = vmatprep.subr.mxu0 0.0
        %3997 = vmatpush1.msra.mxu0 0.0
        %3998 = vmatprep.subr.mxu0 0.0
        %3999 = vmatpush1.msra.mxu0 0.0
        %4000 = vmatprep.subr.mxu0 0.0
        %4001 = vmatpush1.msra.mxu0 0.0
        %4002 = vmatprep.subr.mxu0 0.0
        %4003 = vmatpush1.msra.mxu0 0.0
        %4004 = vmatprep.subr.mxu0 0.0
        %4005 = vmatpush1.msra.mxu0 0.0
        %4006 = vmatprep.subr.mxu0 0.0
        %4007 = vmatpush1.msra.mxu0 0.0
        %4008 = vmatprep.subr.mxu0 0.0
        %4009 = vmatpush1.msra.mxu0 0.0
        %4010 = vmatprep.subr.mxu0 0.0
        %4011 = vmatpush1.msra.mxu0 0.0
        %4012 = vmatprep.mubr.f32.mxu0 0.0
        %4013 = vmatmul.mubr.f32.gmra.mrb[0].mxu0 %v3925
        %v4014 = vpop.f32.mrb[0].mxu0
        %v4015 = vadd.f32 %v3886, %v4014
        %v4016 = vpop.f32.mrb[0].mxu0
        %4017 = vmatprep.mubr.f32.mxu0 0.0
        %4018 = vmatmul.mubr.f32.gmra.mrb[0].mxu0 %v3928
        %v4019 = vpop.f32.mrb[0].mxu0
        %v4020 = vadd.f32 %v3891, %v4019
        %v4021 = vpop.f32.mrb[0].mxu0
        %4022 = vmatprep.mubr.f32.mxu0 0.0
        %4023 = vmatmul.mubr.f32.gmra.mrb[0].mxu0 %v3931
        %v4024 = vpop.f32.mrb[0].mxu0
        %v4025 = vadd.f32 %v3896, %v4024
        %v4026 = vpop.f32.mrb[0].mxu0
        %4027 = vmatprep.mubr.f32.mxu0 0.0
        %4028 = vmatmul.mubr.f32.gmra.mrb[0].mxu0 %v3934
        %v4029 = vpop.f32.mrb[0].mxu0
        %v4030 = vadd.f32 %v3901, %v4029
        %v4031 = vpop.f32.mrb[0].mxu0
        %4032 = vmatprep.mubr.f32.mxu0 0.0
        %4033 = vmatmul.mubr.f32.gmra.mrb[0].mxu0 %v3937
        %v4034 = vpop.f32.mrb[0].mxu0
        %v4035 = vadd.f32 %v3906, %v4034
        %v4036 = vpop.f32.mrb[0].mxu0
        %4037 = vmatprep.mubr.f32.mxu0 0.0
        %4038 = vmatmul.mubr.f32.gmra.mrb[0].mxu0 %v3940
        %v4039 = vpop.f32.mrb[0].mxu0
        %v4040 = vadd.f32 %v3911, %v4039
        %v4041 = vpop.f32.mrb[0].mxu0
        %4042 = vmatprep.mubr.f32.mxu0 0.0
        %4043 = vmatmul.mubr.f32.gmra.mrb[0].mxu0 %v3943
        %v4044 = vpop.f32.mrb[0].mxu0
        %v4045 = vadd.f32 %v3916, %v4044
        %v4046 = vpop.f32.mrb[0].mxu0
        %4047 = vmatprep.mubr.f32.mxu0 0.0
        %4048 = vmatmul.mubr.f32.gmra.mrb[0].mxu0 %v3946
        %v4049 = vpop.f32.mrb[0].mxu0
        %v4050 = vadd.f32 %v3921, %v4049
        %v4051 = vpop.f32.mrb[0].mxu0
        %4052 = vdwg.mxu0
        %s4053 = scalar_lea.vmem %s12, 128
        %v4054 = vld [vmem:[%s4053] sm:$0xff]
        %v4055 = vld [vmem:[%s4053 + $0x8] sm:$0xff]
        %v4056 = vld [vmem:[%s4053 + $0x10] sm:$0xff]
        %v4057 = vld [vmem:[%s4053 + $0x18] sm:$0xff]
        %v4058 = vld [vmem:[%s4053 + $0x20] sm:$0xff]
        %v4059 = vld [vmem:[%s4053 + $0x28] sm:$0xff]
        %v4060 = vld [vmem:[%s4053 + $0x30] sm:$0xff]
        %v4061 = vld [vmem:[%s4053 + $0x38] sm:$0xff]
        %4062 = vrot.lane.b32.xlu0 %v3747, 127
        %v4063 = vpop.permute.xlu0 %4062
        %4064 = vrot.lane.b32.xlu0 %v3748, 127
        %v4065 = vpop.permute.xlu0 %4064
        %4066 = vrot.lane.b32.xlu0 %v3749, 127
        %v4067 = vpop.permute.xlu0 %4066
        %4068 = vrot.lane.b32.xlu0 %v3750, 127
        %v4069 = vpop.permute.xlu0 %4068
        %4070 = vrot.lane.b32.xlu0 %v3751, 127
        %v4071 = vpop.permute.xlu0 %4070
        %4072 = vrot.lane.b32.xlu0 %v3752, 127
        %v4073 = vpop.permute.xlu0 %4072
        %4074 = vrot.lane.b32.xlu0 %v3753, 127
        %v4075 = vpop.permute.xlu0 %4074
        %4076 = vrot.lane.b32.xlu0 %v3754, 127
        %v4077 = vpop.permute.xlu0 %4076
        %v4086 = vsel %vm2325, 0.0, %v4063
        %v4087 = vsel %vm2325, 0.0, %v4065
        %v4088 = vsel %vm2325, 0.0, %v4067
        %v4089 = vsel %vm2325, 0.0, %v4069
        %v4090 = vsel %vm2325, 0.0, %v4071
        %v4091 = vsel %vm2325, 0.0, %v4073
        %v4092 = vsel %vm2325, 0.0, %v4075
        %v4093 = vsel %vm2325, 0.0, %v4077
        %v4095 = vsel %vm1921, %v4054, 0
        %v4098 = vsel %vm1921, %v4055, 0
        %v4101 = vsel %vm1921, %v4056, 0
        %v4104 = vsel %vm1921, %v4057, 0
        %v4107 = vsel %vm1921, %v4058, 0
        %v4110 = vsel %vm1921, %v4059, 0
        %v4113 = vsel %vm1921, %v4060, 0
        %v4116 = vsel %vm1921, %v4061, 0
        %4118 = vmatprep.subr.mxu0 0.0
        %4119 = vmatpush1.msra.mxu0 %v4086
        %4120 = vmatprep.subr.mxu0 0.0
        %4121 = vmatpush1.msra.mxu0 %v4087
        %4122 = vmatprep.subr.mxu0 0.0
        %4123 = vmatpush1.msra.mxu0 %v4088
        %4124 = vmatprep.subr.mxu0 0.0
        %4125 = vmatpush1.msra.mxu0 %v4089
        %4126 = vmatprep.subr.mxu0 0.0
        %4127 = vmatpush1.msra.mxu0 %v4090
        %4128 = vmatprep.subr.mxu0 0.0
        %4129 = vmatpush1.msra.mxu0 %v4091
        %4130 = vmatprep.subr.mxu0 0.0
        %4131 = vmatpush1.msra.mxu0 %v4092
        %4132 = vmatprep.subr.mxu0 0.0
        %4133 = vmatpush1.msra.mxu0 %v4093
        %4134 = vmatprep.subr.mxu0 0.0
        %4135 = vmatpush1.msra.mxu0 0.0
        %4136 = vmatprep.subr.mxu0 0.0
        %4137 = vmatpush1.msra.mxu0 0.0
        %4138 = vmatprep.subr.mxu0 0.0
        %4139 = vmatpush1.msra.mxu0 0.0
        %4140 = vmatprep.subr.mxu0 0.0
        %4141 = vmatpush1.msra.mxu0 0.0
        %4142 = vmatprep.subr.mxu0 0.0
        %4143 = vmatpush1.msra.mxu0 0.0
        %4144 = vmatprep.subr.mxu0 0.0
        %4145 = vmatpush1.msra.mxu0 0.0
        %4146 = vmatprep.subr.mxu0 0.0
        %4147 = vmatpush1.msra.mxu0 0.0
        %4148 = vmatprep.subr.mxu0 0.0
        %4149 = vmatpush1.msra.mxu0 0.0
        %4150 = vmatprep.subr.mxu0 0.0
        %4151 = vmatpush1.msra.mxu0 0.0
        %4152 = vmatprep.subr.mxu0 0.0
        %4153 = vmatpush1.msra.mxu0 0.0
        %4154 = vmatprep.subr.mxu0 0.0
        %4155 = vmatpush1.msra.mxu0 0.0
        %4156 = vmatprep.subr.mxu0 0.0
        %4157 = vmatpush1.msra.mxu0 0.0
        %4158 = vmatprep.subr.mxu0 0.0
        %4159 = vmatpush1.msra.mxu0 0.0
        %4160 = vmatprep.subr.mxu0 0.0
        %4161 = vmatpush1.msra.mxu0 0.0
        %4162 = vmatprep.subr.mxu0 0.0
        %4163 = vmatpush1.msra.mxu0 0.0
        %4164 = vmatprep.subr.mxu0 0.0
        %4165 = vmatpush1.msra.mxu0 0.0
        %4166 = vmatprep.subr.mxu0 0.0
        %4167 = vmatpush1.msra.mxu0 0.0
        %4168 = vmatprep.subr.mxu0 0.0
        %4169 = vmatpush1.msra.mxu0 0.0
        %4170 = vmatprep.subr.mxu0 0.0
        %4171 = vmatpush1.msra.mxu0 0.0
        %4172 = vmatprep.subr.mxu0 0.0
        %4173 = vmatpush1.msra.mxu0 0.0
        %4174 = vmatprep.subr.mxu0 0.0
        %4175 = vmatpush1.msra.mxu0 0.0
        %4176 = vmatprep.subr.mxu0 0.0
        %4177 = vmatpush1.msra.mxu0 0.0
        %4178 = vmatprep.subr.mxu0 0.0
        %4179 = vmatpush1.msra.mxu0 0.0
        %4180 = vmatprep.subr.mxu0 0.0
        %4181 = vmatpush1.msra.mxu0 0.0
        %4182 = vmatprep.mubr.f32.mxu0 0.0
        %4183 = vmatmul.mubr.f32.gmra.mrb[0].mxu0 %v4095
        %v4184 = vpop.f32.mrb[0].mxu0
        %v4185 = vadd.f32 0.0, %v4184
        %v4186 = vpop.f32.mrb[0].mxu0
        %4187 = vmatprep.mubr.f32.mxu0 0.0
        %4188 = vmatmul.mubr.f32.gmra.mrb[0].mxu0 %v4098
        %v4189 = vpop.f32.mrb[0].mxu0
        %v4190 = vadd.f32 0.0, %v4189
        %v4191 = vpop.f32.mrb[0].mxu0
        %4192 = vmatprep.mubr.f32.mxu0 0.0
        %4193 = vmatmul.mubr.f32.gmra.mrb[0].mxu0 %v4101
        %v4194 = vpop.f32.mrb[0].mxu0
        %v4195 = vadd.f32 0.0, %v4194
        %v4196 = vpop.f32.mrb[0].mxu0
        %4197 = vmatprep.mubr.f32.mxu0 0.0
        %4198 = vmatmul.mubr.f32.gmra.mrb[0].mxu0 %v4104
        %v4199 = vpop.f32.mrb[0].mxu0
        %v4200 = vadd.f32 0.0, %v4199
        %v4201 = vpop.f32.mrb[0].mxu0
        %4202 = vmatprep.mubr.f32.mxu0 0.0
        %4203 = vmatmul.mubr.f32.gmra.mrb[0].mxu0 %v4107
        %v4204 = vpop.f32.mrb[0].mxu0
        %v4205 = vadd.f32 0.0, %v4204
        %v4206 = vpop.f32.mrb[0].mxu0
        %4207 = vmatprep.mubr.f32.mxu0 0.0
        %4208 = vmatmul.mubr.f32.gmra.mrb[0].mxu0 %v4110
        %v4209 = vpop.f32.mrb[0].mxu0
        %v4210 = vadd.f32 0.0, %v4209
        %v4211 = vpop.f32.mrb[0].mxu0
        %4212 = vmatprep.mubr.f32.mxu0 0.0
        %4213 = vmatmul.mubr.f32.gmra.mrb[0].mxu0 %v4113
        %v4214 = vpop.f32.mrb[0].mxu0
        %v4215 = vadd.f32 0.0, %v4214
        %v4216 = vpop.f32.mrb[0].mxu0
        %4217 = vmatprep.mubr.f32.mxu0 0.0
        %4218 = vmatmul.mubr.f32.gmra.mrb[0].mxu0 %v4116
        %v4219 = vpop.f32.mrb[0].mxu0
        %v4220 = vadd.f32 0.0, %v4219
        %v4221 = vpop.f32.mrb[0].mxu0
        %4222 = vdwg.mxu0
        %v4223 = vadd.f32 %v4015, %v4185
        %v4224 = vadd.f32 %v4020, %v4190
        %v4225 = vadd.f32 %v4025, %v4195
        %v4226 = vadd.f32 %v4030, %v4200
        %v4227 = vadd.f32 %v4035, %v4205
        %v4228 = vadd.f32 %v4040, %v4210
        %v4229 = vadd.f32 %v4045, %v4215
        %v4230 = vadd.f32 %v4050, %v4220
        %4232 = vset.pattern.permute.xlu0 0
        %4233 = vperm.xlu0 %4232, %v3682
        %v4234 = vpop.permute.xlu0 %4233
        %4237 = vset.pattern.permute.xlu0 0
        %4238 = vperm.xlu0 %4237, %v3683
        %v4239 = vpop.permute.xlu0 %4238
        %4242 = vset.pattern.permute.xlu0 0
        %4243 = vperm.xlu0 %4242, %v3684
        %v4244 = vpop.permute.xlu0 %4243
        %4247 = vset.pattern.permute.xlu0 0
        %4248 = vperm.xlu0 %4247, %v3685
        %v4249 = vpop.permute.xlu0 %4248
        %4252 = vset.pattern.permute.xlu0 0
        %4253 = vperm.xlu0 %4252, %v3686
        %v4254 = vpop.permute.xlu0 %4253
        %4257 = vset.pattern.permute.xlu0 0
        %4258 = vperm.xlu0 %4257, %v3687
        %v4259 = vpop.permute.xlu0 %4258
        %4262 = vset.pattern.permute.xlu0 0
        %4263 = vperm.xlu0 %4262, %v3688
        %v4264 = vpop.permute.xlu0 %4263
        %4267 = vset.pattern.permute.xlu0 0
        %4268 = vperm.xlu0 %4267, %v3689
        %v4269 = vpop.permute.xlu0 %4268
        %v4271 = vadd.f32 %v4223, %v4234
        %v4272 = vadd.f32 %v4224, %v4239
        %v4273 = vadd.f32 %v4225, %v4244
        %v4274 = vadd.f32 %v4226, %v4249
        %v4275 = vadd.f32 %v4227, %v4254
        %v4276 = vadd.f32 %v4228, %v4259
        %v4277 = vadd.f32 %v4229, %v4264
        %v4278 = vadd.f32 %v4230, %v4269
        %s4279 = scalar_lea.vmem %s14, 128
        %v4280 = vld [vmem:[%s4279] sm:$0xff]
        %v4281 = vld [vmem:[%s4279 + $0x8] sm:$0xff]
        %v4282 = vld [vmem:[%s4279 + $0x10] sm:$0xff]
        %v4283 = vld [vmem:[%s4279 + $0x18] sm:$0xff]
        %v4284 = vld [vmem:[%s4279 + $0x20] sm:$0xff]
        %v4285 = vld [vmem:[%s4279 + $0x28] sm:$0xff]
        %v4286 = vld [vmem:[%s4279 + $0x30] sm:$0xff]
        %v4287 = vld [vmem:[%s4279 + $0x38] sm:$0xff]
        %4289 = vset.pattern.permute.xlu0 0
        %4290 = vperm.xlu0 %4289, %v4280
        %v4291 = vpop.permute.xlu0 %4290
        %4294 = vset.pattern.permute.xlu0 0
        %4295 = vperm.xlu0 %4294, %v4281
        %v4296 = vpop.permute.xlu0 %4295
        %4299 = vset.pattern.permute.xlu0 0
        %4300 = vperm.xlu0 %4299, %v4282
        %v4301 = vpop.permute.xlu0 %4300
        %4304 = vset.pattern.permute.xlu0 0
        %4305 = vperm.xlu0 %4304, %v4283
        %v4306 = vpop.permute.xlu0 %4305
        %4309 = vset.pattern.permute.xlu0 0
        %4310 = vperm.xlu0 %4309, %v4284
        %v4311 = vpop.permute.xlu0 %4310
        %4314 = vset.pattern.permute.xlu0 0
        %4315 = vperm.xlu0 %4314, %v4285
        %v4316 = vpop.permute.xlu0 %4315
        %4319 = vset.pattern.permute.xlu0 0
        %4320 = vperm.xlu0 %4319, %v4286
        %v4321 = vpop.permute.xlu0 %4320
        %4324 = vset.pattern.permute.xlu0 0
        %4325 = vperm.xlu0 %4324, %v4287
        %v4326 = vpop.permute.xlu0 %4325
        %v4328 = vadd.f32 %v3609, %v4291
        %v4329 = vadd.f32 %v3610, %v4296
        %v4330 = vadd.f32 %v3611, %v4301
        %v4331 = vadd.f32 %v3612, %v4306
        %v4332 = vadd.f32 %v3613, %v4311
        %v4333 = vadd.f32 %v3614, %v4316
        %v4334 = vadd.f32 %v3615, %v4321
        %v4335 = vadd.f32 %v3616, %v4326
        %v4336 = vadd.f32 %v4271, %v4328
        %v4337 = vadd.f32 %v4272, %v4329
        %v4338 = vadd.f32 %v4273, %v4330
        %v4339 = vadd.f32 %v4274, %v4331
        %v4340 = vadd.f32 %v4275, %v4332
        %v4341 = vadd.f32 %v4276, %v4333
        %v4342 = vadd.f32 %v4277, %v4334
        %v4343 = vadd.f32 %v4278, %v4335
        %v4344 = vmax.f32 %v4336, 0.0
        %v4345 = vmax.f32 %v4337, 0.0
        %v4346 = vmax.f32 %v4338, 0.0
        %v4347 = vmax.f32 %v4339, 0.0
        %v4348 = vmax.f32 %v4340, 0.0
        %v4349 = vmax.f32 %v4341, 0.0
        %v4350 = vmax.f32 %v4342, 0.0
        %v4351 = vmax.f32 %v4343, 0.0
        %v4352 = vld [vmem:[%s9] sm:$0xff]
        %vm4353 = vcmask 64512
        %v4355 = vsel %vm4353, %v4344, 0
        %v4358 = vsel %vm4353, %v4345, 0
        %v4361 = vsel %vm4353, %v4346, 0
        %v4364 = vsel %vm4353, %v4347, 0
        %v4367 = vsel %vm4353, %v4348, 0
        %v4370 = vsel %vm4353, %v4349, 0
        %v4373 = vsel %vm4353, %v4350, 0
        %v4376 = vsel %vm4353, %v4351, 0
        %4378 = vmatprep.subr.mxu0 0.0
        %4379 = vmatpush1.msra.mxu0 %v4352
        %4380 = vmatprep.subr.mxu0 0.0
        %4381 = vmatpush1.msra.mxu0 0.0
        %4382 = vmatprep.subr.mxu0 0.0
        %4383 = vmatpush1.msra.mxu0 0.0
        %4384 = vmatprep.subr.mxu0 0.0
        %4385 = vmatpush1.msra.mxu0 0.0
        %4386 = vmatprep.subr.mxu0 0.0
        %4387 = vmatpush1.msra.mxu0 0.0
        %4388 = vmatprep.subr.mxu0 0.0
        %4389 = vmatpush1.msra.mxu0 0.0
        %4390 = vmatprep.subr.mxu0 0.0
        %4391 = vmatpush1.msra.mxu0 0.0
        %4392 = vmatprep.subr.mxu0 0.0
        %4393 = vmatpush1.msra.mxu0 0.0
        %4394 = vmatprep.subr.mxu0 0.0
        %4395 = vmatpush1.msra.mxu0 0.0
        %4396 = vmatprep.subr.mxu0 0.0
        %4397 = vmatpush1.msra.mxu0 0.0
        %4398 = vmatprep.subr.mxu0 0.0
        %4399 = vmatpush1.msra.mxu0 0.0
        %4400 = vmatprep.subr.mxu0 0.0
        %4401 = vmatpush1.msra.mxu0 0.0
        %4402 = vmatprep.subr.mxu0 0.0
        %4403 = vmatpush1.msra.mxu0 0.0
        %4404 = vmatprep.subr.mxu0 0.0
        %4405 = vmatpush1.msra.mxu0 0.0
        %4406 = vmatprep.subr.mxu0 0.0
        %4407 = vmatpush1.msra.mxu0 0.0
        %4408 = vmatprep.subr.mxu0 0.0
        %4409 = vmatpush1.msra.mxu0 0.0
        %4410 = vmatprep.subr.mxu0 0.0
        %4411 = vmatpush1.msra.mxu0 0.0
        %4412 = vmatprep.subr.mxu0 0.0
        %4413 = vmatpush1.msra.mxu0 0.0
        %4414 = vmatprep.subr.mxu0 0.0
        %4415 = vmatpush1.msra.mxu0 0.0
        %4416 = vmatprep.subr.mxu0 0.0
        %4417 = vmatpush1.msra.mxu0 0.0
        %4418 = vmatprep.subr.mxu0 0.0
        %4419 = vmatpush1.msra.mxu0 0.0
        %4420 = vmatprep.subr.mxu0 0.0
        %4421 = vmatpush1.msra.mxu0 0.0
        %4422 = vmatprep.subr.mxu0 0.0
        %4423 = vmatpush1.msra.mxu0 0.0
        %4424 = vmatprep.subr.mxu0 0.0
        %4425 = vmatpush1.msra.mxu0 0.0
        %4426 = vmatprep.subr.mxu0 0.0
        %4427 = vmatpush1.msra.mxu0 0.0
        %4428 = vmatprep.subr.mxu0 0.0
        %4429 = vmatpush1.msra.mxu0 0.0
        %4430 = vmatprep.subr.mxu0 0.0
        %4431 = vmatpush1.msra.mxu0 0.0
        %4432 = vmatprep.subr.mxu0 0.0
        %4433 = vmatpush1.msra.mxu0 0.0
        %4434 = vmatprep.subr.mxu0 0.0
        %4435 = vmatpush1.msra.mxu0 0.0
        %4436 = vmatprep.subr.mxu0 0.0
        %4437 = vmatpush1.msra.mxu0 0.0
        %4438 = vmatprep.subr.mxu0 0.0
        %4439 = vmatpush1.msra.mxu0 0.0
        %4440 = vmatprep.subr.mxu0 0.0
        %4441 = vmatpush1.msra.mxu0 0.0
        %4442 = vmatprep.mubr.f32.mxu0 0.0
        %4443 = vmatmul.mubr.f32.gmra.mrb[0].mxu0 %v4355
        %v4444 = vpop.f32.mrb[0].mxu0
        %v4445 = vadd.f32 0.0, %v4444
        %v4446 = vpop.f32.mrb[0].mxu0
        %4447 = vmatprep.mubr.f32.mxu0 0.0
        %4448 = vmatmul.mubr.f32.gmra.mrb[0].mxu0 %v4358
        %v4449 = vpop.f32.mrb[0].mxu0
        %v4450 = vadd.f32 0.0, %v4449
        %v4451 = vpop.f32.mrb[0].mxu0
        %4452 = vmatprep.mubr.f32.mxu0 0.0
        %4453 = vmatmul.mubr.f32.gmra.mrb[0].mxu0 %v4361
        %v4454 = vpop.f32.mrb[0].mxu0
        %v4455 = vadd.f32 0.0, %v4454
        %v4456 = vpop.f32.mrb[0].mxu0
        %4457 = vmatprep.mubr.f32.mxu0 0.0
        %4458 = vmatmul.mubr.f32.gmra.mrb[0].mxu0 %v4364
        %v4459 = vpop.f32.mrb[0].mxu0
        %v4460 = vadd.f32 0.0, %v4459
        %v4461 = vpop.f32.mrb[0].mxu0
        %4462 = vmatprep.mubr.f32.mxu0 0.0
        %4463 = vmatmul.mubr.f32.gmra.mrb[0].mxu0 %v4367
        %v4464 = vpop.f32.mrb[0].mxu0
        %v4465 = vadd.f32 0.0, %v4464
        %v4466 = vpop.f32.mrb[0].mxu0
        %4467 = vmatprep.mubr.f32.mxu0 0.0
        %4468 = vmatmul.mubr.f32.gmra.mrb[0].mxu0 %v4370
        %v4469 = vpop.f32.mrb[0].mxu0
        %v4470 = vadd.f32 0.0, %v4469
        %v4471 = vpop.f32.mrb[0].mxu0
        %4472 = vmatprep.mubr.f32.mxu0 0.0
        %4473 = vmatmul.mubr.f32.gmra.mrb[0].mxu0 %v4373
        %v4474 = vpop.f32.mrb[0].mxu0
        %v4475 = vadd.f32 0.0, %v4474
        %v4476 = vpop.f32.mrb[0].mxu0
        %4477 = vmatprep.mubr.f32.mxu0 0.0
        %4478 = vmatmul.mubr.f32.gmra.mrb[0].mxu0 %v4376
        %v4479 = vpop.f32.mrb[0].mxu0
        %v4480 = vadd.f32 0.0, %v4479
        %v4481 = vpop.f32.mrb[0].mxu0
        %4482 = vdwg.mxu0
        %4483 = vrot.lane.b32.xlu0 %v4445, 16
        %v4484 = vpop.permute.xlu0 %4483
        %v4485 = vsel %vm1041, %v4484, %v4445
        %4486 = vrot.lane.b32.xlu0 %v4450, 16
        %v4487 = vpop.permute.xlu0 %4486
        %v4488 = vsel %vm1041, %v4487, %v4450
        %4489 = vrot.lane.b32.xlu0 %v4455, 16
        %v4490 = vpop.permute.xlu0 %4489
        %v4491 = vsel %vm1041, %v4490, %v4455
        %4492 = vrot.lane.b32.xlu0 %v4460, 16
        %v4493 = vpop.permute.xlu0 %4492
        %v4494 = vsel %vm1041, %v4493, %v4460
        %4495 = vrot.lane.b32.xlu0 %v4465, 16
        %v4496 = vpop.permute.xlu0 %4495
        %v4497 = vsel %vm1041, %v4496, %v4465
        %4498 = vrot.lane.b32.xlu0 %v4470, 16
        %v4499 = vpop.permute.xlu0 %4498
        %v4500 = vsel %vm1041, %v4499, %v4470
        %4501 = vrot.lane.b32.xlu0 %v4475, 16
        %v4502 = vpop.permute.xlu0 %4501
        %v4503 = vsel %vm1041, %v4502, %v4475
        %4504 = vrot.lane.b32.xlu0 %v4480, 16
        %v4505 = vpop.permute.xlu0 %4504
        %v4506 = vsel %vm1041, %v4505, %v4480
        %4507 = vrot.lane.b32.xlu0 %v4485, 16
        %v4508 = vpop.permute.xlu0 %4507
        %4509 = vrot.lane.b32.xlu0 %v4488, 16
        %v4510 = vpop.permute.xlu0 %4509
        %4511 = vrot.lane.b32.xlu0 %v4491, 16
        %v4512 = vpop.permute.xlu0 %4511
        %4513 = vrot.lane.b32.xlu0 %v4494, 16
        %v4514 = vpop.permute.xlu0 %4513
        %4515 = vrot.lane.b32.xlu0 %v4497, 16
        %v4516 = vpop.permute.xlu0 %4515
        %4517 = vrot.lane.b32.xlu0 %v4500, 16
        %v4518 = vpop.permute.xlu0 %4517
        %4519 = vrot.lane.b32.xlu0 %v4503, 16
        %v4520 = vpop.permute.xlu0 %4519
        %4521 = vrot.lane.b32.xlu0 %v4506, 16
        %v4522 = vpop.permute.xlu0 %4521
        %v4523 = vsel %vm1041, %v4508, %v4445
        %v4524 = vsel %vm1041, %v4510, %v4450
        %v4525 = vsel %vm1041, %v4512, %v4455
        %v4526 = vsel %vm1041, %v4514, %v4460
        %v4527 = vsel %vm1041, %v4516, %v4465
        %v4528 = vsel %vm1041, %v4518, %v4470
        %v4529 = vsel %vm1041, %v4520, %v4475
        %v4530 = vsel %vm1041, %v4522, %v4480
        %4539 = vrot.lane.b32.xlu0 %v4523, 113
        %v4540 = vpop.permute.xlu0 %4539
        %4541 = vrot.lane.b32.xlu0 %v4524, 113
        %v4542 = vpop.permute.xlu0 %4541
        %4543 = vrot.lane.b32.xlu0 %v4525, 113
        %v4544 = vpop.permute.xlu0 %4543
        %4545 = vrot.lane.b32.xlu0 %v4526, 113
        %v4546 = vpop.permute.xlu0 %4545
        %4547 = vrot.lane.b32.xlu0 %v4527, 113
        %v4548 = vpop.permute.xlu0 %4547
        %4549 = vrot.lane.b32.xlu0 %v4528, 113
        %v4550 = vpop.permute.xlu0 %4549
        %4551 = vrot.lane.b32.xlu0 %v4529, 113
        %v4552 = vpop.permute.xlu0 %4551
        %4553 = vrot.lane.b32.xlu0 %v4530, 113
        %v4554 = vpop.permute.xlu0 %4553
        %v4563 = vsel %vm705, 0.0, %v4540
        %v4564 = vsel %vm705, 0.0, %v4542
        %v4565 = vsel %vm705, 0.0, %v4544
        %v4566 = vsel %vm705, 0.0, %v4546
        %v4567 = vsel %vm705, 0.0, %v4548
        %v4568 = vsel %vm705, 0.0, %v4550
        %v4569 = vsel %vm705, 0.0, %v4552
        %v4570 = vsel %vm705, 0.0, %v4554
        %v4571 = vld [vmem:[%s15] sm:$0xff]
        %v4572 = vld [vmem:[%s15 + $0x8] sm:$0xff]
        %v4573 = vld [vmem:[%s15 + $0x10] sm:$0xff]
        %v4574 = vld [vmem:[%s15 + $0x18] sm:$0xff]
        %v4575 = vld [vmem:[%s17] sm:$0xff]
        %v4576 = vld [vmem:[%s17 + $0x8] sm:$0xff]
        %v4577 = vld [vmem:[%s17 + $0x10] sm:$0xff]
        %v4578 = vld [vmem:[%s17 + $0x18] sm:$0xff]
        %s4579 = scalar_lea.vmem %s15, 32
        %v4580 = vld [vmem:[%s4579] sm:$0xff]
        %v4581 = vld [vmem:[%s4579 + $0x8] sm:$0xff]
        %v4582 = vld [vmem:[%s4579 + $0x10] sm:$0xff]
        %v4583 = vld [vmem:[%s4579 + $0x18] sm:$0xff]
        %v4585 = vsel %vm1921, %v4580, 0
        %v4588 = vsel %vm1921, %v4581, 0
        %v4591 = vsel %vm1921, %v4582, 0
        %v4594 = vsel %vm1921, %v4583, 0
        %4596 = vmatprep.subr.mxu0 0.0
        %4597 = vmatpush1.msra.mxu0 %v4445
        %4598 = vmatprep.subr.mxu0 0.0
        %4599 = vmatpush1.msra.mxu0 %v4450
        %4600 = vmatprep.subr.mxu0 0.0
        %4601 = vmatpush1.msra.mxu0 %v4455
        %4602 = vmatprep.subr.mxu0 0.0
        %4603 = vmatpush1.msra.mxu0 %v4460
        %4604 = vmatprep.subr.mxu0 0.0
        %4605 = vmatpush1.msra.mxu0 %v4465
        %4606 = vmatprep.subr.mxu0 0.0
        %4607 = vmatpush1.msra.mxu0 %v4470
        %4608 = vmatprep.subr.mxu0 0.0
        %4609 = vmatpush1.msra.mxu0 %v4475
        %4610 = vmatprep.subr.mxu0 0.0
        %4611 = vmatpush1.msra.mxu0 %v4480
        %4612 = vmatprep.subr.mxu0 0.0
        %4613 = vmatpush1.msra.mxu0 0.0
        %4614 = vmatprep.subr.mxu0 0.0
        %4615 = vmatpush1.msra.mxu0 0.0
        %4616 = vmatprep.subr.mxu0 0.0
        %4617 = vmatpush1.msra.mxu0 0.0
        %4618 = vmatprep.subr.mxu0 0.0
        %4619 = vmatpush1.msra.mxu0 0.0
        %4620 = vmatprep.subr.mxu0 0.0
        %4621 = vmatpush1.msra.mxu0 0.0
        %4622 = vmatprep.subr.mxu0 0.0
        %4623 = vmatpush1.msra.mxu0 0.0
        %4624 = vmatprep.subr.mxu0 0.0
        %4625 = vmatpush1.msra.mxu0 0.0
        %4626 = vmatprep.subr.mxu0 0.0
        %4627 = vmatpush1.msra.mxu0 0.0
        %4628 = vmatprep.subr.mxu0 0.0
        %4629 = vmatpush1.msra.mxu0 0.0
        %4630 = vmatprep.subr.mxu0 0.0
        %4631 = vmatpush1.msra.mxu0 0.0
        %4632 = vmatprep.subr.mxu0 0.0
        %4633 = vmatpush1.msra.mxu0 0.0
        %4634 = vmatprep.subr.mxu0 0.0
        %4635 = vmatpush1.msra.mxu0 0.0
        %4636 = vmatprep.subr.mxu0 0.0
        %4637 = vmatpush1.msra.mxu0 0.0
        %4638 = vmatprep.subr.mxu0 0.0
        %4639 = vmatpush1.msra.mxu0 0.0
        %4640 = vmatprep.subr.mxu0 0.0
        %4641 = vmatpush1.msra.mxu0 0.0
        %4642 = vmatprep.subr.mxu0 0.0
        %4643 = vmatpush1.msra.mxu0 0.0
        %4644 = vmatprep.subr.mxu0 0.0
        %4645 = vmatpush1.msra.mxu0 0.0
        %4646 = vmatprep.subr.mxu0 0.0
        %4647 = vmatpush1.msra.mxu0 0.0
        %4648 = vmatprep.subr.mxu0 0.0
        %4649 = vmatpush1.msra.mxu0 0.0
        %4650 = vmatprep.subr.mxu0 0.0
        %4651 = vmatpush1.msra.mxu0 0.0
        %4652 = vmatprep.subr.mxu0 0.0
        %4653 = vmatpush1.msra.mxu0 0.0
        %4654 = vmatprep.subr.mxu0 0.0
        %4655 = vmatpush1.msra.mxu0 0.0
        %4656 = vmatprep.subr.mxu0 0.0
        %4657 = vmatpush1.msra.mxu0 0.0
        %4658 = vmatprep.subr.mxu0 0.0
        %4659 = vmatpush1.msra.mxu0 0.0
        %4660 = vmatprep.mubr.f32.mxu0 0.0
        %4661 = vmatmul.mubr.f32.gmra.mrb[0].mxu0 %v4585
        %v4662 = vpop.f32.mrb[0].mxu0
        %v4663 = vadd.f32 0.0, %v4662
        %v4664 = vpop.f32.mrb[0].mxu0
        %4665 = vmatprep.mubr.f32.mxu0 0.0
        %4666 = vmatmul.mubr.f32.gmra.mrb[0].mxu0 %v4588
        %v4667 = vpop.f32.mrb[0].mxu0
        %v4668 = vadd.f32 0.0, %v4667
        %v4669 = vpop.f32.mrb[0].mxu0
        %4670 = vmatprep.mubr.f32.mxu0 0.0
        %4671 = vmatmul.mubr.f32.gmra.mrb[0].mxu0 %v4591
        %v4672 = vpop.f32.mrb[0].mxu0
        %v4673 = vadd.f32 0.0, %v4672
        %v4674 = vpop.f32.mrb[0].mxu0
        %4675 = vmatprep.mubr.f32.mxu0 0.0
        %4676 = vmatmul.mubr.f32.gmra.mrb[0].mxu0 %v4594
        %v4677 = vpop.f32.mrb[0].mxu0
        %v4678 = vadd.f32 0.0, %v4677
        %v4679 = vpop.f32.mrb[0].mxu0
        %4680 = vdwg.mxu0
        %v4682 = vsel %vm1921, %v4571, 0
        %v4685 = vsel %vm1921, %v4572, 0
        %v4688 = vsel %vm1921, %v4573, 0
        %v4691 = vsel %vm1921, %v4574, 0
        %4693 = vmatprep.subr.mxu0 0.0
        %4694 = vmatpush1.msra.mxu0 %v4563
        %4695 = vmatprep.subr.mxu0 0.0
        %4696 = vmatpush1.msra.mxu0 %v4564
        %4697 = vmatprep.subr.mxu0 0.0
        %4698 = vmatpush1.msra.mxu0 %v4565
        %4699 = vmatprep.subr.mxu0 0.0
        %4700 = vmatpush1.msra.mxu0 %v4566
        %4701 = vmatprep.subr.mxu0 0.0
        %4702 = vmatpush1.msra.mxu0 %v4567
        %4703 = vmatprep.subr.mxu0 0.0
        %4704 = vmatpush1.msra.mxu0 %v4568
        %4705 = vmatprep.subr.mxu0 0.0
        %4706 = vmatpush1.msra.mxu0 %v4569
        %4707 = vmatprep.subr.mxu0 0.0
        %4708 = vmatpush1.msra.mxu0 %v4570
        %4709 = vmatprep.subr.mxu0 0.0
        %4710 = vmatpush1.msra.mxu0 0.0
        %4711 = vmatprep.subr.mxu0 0.0
        %4712 = vmatpush1.msra.mxu0 0.0
        %4713 = vmatprep.subr.mxu0 0.0
        %4714 = vmatpush1.msra.mxu0 0.0
        %4715 = vmatprep.subr.mxu0 0.0
        %4716 = vmatpush1.msra.mxu0 0.0
        %4717 = vmatprep.subr.mxu0 0.0
        %4718 = vmatpush1.msra.mxu0 0.0
        %4719 = vmatprep.subr.mxu0 0.0
        %4720 = vmatpush1.msra.mxu0 0.0
        %4721 = vmatprep.subr.mxu0 0.0
        %4722 = vmatpush1.msra.mxu0 0.0
        %4723 = vmatprep.subr.mxu0 0.0
        %4724 = vmatpush1.msra.mxu0 0.0
        %4725 = vmatprep.subr.mxu0 0.0
        %4726 = vmatpush1.msra.mxu0 0.0
        %4727 = vmatprep.subr.mxu0 0.0
        %4728 = vmatpush1.msra.mxu0 0.0
        %4729 = vmatprep.subr.mxu0 0.0
        %4730 = vmatpush1.msra.mxu0 0.0
        %4731 = vmatprep.subr.mxu0 0.0
        %4732 = vmatpush1.msra.mxu0 0.0
        %4733 = vmatprep.subr.mxu0 0.0
        %4734 = vmatpush1.msra.mxu0 0.0
        %4735 = vmatprep.subr.mxu0 0.0
        %4736 = vmatpush1.msra.mxu0 0.0
        %4737 = vmatprep.subr.mxu0 0.0
        %4738 = vmatpush1.msra.mxu0 0.0
        %4739 = vmatprep.subr.mxu0 0.0
        %4740 = vmatpush1.msra.mxu0 0.0
        %4741 = vmatprep.subr.mxu0 0.0
        %4742 = vmatpush1.msra.mxu0 0.0
        %4743 = vmatprep.subr.mxu0 0.0
        %4744 = vmatpush1.msra.mxu0 0.0
        %4745 = vmatprep.subr.mxu0 0.0
        %4746 = vmatpush1.msra.mxu0 0.0
        %4747 = vmatprep.subr.mxu0 0.0
        %4748 = vmatpush1.msra.mxu0 0.0
        %4749 = vmatprep.subr.mxu0 0.0
        %4750 = vmatpush1.msra.mxu0 0.0
        %4751 = vmatprep.subr.mxu0 0.0
        %4752 = vmatpush1.msra.mxu0 0.0
        %4753 = vmatprep.subr.mxu0 0.0
        %4754 = vmatpush1.msra.mxu0 0.0
        %4755 = vmatprep.subr.mxu0 0.0
        %4756 = vmatpush1.msra.mxu0 0.0
        %4757 = vmatprep.mubr.f32.mxu0 0.0
        %4758 = vmatmul.mubr.f32.gmra.mrb[0].mxu0 %v4682
        %v4759 = vpop.f32.mrb[0].mxu0
        %v4760 = vadd.f32 %v4663, %v4759
        %v4761 = vpop.f32.mrb[0].mxu0
        %4762 = vmatprep.mubr.f32.mxu0 0.0
        %4763 = vmatmul.mubr.f32.gmra.mrb[0].mxu0 %v4685
        %v4764 = vpop.f32.mrb[0].mxu0
        %v4765 = vadd.f32 %v4668, %v4764
        %v4766 = vpop.f32.mrb[0].mxu0
        %4767 = vmatprep.mubr.f32.mxu0 0.0
        %4768 = vmatmul.mubr.f32.gmra.mrb[0].mxu0 %v4688
        %v4769 = vpop.f32.mrb[0].mxu0
        %v4770 = vadd.f32 %v4673, %v4769
        %v4771 = vpop.f32.mrb[0].mxu0
        %4772 = vmatprep.mubr.f32.mxu0 0.0
        %4773 = vmatmul.mubr.f32.gmra.mrb[0].mxu0 %v4691
        %v4774 = vpop.f32.mrb[0].mxu0
        %v4775 = vadd.f32 %v4678, %v4774
        %v4776 = vpop.f32.mrb[0].mxu0
        %4777 = vdwg.mxu0
        %s4778 = scalar_lea.vmem %s17, 32
        %v4779 = vld [vmem:[%s4778] sm:$0xff]
        %v4780 = vld [vmem:[%s4778 + $0x8] sm:$0xff]
        %v4781 = vld [vmem:[%s4778 + $0x10] sm:$0xff]
        %v4782 = vld [vmem:[%s4778 + $0x18] sm:$0xff]
        %v4784 = vsel %vm1921, %v4779, 0
        %v4787 = vsel %vm1921, %v4780, 0
        %v4790 = vsel %vm1921, %v4781, 0
        %v4793 = vsel %vm1921, %v4782, 0
        %4795 = vmatprep.subr.mxu0 0.0
        %4796 = vmatpush1.msra.mxu0 %v4445
        %4797 = vmatprep.subr.mxu0 0.0
        %4798 = vmatpush1.msra.mxu0 %v4450
        %4799 = vmatprep.subr.mxu0 0.0
        %4800 = vmatpush1.msra.mxu0 %v4455
        %4801 = vmatprep.subr.mxu0 0.0
        %4802 = vmatpush1.msra.mxu0 %v4460
        %4803 = vmatprep.subr.mxu0 0.0
        %4804 = vmatpush1.msra.mxu0 %v4465
        %4805 = vmatprep.subr.mxu0 0.0
        %4806 = vmatpush1.msra.mxu0 %v4470
        %4807 = vmatprep.subr.mxu0 0.0
        %4808 = vmatpush1.msra.mxu0 %v4475
        %4809 = vmatprep.subr.mxu0 0.0
        %4810 = vmatpush1.msra.mxu0 %v4480
        %4811 = vmatprep.subr.mxu0 0.0
        %4812 = vmatpush1.msra.mxu0 0.0
        %4813 = vmatprep.subr.mxu0 0.0
        %4814 = vmatpush1.msra.mxu0 0.0
        %4815 = vmatprep.subr.mxu0 0.0
        %4816 = vmatpush1.msra.mxu0 0.0
        %4817 = vmatprep.subr.mxu0 0.0
        %4818 = vmatpush1.msra.mxu0 0.0
        %4819 = vmatprep.subr.mxu0 0.0
        %4820 = vmatpush1.msra.mxu0 0.0
        %4821 = vmatprep.subr.mxu0 0.0
        %4822 = vmatpush1.msra.mxu0 0.0
        %4823 = vmatprep.subr.mxu0 0.0
        %4824 = vmatpush1.msra.mxu0 0.0
        %4825 = vmatprep.subr.mxu0 0.0
        %4826 = vmatpush1.msra.mxu0 0.0
        %4827 = vmatprep.subr.mxu0 0.0
        %4828 = vmatpush1.msra.mxu0 0.0
        %4829 = vmatprep.subr.mxu0 0.0
        %4830 = vmatpush1.msra.mxu0 0.0
        %4831 = vmatprep.subr.mxu0 0.0
        %4832 = vmatpush1.msra.mxu0 0.0
        %4833 = vmatprep.subr.mxu0 0.0
        %4834 = vmatpush1.msra.mxu0 0.0
        %4835 = vmatprep.subr.mxu0 0.0
        %4836 = vmatpush1.msra.mxu0 0.0
        %4837 = vmatprep.subr.mxu0 0.0
        %4838 = vmatpush1.msra.mxu0 0.0
        %4839 = vmatprep.subr.mxu0 0.0
        %4840 = vmatpush1.msra.mxu0 0.0
        %4841 = vmatprep.subr.mxu0 0.0
        %4842 = vmatpush1.msra.mxu0 0.0
        %4843 = vmatprep.subr.mxu0 0.0
        %4844 = vmatpush1.msra.mxu0 0.0
        %4845 = vmatprep.subr.mxu0 0.0
        %4846 = vmatpush1.msra.mxu0 0.0
        %4847 = vmatprep.subr.mxu0 0.0
        %4848 = vmatpush1.msra.mxu0 0.0
        %4849 = vmatprep.subr.mxu0 0.0
        %4850 = vmatpush1.msra.mxu0 0.0
        %4851 = vmatprep.subr.mxu0 0.0
        %4852 = vmatpush1.msra.mxu0 0.0
        %4853 = vmatprep.subr.mxu0 0.0
        %4854 = vmatpush1.msra.mxu0 0.0
        %4855 = vmatprep.subr.mxu0 0.0
        %4856 = vmatpush1.msra.mxu0 0.0
        %4857 = vmatprep.subr.mxu0 0.0
        %4858 = vmatpush1.msra.mxu0 0.0
        %4859 = vmatprep.mubr.f32.mxu0 0.0
        %4860 = vmatmul.mubr.f32.gmra.mrb[0].mxu0 %v4784
        %v4861 = vpop.f32.mrb[0].mxu0
        %v4862 = vadd.f32 0.0, %v4861
        %v4863 = vpop.f32.mrb[0].mxu0
        %4864 = vmatprep.mubr.f32.mxu0 0.0
        %4865 = vmatmul.mubr.f32.gmra.mrb[0].mxu0 %v4787
        %v4866 = vpop.f32.mrb[0].mxu0
        %v4867 = vadd.f32 0.0, %v4866
        %v4868 = vpop.f32.mrb[0].mxu0
        %4869 = vmatprep.mubr.f32.mxu0 0.0
        %4870 = vmatmul.mubr.f32.gmra.mrb[0].mxu0 %v4790
        %v4871 = vpop.f32.mrb[0].mxu0
        %v4872 = vadd.f32 0.0, %v4871
        %v4873 = vpop.f32.mrb[0].mxu0
        %4874 = vmatprep.mubr.f32.mxu0 0.0
        %4875 = vmatmul.mubr.f32.gmra.mrb[0].mxu0 %v4793
        %v4876 = vpop.f32.mrb[0].mxu0
        %v4877 = vadd.f32 0.0, %v4876
        %v4878 = vpop.f32.mrb[0].mxu0
        %4879 = vdwg.mxu0
        %v4881 = vsel %vm1921, %v4575, 0
        %v4884 = vsel %vm1921, %v4576, 0
        %v4887 = vsel %vm1921, %v4577, 0
        %v4890 = vsel %vm1921, %v4578, 0
        %4892 = vmatprep.subr.mxu0 0.0
        %4893 = vmatpush1.msra.mxu0 %v4563
        %4894 = vmatprep.subr.mxu0 0.0
        %4895 = vmatpush1.msra.mxu0 %v4564
        %4896 = vmatprep.subr.mxu0 0.0
        %4897 = vmatpush1.msra.mxu0 %v4565
        %4898 = vmatprep.subr.mxu0 0.0
        %4899 = vmatpush1.msra.mxu0 %v4566
        %4900 = vmatprep.subr.mxu0 0.0
        %4901 = vmatpush1.msra.mxu0 %v4567
        %4902 = vmatprep.subr.mxu0 0.0
        %4903 = vmatpush1.msra.mxu0 %v4568
        %4904 = vmatprep.subr.mxu0 0.0
        %4905 = vmatpush1.msra.mxu0 %v4569
        %4906 = vmatprep.subr.mxu0 0.0
        %4907 = vmatpush1.msra.mxu0 %v4570
        %4908 = vmatprep.subr.mxu0 0.0
        %4909 = vmatpush1.msra.mxu0 0.0
        %4910 = vmatprep.subr.mxu0 0.0
        %4911 = vmatpush1.msra.mxu0 0.0
        %4912 = vmatprep.subr.mxu0 0.0
        %4913 = vmatpush1.msra.mxu0 0.0
        %4914 = vmatprep.subr.mxu0 0.0
        %4915 = vmatpush1.msra.mxu0 0.0
        %4916 = vmatprep.subr.mxu0 0.0
        %4917 = vmatpush1.msra.mxu0 0.0
        %4918 = vmatprep.subr.mxu0 0.0
        %4919 = vmatpush1.msra.mxu0 0.0
        %4920 = vmatprep.subr.mxu0 0.0
        %4921 = vmatpush1.msra.mxu0 0.0
        %4922 = vmatprep.subr.mxu0 0.0
        %4923 = vmatpush1.msra.mxu0 0.0
        %4924 = vmatprep.subr.mxu0 0.0
        %4925 = vmatpush1.msra.mxu0 0.0
        %4926 = vmatprep.subr.mxu0 0.0
        %4927 = vmatpush1.msra.mxu0 0.0
        %4928 = vmatprep.subr.mxu0 0.0
        %4929 = vmatpush1.msra.mxu0 0.0
        %4930 = vmatprep.subr.mxu0 0.0
        %4931 = vmatpush1.msra.mxu0 0.0
        %4932 = vmatprep.subr.mxu0 0.0
        %4933 = vmatpush1.msra.mxu0 0.0
        %4934 = vmatprep.subr.mxu0 0.0
        %4935 = vmatpush1.msra.mxu0 0.0
        %4936 = vmatprep.subr.mxu0 0.0
        %4937 = vmatpush1.msra.mxu0 0.0
        %4938 = vmatprep.subr.mxu0 0.0
        %4939 = vmatpush1.msra.mxu0 0.0
        %4940 = vmatprep.subr.mxu0 0.0
        %4941 = vmatpush1.msra.mxu0 0.0
        %4942 = vmatprep.subr.mxu0 0.0
        %4943 = vmatpush1.msra.mxu0 0.0
        %4944 = vmatprep.subr.mxu0 0.0
        %4945 = vmatpush1.msra.mxu0 0.0
        %4946 = vmatprep.subr.mxu0 0.0
        %4947 = vmatpush1.msra.mxu0 0.0
        %4948 = vmatprep.subr.mxu0 0.0
        %4949 = vmatpush1.msra.mxu0 0.0
        %4950 = vmatprep.subr.mxu0 0.0
        %4951 = vmatpush1.msra.mxu0 0.0
        %4952 = vmatprep.subr.mxu0 0.0
        %4953 = vmatpush1.msra.mxu0 0.0
        %4954 = vmatprep.subr.mxu0 0.0
        %4955 = vmatpush1.msra.mxu0 0.0
        %4956 = vmatprep.mubr.f32.mxu0 0.0
        %4957 = vmatmul.mubr.f32.gmra.mrb[0].mxu0 %v4881
        %v4958 = vpop.f32.mrb[0].mxu0
        %v4959 = vadd.f32 %v4862, %v4958
        %v4960 = vpop.f32.mrb[0].mxu0
        %4961 = vmatprep.mubr.f32.mxu0 0.0
        %4962 = vmatmul.mubr.f32.gmra.mrb[0].mxu0 %v4884
        %v4963 = vpop.f32.mrb[0].mxu0
        %v4964 = vadd.f32 %v4867, %v4963
        %v4965 = vpop.f32.mrb[0].mxu0
        %4966 = vmatprep.mubr.f32.mxu0 0.0
        %4967 = vmatmul.mubr.f32.gmra.mrb[0].mxu0 %v4887
        %v4968 = vpop.f32.mrb[0].mxu0
        %v4969 = vadd.f32 %v4872, %v4968
        %v4970 = vpop.f32.mrb[0].mxu0
        %4971 = vmatprep.mubr.f32.mxu0 0.0
        %4972 = vmatmul.mubr.f32.gmra.mrb[0].mxu0 %v4890
        %v4973 = vpop.f32.mrb[0].mxu0
        %v4974 = vadd.f32 %v4877, %v4973
        %v4975 = vpop.f32.mrb[0].mxu0
        %4976 = vdwg.mxu0
        %4977 = vrot.lane.b32.xlu0 %v4523, 127
        %v4978 = vpop.permute.xlu0 %4977
        %4979 = vrot.lane.b32.xlu0 %v4524, 127
        %v4980 = vpop.permute.xlu0 %4979
        %4981 = vrot.lane.b32.xlu0 %v4525, 127
        %v4982 = vpop.permute.xlu0 %4981
        %4983 = vrot.lane.b32.xlu0 %v4526, 127
        %v4984 = vpop.permute.xlu0 %4983
        %4985 = vrot.lane.b32.xlu0 %v4527, 127
        %v4986 = vpop.permute.xlu0 %4985
        %4987 = vrot.lane.b32.xlu0 %v4528, 127
        %v4988 = vpop.permute.xlu0 %4987
        %4989 = vrot.lane.b32.xlu0 %v4529, 127
        %v4990 = vpop.permute.xlu0 %4989
        %4991 = vrot.lane.b32.xlu0 %v4530, 127
        %v4992 = vpop.permute.xlu0 %4991
        %v5001 = vsel %vm1353, 0.0, %v4978
        %v5002 = vsel %vm1353, 0.0, %v4980
        %v5003 = vsel %vm1353, 0.0, %v4982
        %v5004 = vsel %vm1353, 0.0, %v4984
        %v5005 = vsel %vm1353, 0.0, %v4986
        %v5006 = vsel %vm1353, 0.0, %v4988
        %v5007 = vsel %vm1353, 0.0, %v4990
        %v5008 = vsel %vm1353, 0.0, %v4992
        %s5009 = scalar_lea.vmem %s15, 64
        %v5010 = vld [vmem:[%s5009] sm:$0xff]
        %v5011 = vld [vmem:[%s5009 + $0x8] sm:$0xff]
        %v5012 = vld [vmem:[%s5009 + $0x10] sm:$0xff]
        %v5013 = vld [vmem:[%s5009 + $0x18] sm:$0xff]
        %v5015 = vsel %vm1921, %v5010, 0
        %v5018 = vsel %vm1921, %v5011, 0
        %v5021 = vsel %vm1921, %v5012, 0
        %v5024 = vsel %vm1921, %v5013, 0
        %5026 = vmatprep.subr.mxu0 0.0
        %5027 = vmatpush1.msra.mxu0 %v5001
        %5028 = vmatprep.subr.mxu0 0.0
        %5029 = vmatpush1.msra.mxu0 %v5002
        %5030 = vmatprep.subr.mxu0 0.0
        %5031 = vmatpush1.msra.mxu0 %v5003
        %5032 = vmatprep.subr.mxu0 0.0
        %5033 = vmatpush1.msra.mxu0 %v5004
        %5034 = vmatprep.subr.mxu0 0.0
        %5035 = vmatpush1.msra.mxu0 %v5005
        %5036 = vmatprep.subr.mxu0 0.0
        %5037 = vmatpush1.msra.mxu0 %v5006
        %5038 = vmatprep.subr.mxu0 0.0
        %5039 = vmatpush1.msra.mxu0 %v5007
        %5040 = vmatprep.subr.mxu0 0.0
        %5041 = vmatpush1.msra.mxu0 %v5008
        %5042 = vmatprep.subr.mxu0 0.0
        %5043 = vmatpush1.msra.mxu0 0.0
        %5044 = vmatprep.subr.mxu0 0.0
        %5045 = vmatpush1.msra.mxu0 0.0
        %5046 = vmatprep.subr.mxu0 0.0
        %5047 = vmatpush1.msra.mxu0 0.0
        %5048 = vmatprep.subr.mxu0 0.0
        %5049 = vmatpush1.msra.mxu0 0.0
        %5050 = vmatprep.subr.mxu0 0.0
        %5051 = vmatpush1.msra.mxu0 0.0
        %5052 = vmatprep.subr.mxu0 0.0
        %5053 = vmatpush1.msra.mxu0 0.0
        %5054 = vmatprep.subr.mxu0 0.0
        %5055 = vmatpush1.msra.mxu0 0.0
        %5056 = vmatprep.subr.mxu0 0.0
        %5057 = vmatpush1.msra.mxu0 0.0
        %5058 = vmatprep.subr.mxu0 0.0
        %5059 = vmatpush1.msra.mxu0 0.0
        %5060 = vmatprep.subr.mxu0 0.0
        %5061 = vmatpush1.msra.mxu0 0.0
        %5062 = vmatprep.subr.mxu0 0.0
        %5063 = vmatpush1.msra.mxu0 0.0
        %5064 = vmatprep.subr.mxu0 0.0
        %5065 = vmatpush1.msra.mxu0 0.0
        %5066 = vmatprep.subr.mxu0 0.0
        %5067 = vmatpush1.msra.mxu0 0.0
        %5068 = vmatprep.subr.mxu0 0.0
        %5069 = vmatpush1.msra.mxu0 0.0
        %5070 = vmatprep.subr.mxu0 0.0
        %5071 = vmatpush1.msra.mxu0 0.0
        %5072 = vmatprep.subr.mxu0 0.0
        %5073 = vmatpush1.msra.mxu0 0.0
        %5074 = vmatprep.subr.mxu0 0.0
        %5075 = vmatpush1.msra.mxu0 0.0
        %5076 = vmatprep.subr.mxu0 0.0
        %5077 = vmatpush1.msra.mxu0 0.0
        %5078 = vmatprep.subr.mxu0 0.0
        %5079 = vmatpush1.msra.mxu0 0.0
        %5080 = vmatprep.subr.mxu0 0.0
        %5081 = vmatpush1.msra.mxu0 0.0
        %5082 = vmatprep.subr.mxu0 0.0
        %5083 = vmatpush1.msra.mxu0 0.0
        %5084 = vmatprep.subr.mxu0 0.0
        %5085 = vmatpush1.msra.mxu0 0.0
        %5086 = vmatprep.subr.mxu0 0.0
        %5087 = vmatpush1.msra.mxu0 0.0
        %5088 = vmatprep.subr.mxu0 0.0
        %5089 = vmatpush1.msra.mxu0 0.0
        %5090 = vmatprep.mubr.f32.mxu0 0.0
        %5091 = vmatmul.mubr.f32.gmra.mrb[0].mxu0 %v5015
        %v5092 = vpop.f32.mrb[0].mxu0
        %v5093 = vadd.f32 0.0, %v5092
        %v5094 = vpop.f32.mrb[0].mxu0
        %5095 = vmatprep.mubr.f32.mxu0 0.0
        %5096 = vmatmul.mubr.f32.gmra.mrb[0].mxu0 %v5018
        %v5097 = vpop.f32.mrb[0].mxu0
        %v5098 = vadd.f32 0.0, %v5097
        %v5099 = vpop.f32.mrb[0].mxu0
        %5100 = vmatprep.mubr.f32.mxu0 0.0
        %5101 = vmatmul.mubr.f32.gmra.mrb[0].mxu0 %v5021
        %v5102 = vpop.f32.mrb[0].mxu0
        %v5103 = vadd.f32 0.0, %v5102
        %v5104 = vpop.f32.mrb[0].mxu0
        %5105 = vmatprep.mubr.f32.mxu0 0.0
        %5106 = vmatmul.mubr.f32.gmra.mrb[0].mxu0 %v5024
        %v5107 = vpop.f32.mrb[0].mxu0
        %v5108 = vadd.f32 0.0, %v5107
        %v5109 = vpop.f32.mrb[0].mxu0
        %5110 = vdwg.mxu0
        %v5111 = vadd.f32 %v4760, %v5093
        %v5112 = vadd.f32 %v4765, %v5098
        %v5113 = vadd.f32 %v4770, %v5103
        %v5114 = vadd.f32 %v4775, %v5108
        %s5115 = scalar_lea.vmem %s17, 64
        %v5116 = vld [vmem:[%s5115] sm:$0xff]
        %v5117 = vld [vmem:[%s5115 + $0x8] sm:$0xff]
        %v5118 = vld [vmem:[%s5115 + $0x10] sm:$0xff]
        %v5119 = vld [vmem:[%s5115 + $0x18] sm:$0xff]
        %v5121 = vsel %vm1921, %v5116, 0
        %v5124 = vsel %vm1921, %v5117, 0
        %v5127 = vsel %vm1921, %v5118, 0
        %v5130 = vsel %vm1921, %v5119, 0
        %5132 = vmatprep.subr.mxu0 0.0
        %5133 = vmatpush1.msra.mxu0 %v5001
        %5134 = vmatprep.subr.mxu0 0.0
        %5135 = vmatpush1.msra.mxu0 %v5002
        %5136 = vmatprep.subr.mxu0 0.0
        %5137 = vmatpush1.msra.mxu0 %v5003
        %5138 = vmatprep.subr.mxu0 0.0
        %5139 = vmatpush1.msra.mxu0 %v5004
        %5140 = vmatprep.subr.mxu0 0.0
        %5141 = vmatpush1.msra.mxu0 %v5005
        %5142 = vmatprep.subr.mxu0 0.0
        %5143 = vmatpush1.msra.mxu0 %v5006
        %5144 = vmatprep.subr.mxu0 0.0
        %5145 = vmatpush1.msra.mxu0 %v5007
        %5146 = vmatprep.subr.mxu0 0.0
        %5147 = vmatpush1.msra.mxu0 %v5008
        %5148 = vmatprep.subr.mxu0 0.0
        %5149 = vmatpush1.msra.mxu0 0.0
        %5150 = vmatprep.subr.mxu0 0.0
        %5151 = vmatpush1.msra.mxu0 0.0
        %5152 = vmatprep.subr.mxu0 0.0
        %5153 = vmatpush1.msra.mxu0 0.0
        %5154 = vmatprep.subr.mxu0 0.0
        %5155 = vmatpush1.msra.mxu0 0.0
        %5156 = vmatprep.subr.mxu0 0.0
        %5157 = vmatpush1.msra.mxu0 0.0
        %5158 = vmatprep.subr.mxu0 0.0
        %5159 = vmatpush1.msra.mxu0 0.0
        %5160 = vmatprep.subr.mxu0 0.0
        %5161 = vmatpush1.msra.mxu0 0.0
        %5162 = vmatprep.subr.mxu0 0.0
        %5163 = vmatpush1.msra.mxu0 0.0
        %5164 = vmatprep.subr.mxu0 0.0
        %5165 = vmatpush1.msra.mxu0 0.0
        %5166 = vmatprep.subr.mxu0 0.0
        %5167 = vmatpush1.msra.mxu0 0.0
        %5168 = vmatprep.subr.mxu0 0.0
        %5169 = vmatpush1.msra.mxu0 0.0
        %5170 = vmatprep.subr.mxu0 0.0
        %5171 = vmatpush1.msra.mxu0 0.0
        %5172 = vmatprep.subr.mxu0 0.0
        %5173 = vmatpush1.msra.mxu0 0.0
        %5174 = vmatprep.subr.mxu0 0.0
        %5175 = vmatpush1.msra.mxu0 0.0
        %5176 = vmatprep.subr.mxu0 0.0
        %5177 = vmatpush1.msra.mxu0 0.0
        %5178 = vmatprep.subr.mxu0 0.0
        %5179 = vmatpush1.msra.mxu0 0.0
        %5180 = vmatprep.subr.mxu0 0.0
        %5181 = vmatpush1.msra.mxu0 0.0
        %5182 = vmatprep.subr.mxu0 0.0
        %5183 = vmatpush1.msra.mxu0 0.0
        %5184 = vmatprep.subr.mxu0 0.0
        %5185 = vmatpush1.msra.mxu0 0.0
        %5186 = vmatprep.subr.mxu0 0.0
        %5187 = vmatpush1.msra.mxu0 0.0
        %5188 = vmatprep.subr.mxu0 0.0
        %5189 = vmatpush1.msra.mxu0 0.0
        %5190 = vmatprep.subr.mxu0 0.0
        %5191 = vmatpush1.msra.mxu0 0.0
        %5192 = vmatprep.subr.mxu0 0.0
        %5193 = vmatpush1.msra.mxu0 0.0
        %5194 = vmatprep.subr.mxu0 0.0
        %5195 = vmatpush1.msra.mxu0 0.0
        %5196 = vmatprep.mubr.f32.mxu0 0.0
        %5197 = vmatmul.mubr.f32.gmra.mrb[0].mxu0 %v5121
        %v5198 = vpop.f32.mrb[0].mxu0
        %v5199 = vadd.f32 0.0, %v5198
        %v5200 = vpop.f32.mrb[0].mxu0
        %5201 = vmatprep.mubr.f32.mxu0 0.0
        %5202 = vmatmul.mubr.f32.gmra.mrb[0].mxu0 %v5124
        %v5203 = vpop.f32.mrb[0].mxu0
        %v5204 = vadd.f32 0.0, %v5203
        %v5205 = vpop.f32.mrb[0].mxu0
        %5206 = vmatprep.mubr.f32.mxu0 0.0
        %5207 = vmatmul.mubr.f32.gmra.mrb[0].mxu0 %v5127
        %v5208 = vpop.f32.mrb[0].mxu0
        %v5209 = vadd.f32 0.0, %v5208
        %v5210 = vpop.f32.mrb[0].mxu0
        %5211 = vmatprep.mubr.f32.mxu0 0.0
        %5212 = vmatmul.mubr.f32.gmra.mrb[0].mxu0 %v5130
        %v5213 = vpop.f32.mrb[0].mxu0
        %v5214 = vadd.f32 0.0, %v5213
        %v5215 = vpop.f32.mrb[0].mxu0
        %5216 = vdwg.mxu0
        %v5217 = vadd.f32 %v4959, %v5199
        %v5218 = vadd.f32 %v4964, %v5204
        %v5219 = vadd.f32 %v4969, %v5209
        %v5220 = vadd.f32 %v4974, %v5214
        %v5221 = vld [vmem:[%s18] sm:$0xff]
        %v5222 = vld [vmem:[%s18 + $0x8] sm:$0xff]
        %v5223 = vld [vmem:[%s18 + $0x10] sm:$0xff]
        %v5224 = vld [vmem:[%s18 + $0x18] sm:$0xff]
        %5226 = vset.pattern.permute.xlu0 0
        %5227 = vperm.xlu0 %5226, %v5221
        %v5228 = vpop.permute.xlu0 %5227
        %5231 = vset.pattern.permute.xlu0 0
        %5232 = vperm.xlu0 %5231, %v5222
        %v5233 = vpop.permute.xlu0 %5232
        %5236 = vset.pattern.permute.xlu0 0
        %5237 = vperm.xlu0 %5236, %v5223
        %v5238 = vpop.permute.xlu0 %5237
        %5241 = vset.pattern.permute.xlu0 0
        %5242 = vperm.xlu0 %5241, %v5224
        %v5243 = vpop.permute.xlu0 %5242
        %v5245 = vadd.f32 %v5111, %v5228
        %v5246 = vadd.f32 %v5112, %v5233
        %v5247 = vadd.f32 %v5113, %v5238
        %v5248 = vadd.f32 %v5114, %v5243
        %v5249 = vmax.f32 %v5245, 0.0
        %v5250 = vmax.f32 %v5246, 0.0
        %v5251 = vmax.f32 %v5247, 0.0
        %v5252 = vmax.f32 %v5248, 0.0
        %s5253 = scalar_lea.vmem %s18, 32
        %v5254 = vld [vmem:[%s5253] sm:$0xff]
        %v5255 = vld [vmem:[%s5253 + $0x8] sm:$0xff]
        %v5256 = vld [vmem:[%s5253 + $0x10] sm:$0xff]
        %v5257 = vld [vmem:[%s5253 + $0x18] sm:$0xff]
        %s5258 = scalar_lea.vmem %s16, 32
        %v5259 = vld [vmem:[%s5258] sm:$0xff]
        %v5260 = vld [vmem:[%s5258 + $0x8] sm:$0xff]
        %v5261 = vld [vmem:[%s5258 + $0x10] sm:$0xff]
        %v5262 = vld [vmem:[%s5258 + $0x18] sm:$0xff]
        %v5263 = vld [vmem:[%s16] sm:$0xff]
        %v5264 = vld [vmem:[%s16 + $0x8] sm:$0xff]
        %v5265 = vld [vmem:[%s16 + $0x10] sm:$0xff]
        %v5266 = vld [vmem:[%s16 + $0x18] sm:$0xff]
        %5267 = vrot.lane.b32.xlu0 %v5249, 16
        %v5268 = vpop.permute.xlu0 %5267
        %v5269 = vsel %vm1041, %v5268, %v5249
        %5270 = vrot.lane.b32.xlu0 %v5250, 16
        %v5271 = vpop.permute.xlu0 %5270
        %v5272 = vsel %vm1041, %v5271, %v5250
        %5273 = vrot.lane.b32.xlu0 %v5251, 16
        %v5274 = vpop.permute.xlu0 %5273
        %v5275 = vsel %vm1041, %v5274, %v5251
        %5276 = vrot.lane.b32.xlu0 %v5252, 16
        %v5277 = vpop.permute.xlu0 %5276
        %v5278 = vsel %vm1041, %v5277, %v5252
        %5279 = vrot.lane.b32.xlu0 %v5269, 16
        %v5280 = vpop.permute.xlu0 %5279
        %5281 = vrot.lane.b32.xlu0 %v5272, 16
        %v5282 = vpop.permute.xlu0 %5281
        %5283 = vrot.lane.b32.xlu0 %v5275, 16
        %v5284 = vpop.permute.xlu0 %5283
        %5285 = vrot.lane.b32.xlu0 %v5278, 16
        %v5286 = vpop.permute.xlu0 %5285
        %v5287 = vsel %vm1041, %v5280, %v5249
        %v5288 = vsel %vm1041, %v5282, %v5250
        %v5289 = vsel %vm1041, %v5284, %v5251
        %v5290 = vsel %vm1041, %v5286, %v5252
        %5295 = vrot.lane.b32.xlu0 %v5287, 113
        %v5296 = vpop.permute.xlu0 %5295
        %5297 = vrot.lane.b32.xlu0 %v5288, 113
        %v5298 = vpop.permute.xlu0 %5297
        %5299 = vrot.lane.b32.xlu0 %v5289, 113
        %v5300 = vpop.permute.xlu0 %5299
        %5301 = vrot.lane.b32.xlu0 %v5290, 113
        %v5302 = vpop.permute.xlu0 %5301
        %v5307 = vsel %vm705, 0.0, %v5296
        %v5308 = vsel %vm705, 0.0, %v5298
        %v5309 = vsel %vm705, 0.0, %v5300
        %v5310 = vsel %vm705, 0.0, %v5302
        %v5312 = vsel %vm914, %v5263, 0
        %v5315 = vsel %vm914, %v5264, 0
        %v5318 = vsel %vm914, %v5265, 0
        %v5321 = vsel %vm914, %v5266, 0
        %5323 = vmatprep.subr.mxu0 0.0
        %5324 = vmatpush1.msra.mxu0 %v5307
        %5325 = vmatprep.subr.mxu0 0.0
        %5326 = vmatpush1.msra.mxu0 %v5308
        %5327 = vmatprep.subr.mxu0 0.0
        %5328 = vmatpush1.msra.mxu0 %v5309
        %5329 = vmatprep.subr.mxu0 0.0
        %5330 = vmatpush1.msra.mxu0 %v5310
        %5331 = vmatprep.subr.mxu0 0.0
        %5332 = vmatpush1.msra.mxu0 0.0
        %5333 = vmatprep.subr.mxu0 0.0
        %5334 = vmatpush1.msra.mxu0 0.0
        %5335 = vmatprep.subr.mxu0 0.0
        %5336 = vmatpush1.msra.mxu0 0.0
        %5337 = vmatprep.subr.mxu0 0.0
        %5338 = vmatpush1.msra.mxu0 0.0
        %5339 = vmatprep.subr.mxu0 0.0
        %5340 = vmatpush1.msra.mxu0 0.0
        %5341 = vmatprep.subr.mxu0 0.0
        %5342 = vmatpush1.msra.mxu0 0.0
        %5343 = vmatprep.subr.mxu0 0.0
        %5344 = vmatpush1.msra.mxu0 0.0
        %5345 = vmatprep.subr.mxu0 0.0
        %5346 = vmatpush1.msra.mxu0 0.0
        %5347 = vmatprep.subr.mxu0 0.0
        %5348 = vmatpush1.msra.mxu0 0.0
        %5349 = vmatprep.subr.mxu0 0.0
        %5350 = vmatpush1.msra.mxu0 0.0
        %5351 = vmatprep.subr.mxu0 0.0
        %5352 = vmatpush1.msra.mxu0 0.0
        %5353 = vmatprep.subr.mxu0 0.0
        %5354 = vmatpush1.msra.mxu0 0.0
        %5355 = vmatprep.subr.mxu0 0.0
        %5356 = vmatpush1.msra.mxu0 0.0
        %5357 = vmatprep.subr.mxu0 0.0
        %5358 = vmatpush1.msra.mxu0 0.0
        %5359 = vmatprep.subr.mxu0 0.0
        %5360 = vmatpush1.msra.mxu0 0.0
        %5361 = vmatprep.subr.mxu0 0.0
        %5362 = vmatpush1.msra.mxu0 0.0
        %5363 = vmatprep.subr.mxu0 0.0
        %5364 = vmatpush1.msra.mxu0 0.0
        %5365 = vmatprep.subr.mxu0 0.0
        %5366 = vmatpush1.msra.mxu0 0.0
        %5367 = vmatprep.subr.mxu0 0.0
        %5368 = vmatpush1.msra.mxu0 0.0
        %5369 = vmatprep.subr.mxu0 0.0
        %5370 = vmatpush1.msra.mxu0 0.0
        %5371 = vmatprep.subr.mxu0 0.0
        %5372 = vmatpush1.msra.mxu0 0.0
        %5373 = vmatprep.subr.mxu0 0.0
        %5374 = vmatpush1.msra.mxu0 0.0
        %5375 = vmatprep.subr.mxu0 0.0
        %5376 = vmatpush1.msra.mxu0 0.0
        %5377 = vmatprep.subr.mxu0 0.0
        %5378 = vmatpush1.msra.mxu0 0.0
        %5379 = vmatprep.subr.mxu0 0.0
        %5380 = vmatpush1.msra.mxu0 0.0
        %5381 = vmatprep.subr.mxu0 0.0
        %5382 = vmatpush1.msra.mxu0 0.0
        %5383 = vmatprep.subr.mxu0 0.0
        %5384 = vmatpush1.msra.mxu0 0.0
        %5385 = vmatprep.subr.mxu0 0.0
        %5386 = vmatpush1.msra.mxu0 0.0
        %5387 = vmatprep.mubr.f32.mxu0 0.0
        %5388 = vmatmul.mubr.f32.gmra.mrb[0].mxu0 %v5312
        %v5389 = vpop.f32.mrb[0].mxu0
        %v5390 = vadd.f32 0.0, %v5389
        %v5391 = vpop.f32.mrb[0].mxu0
        %5392 = vmatprep.mubr.f32.mxu0 0.0
        %5393 = vmatmul.mubr.f32.gmra.mrb[0].mxu0 %v5315
        %v5394 = vpop.f32.mrb[0].mxu0
        %v5395 = vadd.f32 0.0, %v5394
        %v5396 = vpop.f32.mrb[0].mxu0
        %5397 = vmatprep.mubr.f32.mxu0 0.0
        %5398 = vmatmul.mubr.f32.gmra.mrb[0].mxu0 %v5318
        %v5399 = vpop.f32.mrb[0].mxu0
        %v5400 = vadd.f32 0.0, %v5399
        %v5401 = vpop.f32.mrb[0].mxu0
        %5402 = vmatprep.mubr.f32.mxu0 0.0
        %5403 = vmatmul.mubr.f32.gmra.mrb[0].mxu0 %v5321
        %v5404 = vpop.f32.mrb[0].mxu0
        %v5405 = vadd.f32 0.0, %v5404
        %v5406 = vpop.f32.mrb[0].mxu0
        %5407 = vdwg.mxu0
        %v5409 = vsel %vm914, %v5259, 0
        %v5412 = vsel %vm914, %v5260, 0
        %v5415 = vsel %vm914, %v5261, 0
        %v5418 = vsel %vm914, %v5262, 0
        %5420 = vmatprep.subr.mxu0 0.0
        %5421 = vmatpush1.msra.mxu0 %v5249
        %5422 = vmatprep.subr.mxu0 0.0
        %5423 = vmatpush1.msra.mxu0 %v5250
        %5424 = vmatprep.subr.mxu0 0.0
        %5425 = vmatpush1.msra.mxu0 %v5251
        %5426 = vmatprep.subr.mxu0 0.0
        %5427 = vmatpush1.msra.mxu0 %v5252
        %5428 = vmatprep.subr.mxu0 0.0
        %5429 = vmatpush1.msra.mxu0 0.0
        %5430 = vmatprep.subr.mxu0 0.0
        %5431 = vmatpush1.msra.mxu0 0.0
        %5432 = vmatprep.subr.mxu0 0.0
        %5433 = vmatpush1.msra.mxu0 0.0
        %5434 = vmatprep.subr.mxu0 0.0
        %5435 = vmatpush1.msra.mxu0 0.0
        %5436 = vmatprep.subr.mxu0 0.0
        %5437 = vmatpush1.msra.mxu0 0.0
        %5438 = vmatprep.subr.mxu0 0.0
        %5439 = vmatpush1.msra.mxu0 0.0
        %5440 = vmatprep.subr.mxu0 0.0
        %5441 = vmatpush1.msra.mxu0 0.0
        %5442 = vmatprep.subr.mxu0 0.0
        %5443 = vmatpush1.msra.mxu0 0.0
        %5444 = vmatprep.subr.mxu0 0.0
        %5445 = vmatpush1.msra.mxu0 0.0
        %5446 = vmatprep.subr.mxu0 0.0
        %5447 = vmatpush1.msra.mxu0 0.0
        %5448 = vmatprep.subr.mxu0 0.0
        %5449 = vmatpush1.msra.mxu0 0.0
        %5450 = vmatprep.subr.mxu0 0.0
        %5451 = vmatpush1.msra.mxu0 0.0
        %5452 = vmatprep.subr.mxu0 0.0
        %5453 = vmatpush1.msra.mxu0 0.0
        %5454 = vmatprep.subr.mxu0 0.0
        %5455 = vmatpush1.msra.mxu0 0.0
        %5456 = vmatprep.subr.mxu0 0.0
        %5457 = vmatpush1.msra.mxu0 0.0
        %5458 = vmatprep.subr.mxu0 0.0
        %5459 = vmatpush1.msra.mxu0 0.0
        %5460 = vmatprep.subr.mxu0 0.0
        %5461 = vmatpush1.msra.mxu0 0.0
        %5462 = vmatprep.subr.mxu0 0.0
        %5463 = vmatpush1.msra.mxu0 0.0
        %5464 = vmatprep.subr.mxu0 0.0
        %5465 = vmatpush1.msra.mxu0 0.0
        %5466 = vmatprep.subr.mxu0 0.0
        %5467 = vmatpush1.msra.mxu0 0.0
        %5468 = vmatprep.subr.mxu0 0.0
        %5469 = vmatpush1.msra.mxu0 0.0
        %5470 = vmatprep.subr.mxu0 0.0
        %5471 = vmatpush1.msra.mxu0 0.0
        %5472 = vmatprep.subr.mxu0 0.0
        %5473 = vmatpush1.msra.mxu0 0.0
        %5474 = vmatprep.subr.mxu0 0.0
        %5475 = vmatpush1.msra.mxu0 0.0
        %5476 = vmatprep.subr.mxu0 0.0
        %5477 = vmatpush1.msra.mxu0 0.0
        %5478 = vmatprep.subr.mxu0 0.0
        %5479 = vmatpush1.msra.mxu0 0.0
        %5480 = vmatprep.subr.mxu0 0.0
        %5481 = vmatpush1.msra.mxu0 0.0
        %5482 = vmatprep.subr.mxu0 0.0
        %5483 = vmatpush1.msra.mxu0 0.0
        %5484 = vmatprep.mubr.f32.mxu0 0.0
        %5485 = vmatmul.mubr.f32.gmra.mrb[0].mxu0 %v5409
        %v5486 = vpop.f32.mrb[0].mxu0
        %v5487 = vadd.f32 %v5390, %v5486
        %v5488 = vpop.f32.mrb[0].mxu0
        %5489 = vmatprep.mubr.f32.mxu0 0.0
        %5490 = vmatmul.mubr.f32.gmra.mrb[0].mxu0 %v5412
        %v5491 = vpop.f32.mrb[0].mxu0
        %v5492 = vadd.f32 %v5395, %v5491
        %v5493 = vpop.f32.mrb[0].mxu0
        %5494 = vmatprep.mubr.f32.mxu0 0.0
        %5495 = vmatmul.mubr.f32.gmra.mrb[0].mxu0 %v5415
        %v5496 = vpop.f32.mrb[0].mxu0
        %v5497 = vadd.f32 %v5400, %v5496
        %v5498 = vpop.f32.mrb[0].mxu0
        %5499 = vmatprep.mubr.f32.mxu0 0.0
        %5500 = vmatmul.mubr.f32.gmra.mrb[0].mxu0 %v5418
        %v5501 = vpop.f32.mrb[0].mxu0
        %v5502 = vadd.f32 %v5405, %v5501
        %v5503 = vpop.f32.mrb[0].mxu0
        %5504 = vdwg.mxu0
        %s5505 = scalar_lea.vmem %s16, 64
        %v5506 = vld [vmem:[%s5505] sm:$0xff]
        %v5507 = vld [vmem:[%s5505 + $0x8] sm:$0xff]
        %v5508 = vld [vmem:[%s5505 + $0x10] sm:$0xff]
        %v5509 = vld [vmem:[%s5505 + $0x18] sm:$0xff]
        %5510 = vrot.lane.b32.xlu0 %v5287, 127
        %v5511 = vpop.permute.xlu0 %5510
        %5512 = vrot.lane.b32.xlu0 %v5288, 127
        %v5513 = vpop.permute.xlu0 %5512
        %5514 = vrot.lane.b32.xlu0 %v5289, 127
        %v5515 = vpop.permute.xlu0 %5514
        %5516 = vrot.lane.b32.xlu0 %v5290, 127
        %v5517 = vpop.permute.xlu0 %5516
        %v5522 = vsel %vm1353, 0.0, %v5511
        %v5523 = vsel %vm1353, 0.0, %v5513
        %v5524 = vsel %vm1353, 0.0, %v5515
        %v5525 = vsel %vm1353, 0.0, %v5517
        %v5527 = vsel %vm914, %v5506, 0
        %v5530 = vsel %vm914, %v5507, 0
        %v5533 = vsel %vm914, %v5508, 0
        %v5536 = vsel %vm914, %v5509, 0
        %5538 = vmatprep.subr.mxu0 0.0
        %5539 = vmatpush1.msra.mxu0 %v5522
        %5540 = vmatprep.subr.mxu0 0.0
        %5541 = vmatpush1.msra.mxu0 %v5523
        %5542 = vmatprep.subr.mxu0 0.0
        %5543 = vmatpush1.msra.mxu0 %v5524
        %5544 = vmatprep.subr.mxu0 0.0
        %5545 = vmatpush1.msra.mxu0 %v5525
        %5546 = vmatprep.subr.mxu0 0.0
        %5547 = vmatpush1.msra.mxu0 0.0
        %5548 = vmatprep.subr.mxu0 0.0
        %5549 = vmatpush1.msra.mxu0 0.0
        %5550 = vmatprep.subr.mxu0 0.0
        %5551 = vmatpush1.msra.mxu0 0.0
        %5552 = vmatprep.subr.mxu0 0.0
        %5553 = vmatpush1.msra.mxu0 0.0
        %5554 = vmatprep.subr.mxu0 0.0
        %5555 = vmatpush1.msra.mxu0 0.0
        %5556 = vmatprep.subr.mxu0 0.0
        %5557 = vmatpush1.msra.mxu0 0.0
        %5558 = vmatprep.subr.mxu0 0.0
        %5559 = vmatpush1.msra.mxu0 0.0
        %5560 = vmatprep.subr.mxu0 0.0
        %5561 = vmatpush1.msra.mxu0 0.0
        %5562 = vmatprep.subr.mxu0 0.0
        %5563 = vmatpush1.msra.mxu0 0.0
        %5564 = vmatprep.subr.mxu0 0.0
        %5565 = vmatpush1.msra.mxu0 0.0
        %5566 = vmatprep.subr.mxu0 0.0
        %5567 = vmatpush1.msra.mxu0 0.0
        %5568 = vmatprep.subr.mxu0 0.0
        %5569 = vmatpush1.msra.mxu0 0.0
        %5570 = vmatprep.subr.mxu0 0.0
        %5571 = vmatpush1.msra.mxu0 0.0
        %5572 = vmatprep.subr.mxu0 0.0
        %5573 = vmatpush1.msra.mxu0 0.0
        %5574 = vmatprep.subr.mxu0 0.0
        %5575 = vmatpush1.msra.mxu0 0.0
        %5576 = vmatprep.subr.mxu0 0.0
        %5577 = vmatpush1.msra.mxu0 0.0
        %5578 = vmatprep.subr.mxu0 0.0
        %5579 = vmatpush1.msra.mxu0 0.0
        %5580 = vmatprep.subr.mxu0 0.0
        %5581 = vmatpush1.msra.mxu0 0.0
        %5582 = vmatprep.subr.mxu0 0.0
        %5583 = vmatpush1.msra.mxu0 0.0
        %5584 = vmatprep.subr.mxu0 0.0
        %5585 = vmatpush1.msra.mxu0 0.0
        %5586 = vmatprep.subr.mxu0 0.0
        %5587 = vmatpush1.msra.mxu0 0.0
        %5588 = vmatprep.subr.mxu0 0.0
        %5589 = vmatpush1.msra.mxu0 0.0
        %5590 = vmatprep.subr.mxu0 0.0
        %5591 = vmatpush1.msra.mxu0 0.0
        %5592 = vmatprep.subr.mxu0 0.0
        %5593 = vmatpush1.msra.mxu0 0.0
        %5594 = vmatprep.subr.mxu0 0.0
        %5595 = vmatpush1.msra.mxu0 0.0
        %5596 = vmatprep.subr.mxu0 0.0
        %5597 = vmatpush1.msra.mxu0 0.0
        %5598 = vmatprep.subr.mxu0 0.0
        %5599 = vmatpush1.msra.mxu0 0.0
        %5600 = vmatprep.subr.mxu0 0.0
        %5601 = vmatpush1.msra.mxu0 0.0
        %5602 = vmatprep.mubr.f32.mxu0 0.0
        %5603 = vmatmul.mubr.f32.gmra.mrb[0].mxu0 %v5527
        %v5604 = vpop.f32.mrb[0].mxu0
        %v5605 = vadd.f32 0.0, %v5604
        %v5606 = vpop.f32.mrb[0].mxu0
        %5607 = vmatprep.mubr.f32.mxu0 0.0
        %5608 = vmatmul.mubr.f32.gmra.mrb[0].mxu0 %v5530
        %v5609 = vpop.f32.mrb[0].mxu0
        %v5610 = vadd.f32 0.0, %v5609
        %v5611 = vpop.f32.mrb[0].mxu0
        %5612 = vmatprep.mubr.f32.mxu0 0.0
        %5613 = vmatmul.mubr.f32.gmra.mrb[0].mxu0 %v5533
        %v5614 = vpop.f32.mrb[0].mxu0
        %v5615 = vadd.f32 0.0, %v5614
        %v5616 = vpop.f32.mrb[0].mxu0
        %5617 = vmatprep.mubr.f32.mxu0 0.0
        %5618 = vmatmul.mubr.f32.gmra.mrb[0].mxu0 %v5536
        %v5619 = vpop.f32.mrb[0].mxu0
        %v5620 = vadd.f32 0.0, %v5619
        %v5621 = vpop.f32.mrb[0].mxu0
        %5622 = vdwg.mxu0
        %v5623 = vadd.f32 %v5487, %v5605
        %v5624 = vadd.f32 %v5492, %v5610
        %v5625 = vadd.f32 %v5497, %v5615
        %v5626 = vadd.f32 %v5502, %v5620
        %5628 = vset.pattern.permute.xlu0 0
        %5629 = vperm.xlu0 %5628, %v5254
        %v5630 = vpop.permute.xlu0 %5629
        %5633 = vset.pattern.permute.xlu0 0
        %5634 = vperm.xlu0 %5633, %v5255
        %v5635 = vpop.permute.xlu0 %5634
        %5638 = vset.pattern.permute.xlu0 0
        %5639 = vperm.xlu0 %5638, %v5256
        %v5640 = vpop.permute.xlu0 %5639
        %5643 = vset.pattern.permute.xlu0 0
        %5644 = vperm.xlu0 %5643, %v5257
        %v5645 = vpop.permute.xlu0 %5644
        %v5647 = vadd.f32 %v5623, %v5630
        %v5648 = vadd.f32 %v5624, %v5635
        %v5649 = vadd.f32 %v5625, %v5640
        %v5650 = vadd.f32 %v5626, %v5645
        %s5651 = scalar_lea.vmem %s18, 64
        %v5652 = vld [vmem:[%s5651] sm:$0xff]
        %v5653 = vld [vmem:[%s5651 + $0x8] sm:$0xff]
        %v5654 = vld [vmem:[%s5651 + $0x10] sm:$0xff]
        %v5655 = vld [vmem:[%s5651 + $0x18] sm:$0xff]
        %5657 = vset.pattern.permute.xlu0 0
        %5658 = vperm.xlu0 %5657, %v5652
        %v5659 = vpop.permute.xlu0 %5658
        %5662 = vset.pattern.permute.xlu0 0
        %5663 = vperm.xlu0 %5662, %v5653
        %v5664 = vpop.permute.xlu0 %5663
        %5667 = vset.pattern.permute.xlu0 0
        %5668 = vperm.xlu0 %5667, %v5654
        %v5669 = vpop.permute.xlu0 %5668
        %5672 = vset.pattern.permute.xlu0 0
        %5673 = vperm.xlu0 %5672, %v5655
        %v5674 = vpop.permute.xlu0 %5673
        %v5676 = vadd.f32 %v5217, %v5659
        %v5677 = vadd.f32 %v5218, %v5664
        %v5678 = vadd.f32 %v5219, %v5669
        %v5679 = vadd.f32 %v5220, %v5674
        %v5680 = vadd.f32 %v5647, %v5676
        %v5681 = vadd.f32 %v5648, %v5677
        %v5682 = vadd.f32 %v5649, %v5678
        %v5683 = vadd.f32 %v5650, %v5679
        %v5684 = vmax.f32 %v5680, 0.0
        %v5685 = vmax.f32 %v5681, 0.0
        %v5686 = vmax.f32 %v5682, 0.0
        %v5687 = vmax.f32 %v5683, 0.0
        %v5688 = vld [vmem:[%s10] sm:$0xff]
        %v5689 = vld [vmem:[%s10 + $0x8] sm:$0xff]
        %v5691 = vsel %vm1645, %v5684, 0
        %v5694 = vsel %vm1645, %v5685, 0
        %v5697 = vsel %vm1645, %v5686, 0
        %v5700 = vsel %vm1645, %v5687, 0
        %5702 = vmatprep.subr.mxu0 0.0
        %5703 = vmatpush1.msra.mxu0 %v5688
        %5704 = vmatprep.subr.mxu0 0.0
        %5705 = vmatpush1.msra.mxu0 %v5689
        %5706 = vmatprep.subr.mxu0 0.0
        %5707 = vmatpush1.msra.mxu0 0.0
        %5708 = vmatprep.subr.mxu0 0.0
        %5709 = vmatpush1.msra.mxu0 0.0
        %5710 = vmatprep.subr.mxu0 0.0
        %5711 = vmatpush1.msra.mxu0 0.0
        %5712 = vmatprep.subr.mxu0 0.0
        %5713 = vmatpush1.msra.mxu0 0.0
        %5714 = vmatprep.subr.mxu0 0.0
        %5715 = vmatpush1.msra.mxu0 0.0
        %5716 = vmatprep.subr.mxu0 0.0
        %5717 = vmatpush1.msra.mxu0 0.0
        %5718 = vmatprep.subr.mxu0 0.0
        %5719 = vmatpush1.msra.mxu0 0.0
        %5720 = vmatprep.subr.mxu0 0.0
        %5721 = vmatpush1.msra.mxu0 0.0
        %5722 = vmatprep.subr.mxu0 0.0
        %5723 = vmatpush1.msra.mxu0 0.0
        %5724 = vmatprep.subr.mxu0 0.0
        %5725 = vmatpush1.msra.mxu0 0.0
        %5726 = vmatprep.subr.mxu0 0.0
        %5727 = vmatpush1.msra.mxu0 0.0
        %5728 = vmatprep.subr.mxu0 0.0
        %5729 = vmatpush1.msra.mxu0 0.0
        %5730 = vmatprep.subr.mxu0 0.0
        %5731 = vmatpush1.msra.mxu0 0.0
        %5732 = vmatprep.subr.mxu0 0.0
        %5733 = vmatpush1.msra.mxu0 0.0
        %5734 = vmatprep.subr.mxu0 0.0
        %5735 = vmatpush1.msra.mxu0 0.0
        %5736 = vmatprep.subr.mxu0 0.0
        %5737 = vmatpush1.msra.mxu0 0.0
        %5738 = vmatprep.subr.mxu0 0.0
        %5739 = vmatpush1.msra.mxu0 0.0
        %5740 = vmatprep.subr.mxu0 0.0
        %5741 = vmatpush1.msra.mxu0 0.0
        %5742 = vmatprep.subr.mxu0 0.0
        %5743 = vmatpush1.msra.mxu0 0.0
        %5744 = vmatprep.subr.mxu0 0.0
        %5745 = vmatpush1.msra.mxu0 0.0
        %5746 = vmatprep.subr.mxu0 0.0
        %5747 = vmatpush1.msra.mxu0 0.0
        %5748 = vmatprep.subr.mxu0 0.0
        %5749 = vmatpush1.msra.mxu0 0.0
        %5750 = vmatprep.subr.mxu0 0.0
        %5751 = vmatpush1.msra.mxu0 0.0
        %5752 = vmatprep.subr.mxu0 0.0
        %5753 = vmatpush1.msra.mxu0 0.0
        %5754 = vmatprep.subr.mxu0 0.0
        %5755 = vmatpush1.msra.mxu0 0.0
        %5756 = vmatprep.subr.mxu0 0.0
        %5757 = vmatpush1.msra.mxu0 0.0
        %5758 = vmatprep.subr.mxu0 0.0
        %5759 = vmatpush1.msra.mxu0 0.0
        %5760 = vmatprep.subr.mxu0 0.0
        %5761 = vmatpush1.msra.mxu0 0.0
        %5762 = vmatprep.subr.mxu0 0.0
        %5763 = vmatpush1.msra.mxu0 0.0
        %5764 = vmatprep.subr.mxu0 0.0
        %5765 = vmatpush1.msra.mxu0 0.0
        %5766 = vmatprep.mubr.f32.mxu0 0.0
        %5767 = vmatmul.mubr.f32.gmra.mrb[0].mxu0 %v5691
        %v5768 = vpop.f32.mrb[0].mxu0
        %v5769 = vadd.f32 0.0, %v5768
        %v5770 = vpop.f32.mrb[0].mxu0
        %5771 = vmatprep.mubr.f32.mxu0 0.0
        %5772 = vmatmul.mubr.f32.gmra.mrb[0].mxu0 %v5694
        %v5773 = vpop.f32.mrb[0].mxu0
        %v5774 = vadd.f32 0.0, %v5773
        %v5775 = vpop.f32.mrb[0].mxu0
        %5776 = vmatprep.mubr.f32.mxu0 0.0
        %5777 = vmatmul.mubr.f32.gmra.mrb[0].mxu0 %v5697
        %v5778 = vpop.f32.mrb[0].mxu0
        %v5779 = vadd.f32 0.0, %v5778
        %v5780 = vpop.f32.mrb[0].mxu0
        %5781 = vmatprep.mubr.f32.mxu0 0.0
        %5782 = vmatmul.mubr.f32.gmra.mrb[0].mxu0 %v5700
        %v5783 = vpop.f32.mrb[0].mxu0
        %v5784 = vadd.f32 0.0, %v5783
        %v5785 = vpop.f32.mrb[0].mxu0
        %5786 = vdwg.mxu0
        %5787 = vrot.lane.b32.xlu0 %v5769, 32
        %v5788 = vpop.permute.xlu0 %5787
        %v5789 = vsel %vm706, %v5788, %v5769
        %5790 = vrot.lane.b32.xlu0 %v5774, 32
        %v5791 = vpop.permute.xlu0 %5790
        %v5792 = vsel %vm706, %v5791, %v5774
        %5793 = vrot.lane.b32.xlu0 %v5779, 32
        %v5794 = vpop.permute.xlu0 %5793
        %v5795 = vsel %vm706, %v5794, %v5779
        %5796 = vrot.lane.b32.xlu0 %v5784, 32
        %v5797 = vpop.permute.xlu0 %5796
        %v5798 = vsel %vm706, %v5797, %v5784
        %5799 = vrot.lane.b32.xlu0 %v5789, 32
        %v5800 = vpop.permute.xlu0 %5799
        %5801 = vrot.lane.b32.xlu0 %v5792, 32
        %v5802 = vpop.permute.xlu0 %5801
        %5803 = vrot.lane.b32.xlu0 %v5795, 32
        %v5804 = vpop.permute.xlu0 %5803
        %5805 = vrot.lane.b32.xlu0 %v5798, 32
        %v5806 = vpop.permute.xlu0 %5805
        %v5807 = vsel %vm706, %v5800, %v5769
        %v5808 = vsel %vm706, %v5802, %v5774
        %v5809 = vsel %vm706, %v5804, %v5779
        %v5810 = vsel %vm706, %v5806, %v5784
        %5815 = vrot.lane.b32.xlu0 %v5807, 97
        %v5816 = vpop.permute.xlu0 %5815
        %5817 = vrot.lane.b32.xlu0 %v5808, 97
        %v5818 = vpop.permute.xlu0 %5817
        %5819 = vrot.lane.b32.xlu0 %v5809, 97
        %v5820 = vpop.permute.xlu0 %5819
        %5821 = vrot.lane.b32.xlu0 %v5810, 97
        %v5822 = vpop.permute.xlu0 %5821
        %v5827 = vsel %vm705, 0.0, %v5816
        %v5828 = vsel %vm705, 0.0, %v5818
        %v5829 = vsel %vm705, 0.0, %v5820
        %v5830 = vsel %vm705, 0.0, %v5822
        %v5831 = vld [vmem:[%s19] sm:$0x1]
        %v5832 = vld [vmem:[%s21] sm:$0x1]
        %s5833 = scalar_lea.vmem %s19, 1
        %v5834 = vld [vmem:[%s5833] sm:$0x1]
        %v5836 = vsel %vm914, %v5834, 0
        %5838 = vmatprep.subr.mxu0 0.0
        %5839 = vmatpush1.msra.mxu0 %v5769
        %5840 = vmatprep.subr.mxu0 0.0
        %5841 = vmatpush1.msra.mxu0 %v5774
        %5842 = vmatprep.subr.mxu0 0.0
        %5843 = vmatpush1.msra.mxu0 %v5779
        %5844 = vmatprep.subr.mxu0 0.0
        %5845 = vmatpush1.msra.mxu0 %v5784
        %5846 = vmatprep.subr.mxu0 0.0
        %5847 = vmatpush1.msra.mxu0 0.0
        %5848 = vmatprep.subr.mxu0 0.0
        %5849 = vmatpush1.msra.mxu0 0.0
        %5850 = vmatprep.subr.mxu0 0.0
        %5851 = vmatpush1.msra.mxu0 0.0
        %5852 = vmatprep.subr.mxu0 0.0
        %5853 = vmatpush1.msra.mxu0 0.0
        %5854 = vmatprep.subr.mxu0 0.0
        %5855 = vmatpush1.msra.mxu0 0.0
        %5856 = vmatprep.subr.mxu0 0.0
        %5857 = vmatpush1.msra.mxu0 0.0
        %5858 = vmatprep.subr.mxu0 0.0
        %5859 = vmatpush1.msra.mxu0 0.0
        %5860 = vmatprep.subr.mxu0 0.0
        %5861 = vmatpush1.msra.mxu0 0.0
        %5862 = vmatprep.subr.mxu0 0.0
        %5863 = vmatpush1.msra.mxu0 0.0
        %5864 = vmatprep.subr.mxu0 0.0
        %5865 = vmatpush1.msra.mxu0 0.0
        %5866 = vmatprep.subr.mxu0 0.0
        %5867 = vmatpush1.msra.mxu0 0.0
        %5868 = vmatprep.subr.mxu0 0.0
        %5869 = vmatpush1.msra.mxu0 0.0
        %5870 = vmatprep.subr.mxu0 0.0
        %5871 = vmatpush1.msra.mxu0 0.0
        %5872 = vmatprep.subr.mxu0 0.0
        %5873 = vmatpush1.msra.mxu0 0.0
        %5874 = vmatprep.subr.mxu0 0.0
        %5875 = vmatpush1.msra.mxu0 0.0
        %5876 = vmatprep.subr.mxu0 0.0
        %5877 = vmatpush1.msra.mxu0 0.0
        %5878 = vmatprep.subr.mxu0 0.0
        %5879 = vmatpush1.msra.mxu0 0.0
        %5880 = vmatprep.subr.mxu0 0.0
        %5881 = vmatpush1.msra.mxu0 0.0
        %5882 = vmatprep.subr.mxu0 0.0
        %5883 = vmatpush1.msra.mxu0 0.0
        %5884 = vmatprep.subr.mxu0 0.0
        %5885 = vmatpush1.msra.mxu0 0.0
        %5886 = vmatprep.subr.mxu0 0.0
        %5887 = vmatpush1.msra.mxu0 0.0
        %5888 = vmatprep.subr.mxu0 0.0
        %5889 = vmatpush1.msra.mxu0 0.0
        %5890 = vmatprep.subr.mxu0 0.0
        %5891 = vmatpush1.msra.mxu0 0.0
        %5892 = vmatprep.subr.mxu0 0.0
        %5893 = vmatpush1.msra.mxu0 0.0
        %5894 = vmatprep.subr.mxu0 0.0
        %5895 = vmatpush1.msra.mxu0 0.0
        %5896 = vmatprep.subr.mxu0 0.0
        %5897 = vmatpush1.msra.mxu0 0.0
        %5898 = vmatprep.subr.mxu0 0.0
        %5899 = vmatpush1.msra.mxu0 0.0
        %5900 = vmatprep.subr.mxu0 0.0
        %5901 = vmatpush1.msra.mxu0 0.0
        %5902 = vmatprep.mubr.f32.mxu0 0.0
        %5903 = vmatmul.mubr.f32.gmra.mrb[0].mxu0 %v5836
        %v5904 = vpop.f32.mrb[0].mxu0
        %v5905 = vadd.f32 0.0, %v5904
        %v5906 = vpop.f32.mrb[0].mxu0
        %5907 = vdwg.mxu0
        %v5909 = vsel %vm914, %v5831, 0
        %5911 = vmatprep.subr.mxu0 0.0
        %5912 = vmatpush1.msra.mxu0 %v5827
        %5913 = vmatprep.subr.mxu0 0.0
        %5914 = vmatpush1.msra.mxu0 %v5828
        %5915 = vmatprep.subr.mxu0 0.0
        %5916 = vmatpush1.msra.mxu0 %v5829
        %5917 = vmatprep.subr.mxu0 0.0
        %5918 = vmatpush1.msra.mxu0 %v5830
        %5919 = vmatprep.subr.mxu0 0.0
        %5920 = vmatpush1.msra.mxu0 0.0
        %5921 = vmatprep.subr.mxu0 0.0
        %5922 = vmatpush1.msra.mxu0 0.0
        %5923 = vmatprep.subr.mxu0 0.0
        %5924 = vmatpush1.msra.mxu0 0.0
        %5925 = vmatprep.subr.mxu0 0.0
        %5926 = vmatpush1.msra.mxu0 0.0
        %5927 = vmatprep.subr.mxu0 0.0
        %5928 = vmatpush1.msra.mxu0 0.0
        %5929 = vmatprep.subr.mxu0 0.0
        %5930 = vmatpush1.msra.mxu0 0.0
        %5931 = vmatprep.subr.mxu0 0.0
        %5932 = vmatpush1.msra.mxu0 0.0
        %5933 = vmatprep.subr.mxu0 0.0
        %5934 = vmatpush1.msra.mxu0 0.0
        %5935 = vmatprep.subr.mxu0 0.0
        %5936 = vmatpush1.msra.mxu0 0.0
        %5937 = vmatprep.subr.mxu0 0.0
        %5938 = vmatpush1.msra.mxu0 0.0
        %5939 = vmatprep.subr.mxu0 0.0
        %5940 = vmatpush1.msra.mxu0 0.0
        %5941 = vmatprep.subr.mxu0 0.0
        %5942 = vmatpush1.msra.mxu0 0.0
        %5943 = vmatprep.subr.mxu0 0.0
        %5944 = vmatpush1.msra.mxu0 0.0
        %5945 = vmatprep.subr.mxu0 0.0
        %5946 = vmatpush1.msra.mxu0 0.0
        %5947 = vmatprep.subr.mxu0 0.0
        %5948 = vmatpush1.msra.mxu0 0.0
        %5949 = vmatprep.subr.mxu0 0.0
        %5950 = vmatpush1.msra.mxu0 0.0
        %5951 = vmatprep.subr.mxu0 0.0
        %5952 = vmatpush1.msra.mxu0 0.0
        %5953 = vmatprep.subr.mxu0 0.0
        %5954 = vmatpush1.msra.mxu0 0.0
        %5955 = vmatprep.subr.mxu0 0.0
        %5956 = vmatpush1.msra.mxu0 0.0
        %5957 = vmatprep.subr.mxu0 0.0
        %5958 = vmatpush1.msra.mxu0 0.0
        %5959 = vmatprep.subr.mxu0 0.0
        %5960 = vmatpush1.msra.mxu0 0.0
        %5961 = vmatprep.subr.mxu0 0.0
        %5962 = vmatpush1.msra.mxu0 0.0
        %5963 = vmatprep.subr.mxu0 0.0
        %5964 = vmatpush1.msra.mxu0 0.0
        %5965 = vmatprep.subr.mxu0 0.0
        %5966 = vmatpush1.msra.mxu0 0.0
        %5967 = vmatprep.subr.mxu0 0.0
        %5968 = vmatpush1.msra.mxu0 0.0
        %5969 = vmatprep.subr.mxu0 0.0
        %5970 = vmatpush1.msra.mxu0 0.0
        %5971 = vmatprep.subr.mxu0 0.0
        %5972 = vmatpush1.msra.mxu0 0.0
        %5973 = vmatprep.subr.mxu0 0.0
        %5974 = vmatpush1.msra.mxu0 0.0
        %5975 = vmatprep.mubr.f32.mxu0 0.0
        %5976 = vmatmul.mubr.f32.gmra.mrb[0].mxu0 %v5909
        %v5977 = vpop.f32.mrb[0].mxu0
        %v5978 = vadd.f32 %v5905, %v5977
        %v5979 = vpop.f32.mrb[0].mxu0
        %5980 = vdwg.mxu0
        %s5981 = scalar_lea.vmem %s21, 1
        %v5982 = vld [vmem:[%s5981] sm:$0x1]
        %v5984 = vsel %vm914, %v5982, 0
        %5986 = vmatprep.subr.mxu0 0.0
        %5987 = vmatpush1.msra.mxu0 %v5769
        %5988 = vmatprep.subr.mxu0 0.0
        %5989 = vmatpush1.msra.mxu0 %v5774
        %5990 = vmatprep.subr.mxu0 0.0
        %5991 = vmatpush1.msra.mxu0 %v5779
        %5992 = vmatprep.subr.mxu0 0.0
        %5993 = vmatpush1.msra.mxu0 %v5784
        %5994 = vmatprep.subr.mxu0 0.0
        %5995 = vmatpush1.msra.mxu0 0.0
        %5996 = vmatprep.subr.mxu0 0.0
        %5997 = vmatpush1.msra.mxu0 0.0
        %5998 = vmatprep.subr.mxu0 0.0
        %5999 = vmatpush1.msra.mxu0 0.0
        %6000 = vmatprep.subr.mxu0 0.0
        %6001 = vmatpush1.msra.mxu0 0.0
        %6002 = vmatprep.subr.mxu0 0.0
        %6003 = vmatpush1.msra.mxu0 0.0
        %6004 = vmatprep.subr.mxu0 0.0
        %6005 = vmatpush1.msra.mxu0 0.0
        %6006 = vmatprep.subr.mxu0 0.0
        %6007 = vmatpush1.msra.mxu0 0.0
        %6008 = vmatprep.subr.mxu0 0.0
        %6009 = vmatpush1.msra.mxu0 0.0
        %6010 = vmatprep.subr.mxu0 0.0
        %6011 = vmatpush1.msra.mxu0 0.0
        %6012 = vmatprep.subr.mxu0 0.0
        %6013 = vmatpush1.msra.mxu0 0.0
        %6014 = vmatprep.subr.mxu0 0.0
        %6015 = vmatpush1.msra.mxu0 0.0
        %6016 = vmatprep.subr.mxu0 0.0
        %6017 = vmatpush1.msra.mxu0 0.0
        %6018 = vmatprep.subr.mxu0 0.0
        %6019 = vmatpush1.msra.mxu0 0.0
        %6020 = vmatprep.subr.mxu0 0.0
        %6021 = vmatpush1.msra.mxu0 0.0
        %6022 = vmatprep.subr.mxu0 0.0
        %6023 = vmatpush1.msra.mxu0 0.0
        %6024 = vmatprep.subr.mxu0 0.0
        %6025 = vmatpush1.msra.mxu0 0.0
        %6026 = vmatprep.subr.mxu0 0.0
        %6027 = vmatpush1.msra.mxu0 0.0
        %6028 = vmatprep.subr.mxu0 0.0
        %6029 = vmatpush1.msra.mxu0 0.0
        %6030 = vmatprep.subr.mxu0 0.0
        %6031 = vmatpush1.msra.mxu0 0.0
        %6032 = vmatprep.subr.mxu0 0.0
        %6033 = vmatpush1.msra.mxu0 0.0
        %6034 = vmatprep.subr.mxu0 0.0
        %6035 = vmatpush1.msra.mxu0 0.0
        %6036 = vmatprep.subr.mxu0 0.0
        %6037 = vmatpush1.msra.mxu0 0.0
        %6038 = vmatprep.subr.mxu0 0.0
        %6039 = vmatpush1.msra.mxu0 0.0
        %6040 = vmatprep.subr.mxu0 0.0
        %6041 = vmatpush1.msra.mxu0 0.0
        %6042 = vmatprep.subr.mxu0 0.0
        %6043 = vmatpush1.msra.mxu0 0.0
        %6044 = vmatprep.subr.mxu0 0.0
        %6045 = vmatpush1.msra.mxu0 0.0
        %6046 = vmatprep.subr.mxu0 0.0
        %6047 = vmatpush1.msra.mxu0 0.0
        %6048 = vmatprep.subr.mxu0 0.0
        %6049 = vmatpush1.msra.mxu0 0.0
        %6050 = vmatprep.mubr.f32.mxu0 0.0
        %6051 = vmatmul.mubr.f32.gmra.mrb[0].mxu0 %v5984
        %v6052 = vpop.f32.mrb[0].mxu0
        %v6053 = vadd.f32 0.0, %v6052
        %v6054 = vpop.f32.mrb[0].mxu0
        %6055 = vdwg.mxu0
        %v6057 = vsel %vm914, %v5832, 0
        %6059 = vmatprep.subr.mxu0 0.0
        %6060 = vmatpush1.msra.mxu0 %v5827
        %6061 = vmatprep.subr.mxu0 0.0
        %6062 = vmatpush1.msra.mxu0 %v5828
        %6063 = vmatprep.subr.mxu0 0.0
        %6064 = vmatpush1.msra.mxu0 %v5829
        %6065 = vmatprep.subr.mxu0 0.0
        %6066 = vmatpush1.msra.mxu0 %v5830
        %6067 = vmatprep.subr.mxu0 0.0
        %6068 = vmatpush1.msra.mxu0 0.0
        %6069 = vmatprep.subr.mxu0 0.0
        %6070 = vmatpush1.msra.mxu0 0.0
        %6071 = vmatprep.subr.mxu0 0.0
        %6072 = vmatpush1.msra.mxu0 0.0
        %6073 = vmatprep.subr.mxu0 0.0
        %6074 = vmatpush1.msra.mxu0 0.0
        %6075 = vmatprep.subr.mxu0 0.0
        %6076 = vmatpush1.msra.mxu0 0.0
        %6077 = vmatprep.subr.mxu0 0.0
        %6078 = vmatpush1.msra.mxu0 0.0
        %6079 = vmatprep.subr.mxu0 0.0
        %6080 = vmatpush1.msra.mxu0 0.0
        %6081 = vmatprep.subr.mxu0 0.0
        %6082 = vmatpush1.msra.mxu0 0.0
        %6083 = vmatprep.subr.mxu0 0.0
        %6084 = vmatpush1.msra.mxu0 0.0
        %6085 = vmatprep.subr.mxu0 0.0
        %6086 = vmatpush1.msra.mxu0 0.0
        %6087 = vmatprep.subr.mxu0 0.0
        %6088 = vmatpush1.msra.mxu0 0.0
        %6089 = vmatprep.subr.mxu0 0.0
        %6090 = vmatpush1.msra.mxu0 0.0
        %6091 = vmatprep.subr.mxu0 0.0
        %6092 = vmatpush1.msra.mxu0 0.0
        %6093 = vmatprep.subr.mxu0 0.0
        %6094 = vmatpush1.msra.mxu0 0.0
        %6095 = vmatprep.subr.mxu0 0.0
        %6096 = vmatpush1.msra.mxu0 0.0
        %6097 = vmatprep.subr.mxu0 0.0
        %6098 = vmatpush1.msra.mxu0 0.0
        %6099 = vmatprep.subr.mxu0 0.0
        %6100 = vmatpush1.msra.mxu0 0.0
        %6101 = vmatprep.subr.mxu0 0.0
        %6102 = vmatpush1.msra.mxu0 0.0
        %6103 = vmatprep.subr.mxu0 0.0
        %6104 = vmatpush1.msra.mxu0 0.0
        %6105 = vmatprep.subr.mxu0 0.0
        %6106 = vmatpush1.msra.mxu0 0.0
        %6107 = vmatprep.subr.mxu0 0.0
        %6108 = vmatpush1.msra.mxu0 0.0
        %6109 = vmatprep.subr.mxu0 0.0
        %6110 = vmatpush1.msra.mxu0 0.0
        %6111 = vmatprep.subr.mxu0 0.0
        %6112 = vmatpush1.msra.mxu0 0.0
        %6113 = vmatprep.subr.mxu0 0.0
        %6114 = vmatpush1.msra.mxu0 0.0
        %6115 = vmatprep.subr.mxu0 0.0
        %6116 = vmatpush1.msra.mxu0 0.0
        %6117 = vmatprep.subr.mxu0 0.0
        %6118 = vmatpush1.msra.mxu0 0.0
        %6119 = vmatprep.subr.mxu0 0.0
        %6120 = vmatpush1.msra.mxu0 0.0
        %6121 = vmatprep.subr.mxu0 0.0
        %6122 = vmatpush1.msra.mxu0 0.0
        %6123 = vmatprep.mubr.f32.mxu0 0.0
        %6124 = vmatmul.mubr.f32.gmra.mrb[0].mxu0 %v6057
        %v6125 = vpop.f32.mrb[0].mxu0
        %v6126 = vadd.f32 %v6053, %v6125
        %v6127 = vpop.f32.mrb[0].mxu0
        %6128 = vdwg.mxu0
        %6129 = vrot.lane.b32.xlu0 %v5807, 127
        %v6130 = vpop.permute.xlu0 %6129
        %6131 = vrot.lane.b32.xlu0 %v5808, 127
        %v6132 = vpop.permute.xlu0 %6131
        %6133 = vrot.lane.b32.xlu0 %v5809, 127
        %v6134 = vpop.permute.xlu0 %6133
        %6135 = vrot.lane.b32.xlu0 %v5810, 127
        %v6136 = vpop.permute.xlu0 %6135
        %v6141 = vsel %vm718, 0.0, %v6130
        %v6142 = vsel %vm718, 0.0, %v6132
        %v6143 = vsel %vm718, 0.0, %v6134
        %v6144 = vsel %vm718, 0.0, %v6136
        %s6145 = scalar_lea.vmem %s19, 2
        %v6146 = vld [vmem:[%s6145] sm:$0x1]
        %v6148 = vsel %vm914, %v6146, 0
        %6150 = vmatprep.subr.mxu0 0.0
        %6151 = vmatpush1.msra.mxu0 %v6141
        %6152 = vmatprep.subr.mxu0 0.0
        %6153 = vmatpush1.msra.mxu0 %v6142
        %6154 = vmatprep.subr.mxu0 0.0
        %6155 = vmatpush1.msra.mxu0 %v6143
        %6156 = vmatprep.subr.mxu0 0.0
        %6157 = vmatpush1.msra.mxu0 %v6144
        %6158 = vmatprep.subr.mxu0 0.0
        %6159 = vmatpush1.msra.mxu0 0.0
        %6160 = vmatprep.subr.mxu0 0.0
        %6161 = vmatpush1.msra.mxu0 0.0
        %6162 = vmatprep.subr.mxu0 0.0
        %6163 = vmatpush1.msra.mxu0 0.0
        %6164 = vmatprep.subr.mxu0 0.0
        %6165 = vmatpush1.msra.mxu0 0.0
        %6166 = vmatprep.subr.mxu0 0.0
        %6167 = vmatpush1.msra.mxu0 0.0
        %6168 = vmatprep.subr.mxu0 0.0
        %6169 = vmatpush1.msra.mxu0 0.0
        %6170 = vmatprep.subr.mxu0 0.0
        %6171 = vmatpush1.msra.mxu0 0.0
        %6172 = vmatprep.subr.mxu0 0.0
        %6173 = vmatpush1.msra.mxu0 0.0
        %6174 = vmatprep.subr.mxu0 0.0
        %6175 = vmatpush1.msra.mxu0 0.0
        %6176 = vmatprep.subr.mxu0 0.0
        %6177 = vmatpush1.msra.mxu0 0.0
        %6178 = vmatprep.subr.mxu0 0.0
        %6179 = vmatpush1.msra.mxu0 0.0
        %6180 = vmatprep.subr.mxu0 0.0
        %6181 = vmatpush1.msra.mxu0 0.0
        %6182 = vmatprep.subr.mxu0 0.0
        %6183 = vmatpush1.msra.mxu0 0.0
        %6184 = vmatprep.subr.mxu0 0.0
        %6185 = vmatpush1.msra.mxu0 0.0
        %6186 = vmatprep.subr.mxu0 0.0
        %6187 = vmatpush1.msra.mxu0 0.0
        %6188 = vmatprep.subr.mxu0 0.0
        %6189 = vmatpush1.msra.mxu0 0.0
        %6190 = vmatprep.subr.mxu0 0.0
        %6191 = vmatpush1.msra.mxu0 0.0
        %6192 = vmatprep.subr.mxu0 0.0
        %6193 = vmatpush1.msra.mxu0 0.0
        %6194 = vmatprep.subr.mxu0 0.0
        %6195 = vmatpush1.msra.mxu0 0.0
        %6196 = vmatprep.subr.mxu0 0.0
        %6197 = vmatpush1.msra.mxu0 0.0
        %6198 = vmatprep.subr.mxu0 0.0
        %6199 = vmatpush1.msra.mxu0 0.0
        %6200 = vmatprep.subr.mxu0 0.0
        %6201 = vmatpush1.msra.mxu0 0.0
        %6202 = vmatprep.subr.mxu0 0.0
        %6203 = vmatpush1.msra.mxu0 0.0
        %6204 = vmatprep.subr.mxu0 0.0
        %6205 = vmatpush1.msra.mxu0 0.0
        %6206 = vmatprep.subr.mxu0 0.0
        %6207 = vmatpush1.msra.mxu0 0.0
        %6208 = vmatprep.subr.mxu0 0.0
        %6209 = vmatpush1.msra.mxu0 0.0
        %6210 = vmatprep.subr.mxu0 0.0
        %6211 = vmatpush1.msra.mxu0 0.0
        %6212 = vmatprep.subr.mxu0 0.0
        %6213 = vmatpush1.msra.mxu0 0.0
        %6214 = vmatprep.mubr.f32.mxu0 0.0
        %6215 = vmatmul.mubr.f32.gmra.mrb[0].mxu0 %v6148
        %v6216 = vpop.f32.mrb[0].mxu0
        %v6217 = vadd.f32 0.0, %v6216
        %v6218 = vpop.f32.mrb[0].mxu0
        %6219 = vdwg.mxu0
        %v6220 = vadd.f32 %v5978, %v6217
        %s6221 = scalar_lea.vmem %s21, 2
        %v6222 = vld [vmem:[%s6221] sm:$0x1]
        %v6224 = vsel %vm914, %v6222, 0
        %6226 = vmatprep.subr.mxu0 0.0
        %6227 = vmatpush1.msra.mxu0 %v6141
        %6228 = vmatprep.subr.mxu0 0.0
        %6229 = vmatpush1.msra.mxu0 %v6142
        %6230 = vmatprep.subr.mxu0 0.0
        %6231 = vmatpush1.msra.mxu0 %v6143
        %6232 = vmatprep.subr.mxu0 0.0
        %6233 = vmatpush1.msra.mxu0 %v6144
        %6234 = vmatprep.subr.mxu0 0.0
        %6235 = vmatpush1.msra.mxu0 0.0
        %6236 = vmatprep.subr.mxu0 0.0
        %6237 = vmatpush1.msra.mxu0 0.0
        %6238 = vmatprep.subr.mxu0 0.0
        %6239 = vmatpush1.msra.mxu0 0.0
        %6240 = vmatprep.subr.mxu0 0.0
        %6241 = vmatpush1.msra.mxu0 0.0
        %6242 = vmatprep.subr.mxu0 0.0
        %6243 = vmatpush1.msra.mxu0 0.0
        %6244 = vmatprep.subr.mxu0 0.0
        %6245 = vmatpush1.msra.mxu0 0.0
        %6246 = vmatprep.subr.mxu0 0.0
        %6247 = vmatpush1.msra.mxu0 0.0
        %6248 = vmatprep.subr.mxu0 0.0
        %6249 = vmatpush1.msra.mxu0 0.0
        %6250 = vmatprep.subr.mxu0 0.0
        %6251 = vmatpush1.msra.mxu0 0.0
        %6252 = vmatprep.subr.mxu0 0.0
        %6253 = vmatpush1.msra.mxu0 0.0
        %6254 = vmatprep.subr.mxu0 0.0
        %6255 = vmatpush1.msra.mxu0 0.0
        %6256 = vmatprep.subr.mxu0 0.0
        %6257 = vmatpush1.msra.mxu0 0.0
        %6258 = vmatprep.subr.mxu0 0.0
        %6259 = vmatpush1.msra.mxu0 0.0
        %6260 = vmatprep.subr.mxu0 0.0
        %6261 = vmatpush1.msra.mxu0 0.0
        %6262 = vmatprep.subr.mxu0 0.0
        %6263 = vmatpush1.msra.mxu0 0.0
        %6264 = vmatprep.subr.mxu0 0.0
        %6265 = vmatpush1.msra.mxu0 0.0
        %6266 = vmatprep.subr.mxu0 0.0
        %6267 = vmatpush1.msra.mxu0 0.0
        %6268 = vmatprep.subr.mxu0 0.0
        %6269 = vmatpush1.msra.mxu0 0.0
        %6270 = vmatprep.subr.mxu0 0.0
        %6271 = vmatpush1.msra.mxu0 0.0
        %6272 = vmatprep.subr.mxu0 0.0
        %6273 = vmatpush1.msra.mxu0 0.0
        %6274 = vmatprep.subr.mxu0 0.0
        %6275 = vmatpush1.msra.mxu0 0.0
        %6276 = vmatprep.subr.mxu0 0.0
        %6277 = vmatpush1.msra.mxu0 0.0
        %6278 = vmatprep.subr.mxu0 0.0
        %6279 = vmatpush1.msra.mxu0 0.0
        %6280 = vmatprep.subr.mxu0 0.0
        %6281 = vmatpush1.msra.mxu0 0.0
        %6282 = vmatprep.subr.mxu0 0.0
        %6283 = vmatpush1.msra.mxu0 0.0
        %6284 = vmatprep.subr.mxu0 0.0
        %6285 = vmatpush1.msra.mxu0 0.0
        %6286 = vmatprep.subr.mxu0 0.0
        %6287 = vmatpush1.msra.mxu0 0.0
        %6288 = vmatprep.subr.mxu0 0.0
        %6289 = vmatpush1.msra.mxu0 0.0
        %6290 = vmatprep.mubr.f32.mxu0 0.0
        %6291 = vmatmul.mubr.f32.gmra.mrb[0].mxu0 %v6224
        %v6292 = vpop.f32.mrb[0].mxu0
        %v6293 = vadd.f32 0.0, %v6292
        %v6294 = vpop.f32.mrb[0].mxu0
        %6295 = vdwg.mxu0
        %v6296 = vadd.f32 %v6126, %v6293
        %v6297 = vld [vmem:[%s22] sm:$0x1]
        %6299 = vset.pattern.permute.xlu0 0
        %6300 = vperm.xlu0 %6299, %v6297
        %v6301 = vpop.permute.xlu0 %6300
        %v6303 = vlaneseq
        %v6304 = vshrl.u32 %v6303, 7
        %v6305 = vsub.s32 0, %v6304
        %v6306 = vrot.slane %v6301, %v6305
        %v6307 = vadd.f32 %v6220, %v6306
        %v6308 = vmax.f32 %v6307, 0.0
        %s6309 = scalar_lea.vmem %s22, 1
        %v6310 = vld [vmem:[%s6309] sm:$0x1]
        %s6311 = scalar_lea.vmem %s20, 1
        %v6312 = vld [vmem:[%s6311] sm:$0x1]
        %v6313 = vld [vmem:[%s20] sm:$0x1]
        %6314 = vrot.lane.b32.xlu0 %v6308, 32
        %v6315 = vpop.permute.xlu0 %6314
        %v6316 = vsel %vm706, %v6315, %v6308
        %6317 = vrot.lane.b32.xlu0 %v6316, 32
        %v6318 = vpop.permute.xlu0 %6317
        %v6319 = vsel %vm706, %v6318, %v6308
        %6321 = vrot.lane.b32.xlu0 %v6319, 97
        %v6322 = vpop.permute.xlu0 %6321
        %v6324 = vsel %vm705, 0.0, %v6322
        %vm6325 = vcmask 7168
        %v6327 = vsel %vm6325, %v6313, 0
        %v6330 = vsel %vm732, %v6324, 0
        %6332 = vmatprep.subr.mxu0 0.0
        %6333 = vmatpush1.msra.mxu0 %v6330
        %6334 = vmatprep.subr.mxu0 0.0
        %6335 = vmatpush1.msra.mxu0 0.0
        %6336 = vmatprep.subr.mxu0 0.0
        %6337 = vmatpush1.msra.mxu0 0.0
        %6338 = vmatprep.subr.mxu0 0.0
        %6339 = vmatpush1.msra.mxu0 0.0
        %6340 = vmatprep.subr.mxu0 0.0
        %6341 = vmatpush1.msra.mxu0 0.0
        %6342 = vmatprep.subr.mxu0 0.0
        %6343 = vmatpush1.msra.mxu0 0.0
        %6344 = vmatprep.subr.mxu0 0.0
        %6345 = vmatpush1.msra.mxu0 0.0
        %6346 = vmatprep.subr.mxu0 0.0
        %6347 = vmatpush1.msra.mxu0 0.0
        %6348 = vmatprep.subr.mxu0 0.0
        %6349 = vmatpush1.msra.mxu0 0.0
        %6350 = vmatprep.subr.mxu0 0.0
        %6351 = vmatpush1.msra.mxu0 0.0
        %6352 = vmatprep.subr.mxu0 0.0
        %6353 = vmatpush1.msra.mxu0 0.0
        %6354 = vmatprep.subr.mxu0 0.0
        %6355 = vmatpush1.msra.mxu0 0.0
        %6356 = vmatprep.subr.mxu0 0.0
        %6357 = vmatpush1.msra.mxu0 0.0
        %6358 = vmatprep.subr.mxu0 0.0
        %6359 = vmatpush1.msra.mxu0 0.0
        %6360 = vmatprep.subr.mxu0 0.0
        %6361 = vmatpush1.msra.mxu0 0.0
        %6362 = vmatprep.subr.mxu0 0.0
        %6363 = vmatpush1.msra.mxu0 0.0
        %6364 = vmatprep.subr.mxu0 0.0
        %6365 = vmatpush1.msra.mxu0 0.0
        %6366 = vmatprep.subr.mxu0 0.0
        %6367 = vmatpush1.msra.mxu0 0.0
        %6368 = vmatprep.subr.mxu0 0.0
        %6369 = vmatpush1.msra.mxu0 0.0
        %6370 = vmatprep.subr.mxu0 0.0
        %6371 = vmatpush1.msra.mxu0 0.0
        %6372 = vmatprep.subr.mxu0 0.0
        %6373 = vmatpush1.msra.mxu0 0.0
        %6374 = vmatprep.subr.mxu0 0.0
        %6375 = vmatpush1.msra.mxu0 0.0
        %6376 = vmatprep.subr.mxu0 0.0
        %6377 = vmatpush1.msra.mxu0 0.0
        %6378 = vmatprep.subr.mxu0 0.0
        %6379 = vmatpush1.msra.mxu0 0.0
        %6380 = vmatprep.subr.mxu0 0.0
        %6381 = vmatpush1.msra.mxu0 0.0
        %6382 = vmatprep.subr.mxu0 0.0
        %6383 = vmatpush1.msra.mxu0 0.0
        %6384 = vmatprep.subr.mxu0 0.0
        %6385 = vmatpush1.msra.mxu0 0.0
        %6386 = vmatprep.subr.mxu0 0.0
        %6387 = vmatpush1.msra.mxu0 0.0
        %6388 = vmatprep.subr.mxu0 0.0
        %6389 = vmatpush1.msra.mxu0 0.0
        %6390 = vmatprep.subr.mxu0 0.0
        %6391 = vmatpush1.msra.mxu0 0.0
        %6392 = vmatprep.subr.mxu0 0.0
        %6393 = vmatpush1.msra.mxu0 0.0
        %6394 = vmatprep.subr.mxu0 0.0
        %6395 = vmatpush1.msra.mxu0 0.0
        %6396 = vmatprep.mubr.f32.mxu0 0.0
        %6397 = vmatmul.mubr.f32.gmra.mrb[0].mxu0 %v6327
        %v6398 = vpop.f32.mrb[0].mxu0
        %v6399 = vadd.f32 0.0, %v6398
        %v6400 = vpop.f32.mrb[0].mxu0
        %6401 = vdwg.mxu0
        %v6403 = vsel %vm6325, %v6312, 0
        %v6406 = vsel %vm732, %v6308, 0
        %6408 = vmatprep.subr.mxu0 0.0
        %6409 = vmatpush1.msra.mxu0 %v6406
        %6410 = vmatprep.subr.mxu0 0.0
        %6411 = vmatpush1.msra.mxu0 0.0
        %6412 = vmatprep.subr.mxu0 0.0
        %6413 = vmatpush1.msra.mxu0 0.0
        %6414 = vmatprep.subr.mxu0 0.0
        %6415 = vmatpush1.msra.mxu0 0.0
        %6416 = vmatprep.subr.mxu0 0.0
        %6417 = vmatpush1.msra.mxu0 0.0
        %6418 = vmatprep.subr.mxu0 0.0
        %6419 = vmatpush1.msra.mxu0 0.0
        %6420 = vmatprep.subr.mxu0 0.0
        %6421 = vmatpush1.msra.mxu0 0.0
        %6422 = vmatprep.subr.mxu0 0.0
        %6423 = vmatpush1.msra.mxu0 0.0
        %6424 = vmatprep.subr.mxu0 0.0
        %6425 = vmatpush1.msra.mxu0 0.0
        %6426 = vmatprep.subr.mxu0 0.0
        %6427 = vmatpush1.msra.mxu0 0.0
        %6428 = vmatprep.subr.mxu0 0.0
        %6429 = vmatpush1.msra.mxu0 0.0
        %6430 = vmatprep.subr.mxu0 0.0
        %6431 = vmatpush1.msra.mxu0 0.0
        %6432 = vmatprep.subr.mxu0 0.0
        %6433 = vmatpush1.msra.mxu0 0.0
        %6434 = vmatprep.subr.mxu0 0.0
        %6435 = vmatpush1.msra.mxu0 0.0
        %6436 = vmatprep.subr.mxu0 0.0
        %6437 = vmatpush1.msra.mxu0 0.0
        %6438 = vmatprep.subr.mxu0 0.0
        %6439 = vmatpush1.msra.mxu0 0.0
        %6440 = vmatprep.subr.mxu0 0.0
        %6441 = vmatpush1.msra.mxu0 0.0
        %6442 = vmatprep.subr.mxu0 0.0
        %6443 = vmatpush1.msra.mxu0 0.0
        %6444 = vmatprep.subr.mxu0 0.0
        %6445 = vmatpush1.msra.mxu0 0.0
        %6446 = vmatprep.subr.mxu0 0.0
        %6447 = vmatpush1.msra.mxu0 0.0
        %6448 = vmatprep.subr.mxu0 0.0
        %6449 = vmatpush1.msra.mxu0 0.0
        %6450 = vmatprep.subr.mxu0 0.0
        %6451 = vmatpush1.msra.mxu0 0.0
        %6452 = vmatprep.subr.mxu0 0.0
        %6453 = vmatpush1.msra.mxu0 0.0
        %6454 = vmatprep.subr.mxu0 0.0
        %6455 = vmatpush1.msra.mxu0 0.0
        %6456 = vmatprep.subr.mxu0 0.0
        %6457 = vmatpush1.msra.mxu0 0.0
        %6458 = vmatprep.subr.mxu0 0.0
        %6459 = vmatpush1.msra.mxu0 0.0
        %6460 = vmatprep.subr.mxu0 0.0
        %6461 = vmatpush1.msra.mxu0 0.0
        %6462 = vmatprep.subr.mxu0 0.0
        %6463 = vmatpush1.msra.mxu0 0.0
        %6464 = vmatprep.subr.mxu0 0.0
        %6465 = vmatpush1.msra.mxu0 0.0
        %6466 = vmatprep.subr.mxu0 0.0
        %6467 = vmatpush1.msra.mxu0 0.0
        %6468 = vmatprep.subr.mxu0 0.0
        %6469 = vmatpush1.msra.mxu0 0.0
        %6470 = vmatprep.subr.mxu0 0.0
        %6471 = vmatpush1.msra.mxu0 0.0
        %6472 = vmatprep.mubr.f32.mxu0 0.0
        %6473 = vmatmul.mubr.f32.gmra.mrb[0].mxu0 %v6403
        %v6474 = vpop.f32.mrb[0].mxu0
        %v6475 = vadd.f32 %v6399, %v6474
        %v6476 = vpop.f32.mrb[0].mxu0
        %6477 = vdwg.mxu0
        %s6478 = scalar_lea.vmem %s20, 2
        %v6479 = vld [vmem:[%s6478] sm:$0x1]
        %6480 = vrot.lane.b32.xlu0 %v6319, 127
        %v6481 = vpop.permute.xlu0 %6480
        %v6483 = vsel %vm718, 0.0, %v6481
        %v6485 = vsel %vm6325, %v6479, 0
        %v6488 = vsel %vm732, %v6483, 0
        %6490 = vmatprep.subr.mxu0 0.0
        %6491 = vmatpush1.msra.mxu0 %v6488
        %6492 = vmatprep.subr.mxu0 0.0
        %6493 = vmatpush1.msra.mxu0 0.0
        %6494 = vmatprep.subr.mxu0 0.0
        %6495 = vmatpush1.msra.mxu0 0.0
        %6496 = vmatprep.subr.mxu0 0.0
        %6497 = vmatpush1.msra.mxu0 0.0
        %6498 = vmatprep.subr.mxu0 0.0
        %6499 = vmatpush1.msra.mxu0 0.0
        %6500 = vmatprep.subr.mxu0 0.0
        %6501 = vmatpush1.msra.mxu0 0.0
        %6502 = vmatprep.subr.mxu0 0.0
        %6503 = vmatpush1.msra.mxu0 0.0
        %6504 = vmatprep.subr.mxu0 0.0
        %6505 = vmatpush1.msra.mxu0 0.0
        %6506 = vmatprep.subr.mxu0 0.0
        %6507 = vmatpush1.msra.mxu0 0.0
        %6508 = vmatprep.subr.mxu0 0.0
        %6509 = vmatpush1.msra.mxu0 0.0
        %6510 = vmatprep.subr.mxu0 0.0
        %6511 = vmatpush1.msra.mxu0 0.0
        %6512 = vmatprep.subr.mxu0 0.0
        %6513 = vmatpush1.msra.mxu0 0.0
        %6514 = vmatprep.subr.mxu0 0.0
        %6515 = vmatpush1.msra.mxu0 0.0
        %6516 = vmatprep.subr.mxu0 0.0
        %6517 = vmatpush1.msra.mxu0 0.0
        %6518 = vmatprep.subr.mxu0 0.0
        %6519 = vmatpush1.msra.mxu0 0.0
        %6520 = vmatprep.subr.mxu0 0.0
        %6521 = vmatpush1.msra.mxu0 0.0
        %6522 = vmatprep.subr.mxu0 0.0
        %6523 = vmatpush1.msra.mxu0 0.0
        %6524 = vmatprep.subr.mxu0 0.0
        %6525 = vmatpush1.msra.mxu0 0.0
        %6526 = vmatprep.subr.mxu0 0.0
        %6527 = vmatpush1.msra.mxu0 0.0
        %6528 = vmatprep.subr.mxu0 0.0
        %6529 = vmatpush1.msra.mxu0 0.0
        %6530 = vmatprep.subr.mxu0 0.0
        %6531 = vmatpush1.msra.mxu0 0.0
        %6532 = vmatprep.subr.mxu0 0.0
        %6533 = vmatpush1.msra.mxu0 0.0
        %6534 = vmatprep.subr.mxu0 0.0
        %6535 = vmatpush1.msra.mxu0 0.0
        %6536 = vmatprep.subr.mxu0 0.0
        %6537 = vmatpush1.msra.mxu0 0.0
        %6538 = vmatprep.subr.mxu0 0.0
        %6539 = vmatpush1.msra.mxu0 0.0
        %6540 = vmatprep.subr.mxu0 0.0
        %6541 = vmatpush1.msra.mxu0 0.0
        %6542 = vmatprep.subr.mxu0 0.0
        %6543 = vmatpush1.msra.mxu0 0.0
        %6544 = vmatprep.subr.mxu0 0.0
        %6545 = vmatpush1.msra.mxu0 0.0
        %6546 = vmatprep.subr.mxu0 0.0
        %6547 = vmatpush1.msra.mxu0 0.0
        %6548 = vmatprep.subr.mxu0 0.0
        %6549 = vmatpush1.msra.mxu0 0.0
        %6550 = vmatprep.subr.mxu0 0.0
        %6551 = vmatpush1.msra.mxu0 0.0
        %6552 = vmatprep.subr.mxu0 0.0
        %6553 = vmatpush1.msra.mxu0 0.0
        %6554 = vmatprep.mubr.f32.mxu0 0.0
        %6555 = vmatmul.mubr.f32.gmra.mrb[0].mxu0 %v6485
        %v6556 = vpop.f32.mrb[0].mxu0
        %v6557 = vadd.f32 0.0, %v6556
        %v6558 = vpop.f32.mrb[0].mxu0
        %6559 = vdwg.mxu0
        %v6560 = vadd.f32 %v6475, %v6557
        %6562 = vset.pattern.permute.xlu0 0
        %6563 = vperm.xlu0 %6562, %v6310
        %v6564 = vpop.permute.xlu0 %6563
        %v6566 = vlaneseq
        %v6567 = vshrl.u32 %v6566, 7
        %v6568 = vsub.s32 0, %v6567
        %v6569 = vrot.slane %v6564, %v6568
        %v6570 = vadd.f32 %v6560, %v6569
        %s6571 = scalar_lea.vmem %s22, 2
        %v6572 = vld [vmem:[%s6571] sm:$0x1]
        %6574 = vset.pattern.permute.xlu0 0
        %6575 = vperm.xlu0 %6574, %v6572
        %v6576 = vpop.permute.xlu0 %6575
        %v6578 = vlaneseq
        %v6579 = vshrl.u32 %v6578, 7
        %v6580 = vsub.s32 0, %v6579
        %v6581 = vrot.slane %v6576, %v6580
        %v6582 = vadd.f32 %v6296, %v6581
        %v6583 = vadd.f32 %v6570, %v6582
        %v6584 = vmax.f32 %v6583, 0.0
        %vm6585 = vcmask 253952
        %6586 = vst.msk [vmem:[%s698] sm:$0x1] %vm6585, %v6584
        %s6587 = sand.u32 %s533, 1
        %s6588 = scalar_lea.sflag [#allocation3], %s6587
        %s6589 = sand.u32 %s533, 1
        %s6590 = scalar_lea.vmem [#allocation2], %s6589
        // Predicated region
        $region113: #{tpu_custom_call.1} parent=111 // pred_check
          %p6591 = pneg %p543
        $region114: #{tpu_custom_call.1} parent=111 // pred_check_branch
          %6593 = sbr.rel (%p6591) target = $region116
        $region115: #{tpu_custom_call.1} parent=111 // pred_region
          %s6595 = ssub.s32 16, 16
          %6596 = vsyncadd %s6588, %s6595
          %s6597 = smul.addr %s37, 16
          %s6598 = scalar_lea.hbm %s23, %s6597
          %s6600 = sshll.u32 %s6590, 4
          %s6601 = int_to_ptr.vmem [resolvable:$true] %s6600
          %6603 = dma.vmem_to_hbm [thread:$0]  %s6601, 16, %s6598, %s6588
        $region116: #{tpu_custom_call.1} parent=111 // pred_fallthru
          _
      $region112: #{tpu_custom_call.1} parent=5 // pred_fallthru
        _
      %p6604 = scmp.le.s32.totalorder 2, %s32
      // Predicated region
      $region117: #{tpu_custom_call.1} parent=5 // pred_check
        %p6605 = pneg %p6604
      $region118: #{tpu_custom_call.1} parent=5 // pred_check_branch
        %6607 = sbr.rel (%p6605) target = $region120
      $region119: #{tpu_custom_call.1} parent=5 // pred_region
        %s6608 = ssub.s32 %s32, 2
        // Predicated region
        $region121: #{tpu_custom_call.1} parent=119 // pred_check
          %p6609 = pneg %p549
        $region122: #{tpu_custom_call.1} parent=119 // pred_check_branch
          %6611 = sbr.rel (%p6609) target = $region124
        $region123: #{tpu_custom_call.1} parent=119 // pred_region
          %s6612 = sand.u32 %s534, 1
          %s6613 = scalar_lea.sflag [#allocation3], %s6612
          %s6614 = sand.u32 %s534, 1
          %s6615 = scalar_lea.vmem [#allocation2], %s6614
          %6616 = dma.done %s6613, 16
        $region124: #{tpu_custom_call.1} parent=119 // pred_fallthru
          _
      $region120: #{tpu_custom_call.1} parent=5 // pred_fallthru
        _
    $region6: #{tpu_custom_call.1} parent=1 // loop_footer
      %s36 = sadd.s32 1, %s32
    $region7: #{tpu_custom_call.1} parent=1 // loop_footer_branch
      %31 = sbr.rel target = $region3
    $region8: #{tpu_custom_call.1} parent=1 // loop_exit
      _
    %6617 = vsyncpa [#allocation3], 1
    %s6618 = scalar_lea.sflag [#allocation3], 1
    %6619 = vsyncpa %s6618, 1

</llo_original>
